<compile_context>
chip_gen: v6e
topology: v6e:2x2x1
jax: 0.10.0
libtpu: 0.0.40
codegen_flags: <defaults>
</compile_context>

<pallas_src>
import math
import jax
import jax.numpy as jnp
from jax.experimental import pallas as pl
from jax.experimental.pallas import tpu as pltpu


# ----------------------------------------------------------------------------
# Fused ISABpp kernel builder
# ----------------------------------------------------------------------------
def make_isab_kernel(n_heads: int, dout: int, set_norm_ko: bool = True,
                     eps: float = 1e-5):
    assert dout % n_heads == 0
    hd = dout // n_heads
    scale = 1.0 / math.sqrt(dout)        # matches PyTorch: / sqrt(size)
    f32, bf16 = jnp.float32, jnp.bfloat16

    # ---- helpers (2D/3D ops only; concat/stack/slice instead of reshapes that
    #      would cross the sublane tiling) ----
    def _mean_all(x3):                   # (b,n,d) -> (b,1,1), mean over set+feat
        return jnp.mean(jnp.mean(x3, axis=-1, keepdims=True),
                        axis=-2, keepdims=True)

    def setnorm_core(x3):                # SetNorm without gamma/beta
        mu = _mean_all(x3)
        xc = x3 - mu
        return xc * jax.lax.rsqrt(_mean_all(xc * xc) + eps)

    def flat(x3):                        # (b,n,d) -> (b*n,d)
        return jnp.concatenate([x3[i] for i in range(x3.shape[0])], axis=0)

    def unflat(x2, b, n):                # (b*n,d) -> (b,n,d)
        return jnp.stack([x2[i * n:(i + 1) * n] for i in range(b)], axis=0)

    def split_heads(x3):                 # (b,n,dout) -> (H*b,n,hd)  (torch order)
        return jnp.concatenate(
            [x3[:, :, h * hd:(h + 1) * hd] for h in range(n_heads)], axis=0)

    def merge_heads(xh, b):              # (H*b,n,hd) -> (b,n,dout)
        return jnp.concatenate(
            [xh[h * b:(h + 1) * b] for h in range(n_heads)], axis=-1)

    def linear2d(x2, w_ref, b_ref):      # bf16 MXU operands, f32 accumulate
        return jnp.dot(x2.astype(bf16), w_ref[...],
                       preferred_element_type=f32) + b_ref[...]

    def mha(q3, k3, v3):                 # q pre-scaled; all (b,*,dout) f32
        b = q3.shape[0]
        qh = split_heads(q3).astype(bf16)          # (H*b, nq, hd)
        kh = split_heads(k3).astype(bf16)          # (H*b, nk, hd)
        vh = split_heads(v3).astype(bf16)          # (H*b, nk, hd)
        s = jnp.einsum('bqd,bkd->bqk', qh, kh, preferred_element_type=f32)
        s = s - jnp.max(s, axis=-1, keepdims=True)
        p = jnp.exp(s)
        p = p * pl.reciprocal(jnp.sum(p, axis=-1, keepdims=True), approx=True)
        o = jnp.einsum('bqk,bkd->bqd', p.astype(bf16), vh,
                       preferred_element_type=f32)
        return merge_heads(o, b)                   # (b, nq, dout) f32

    def kernel(x_ref, ind_ref,
               wq0_ref, bq0_ref, wk0_ref, bk0_ref, wv0_ref, bv0_ref,
               wo0_ref, bo0_ref, gk0_ref, betk0_ref, go0_ref, beto0_ref,
               wq1_ref, bq1_ref, wk1_ref, bk1_ref, wv1_ref, bv1_ref,
               wo1_ref, bo1_ref, gq1_ref, betq1_ref, gk1_ref, betk1_ref,
               go1_ref, beto1_ref,
               out_ref):
        Bt, N, _ = x_ref.shape
        n_ind = ind_ref.shape[1]

        x = x_ref[...]                   # (Bt, N, din)      f32
        ind = ind_ref[0]                 # (n_ind, dout)     f32

        # SetNorm core of X (per batch element), shared by mab0.norm_k & mab1.norm_q
        xn = setnorm_core(x)

        # ---------------- mab0: H = MAB(inducing, X) ----------------
        kv0 = xn * gk0_ref[...] + betk0_ref[...] if set_norm_ko else x
        kv0_2d = flat(kv0)                                       # (Bt*N, din)
        k0 = unflat(linear2d(kv0_2d, wk0_ref, bk0_ref), Bt, N)   # (Bt, N, dout)
        v0 = unflat(linear2d(kv0_2d, wv0_ref, bv0_ref), Bt, N)

        # mab0 query is batch-independent (shared inducing points, no norm_q):
        # compute the linear once, then broadcast across the batch tile.
        q0 = (jnp.dot(ind.astype(bf16), wq0_ref[...],
                      preferred_element_type=f32) + bq0_ref[...]) * scale
        q0b = jnp.broadcast_to(q0[None], (Bt, n_ind, dout))

        h_mid = ind[None] + mha(q0b, k0, v0)       # residual on UN-normalized query

        h_in = (setnorm_core(h_mid) * go0_ref[...] + beto0_ref[...]
                if set_norm_ko else h_mid)
        h_ffn = unflat(jnp.maximum(linear2d(flat(h_in), wo0_ref, bo0_ref), 0.0),
                       Bt, n_ind)
        h = h_mid + h_ffn                          # (Bt, n_ind, dout)

        # ---------------- mab1: out = MAB(X, H) ----------------
        qx = xn * gq1_ref[...] + betq1_ref[...]    # set_norm_q=True
        hn = (setnorm_core(h) * gk1_ref[...] + betk1_ref[...]
              if set_norm_ko else h)
        hn_2d = flat(hn)                                         # (Bt*n_ind, dout)
        q1 = unflat(linear2d(flat(qx), wq1_ref, bq1_ref) * scale, Bt, N)
        k1 = unflat(linear2d(hn_2d, wk1_ref, bk1_ref), Bt, n_ind)
        v1 = unflat(linear2d(hn_2d, wv1_ref, bv1_ref), Bt, n_ind)

        out_mid = x + mha(q1, k1, v1)              # residual on UN-normalized X

        o_in = (setnorm_core(out_mid) * go1_ref[...] + beto1_ref[...]
                if set_norm_ko else out_mid)
        o_ffn = unflat(jnp.maximum(linear2d(flat(o_in), wo1_ref, bo1_ref), 0.0),
                       Bt, N)
        out_ref[...] = out_mid + o_ffn             # (Bt, N, dout)

    return kernel


# ----------------------------------------------------------------------------
# Wrapper
# ----------------------------------------------------------------------------
def isab_pallas(X, params, *, n_heads, set_norm_ko=True, block_b=8):
    X = X.astype(jnp.float32)
    B, N, din = X.shape
    inducing = params["inducing"]                       # (1, n_induce, dout)
    _, n_induce, dout = inducing.shape
    # PyTorch residual `input_query + A.bmm(V_)` in mab1 implies din == dout
    assert din == dout, "ISABpp residual requires input_size == output_size"
    assert dout % n_heads == 0

    # Batch tile per grid step; pad B up to a multiple of Bt (padded rows are
    # all-zero -> finite garbage that is sliced off afterwards).
    Bt = max(1, min(block_b, B))
    num_blocks = -(-B // Bt)
    Bp = num_blocks * Bt
    if Bp != B:
        X = jnp.pad(X, ((0, Bp - B), (0, 0), (0, 0)))

    m0, m1 = params["mab0"], params["mab1"]
    weights = [
        m0["Wq"], m0["bq"], m0["Wk"], m0["bk"], m0["Wv"], m0["bv"],
        m0["Wo"], m0["bo"], m0["gamma_k"], m0["beta_k"], m0["gamma_o"], m0["beta_o"],
        m1["Wq"], m1["bq"], m1["Wk"], m1["bk"], m1["Wv"], m1["bv"],
        m1["Wo"], m1["bo"], m1["gamma_q"], m1["beta_q"], m1["gamma_k"], m1["beta_k"],
        m1["gamma_o"], m1["beta_o"],
    ]

    kernel = make_isab_kernel(n_heads, dout, set_norm_ko=set_norm_ko)

    in_specs = [
        pl.BlockSpec((Bt, N, din), lambda b: (b, 0, 0)),           # X tile per step
        pl.BlockSpec((1, n_induce, dout), lambda b: (0, 0, 0)),    # resident
    ] + [pl.BlockSpec(w.shape, lambda b: (0, 0)) for w in weights]  # resident (all 2D)

    out = pl.pallas_call(
        kernel,
        out_shape=jax.ShapeDtypeStruct((Bp, N, dout), jnp.float32),
        grid_spec=pltpu.PrefetchScalarGridSpec(
            num_scalar_prefetch=0,
            grid=(num_blocks,),
            in_specs=in_specs,
            out_specs=pl.BlockSpec((Bt, N, dout), lambda b: (b, 0, 0)),
        ),
        compiler_params=pltpu.CompilerParams(
            dimension_semantics=("parallel",),     # megacore / dual-TC sharding
            vmem_limit_bytes=32 * 1024 * 1024,
        ),
    )(X, inducing, *weights)
    return out[:B]


# ----------------------------------------------------------------------------
# Parameter construction (deterministic, synthetic)
# ----------------------------------------------------------------------------
def _linear_params(key, fan_in, fan_out):
    bound = 1.0 / math.sqrt(fan_in)
    kw, kb = jax.random.split(key)
    W = jax.random.uniform(kw, (fan_in, fan_out), jnp.float32, -bound, bound)
    b = jax.random.uniform(kb, (1, fan_out), jnp.float32, -bound, bound)
    return W.astype(jnp.bfloat16), b        # bf16 weights for the MXU, f32 bias


def make_mab_params(key, size_Q, size_KV, size):
    ks = jax.random.split(key, 4)
    Wq, bq = _linear_params(ks[0], size_Q, size)
    Wk, bk = _linear_params(ks[1], size_KV, size)
    Wv, bv = _linear_params(ks[2], size_KV, size)
    Wo, bo = _linear_params(ks[3], size, size)
    return {
        "Wq": Wq, "bq": bq, "Wk": Wk, "bk": bk, "Wv": Wv, "bv": bv,
        "Wo": Wo, "bo": bo,
        # SetNorm affine params (gamma=1, beta=0 at init)
        "gamma_q": jnp.ones((1, size_Q), jnp.float32),
        "beta_q": jnp.zeros((1, size_Q), jnp.float32),
        "gamma_k": jnp.ones((1, size_KV), jnp.float32),
        "beta_k": jnp.zeros((1, size_KV), jnp.float32),
        "gamma_o": jnp.ones((1, size), jnp.float32),
        "beta_o": jnp.zeros((1, size), jnp.float32),
    }


def make_isab_params(key, input_size, output_size, n_induce):
    k_ind, k0, k1 = jax.random.split(key, 3)
    bound = math.sqrt(6.0 / (n_induce * output_size + output_size))  # xavier-ish
    inducing = jax.random.uniform(k_ind, (1, n_induce, output_size),
                                  jnp.float32, -bound, bound)
    return {
        "inducing": inducing,
        # mab0: MABpp(size_Q=output, size_KV=input, size=output, set_norm_q=False)
        "mab0": make_mab_params(k0, output_size, input_size, output_size),
        # mab1: MABpp(size_Q=input, size_KV=output, size=output, set_norm_q=True)
        "mab1": make_mab_params(k1, input_size, output_size, output_size),
    }


# ----------------------------------------------------------------------------
if __name__ == "__main__":
    B, N = 6, 8
    input_size = output_size = 32
    n_heads = 4
    n_induce = 4

    key = jax.random.PRNGKey(0)
    k_params, k_x = jax.random.split(key)
    params = make_isab_params(k_params, input_size, output_size, n_induce)
    X = jax.random.normal(k_x, (B, N, input_size), jnp.float32)

    # block_b=4: exercises batch tiling, batch padding (6 -> 8) and a 2-step grid.
    out = isab_pallas(X, params, n_heads=n_heads, set_norm_ko=True, block_b=4)
    jax.block_until_ready(out)
    assert out.shape == (B, N, output_size)
    assert bool(jnp.all(jnp.isfinite(out)))
    print("KERNEL_OK")
</pallas_src>

<mosaic_0001>
module attributes {stable_mosaic.version = 11 : i64} {
  func.func @kernel(%arg0: i32, %arg1: memref<4x8x32xf32, #tpu.memory_space<vmem>>, %arg2: memref<1x4x32xf32, #tpu.memory_space<vmem>>, %arg3: memref<32x32xbf16, #tpu.memory_space<vmem>>, %arg4: memref<1x32xf32, #tpu.memory_space<vmem>>, %arg5: memref<32x32xbf16, #tpu.memory_space<vmem>>, %arg6: memref<1x32xf32, #tpu.memory_space<vmem>>, %arg7: memref<32x32xbf16, #tpu.memory_space<vmem>>, %arg8: memref<1x32xf32, #tpu.memory_space<vmem>>, %arg9: memref<32x32xbf16, #tpu.memory_space<vmem>>, %arg10: memref<1x32xf32, #tpu.memory_space<vmem>>, %arg11: memref<1x32xf32, #tpu.memory_space<vmem>>, %arg12: memref<1x32xf32, #tpu.memory_space<vmem>>, %arg13: memref<1x32xf32, #tpu.memory_space<vmem>>, %arg14: memref<1x32xf32, #tpu.memory_space<vmem>>, %arg15: memref<32x32xbf16, #tpu.memory_space<vmem>>, %arg16: memref<1x32xf32, #tpu.memory_space<vmem>>, %arg17: memref<32x32xbf16, #tpu.memory_space<vmem>>, %arg18: memref<1x32xf32, #tpu.memory_space<vmem>>, %arg19: memref<32x32xbf16, #tpu.memory_space<vmem>>, %arg20: memref<1x32xf32, #tpu.memory_space<vmem>>, %arg21: memref<32x32xbf16, #tpu.memory_space<vmem>>, %arg22: memref<1x32xf32, #tpu.memory_space<vmem>>, %arg23: memref<1x32xf32, #tpu.memory_space<vmem>>, %arg24: memref<1x32xf32, #tpu.memory_space<vmem>>, %arg25: memref<1x32xf32, #tpu.memory_space<vmem>>, %arg26: memref<1x32xf32, #tpu.memory_space<vmem>>, %arg27: memref<1x32xf32, #tpu.memory_space<vmem>>, %arg28: memref<1x32xf32, #tpu.memory_space<vmem>>, %arg29: memref<4x8x32xf32, #tpu.memory_space<vmem>>) attributes {dimension_semantics = [#tpu.dimension_semantics<parallel>], iteration_bounds = array<i64: 2>, scalar_prefetch = 0 : i64, scratch_operands = 0 : i64, tpu.core_type = #tpu.core_type<tc>, window_params = [{transform_indices = @transform_0, window_bounds = array<i64: 4, 8, 32>}, {pipeline_mode = #tpu.pipeline_mode<synchronous>, transform_indices = @transform_1, window_bounds = array<i64: 1, 4, 32>}, {pipeline_mode = #tpu.pipeline_mode<synchronous>, transform_indices = @transform_2, window_bounds = array<i64: 32, 32>}, {pipeline_mode = #tpu.pipeline_mode<synchronous>, transform_indices = @transform_3, window_bounds = array<i64: 1, 32>}, {pipeline_mode = #tpu.pipeline_mode<synchronous>, transform_indices = @transform_4, window_bounds = array<i64: 32, 32>}, {pipeline_mode = #tpu.pipeline_mode<synchronous>, transform_indices = @transform_5, window_bounds = array<i64: 1, 32>}, {pipeline_mode = #tpu.pipeline_mode<synchronous>, transform_indices = @transform_6, window_bounds = array<i64: 32, 32>}, {pipeline_mode = #tpu.pipeline_mode<synchronous>, transform_indices = @transform_7, window_bounds = array<i64: 1, 32>}, {pipeline_mode = #tpu.pipeline_mode<synchronous>, transform_indices = @transform_8, window_bounds = array<i64: 32, 32>}, {pipeline_mode = #tpu.pipeline_mode<synchronous>, transform_indices = @transform_9, window_bounds = array<i64: 1, 32>}, {pipeline_mode = #tpu.pipeline_mode<synchronous>, transform_indices = @transform_10, window_bounds = array<i64: 1, 32>}, {pipeline_mode = #tpu.pipeline_mode<synchronous>, transform_indices = @transform_11, window_bounds = array<i64: 1, 32>}, {pipeline_mode = #tpu.pipeline_mode<synchronous>, transform_indices = @transform_12, window_bounds = array<i64: 1, 32>}, {pipeline_mode = #tpu.pipeline_mode<synchronous>, transform_indices = @transform_13, window_bounds = array<i64: 1, 32>}, {pipeline_mode = #tpu.pipeline_mode<synchronous>, transform_indices = @transform_14, window_bounds = array<i64: 32, 32>}, {pipeline_mode = #tpu.pipeline_mode<synchronous>, transform_indices = @transform_15, window_bounds = array<i64: 1, 32>}, {pipeline_mode = #tpu.pipeline_mode<synchronous>, transform_indices = @transform_16, window_bounds = array<i64: 32, 32>}, {pipeline_mode = #tpu.pipeline_mode<synchronous>, transform_indices = @transform_17, window_bounds = array<i64: 1, 32>}, {pipeline_mode = #tpu.pipeline_mode<synchronous>, transform_indices = @transform_18, window_bounds = array<i64: 32, 32>}, {pipeline_mode = #tpu.pipeline_mode<synchronous>, transform_indices = @transform_19, window_bounds = array<i64: 1, 32>}, {pipeline_mode = #tpu.pipeline_mode<synchronous>, transform_indices = @transform_20, window_bounds = array<i64: 32, 32>}, {pipeline_mode = #tpu.pipeline_mode<synchronous>, transform_indices = @transform_21, window_bounds = array<i64: 1, 32>}, {pipeline_mode = #tpu.pipeline_mode<synchronous>, transform_indices = @transform_22, window_bounds = array<i64: 1, 32>}, {pipeline_mode = #tpu.pipeline_mode<synchronous>, transform_indices = @transform_23, window_bounds = array<i64: 1, 32>}, {pipeline_mode = #tpu.pipeline_mode<synchronous>, transform_indices = @transform_24, window_bounds = array<i64: 1, 32>}, {pipeline_mode = #tpu.pipeline_mode<synchronous>, transform_indices = @transform_25, window_bounds = array<i64: 1, 32>}, {pipeline_mode = #tpu.pipeline_mode<synchronous>, transform_indices = @transform_26, window_bounds = array<i64: 1, 32>}, {pipeline_mode = #tpu.pipeline_mode<synchronous>, transform_indices = @transform_27, window_bounds = array<i64: 1, 32>}, {transform_indices = @transform_28, window_bounds = array<i64: 4, 8, 32>}]} {
    %c0 = arith.constant 0 : index
    %c0_0 = arith.constant 0 : index
    %c0_1 = arith.constant 0 : index
    %0 = vector.load %arg1[%c0, %c0_0, %c0_1] : memref<4x8x32xf32, #tpu.memory_space<vmem>>, vector<4x8x32xf32>
    %c0_2 = arith.constant 0 : index
    %c0_3 = arith.constant 0 : index
    %c0_4 = arith.constant 0 : index
    %1 = vector.load %arg2[%c0_2, %c0_3, %c0_4] : memref<1x4x32xf32, #tpu.memory_space<vmem>>, vector<1x4x32xf32>
    %2 = vector.shape_cast %1 : vector<1x4x32xf32> to vector<4x32xf32>
    %cst = arith.constant dense<0.000000e+00> : vector<4x8xf32>
    %3 = vector.multi_reduction <add>, %0, %cst [2] : vector<4x8x32xf32> to vector<4x8xf32>
    %4 = vector.shape_cast %3 : vector<4x8xf32> to vector<4x8x1xf32>
    %cst_5 = arith.constant 3.200000e+01 : f32
    %5 = vector.broadcast %cst_5 : f32 to vector<4x8x1xf32>
    %6 = arith.divf %4, %5 : vector<4x8x1xf32>
    %cst_6 = arith.constant dense<0.000000e+00> : vector<4x1xf32>
    %7 = vector.multi_reduction <add>, %6, %cst_6 [1] : vector<4x8x1xf32> to vector<4x1xf32>
    %8 = vector.shape_cast %7 : vector<4x1xf32> to vector<4x1x1xf32>
    %cst_7 = arith.constant 8.000000e+00 : f32
    %9 = vector.broadcast %cst_7 : f32 to vector<4x1x1xf32>
    %10 = arith.divf %8, %9 : vector<4x1x1xf32>
    %11 = vector.broadcast %10 : vector<4x1x1xf32> to vector<4x8x32xf32>
    %12 = arith.subf %0, %11 : vector<4x8x32xf32>
    %13 = arith.mulf %12, %12 : vector<4x8x32xf32>
    %cst_8 = arith.constant dense<0.000000e+00> : vector<4x8xf32>
    %14 = vector.multi_reduction <add>, %13, %cst_8 [2] : vector<4x8x32xf32> to vector<4x8xf32>
    %15 = vector.shape_cast %14 : vector<4x8xf32> to vector<4x8x1xf32>
    %cst_9 = arith.constant 3.200000e+01 : f32
    %16 = vector.broadcast %cst_9 : f32 to vector<4x8x1xf32>
    %17 = arith.divf %15, %16 : vector<4x8x1xf32>
    %cst_10 = arith.constant dense<0.000000e+00> : vector<4x1xf32>
    %18 = vector.multi_reduction <add>, %17, %cst_10 [1] : vector<4x8x1xf32> to vector<4x1xf32>
    %19 = vector.shape_cast %18 : vector<4x1xf32> to vector<4x1x1xf32>
    %cst_11 = arith.constant 8.000000e+00 : f32
    %20 = vector.broadcast %cst_11 : f32 to vector<4x1x1xf32>
    %21 = arith.divf %19, %20 : vector<4x1x1xf32>
    %cst_12 = arith.constant 9.99999974E-6 : f32
    %22 = vector.broadcast %cst_12 : f32 to vector<4x1x1xf32>
    %23 = arith.addf %21, %22 : vector<4x1x1xf32>
    %24 = math.rsqrt %23 : vector<4x1x1xf32>
    %25 = vector.broadcast %24 : vector<4x1x1xf32> to vector<4x8x32xf32>
    %26 = arith.mulf %12, %25 : vector<4x8x32xf32>
    %c0_13 = arith.constant 0 : index
    %c0_14 = arith.constant 0 : index
    %27 = vector.load %arg11[%c0_13, %c0_14] : memref<1x32xf32, #tpu.memory_space<vmem>>, vector<1x32xf32>
    %28 = vector.shape_cast %27 : vector<1x32xf32> to vector<1x1x32xf32>
    %29 = vector.broadcast %28 : vector<1x1x32xf32> to vector<4x8x32xf32>
    %30 = arith.mulf %26, %29 : vector<4x8x32xf32>
    %c0_15 = arith.constant 0 : index
    %c0_16 = arith.constant 0 : index
    %31 = vector.load %arg12[%c0_15, %c0_16] : memref<1x32xf32, #tpu.memory_space<vmem>>, vector<1x32xf32>
    %32 = vector.shape_cast %31 : vector<1x32xf32> to vector<1x1x32xf32>
    %33 = vector.broadcast %32 : vector<1x1x32xf32> to vector<4x8x32xf32>
    %34 = arith.addf %30, %33 : vector<4x8x32xf32>
    %35 = vector.extract_strided_slice %34 {offsets = [0, 0, 0], sizes = [1, 8, 32], strides = [1, 1, 1]} : vector<4x8x32xf32> to vector<1x8x32xf32>
    %36 = vector.shape_cast %35 : vector<1x8x32xf32> to vector<8x32xf32>
    %37 = vector.extract_strided_slice %34 {offsets = [1, 0, 0], sizes = [1, 8, 32], strides = [1, 1, 1]} : vector<4x8x32xf32> to vector<1x8x32xf32>
    %38 = vector.shape_cast %37 : vector<1x8x32xf32> to vector<8x32xf32>
    %39 = vector.extract_strided_slice %34 {offsets = [2, 0, 0], sizes = [1, 8, 32], strides = [1, 1, 1]} : vector<4x8x32xf32> to vector<1x8x32xf32>
    %40 = vector.shape_cast %39 : vector<1x8x32xf32> to vector<8x32xf32>
    %41 = vector.extract_strided_slice %34 {offsets = [3, 0, 0], sizes = [1, 8, 32], strides = [1, 1, 1]} : vector<4x8x32xf32> to vector<1x8x32xf32>
    %42 = vector.shape_cast %41 : vector<1x8x32xf32> to vector<8x32xf32>
    %43 = tpu.concatenate %36, %38, %40, %42 in 0 : vector<8x32xf32>, vector<8x32xf32>, vector<8x32xf32>, vector<8x32xf32> -> vector<32x32xf32>
    %44 = arith.truncf %43 : vector<32x32xf32> to vector<32x32xbf16>
    %c0_17 = arith.constant 0 : index
    %c0_18 = arith.constant 0 : index
    %45 = vector.load %arg5[%c0_17, %c0_18] : memref<32x32xbf16, #tpu.memory_space<vmem>>, vector<32x32xbf16>
    %cst_19 = arith.constant dense<0.000000e+00> : vector<32x32xf32>
    %46 = tpu.matmul %44, %45, %cst_19 {dimension_numbers = #tpu.dot_dimension_numbers<[1], [0], [0], [1], [0, 0, 1, 1], [], []>} : vector<32x32xbf16>, vector<32x32xbf16>, vector<32x32xf32> -> vector<32x32xf32>
    %c0_20 = arith.constant 0 : index
    %c0_21 = arith.constant 0 : index
    %47 = vector.load %arg6[%c0_20, %c0_21] : memref<1x32xf32, #tpu.memory_space<vmem>>, vector<1x32xf32>
    %48 = vector.broadcast %47 : vector<1x32xf32> to vector<32x32xf32>
    %49 = arith.addf %46, %48 : vector<32x32xf32>
    %50 = vector.extract_strided_slice %49 {offsets = [0, 0], sizes = [8, 32], strides = [1, 1]} : vector<32x32xf32> to vector<8x32xf32>
    %51 = vector.extract_strided_slice %49 {offsets = [8, 0], sizes = [8, 32], strides = [1, 1]} : vector<32x32xf32> to vector<8x32xf32>
    %52 = vector.extract_strided_slice %49 {offsets = [16, 0], sizes = [8, 32], strides = [1, 1]} : vector<32x32xf32> to vector<8x32xf32>
    %53 = vector.extract_strided_slice %49 {offsets = [24, 0], sizes = [8, 32], strides = [1, 1]} : vector<32x32xf32> to vector<8x32xf32>
    %54 = vector.shape_cast %50 : vector<8x32xf32> to vector<1x8x32xf32>
    %55 = vector.shape_cast %51 : vector<8x32xf32> to vector<1x8x32xf32>
    %56 = vector.shape_cast %52 : vector<8x32xf32> to vector<1x8x32xf32>
    %57 = vector.shape_cast %53 : vector<8x32xf32> to vector<1x8x32xf32>
    %58 = tpu.concatenate %54, %55, %56, %57 in 0 : vector<1x8x32xf32>, vector<1x8x32xf32>, vector<1x8x32xf32>, vector<1x8x32xf32> -> vector<4x8x32xf32>
    %59 = arith.truncf %43 : vector<32x32xf32> to vector<32x32xbf16>
    %c0_22 = arith.constant 0 : index
    %c0_23 = arith.constant 0 : index
    %60 = vector.load %arg7[%c0_22, %c0_23] : memref<32x32xbf16, #tpu.memory_space<vmem>>, vector<32x32xbf16>
    %cst_24 = arith.constant dense<0.000000e+00> : vector<32x32xf32>
    %61 = tpu.matmul %59, %60, %cst_24 {dimension_numbers = #tpu.dot_dimension_numbers<[1], [0], [0], [1], [0, 0, 1, 1], [], []>} : vector<32x32xbf16>, vector<32x32xbf16>, vector<32x32xf32> -> vector<32x32xf32>
    %c0_25 = arith.constant 0 : index
    %c0_26 = arith.constant 0 : index
    %62 = vector.load %arg8[%c0_25, %c0_26] : memref<1x32xf32, #tpu.memory_space<vmem>>, vector<1x32xf32>
    %63 = vector.broadcast %62 : vector<1x32xf32> to vector<32x32xf32>
    %64 = arith.addf %61, %63 : vector<32x32xf32>
    %65 = vector.extract_strided_slice %64 {offsets = [0, 0], sizes = [8, 32], strides = [1, 1]} : vector<32x32xf32> to vector<8x32xf32>
    %66 = vector.extract_strided_slice %64 {offsets = [8, 0], sizes = [8, 32], strides = [1, 1]} : vector<32x32xf32> to vector<8x32xf32>
    %67 = vector.extract_strided_slice %64 {offsets = [16, 0], sizes = [8, 32], strides = [1, 1]} : vector<32x32xf32> to vector<8x32xf32>
    %68 = vector.extract_strided_slice %64 {offsets = [24, 0], sizes = [8, 32], strides = [1, 1]} : vector<32x32xf32> to vector<8x32xf32>
    %69 = vector.shape_cast %65 : vector<8x32xf32> to vector<1x8x32xf32>
    %70 = vector.shape_cast %66 : vector<8x32xf32> to vector<1x8x32xf32>
    %71 = vector.shape_cast %67 : vector<8x32xf32> to vector<1x8x32xf32>
    %72 = vector.shape_cast %68 : vector<8x32xf32> to vector<1x8x32xf32>
    %73 = tpu.concatenate %69, %70, %71, %72 in 0 : vector<1x8x32xf32>, vector<1x8x32xf32>, vector<1x8x32xf32>, vector<1x8x32xf32> -> vector<4x8x32xf32>
    %74 = arith.truncf %2 : vector<4x32xf32> to vector<4x32xbf16>
    %c0_27 = arith.constant 0 : index
    %c0_28 = arith.constant 0 : index
    %75 = vector.load %arg3[%c0_27, %c0_28] : memref<32x32xbf16, #tpu.memory_space<vmem>>, vector<32x32xbf16>
    %cst_29 = arith.constant dense<0.000000e+00> : vector<4x32xf32>
    %76 = tpu.matmul %74, %75, %cst_29 {dimension_numbers = #tpu.dot_dimension_numbers<[1], [0], [0], [1], [0, 0, 1, 1], [], []>} : vector<4x32xbf16>, vector<32x32xbf16>, vector<4x32xf32> -> vector<4x32xf32>
    %c0_30 = arith.constant 0 : index
    %c0_31 = arith.constant 0 : index
    %77 = vector.load %arg4[%c0_30, %c0_31] : memref<1x32xf32, #tpu.memory_space<vmem>>, vector<1x32xf32>
    %78 = vector.broadcast %77 : vector<1x32xf32> to vector<4x32xf32>
    %79 = arith.addf %76, %78 : vector<4x32xf32>
    %cst_32 = arith.constant 0.176776692 : f32
    %80 = vector.broadcast %cst_32 : f32 to vector<4x32xf32>
    %81 = arith.mulf %79, %80 : vector<4x32xf32>
    %82 = vector.shape_cast %81 : vector<4x32xf32> to vector<1x4x32xf32>
    %83 = vector.shape_cast %82 : vector<1x4x32xf32> to vector<1x4x32xf32>
    %84 = vector.broadcast %83 : vector<1x4x32xf32> to vector<4x4x32xf32>
    %85 = vector.shape_cast %2 : vector<4x32xf32> to vector<1x4x32xf32>
    %86 = vector.extract_strided_slice %84 {offsets = [0, 0, 0], sizes = [4, 4, 8], strides = [1, 1, 1]} : vector<4x4x32xf32> to vector<4x4x8xf32>
    %87 = vector.extract_strided_slice %84 {offsets = [0, 0, 8], sizes = [4, 4, 8], strides = [1, 1, 1]} : vector<4x4x32xf32> to vector<4x4x8xf32>
    %88 = vector.extract_strided_slice %84 {offsets = [0, 0, 16], sizes = [4, 4, 8], strides = [1, 1, 1]} : vector<4x4x32xf32> to vector<4x4x8xf32>
    %89 = vector.extract_strided_slice %84 {offsets = [0, 0, 24], sizes = [4, 4, 8], strides = [1, 1, 1]} : vector<4x4x32xf32> to vector<4x4x8xf32>
    %90 = tpu.concatenate %86, %87, %88, %89 in 0 : vector<4x4x8xf32>, vector<4x4x8xf32>, vector<4x4x8xf32>, vector<4x4x8xf32> -> vector<16x4x8xf32>
    %91 = arith.truncf %90 : vector<16x4x8xf32> to vector<16x4x8xbf16>
    %92 = vector.extract_strided_slice %58 {offsets = [0, 0, 0], sizes = [4, 8, 8], strides = [1, 1, 1]} : vector<4x8x32xf32> to vector<4x8x8xf32>
    %93 = vector.extract_strided_slice %58 {offsets = [0, 0, 8], sizes = [4, 8, 8], strides = [1, 1, 1]} : vector<4x8x32xf32> to vector<4x8x8xf32>
    %94 = vector.extract_strided_slice %58 {offsets = [0, 0, 16], sizes = [4, 8, 8], strides = [1, 1, 1]} : vector<4x8x32xf32> to vector<4x8x8xf32>
    %95 = vector.extract_strided_slice %58 {offsets = [0, 0, 24], sizes = [4, 8, 8], strides = [1, 1, 1]} : vector<4x8x32xf32> to vector<4x8x8xf32>
    %96 = tpu.concatenate %92, %93, %94, %95 in 0 : vector<4x8x8xf32>, vector<4x8x8xf32>, vector<4x8x8xf32>, vector<4x8x8xf32> -> vector<16x8x8xf32>
    %97 = arith.truncf %96 : vector<16x8x8xf32> to vector<16x8x8xbf16>
    %98 = vector.extract_strided_slice %73 {offsets = [0, 0, 0], sizes = [4, 8, 8], strides = [1, 1, 1]} : vector<4x8x32xf32> to vector<4x8x8xf32>
    %99 = vector.extract_strided_slice %73 {offsets = [0, 0, 8], sizes = [4, 8, 8], strides = [1, 1, 1]} : vector<4x8x32xf32> to vector<4x8x8xf32>
    %100 = vector.extract_strided_slice %73 {offsets = [0, 0, 16], sizes = [4, 8, 8], strides = [1, 1, 1]} : vector<4x8x32xf32> to vector<4x8x8xf32>
    %101 = vector.extract_strided_slice %73 {offsets = [0, 0, 24], sizes = [4, 8, 8], strides = [1, 1, 1]} : vector<4x8x32xf32> to vector<4x8x8xf32>
    %102 = tpu.concatenate %98, %99, %100, %101 in 0 : vector<4x8x8xf32>, vector<4x8x8xf32>, vector<4x8x8xf32>, vector<4x8x8xf32> -> vector<16x8x8xf32>
    %103 = arith.truncf %102 : vector<16x8x8xf32> to vector<16x8x8xbf16>
    "tpu.trace_start"() <{level = 10 : i32, message = "bqd,bkd->bqk"}> : () -> ()
    %cst_33 = arith.constant dense<0.000000e+00> : vector<16x4x8xf32>
    %104 = tpu.matmul %91, %97, %cst_33 {dimension_numbers = #tpu.dot_dimension_numbers<[2], [2], [1], [1], [0, 0, 0, 1, 1, 1], [0], [0]>} : vector<16x4x8xbf16>, vector<16x8x8xbf16>, vector<16x4x8xf32> -> vector<16x4x8xf32>
    "tpu.trace_stop"() : () -> ()
    %cst_34 = arith.constant dense<0xFF800000> : vector<16x4xf32>
    %105 = vector.multi_reduction <maximumf>, %104, %cst_34 [2] : vector<16x4x8xf32> to vector<16x4xf32>
    %106 = vector.shape_cast %105 : vector<16x4xf32> to vector<16x4x1xf32>
    %107 = vector.broadcast %106 : vector<16x4x1xf32> to vector<16x4x8xf32>
    %108 = arith.subf %104, %107 : vector<16x4x8xf32>
    %109 = math.exp %108 : vector<16x4x8xf32>
    %cst_35 = arith.constant dense<0.000000e+00> : vector<16x4xf32>
    %110 = vector.multi_reduction <add>, %109, %cst_35 [2] : vector<16x4x8xf32> to vector<16x4xf32>
    %111 = vector.shape_cast %110 : vector<16x4xf32> to vector<16x4x1xf32>
    %112 = tpu.reciprocal %111 {approx = true} : vector<16x4x1xf32> -> vector<16x4x1xf32>
    %113 = vector.broadcast %112 : vector<16x4x1xf32> to vector<16x4x8xf32>
    %114 = arith.mulf %109, %113 : vector<16x4x8xf32>
    %115 = arith.truncf %114 : vector<16x4x8xf32> to vector<16x4x8xbf16>
    "tpu.trace_start"() <{level = 10 : i32, message = "bqk,bkd->bqd"}> : () -> ()
    %cst_36 = arith.constant dense<0.000000e+00> : vector<16x4x8xf32>
    %116 = tpu.matmul %115, %103, %cst_36 {dimension_numbers = #tpu.dot_dimension_numbers<[2], [1], [1], [2], [0, 0, 0, 1, 1, 2], [0], [0]>} : vector<16x4x8xbf16>, vector<16x8x8xbf16>, vector<16x4x8xf32> -> vector<16x4x8xf32>
    "tpu.trace_stop"() : () -> ()
    %117 = vector.extract_strided_slice %116 {offsets = [0, 0, 0], sizes = [4, 4, 8], strides = [1, 1, 1]} : vector<16x4x8xf32> to vector<4x4x8xf32>
    %118 = vector.extract_strided_slice %116 {offsets = [4, 0, 0], sizes = [4, 4, 8], strides = [1, 1, 1]} : vector<16x4x8xf32> to vector<4x4x8xf32>
    %119 = vector.extract_strided_slice %116 {offsets = [8, 0, 0], sizes = [4, 4, 8], strides = [1, 1, 1]} : vector<16x4x8xf32> to vector<4x4x8xf32>
    %120 = vector.extract_strided_slice %116 {offsets = [12, 0, 0], sizes = [4, 4, 8], strides = [1, 1, 1]} : vector<16x4x8xf32> to vector<4x4x8xf32>
    %121 = tpu.concatenate %117, %118, %119, %120 in 2 : vector<4x4x8xf32>, vector<4x4x8xf32>, vector<4x4x8xf32>, vector<4x4x8xf32> -> vector<4x4x32xf32>
    %122 = vector.broadcast %85 : vector<1x4x32xf32> to vector<4x4x32xf32>
    %123 = arith.addf %122, %121 : vector<4x4x32xf32>
    %cst_37 = arith.constant dense<0.000000e+00> : vector<4x4xf32>
    %124 = vector.multi_reduction <add>, %123, %cst_37 [2] : vector<4x4x32xf32> to vector<4x4xf32>
    %125 = vector.shape_cast %124 : vector<4x4xf32> to vector<4x4x1xf32>
    %cst_38 = arith.constant 3.200000e+01 : f32
    %126 = vector.broadcast %cst_38 : f32 to vector<4x4x1xf32>
    %127 = arith.divf %125, %126 : vector<4x4x1xf32>
    %cst_39 = arith.constant dense<0.000000e+00> : vector<4x1xf32>
    %128 = vector.multi_reduction <add>, %127, %cst_39 [1] : vector<4x4x1xf32> to vector<4x1xf32>
    %129 = vector.shape_cast %128 : vector<4x1xf32> to vector<4x1x1xf32>
    %cst_40 = arith.constant 4.000000e+00 : f32
    %130 = vector.broadcast %cst_40 : f32 to vector<4x1x1xf32>
    %131 = arith.divf %129, %130 : vector<4x1x1xf32>
    %132 = vector.broadcast %131 : vector<4x1x1xf32> to vector<4x4x32xf32>
    %133 = arith.subf %123, %132 : vector<4x4x32xf32>
    %134 = arith.mulf %133, %133 : vector<4x4x32xf32>
    %cst_41 = arith.constant dense<0.000000e+00> : vector<4x4xf32>
    %135 = vector.multi_reduction <add>, %134, %cst_41 [2] : vector<4x4x32xf32> to vector<4x4xf32>
    %136 = vector.shape_cast %135 : vector<4x4xf32> to vector<4x4x1xf32>
    %cst_42 = arith.constant 3.200000e+01 : f32
    %137 = vector.broadcast %cst_42 : f32 to vector<4x4x1xf32>
    %138 = arith.divf %136, %137 : vector<4x4x1xf32>
    %cst_43 = arith.constant dense<0.000000e+00> : vector<4x1xf32>
    %139 = vector.multi_reduction <add>, %138, %cst_43 [1] : vector<4x4x1xf32> to vector<4x1xf32>
    %140 = vector.shape_cast %139 : vector<4x1xf32> to vector<4x1x1xf32>
    %cst_44 = arith.constant 4.000000e+00 : f32
    %141 = vector.broadcast %cst_44 : f32 to vector<4x1x1xf32>
    %142 = arith.divf %140, %141 : vector<4x1x1xf32>
    %cst_45 = arith.constant 9.99999974E-6 : f32
    %143 = vector.broadcast %cst_45 : f32 to vector<4x1x1xf32>
    %144 = arith.addf %142, %143 : vector<4x1x1xf32>
    %145 = math.rsqrt %144 : vector<4x1x1xf32>
    %146 = vector.broadcast %145 : vector<4x1x1xf32> to vector<4x4x32xf32>
    %147 = arith.mulf %133, %146 : vector<4x4x32xf32>
    %c0_46 = arith.constant 0 : index
    %c0_47 = arith.constant 0 : index
    %148 = vector.load %arg13[%c0_46, %c0_47] : memref<1x32xf32, #tpu.memory_space<vmem>>, vector<1x32xf32>
    %149 = vector.shape_cast %148 : vector<1x32xf32> to vector<1x1x32xf32>
    %150 = vector.broadcast %149 : vector<1x1x32xf32> to vector<4x4x32xf32>
    %151 = arith.mulf %147, %150 : vector<4x4x32xf32>
    %c0_48 = arith.constant 0 : index
    %c0_49 = arith.constant 0 : index
    %152 = vector.load %arg14[%c0_48, %c0_49] : memref<1x32xf32, #tpu.memory_space<vmem>>, vector<1x32xf32>
    %153 = vector.shape_cast %152 : vector<1x32xf32> to vector<1x1x32xf32>
    %154 = vector.broadcast %153 : vector<1x1x32xf32> to vector<4x4x32xf32>
    %155 = arith.addf %151, %154 : vector<4x4x32xf32>
    %156 = vector.extract_strided_slice %155 {offsets = [0, 0, 0], sizes = [1, 4, 32], strides = [1, 1, 1]} : vector<4x4x32xf32> to vector<1x4x32xf32>
    %157 = vector.shape_cast %156 : vector<1x4x32xf32> to vector<4x32xf32>
    %158 = vector.extract_strided_slice %155 {offsets = [1, 0, 0], sizes = [1, 4, 32], strides = [1, 1, 1]} : vector<4x4x32xf32> to vector<1x4x32xf32>
    %159 = vector.shape_cast %158 : vector<1x4x32xf32> to vector<4x32xf32>
    %160 = vector.extract_strided_slice %155 {offsets = [2, 0, 0], sizes = [1, 4, 32], strides = [1, 1, 1]} : vector<4x4x32xf32> to vector<1x4x32xf32>
    %161 = vector.shape_cast %160 : vector<1x4x32xf32> to vector<4x32xf32>
    %162 = vector.extract_strided_slice %155 {offsets = [3, 0, 0], sizes = [1, 4, 32], strides = [1, 1, 1]} : vector<4x4x32xf32> to vector<1x4x32xf32>
    %163 = vector.shape_cast %162 : vector<1x4x32xf32> to vector<4x32xf32>
    %164 = tpu.concatenate %157, %159, %161, %163 in 0 : vector<4x32xf32>, vector<4x32xf32>, vector<4x32xf32>, vector<4x32xf32> -> vector<16x32xf32>
    %165 = arith.truncf %164 : vector<16x32xf32> to vector<16x32xbf16>
    %c0_50 = arith.constant 0 : index
    %c0_51 = arith.constant 0 : index
    %166 = vector.load %arg9[%c0_50, %c0_51] : memref<32x32xbf16, #tpu.memory_space<vmem>>, vector<32x32xbf16>
    %cst_52 = arith.constant dense<0.000000e+00> : vector<16x32xf32>
    %167 = tpu.matmul %165, %166, %cst_52 {dimension_numbers = #tpu.dot_dimension_numbers<[1], [0], [0], [1], [0, 0, 1, 1], [], []>} : vector<16x32xbf16>, vector<32x32xbf16>, vector<16x32xf32> -> vector<16x32xf32>
    %c0_53 = arith.constant 0 : index
    %c0_54 = arith.constant 0 : index
    %168 = vector.load %arg10[%c0_53, %c0_54] : memref<1x32xf32, #tpu.memory_space<vmem>>, vector<1x32xf32>
    %169 = vector.broadcast %168 : vector<1x32xf32> to vector<16x32xf32>
    %170 = arith.addf %167, %169 : vector<16x32xf32>
    %cst_55 = arith.constant 0.000000e+00 : f32
    %171 = vector.broadcast %cst_55 : f32 to vector<16x32xf32>
    %172 = arith.maximumf %170, %171 : vector<16x32xf32>
    %173 = vector.extract_strided_slice %172 {offsets = [0, 0], sizes = [4, 32], strides = [1, 1]} : vector<16x32xf32> to vector<4x32xf32>
    %174 = vector.extract_strided_slice %172 {offsets = [4, 0], sizes = [4, 32], strides = [1, 1]} : vector<16x32xf32> to vector<4x32xf32>
    %175 = vector.extract_strided_slice %172 {offsets = [8, 0], sizes = [4, 32], strides = [1, 1]} : vector<16x32xf32> to vector<4x32xf32>
    %176 = vector.extract_strided_slice %172 {offsets = [12, 0], sizes = [4, 32], strides = [1, 1]} : vector<16x32xf32> to vector<4x32xf32>
    %177 = vector.shape_cast %173 : vector<4x32xf32> to vector<1x4x32xf32>
    %178 = vector.shape_cast %174 : vector<4x32xf32> to vector<1x4x32xf32>
    %179 = vector.shape_cast %175 : vector<4x32xf32> to vector<1x4x32xf32>
    %180 = vector.shape_cast %176 : vector<4x32xf32> to vector<1x4x32xf32>
    %181 = tpu.concatenate %177, %178, %179, %180 in 0 : vector<1x4x32xf32>, vector<1x4x32xf32>, vector<1x4x32xf32>, vector<1x4x32xf32> -> vector<4x4x32xf32>
    %182 = arith.addf %123, %181 : vector<4x4x32xf32>
    %c0_56 = arith.constant 0 : index
    %c0_57 = arith.constant 0 : index
    %183 = vector.load %arg23[%c0_56, %c0_57] : memref<1x32xf32, #tpu.memory_space<vmem>>, vector<1x32xf32>
    %184 = vector.shape_cast %183 : vector<1x32xf32> to vector<1x1x32xf32>
    %185 = vector.broadcast %184 : vector<1x1x32xf32> to vector<4x8x32xf32>
    %186 = arith.mulf %26, %185 : vector<4x8x32xf32>
    %c0_58 = arith.constant 0 : index
    %c0_59 = arith.constant 0 : index
    %187 = vector.load %arg24[%c0_58, %c0_59] : memref<1x32xf32, #tpu.memory_space<vmem>>, vector<1x32xf32>
    %188 = vector.shape_cast %187 : vector<1x32xf32> to vector<1x1x32xf32>
    %189 = vector.broadcast %188 : vector<1x1x32xf32> to vector<4x8x32xf32>
    %190 = arith.addf %186, %189 : vector<4x8x32xf32>
    %cst_60 = arith.constant dense<0.000000e+00> : vector<4x4xf32>
    %191 = vector.multi_reduction <add>, %182, %cst_60 [2] : vector<4x4x32xf32> to vector<4x4xf32>
    %192 = vector.shape_cast %191 : vector<4x4xf32> to vector<4x4x1xf32>
    %cst_61 = arith.constant 3.200000e+01 : f32
    %193 = vector.broadcast %cst_61 : f32 to vector<4x4x1xf32>
    %194 = arith.divf %192, %193 : vector<4x4x1xf32>
    %cst_62 = arith.constant dense<0.000000e+00> : vector<4x1xf32>
    %195 = vector.multi_reduction <add>, %194, %cst_62 [1] : vector<4x4x1xf32> to vector<4x1xf32>
    %196 = vector.shape_cast %195 : vector<4x1xf32> to vector<4x1x1xf32>
    %cst_63 = arith.constant 4.000000e+00 : f32
    %197 = vector.broadcast %cst_63 : f32 to vector<4x1x1xf32>
    %198 = arith.divf %196, %197 : vector<4x1x1xf32>
    %199 = vector.broadcast %198 : vector<4x1x1xf32> to vector<4x4x32xf32>
    %200 = arith.subf %182, %199 : vector<4x4x32xf32>
    %201 = arith.mulf %200, %200 : vector<4x4x32xf32>
    %cst_64 = arith.constant dense<0.000000e+00> : vector<4x4xf32>
    %202 = vector.multi_reduction <add>, %201, %cst_64 [2] : vector<4x4x32xf32> to vector<4x4xf32>
    %203 = vector.shape_cast %202 : vector<4x4xf32> to vector<4x4x1xf32>
    %cst_65 = arith.constant 3.200000e+01 : f32
    %204 = vector.broadcast %cst_65 : f32 to vector<4x4x1xf32>
    %205 = arith.divf %203, %204 : vector<4x4x1xf32>
    %cst_66 = arith.constant dense<0.000000e+00> : vector<4x1xf32>
    %206 = vector.multi_reduction <add>, %205, %cst_66 [1] : vector<4x4x1xf32> to vector<4x1xf32>
    %207 = vector.shape_cast %206 : vector<4x1xf32> to vector<4x1x1xf32>
    %cst_67 = arith.constant 4.000000e+00 : f32
    %208 = vector.broadcast %cst_67 : f32 to vector<4x1x1xf32>
    %209 = arith.divf %207, %208 : vector<4x1x1xf32>
    %cst_68 = arith.constant 9.99999974E-6 : f32
    %210 = vector.broadcast %cst_68 : f32 to vector<4x1x1xf32>
    %211 = arith.addf %209, %210 : vector<4x1x1xf32>
    %212 = math.rsqrt %211 : vector<4x1x1xf32>
    %213 = vector.broadcast %212 : vector<4x1x1xf32> to vector<4x4x32xf32>
    %214 = arith.mulf %200, %213 : vector<4x4x32xf32>
    %c0_69 = arith.constant 0 : index
    %c0_70 = arith.constant 0 : index
    %215 = vector.load %arg25[%c0_69, %c0_70] : memref<1x32xf32, #tpu.memory_space<vmem>>, vector<1x32xf32>
    %216 = vector.shape_cast %215 : vector<1x32xf32> to vector<1x1x32xf32>
    %217 = vector.broadcast %216 : vector<1x1x32xf32> to vector<4x4x32xf32>
    %218 = arith.mulf %214, %217 : vector<4x4x32xf32>
    %c0_71 = arith.constant 0 : index
    %c0_72 = arith.constant 0 : index
    %219 = vector.load %arg26[%c0_71, %c0_72] : memref<1x32xf32, #tpu.memory_space<vmem>>, vector<1x32xf32>
    %220 = vector.shape_cast %219 : vector<1x32xf32> to vector<1x1x32xf32>
    %221 = vector.broadcast %220 : vector<1x1x32xf32> to vector<4x4x32xf32>
    %222 = arith.addf %218, %221 : vector<4x4x32xf32>
    %223 = vector.extract_strided_slice %222 {offsets = [0, 0, 0], sizes = [1, 4, 32], strides = [1, 1, 1]} : vector<4x4x32xf32> to vector<1x4x32xf32>
    %224 = vector.shape_cast %223 : vector<1x4x32xf32> to vector<4x32xf32>
    %225 = vector.extract_strided_slice %222 {offsets = [1, 0, 0], sizes = [1, 4, 32], strides = [1, 1, 1]} : vector<4x4x32xf32> to vector<1x4x32xf32>
    %226 = vector.shape_cast %225 : vector<1x4x32xf32> to vector<4x32xf32>
    %227 = vector.extract_strided_slice %222 {offsets = [2, 0, 0], sizes = [1, 4, 32], strides = [1, 1, 1]} : vector<4x4x32xf32> to vector<1x4x32xf32>
    %228 = vector.shape_cast %227 : vector<1x4x32xf32> to vector<4x32xf32>
    %229 = vector.extract_strided_slice %222 {offsets = [3, 0, 0], sizes = [1, 4, 32], strides = [1, 1, 1]} : vector<4x4x32xf32> to vector<1x4x32xf32>
    %230 = vector.shape_cast %229 : vector<1x4x32xf32> to vector<4x32xf32>
    %231 = tpu.concatenate %224, %226, %228, %230 in 0 : vector<4x32xf32>, vector<4x32xf32>, vector<4x32xf32>, vector<4x32xf32> -> vector<16x32xf32>
    %232 = vector.extract_strided_slice %190 {offsets = [0, 0, 0], sizes = [1, 8, 32], strides = [1, 1, 1]} : vector<4x8x32xf32> to vector<1x8x32xf32>
    %233 = vector.shape_cast %232 : vector<1x8x32xf32> to vector<8x32xf32>
    %234 = vector.extract_strided_slice %190 {offsets = [1, 0, 0], sizes = [1, 8, 32], strides = [1, 1, 1]} : vector<4x8x32xf32> to vector<1x8x32xf32>
    %235 = vector.shape_cast %234 : vector<1x8x32xf32> to vector<8x32xf32>
    %236 = vector.extract_strided_slice %190 {offsets = [2, 0, 0], sizes = [1, 8, 32], strides = [1, 1, 1]} : vector<4x8x32xf32> to vector<1x8x32xf32>
    %237 = vector.shape_cast %236 : vector<1x8x32xf32> to vector<8x32xf32>
    %238 = vector.extract_strided_slice %190 {offsets = [3, 0, 0], sizes = [1, 8, 32], strides = [1, 1, 1]} : vector<4x8x32xf32> to vector<1x8x32xf32>
    %239 = vector.shape_cast %238 : vector<1x8x32xf32> to vector<8x32xf32>
    %240 = tpu.concatenate %233, %235, %237, %239 in 0 : vector<8x32xf32>, vector<8x32xf32>, vector<8x32xf32>, vector<8x32xf32> -> vector<32x32xf32>
    %241 = arith.truncf %240 : vector<32x32xf32> to vector<32x32xbf16>
    %c0_73 = arith.constant 0 : index
    %c0_74 = arith.constant 0 : index
    %242 = vector.load %arg15[%c0_73, %c0_74] : memref<32x32xbf16, #tpu.memory_space<vmem>>, vector<32x32xbf16>
    %cst_75 = arith.constant dense<0.000000e+00> : vector<32x32xf32>
    %243 = tpu.matmul %241, %242, %cst_75 {dimension_numbers = #tpu.dot_dimension_numbers<[1], [0], [0], [1], [0, 0, 1, 1], [], []>} : vector<32x32xbf16>, vector<32x32xbf16>, vector<32x32xf32> -> vector<32x32xf32>
    %c0_76 = arith.constant 0 : index
    %c0_77 = arith.constant 0 : index
    %244 = vector.load %arg16[%c0_76, %c0_77] : memref<1x32xf32, #tpu.memory_space<vmem>>, vector<1x32xf32>
    %245 = vector.broadcast %244 : vector<1x32xf32> to vector<32x32xf32>
    %246 = arith.addf %243, %245 : vector<32x32xf32>
    %cst_78 = arith.constant 0.176776692 : f32
    %247 = vector.broadcast %cst_78 : f32 to vector<32x32xf32>
    %248 = arith.mulf %246, %247 : vector<32x32xf32>
    %249 = vector.extract_strided_slice %248 {offsets = [0, 0], sizes = [8, 32], strides = [1, 1]} : vector<32x32xf32> to vector<8x32xf32>
    %250 = vector.extract_strided_slice %248 {offsets = [8, 0], sizes = [8, 32], strides = [1, 1]} : vector<32x32xf32> to vector<8x32xf32>
    %251 = vector.extract_strided_slice %248 {offsets = [16, 0], sizes = [8, 32], strides = [1, 1]} : vector<32x32xf32> to vector<8x32xf32>
    %252 = vector.extract_strided_slice %248 {offsets = [24, 0], sizes = [8, 32], strides = [1, 1]} : vector<32x32xf32> to vector<8x32xf32>
    %253 = vector.shape_cast %249 : vector<8x32xf32> to vector<1x8x32xf32>
    %254 = vector.shape_cast %250 : vector<8x32xf32> to vector<1x8x32xf32>
    %255 = vector.shape_cast %251 : vector<8x32xf32> to vector<1x8x32xf32>
    %256 = vector.shape_cast %252 : vector<8x32xf32> to vector<1x8x32xf32>
    %257 = tpu.concatenate %253, %254, %255, %256 in 0 : vector<1x8x32xf32>, vector<1x8x32xf32>, vector<1x8x32xf32>, vector<1x8x32xf32> -> vector<4x8x32xf32>
    %258 = arith.truncf %231 : vector<16x32xf32> to vector<16x32xbf16>
    %c0_79 = arith.constant 0 : index
    %c0_80 = arith.constant 0 : index
    %259 = vector.load %arg17[%c0_79, %c0_80] : memref<32x32xbf16, #tpu.memory_space<vmem>>, vector<32x32xbf16>
    %cst_81 = arith.constant dense<0.000000e+00> : vector<16x32xf32>
    %260 = tpu.matmul %258, %259, %cst_81 {dimension_numbers = #tpu.dot_dimension_numbers<[1], [0], [0], [1], [0, 0, 1, 1], [], []>} : vector<16x32xbf16>, vector<32x32xbf16>, vector<16x32xf32> -> vector<16x32xf32>
    %c0_82 = arith.constant 0 : index
    %c0_83 = arith.constant 0 : index
    %261 = vector.load %arg18[%c0_82, %c0_83] : memref<1x32xf32, #tpu.memory_space<vmem>>, vector<1x32xf32>
    %262 = vector.broadcast %261 : vector<1x32xf32> to vector<16x32xf32>
    %263 = arith.addf %260, %262 : vector<16x32xf32>
    %264 = vector.extract_strided_slice %263 {offsets = [0, 0], sizes = [4, 32], strides = [1, 1]} : vector<16x32xf32> to vector<4x32xf32>
    %265 = vector.extract_strided_slice %263 {offsets = [4, 0], sizes = [4, 32], strides = [1, 1]} : vector<16x32xf32> to vector<4x32xf32>
    %266 = vector.extract_strided_slice %263 {offsets = [8, 0], sizes = [4, 32], strides = [1, 1]} : vector<16x32xf32> to vector<4x32xf32>
    %267 = vector.extract_strided_slice %263 {offsets = [12, 0], sizes = [4, 32], strides = [1, 1]} : vector<16x32xf32> to vector<4x32xf32>
    %268 = vector.shape_cast %264 : vector<4x32xf32> to vector<1x4x32xf32>
    %269 = vector.shape_cast %265 : vector<4x32xf32> to vector<1x4x32xf32>
    %270 = vector.shape_cast %266 : vector<4x32xf32> to vector<1x4x32xf32>
    %271 = vector.shape_cast %267 : vector<4x32xf32> to vector<1x4x32xf32>
    %272 = tpu.concatenate %268, %269, %270, %271 in 0 : vector<1x4x32xf32>, vector<1x4x32xf32>, vector<1x4x32xf32>, vector<1x4x32xf32> -> vector<4x4x32xf32>
    %273 = arith.truncf %231 : vector<16x32xf32> to vector<16x32xbf16>
    %c0_84 = arith.constant 0 : index
    %c0_85 = arith.constant 0 : index
    %274 = vector.load %arg19[%c0_84, %c0_85] : memref<32x32xbf16, #tpu.memory_space<vmem>>, vector<32x32xbf16>
    %cst_86 = arith.constant dense<0.000000e+00> : vector<16x32xf32>
    %275 = tpu.matmul %273, %274, %cst_86 {dimension_numbers = #tpu.dot_dimension_numbers<[1], [0], [0], [1], [0, 0, 1, 1], [], []>} : vector<16x32xbf16>, vector<32x32xbf16>, vector<16x32xf32> -> vector<16x32xf32>
    %c0_87 = arith.constant 0 : index
    %c0_88 = arith.constant 0 : index
    %276 = vector.load %arg20[%c0_87, %c0_88] : memref<1x32xf32, #tpu.memory_space<vmem>>, vector<1x32xf32>
    %277 = vector.broadcast %276 : vector<1x32xf32> to vector<16x32xf32>
    %278 = arith.addf %275, %277 : vector<16x32xf32>
    %279 = vector.extract_strided_slice %278 {offsets = [0, 0], sizes = [4, 32], strides = [1, 1]} : vector<16x32xf32> to vector<4x32xf32>
    %280 = vector.extract_strided_slice %278 {offsets = [4, 0], sizes = [4, 32], strides = [1, 1]} : vector<16x32xf32> to vector<4x32xf32>
    %281 = vector.extract_strided_slice %278 {offsets = [8, 0], sizes = [4, 32], strides = [1, 1]} : vector<16x32xf32> to vector<4x32xf32>
    %282 = vector.extract_strided_slice %278 {offsets = [12, 0], sizes = [4, 32], strides = [1, 1]} : vector<16x32xf32> to vector<4x32xf32>
    %283 = vector.shape_cast %279 : vector<4x32xf32> to vector<1x4x32xf32>
    %284 = vector.shape_cast %280 : vector<4x32xf32> to vector<1x4x32xf32>
    %285 = vector.shape_cast %281 : vector<4x32xf32> to vector<1x4x32xf32>
    %286 = vector.shape_cast %282 : vector<4x32xf32> to vector<1x4x32xf32>
    %287 = tpu.concatenate %283, %284, %285, %286 in 0 : vector<1x4x32xf32>, vector<1x4x32xf32>, vector<1x4x32xf32>, vector<1x4x32xf32> -> vector<4x4x32xf32>
    %288 = vector.extract_strided_slice %257 {offsets = [0, 0, 0], sizes = [4, 8, 8], strides = [1, 1, 1]} : vector<4x8x32xf32> to vector<4x8x8xf32>
    %289 = vector.extract_strided_slice %257 {offsets = [0, 0, 8], sizes = [4, 8, 8], strides = [1, 1, 1]} : vector<4x8x32xf32> to vector<4x8x8xf32>
    %290 = vector.extract_strided_slice %257 {offsets = [0, 0, 16], sizes = [4, 8, 8], strides = [1, 1, 1]} : vector<4x8x32xf32> to vector<4x8x8xf32>
    %291 = vector.extract_strided_slice %257 {offsets = [0, 0, 24], sizes = [4, 8, 8], strides = [1, 1, 1]} : vector<4x8x32xf32> to vector<4x8x8xf32>
    %292 = tpu.concatenate %288, %289, %290, %291 in 0 : vector<4x8x8xf32>, vector<4x8x8xf32>, vector<4x8x8xf32>, vector<4x8x8xf32> -> vector<16x8x8xf32>
    %293 = arith.truncf %292 : vector<16x8x8xf32> to vector<16x8x8xbf16>
    %294 = vector.extract_strided_slice %272 {offsets = [0, 0, 0], sizes = [4, 4, 8], strides = [1, 1, 1]} : vector<4x4x32xf32> to vector<4x4x8xf32>
    %295 = vector.extract_strided_slice %272 {offsets = [0, 0, 8], sizes = [4, 4, 8], strides = [1, 1, 1]} : vector<4x4x32xf32> to vector<4x4x8xf32>
    %296 = vector.extract_strided_slice %272 {offsets = [0, 0, 16], sizes = [4, 4, 8], strides = [1, 1, 1]} : vector<4x4x32xf32> to vector<4x4x8xf32>
    %297 = vector.extract_strided_slice %272 {offsets = [0, 0, 24], sizes = [4, 4, 8], strides = [1, 1, 1]} : vector<4x4x32xf32> to vector<4x4x8xf32>
    %298 = tpu.concatenate %294, %295, %296, %297 in 0 : vector<4x4x8xf32>, vector<4x4x8xf32>, vector<4x4x8xf32>, vector<4x4x8xf32> -> vector<16x4x8xf32>
    %299 = arith.truncf %298 : vector<16x4x8xf32> to vector<16x4x8xbf16>
    %300 = vector.extract_strided_slice %287 {offsets = [0, 0, 0], sizes = [4, 4, 8], strides = [1, 1, 1]} : vector<4x4x32xf32> to vector<4x4x8xf32>
    %301 = vector.extract_strided_slice %287 {offsets = [0, 0, 8], sizes = [4, 4, 8], strides = [1, 1, 1]} : vector<4x4x32xf32> to vector<4x4x8xf32>
    %302 = vector.extract_strided_slice %287 {offsets = [0, 0, 16], sizes = [4, 4, 8], strides = [1, 1, 1]} : vector<4x4x32xf32> to vector<4x4x8xf32>
    %303 = vector.extract_strided_slice %287 {offsets = [0, 0, 24], sizes = [4, 4, 8], strides = [1, 1, 1]} : vector<4x4x32xf32> to vector<4x4x8xf32>
    %304 = tpu.concatenate %300, %301, %302, %303 in 0 : vector<4x4x8xf32>, vector<4x4x8xf32>, vector<4x4x8xf32>, vector<4x4x8xf32> -> vector<16x4x8xf32>
    %305 = arith.truncf %304 : vector<16x4x8xf32> to vector<16x4x8xbf16>
    "tpu.trace_start"() <{level = 10 : i32, message = "bqd,bkd->bqk"}> : () -> ()
    %cst_89 = arith.constant dense<0.000000e+00> : vector<16x8x4xf32>
    %306 = tpu.matmul %293, %299, %cst_89 {dimension_numbers = #tpu.dot_dimension_numbers<[2], [2], [1], [1], [0, 0, 0, 1, 1, 1], [0], [0]>} : vector<16x8x8xbf16>, vector<16x4x8xbf16>, vector<16x8x4xf32> -> vector<16x8x4xf32>
    "tpu.trace_stop"() : () -> ()
    %cst_90 = arith.constant dense<0xFF800000> : vector<16x8xf32>
    %307 = vector.multi_reduction <maximumf>, %306, %cst_90 [2] : vector<16x8x4xf32> to vector<16x8xf32>
    %308 = vector.shape_cast %307 : vector<16x8xf32> to vector<16x8x1xf32>
    %309 = vector.broadcast %308 : vector<16x8x1xf32> to vector<16x8x4xf32>
    %310 = arith.subf %306, %309 : vector<16x8x4xf32>
    %311 = math.exp %310 : vector<16x8x4xf32>
    %cst_91 = arith.constant dense<0.000000e+00> : vector<16x8xf32>
    %312 = vector.multi_reduction <add>, %311, %cst_91 [2] : vector<16x8x4xf32> to vector<16x8xf32>
    %313 = vector.shape_cast %312 : vector<16x8xf32> to vector<16x8x1xf32>
    %314 = tpu.reciprocal %313 {approx = true} : vector<16x8x1xf32> -> vector<16x8x1xf32>
    %315 = vector.broadcast %314 : vector<16x8x1xf32> to vector<16x8x4xf32>
    %316 = arith.mulf %311, %315 : vector<16x8x4xf32>
    %317 = arith.truncf %316 : vector<16x8x4xf32> to vector<16x8x4xbf16>
    "tpu.trace_start"() <{level = 10 : i32, message = "bqk,bkd->bqd"}> : () -> ()
    %cst_92 = arith.constant dense<0.000000e+00> : vector<16x8x8xf32>
    %318 = tpu.matmul %317, %305, %cst_92 {dimension_numbers = #tpu.dot_dimension_numbers<[2], [1], [1], [2], [0, 0, 0, 1, 1, 2], [0], [0]>} : vector<16x8x4xbf16>, vector<16x4x8xbf16>, vector<16x8x8xf32> -> vector<16x8x8xf32>
    "tpu.trace_stop"() : () -> ()
    %319 = vector.extract_strided_slice %318 {offsets = [0, 0, 0], sizes = [4, 8, 8], strides = [1, 1, 1]} : vector<16x8x8xf32> to vector<4x8x8xf32>
    %320 = vector.extract_strided_slice %318 {offsets = [4, 0, 0], sizes = [4, 8, 8], strides = [1, 1, 1]} : vector<16x8x8xf32> to vector<4x8x8xf32>
    %321 = vector.extract_strided_slice %318 {offsets = [8, 0, 0], sizes = [4, 8, 8], strides = [1, 1, 1]} : vector<16x8x8xf32> to vector<4x8x8xf32>
    %322 = vector.extract_strided_slice %318 {offsets = [12, 0, 0], sizes = [4, 8, 8], strides = [1, 1, 1]} : vector<16x8x8xf32> to vector<4x8x8xf32>
    %323 = tpu.concatenate %319, %320, %321, %322 in 2 : vector<4x8x8xf32>, vector<4x8x8xf32>, vector<4x8x8xf32>, vector<4x8x8xf32> -> vector<4x8x32xf32>
    %324 = arith.addf %0, %323 : vector<4x8x32xf32>
    %cst_93 = arith.constant dense<0.000000e+00> : vector<4x8xf32>
    %325 = vector.multi_reduction <add>, %324, %cst_93 [2] : vector<4x8x32xf32> to vector<4x8xf32>
    %326 = vector.shape_cast %325 : vector<4x8xf32> to vector<4x8x1xf32>
    %cst_94 = arith.constant 3.200000e+01 : f32
    %327 = vector.broadcast %cst_94 : f32 to vector<4x8x1xf32>
    %328 = arith.divf %326, %327 : vector<4x8x1xf32>
    %cst_95 = arith.constant dense<0.000000e+00> : vector<4x1xf32>
    %329 = vector.multi_reduction <add>, %328, %cst_95 [1] : vector<4x8x1xf32> to vector<4x1xf32>
    %330 = vector.shape_cast %329 : vector<4x1xf32> to vector<4x1x1xf32>
    %cst_96 = arith.constant 8.000000e+00 : f32
    %331 = vector.broadcast %cst_96 : f32 to vector<4x1x1xf32>
    %332 = arith.divf %330, %331 : vector<4x1x1xf32>
    %333 = vector.broadcast %332 : vector<4x1x1xf32> to vector<4x8x32xf32>
    %334 = arith.subf %324, %333 : vector<4x8x32xf32>
    %335 = arith.mulf %334, %334 : vector<4x8x32xf32>
    %cst_97 = arith.constant dense<0.000000e+00> : vector<4x8xf32>
    %336 = vector.multi_reduction <add>, %335, %cst_97 [2] : vector<4x8x32xf32> to vector<4x8xf32>
    %337 = vector.shape_cast %336 : vector<4x8xf32> to vector<4x8x1xf32>
    %cst_98 = arith.constant 3.200000e+01 : f32
    %338 = vector.broadcast %cst_98 : f32 to vector<4x8x1xf32>
    %339 = arith.divf %337, %338 : vector<4x8x1xf32>
    %cst_99 = arith.constant dense<0.000000e+00> : vector<4x1xf32>
    %340 = vector.multi_reduction <add>, %339, %cst_99 [1] : vector<4x8x1xf32> to vector<4x1xf32>
    %341 = vector.shape_cast %340 : vector<4x1xf32> to vector<4x1x1xf32>
    %cst_100 = arith.constant 8.000000e+00 : f32
    %342 = vector.broadcast %cst_100 : f32 to vector<4x1x1xf32>
    %343 = arith.divf %341, %342 : vector<4x1x1xf32>
    %cst_101 = arith.constant 9.99999974E-6 : f32
    %344 = vector.broadcast %cst_101 : f32 to vector<4x1x1xf32>
    %345 = arith.addf %343, %344 : vector<4x1x1xf32>
    %346 = math.rsqrt %345 : vector<4x1x1xf32>
    %347 = vector.broadcast %346 : vector<4x1x1xf32> to vector<4x8x32xf32>
    %348 = arith.mulf %334, %347 : vector<4x8x32xf32>
    %c0_102 = arith.constant 0 : index
    %c0_103 = arith.constant 0 : index
    %349 = vector.load %arg27[%c0_102, %c0_103] : memref<1x32xf32, #tpu.memory_space<vmem>>, vector<1x32xf32>
    %350 = vector.shape_cast %349 : vector<1x32xf32> to vector<1x1x32xf32>
    %351 = vector.broadcast %350 : vector<1x1x32xf32> to vector<4x8x32xf32>
    %352 = arith.mulf %348, %351 : vector<4x8x32xf32>
    %c0_104 = arith.constant 0 : index
    %c0_105 = arith.constant 0 : index
    %353 = vector.load %arg28[%c0_104, %c0_105] : memref<1x32xf32, #tpu.memory_space<vmem>>, vector<1x32xf32>
    %354 = vector.shape_cast %353 : vector<1x32xf32> to vector<1x1x32xf32>
    %355 = vector.broadcast %354 : vector<1x1x32xf32> to vector<4x8x32xf32>
    %356 = arith.addf %352, %355 : vector<4x8x32xf32>
    %357 = vector.extract_strided_slice %356 {offsets = [0, 0, 0], sizes = [1, 8, 32], strides = [1, 1, 1]} : vector<4x8x32xf32> to vector<1x8x32xf32>
    %358 = vector.shape_cast %357 : vector<1x8x32xf32> to vector<8x32xf32>
    %359 = vector.extract_strided_slice %356 {offsets = [1, 0, 0], sizes = [1, 8, 32], strides = [1, 1, 1]} : vector<4x8x32xf32> to vector<1x8x32xf32>
    %360 = vector.shape_cast %359 : vector<1x8x32xf32> to vector<8x32xf32>
    %361 = vector.extract_strided_slice %356 {offsets = [2, 0, 0], sizes = [1, 8, 32], strides = [1, 1, 1]} : vector<4x8x32xf32> to vector<1x8x32xf32>
    %362 = vector.shape_cast %361 : vector<1x8x32xf32> to vector<8x32xf32>
    %363 = vector.extract_strided_slice %356 {offsets = [3, 0, 0], sizes = [1, 8, 32], strides = [1, 1, 1]} : vector<4x8x32xf32> to vector<1x8x32xf32>
    %364 = vector.shape_cast %363 : vector<1x8x32xf32> to vector<8x32xf32>
    %365 = tpu.concatenate %358, %360, %362, %364 in 0 : vector<8x32xf32>, vector<8x32xf32>, vector<8x32xf32>, vector<8x32xf32> -> vector<32x32xf32>
    %366 = arith.truncf %365 : vector<32x32xf32> to vector<32x32xbf16>
    %c0_106 = arith.constant 0 : index
    %c0_107 = arith.constant 0 : index
    %367 = vector.load %arg21[%c0_106, %c0_107] : memref<32x32xbf16, #tpu.memory_space<vmem>>, vector<32x32xbf16>
    %cst_108 = arith.constant dense<0.000000e+00> : vector<32x32xf32>
    %368 = tpu.matmul %366, %367, %cst_108 {dimension_numbers = #tpu.dot_dimension_numbers<[1], [0], [0], [1], [0, 0, 1, 1], [], []>} : vector<32x32xbf16>, vector<32x32xbf16>, vector<32x32xf32> -> vector<32x32xf32>
    %c0_109 = arith.constant 0 : index
    %c0_110 = arith.constant 0 : index
    %369 = vector.load %arg22[%c0_109, %c0_110] : memref<1x32xf32, #tpu.memory_space<vmem>>, vector<1x32xf32>
    %370 = vector.broadcast %369 : vector<1x32xf32> to vector<32x32xf32>
    %371 = arith.addf %368, %370 : vector<32x32xf32>
    %cst_111 = arith.constant 0.000000e+00 : f32
    %372 = vector.broadcast %cst_111 : f32 to vector<32x32xf32>
    %373 = arith.maximumf %371, %372 : vector<32x32xf32>
    %374 = vector.extract_strided_slice %373 {offsets = [0, 0], sizes = [8, 32], strides = [1, 1]} : vector<32x32xf32> to vector<8x32xf32>
    %375 = vector.extract_strided_slice %373 {offsets = [8, 0], sizes = [8, 32], strides = [1, 1]} : vector<32x32xf32> to vector<8x32xf32>
    %376 = vector.extract_strided_slice %373 {offsets = [16, 0], sizes = [8, 32], strides = [1, 1]} : vector<32x32xf32> to vector<8x32xf32>
    %377 = vector.extract_strided_slice %373 {offsets = [24, 0], sizes = [8, 32], strides = [1, 1]} : vector<32x32xf32> to vector<8x32xf32>
    %378 = vector.shape_cast %374 : vector<8x32xf32> to vector<1x8x32xf32>
    %379 = vector.shape_cast %375 : vector<8x32xf32> to vector<1x8x32xf32>
    %380 = vector.shape_cast %376 : vector<8x32xf32> to vector<1x8x32xf32>
    %381 = vector.shape_cast %377 : vector<8x32xf32> to vector<1x8x32xf32>
    %382 = tpu.concatenate %378, %379, %380, %381 in 0 : vector<1x8x32xf32>, vector<1x8x32xf32>, vector<1x8x32xf32>, vector<1x8x32xf32> -> vector<4x8x32xf32>
    %383 = arith.addf %324, %382 : vector<4x8x32xf32>
    %c0_112 = arith.constant 0 : index
    %c0_113 = arith.constant 0 : index
    %c0_114 = arith.constant 0 : index
    %384 = vector.load %arg29[%c0_112, %c0_113, %c0_114] : memref<4x8x32xf32, #tpu.memory_space<vmem>>, vector<4x8x32xf32>
    tpu.vector_store %arg29[%c0_112, %c0_113, %c0_114], %383 {strides = array<i32>} : memref<4x8x32xf32, #tpu.memory_space<vmem>>, vector<4x8x32xf32>,
    return
  }
  func.func @transform_0(%arg0: i32) -> (i32, i32, i32) {
    %c0_i32 = arith.constant 0 : i32
    %c0_i32_0 = arith.constant 0 : i32
    %c0_i32_1 = arith.constant 0 : i32
    return %arg0, %c0_i32, %c0_i32_0 : i32, i32, i32
  }
  func.func @transform_1(%arg0: i32) -> (i32, i32, i32) {
    %c0_i32 = arith.constant 0 : i32
    %c0_i32_0 = arith.constant 0 : i32
    %c0_i32_1 = arith.constant 0 : i32
    %c0_i32_2 = arith.constant 0 : i32
    return %c0_i32, %c0_i32_0, %c0_i32_1 : i32, i32, i32
  }
  func.func @transform_2(%arg0: i32) -> (i32, i32) {
    %c0_i32 = arith.constant 0 : i32
    %c0_i32_0 = arith.constant 0 : i32
    %c0_i32_1 = arith.constant 0 : i32
    return %c0_i32, %c0_i32_0 : i32, i32
  }
  func.func @transform_3(%arg0: i32) -> (i32, i32) {
    %c0_i32 = arith.constant 0 : i32
    %c0_i32_0 = arith.constant 0 : i32
    %c0_i32_1 = arith.constant 0 : i32
    return %c0_i32, %c0_i32_0 : i32, i32
  }
  func.func @transform_4(%arg0: i32) -> (i32, i32) {
    %c0_i32 = arith.constant 0 : i32
    %c0_i32_0 = arith.constant 0 : i32
    %c0_i32_1 = arith.constant 0 : i32
    return %c0_i32, %c0_i32_0 : i32, i32
  }
  func.func @transform_5(%arg0: i32) -> (i32, i32) {
    %c0_i32 = arith.constant 0 : i32
    %c0_i32_0 = arith.constant 0 : i32
    %c0_i32_1 = arith.constant 0 : i32
    return %c0_i32, %c0_i32_0 : i32, i32
  }
  func.func @transform_6(%arg0: i32) -> (i32, i32) {
    %c0_i32 = arith.constant 0 : i32
    %c0_i32_0 = arith.constant 0 : i32
    %c0_i32_1 = arith.constant 0 : i32
    return %c0_i32, %c0_i32_0 : i32, i32
  }
  func.func @transform_7(%arg0: i32) -> (i32, i32) {
    %c0_i32 = arith.constant 0 : i32
    %c0_i32_0 = arith.constant 0 : i32
    %c0_i32_1 = arith.constant 0 : i32
    return %c0_i32, %c0_i32_0 : i32, i32
  }
  func.func @transform_8(%arg0: i32) -> (i32, i32) {
    %c0_i32 = arith.constant 0 : i32
    %c0_i32_0 = arith.constant 0 : i32
    %c0_i32_1 = arith.constant 0 : i32
    return %c0_i32, %c0_i32_0 : i32, i32
  }
  func.func @transform_9(%arg0: i32) -> (i32, i32) {
    %c0_i32 = arith.constant 0 : i32
    %c0_i32_0 = arith.constant 0 : i32
    %c0_i32_1 = arith.constant 0 : i32
    return %c0_i32, %c0_i32_0 : i32, i32
  }
  func.func @transform_10(%arg0: i32) -> (i32, i32) {
    %c0_i32 = arith.constant 0 : i32
    %c0_i32_0 = arith.constant 0 : i32
    %c0_i32_1 = arith.constant 0 : i32
    return %c0_i32, %c0_i32_0 : i32, i32
  }
  func.func @transform_11(%arg0: i32) -> (i32, i32) {
    %c0_i32 = arith.constant 0 : i32
    %c0_i32_0 = arith.constant 0 : i32
    %c0_i32_1 = arith.constant 0 : i32
    return %c0_i32, %c0_i32_0 : i32, i32
  }
  func.func @transform_12(%arg0: i32) -> (i32, i32) {
    %c0_i32 = arith.constant 0 : i32
    %c0_i32_0 = arith.constant 0 : i32
    %c0_i32_1 = arith.constant 0 : i32
    return %c0_i32, %c0_i32_0 : i32, i32
  }
  func.func @transform_13(%arg0: i32) -> (i32, i32) {
    %c0_i32 = arith.constant 0 : i32
    %c0_i32_0 = arith.constant 0 : i32
    %c0_i32_1 = arith.constant 0 : i32
    return %c0_i32, %c0_i32_0 : i32, i32
  }
  func.func @transform_14(%arg0: i32) -> (i32, i32) {
    %c0_i32 = arith.constant 0 : i32
    %c0_i32_0 = arith.constant 0 : i32
    %c0_i32_1 = arith.constant 0 : i32
    return %c0_i32, %c0_i32_0 : i32, i32
  }
  func.func @transform_15(%arg0: i32) -> (i32, i32) {
    %c0_i32 = arith.constant 0 : i32
    %c0_i32_0 = arith.constant 0 : i32
    %c0_i32_1 = arith.constant 0 : i32
    return %c0_i32, %c0_i32_0 : i32, i32
  }
  func.func @transform_16(%arg0: i32) -> (i32, i32) {
    %c0_i32 = arith.constant 0 : i32
    %c0_i32_0 = arith.constant 0 : i32
    %c0_i32_1 = arith.constant 0 : i32
    return %c0_i32, %c0_i32_0 : i32, i32
  }
  func.func @transform_17(%arg0: i32) -> (i32, i32) {
    %c0_i32 = arith.constant 0 : i32
    %c0_i32_0 = arith.constant 0 : i32
    %c0_i32_1 = arith.constant 0 : i32
    return %c0_i32, %c0_i32_0 : i32, i32
  }
  func.func @transform_18(%arg0: i32) -> (i32, i32) {
    %c0_i32 = arith.constant 0 : i32
    %c0_i32_0 = arith.constant 0 : i32
    %c0_i32_1 = arith.constant 0 : i32
    return %c0_i32, %c0_i32_0 : i32, i32
  }
  func.func @transform_19(%arg0: i32) -> (i32, i32) {
    %c0_i32 = arith.constant 0 : i32
    %c0_i32_0 = arith.constant 0 : i32
    %c0_i32_1 = arith.constant 0 : i32
    return %c0_i32, %c0_i32_0 : i32, i32
  }
  func.func @transform_20(%arg0: i32) -> (i32, i32) {
    %c0_i32 = arith.constant 0 : i32
    %c0_i32_0 = arith.constant 0 : i32
    %c0_i32_1 = arith.constant 0 : i32
    return %c0_i32, %c0_i32_0 : i32, i32
  }
  func.func @transform_21(%arg0: i32) -> (i32, i32) {
    %c0_i32 = arith.constant 0 : i32
    %c0_i32_0 = arith.constant 0 : i32
    %c0_i32_1 = arith.constant 0 : i32
    return %c0_i32, %c0_i32_0 : i32, i32
  }
  func.func @transform_22(%arg0: i32) -> (i32, i32) {
    %c0_i32 = arith.constant 0 : i32
    %c0_i32_0 = arith.constant 0 : i32
    %c0_i32_1 = arith.constant 0 : i32
    return %c0_i32, %c0_i32_0 : i32, i32
  }
  func.func @transform_23(%arg0: i32) -> (i32, i32) {
    %c0_i32 = arith.constant 0 : i32
    %c0_i32_0 = arith.constant 0 : i32
    %c0_i32_1 = arith.constant 0 : i32
    return %c0_i32, %c0_i32_0 : i32, i32
  }
  func.func @transform_24(%arg0: i32) -> (i32, i32) {
    %c0_i32 = arith.constant 0 : i32
    %c0_i32_0 = arith.constant 0 : i32
    %c0_i32_1 = arith.constant 0 : i32
    return %c0_i32, %c0_i32_0 : i32, i32
  }
  func.func @transform_25(%arg0: i32) -> (i32, i32) {
    %c0_i32 = arith.constant 0 : i32
    %c0_i32_0 = arith.constant 0 : i32
    %c0_i32_1 = arith.constant 0 : i32
    return %c0_i32, %c0_i32_0 : i32, i32
  }
  func.func @transform_26(%arg0: i32) -> (i32, i32) {
    %c0_i32 = arith.constant 0 : i32
    %c0_i32_0 = arith.constant 0 : i32
    %c0_i32_1 = arith.constant 0 : i32
    return %c0_i32, %c0_i32_0 : i32, i32
  }
  func.func @transform_27(%arg0: i32) -> (i32, i32) {
    %c0_i32 = arith.constant 0 : i32
    %c0_i32_0 = arith.constant 0 : i32
    %c0_i32_1 = arith.constant 0 : i32
    return %c0_i32, %c0_i32_0 : i32, i32
  }
  func.func @transform_28(%arg0: i32) -> (i32, i32, i32) {
    %c0_i32 = arith.constant 0 : i32
    %c0_i32_0 = arith.constant 0 : i32
    %c0_i32_1 = arith.constant 0 : i32
    return %arg0, %c0_i32, %c0_i32_0 : i32, i32, i32
  }
}

</mosaic_0001>

<llo_original>
// kernel: tpu_custom_call.1
$region0: #{tpu_custom_call.1}
  #allocation0 [shape = 'u32[]', space=smem, size = 0x4, offset = 0x4, fixed_abs, tag = 'smem constant byte address 0x4 - core index']
  #allocation1 [shape = 'u32[144,128]{1,0:T(1,128)}', space=vmem, size = 0x12000, scoped, tag = 'internal scratch']
  %s0 = inlined_call_operand.hbm [shape: f32[8,8,32], index: 0, kind: input, shape index: {}]
  %s1 = inlined_call_operand.hbm [shape: f32[1,4,32], index: 1, kind: input, shape index: {}]
  %s2 = inlined_call_operand.hbm [shape: bf16[32,32], index: 2, kind: input, shape index: {}]
  %s3 = inlined_call_operand.hbm [shape: f32[1,32], index: 3, kind: input, shape index: {}]
  %s4 = inlined_call_operand.hbm [shape: bf16[32,32], index: 4, kind: input, shape index: {}]
  %s5 = inlined_call_operand.hbm [shape: f32[1,32], index: 5, kind: input, shape index: {}]
  %s6 = inlined_call_operand.hbm [shape: bf16[32,32], index: 6, kind: input, shape index: {}]
  %s7 = inlined_call_operand.hbm [shape: f32[1,32], index: 7, kind: input, shape index: {}]
  %s8 = inlined_call_operand.hbm [shape: bf16[32,32], index: 8, kind: input, shape index: {}]
  %s9 = inlined_call_operand.hbm [shape: f32[1,32], index: 9, kind: input, shape index: {}]
  %s10 = inlined_call_operand.hbm [shape: f32[1,32], index: 10, kind: input, shape index: {}]
  %s11 = inlined_call_operand.hbm [shape: f32[1,32], index: 11, kind: input, shape index: {}]
  %s12 = inlined_call_operand.hbm [shape: f32[1,32], index: 12, kind: input, shape index: {}]
  %s13 = inlined_call_operand.hbm [shape: f32[1,32], index: 13, kind: input, shape index: {}]
  %s14 = inlined_call_operand.vmem [shape: bf16[32,32], index: 14, kind: input, shape index: {}]
  %s15 = inlined_call_operand.hbm [shape: f32[1,32], index: 15, kind: input, shape index: {}]
  %s16 = inlined_call_operand.hbm [shape: bf16[32,32], index: 16, kind: input, shape index: {}]
  %s17 = inlined_call_operand.hbm [shape: f32[1,32], index: 17, kind: input, shape index: {}]
  %s18 = inlined_call_operand.vmem [shape: bf16[32,32], index: 18, kind: input, shape index: {}]
  %s19 = inlined_call_operand.vmem [shape: f32[1,32], index: 19, kind: input, shape index: {}]
  %s20 = inlined_call_operand.hbm [shape: bf16[32,32], index: 20, kind: input, shape index: {}]
  %s21 = inlined_call_operand.vmem [shape: f32[1,32], index: 21, kind: input, shape index: {}]
  %s22 = inlined_call_operand.vmem [shape: f32[1,32], index: 22, kind: input, shape index: {}]
  %s23 = inlined_call_operand.vmem [shape: f32[1,32], index: 23, kind: input, shape index: {}]
  %s24 = inlined_call_operand.vmem [shape: f32[1,32], index: 24, kind: input, shape index: {}]
  %s25 = inlined_call_operand.vmem [shape: f32[1,32], index: 25, kind: input, shape index: {}]
  %s26 = inlined_call_operand.vmem [shape: f32[1,32], index: 26, kind: input, shape index: {}]
  %s27 = inlined_call_operand.vmem [shape: f32[1,32], index: 27, kind: input, shape index: {}]
  %s28 = inlined_call_operand.hbm [shape: f32[8,8,32], index: 28, kind: output, shape index: {}]
  %s29 = sld [smem:[#allocation0]]
  $region217: #{tpu_custom_call.1} parent=0
    _
  %s31 = ssub.s32 1, %s29
  %s32 = scalar_select 0, %s31, %s29
  $region1: #{tpu_custom_call.1} parent=0
    #allocation2 [shape = 'u8[32768]{0}', space=vmem, size = 0x8000, scoped, tag = 'input window, operand 0']
    #allocation3 [shape = 's32[2]{0}', space=sflag, size = 0x8, scoped, tag = 'scoped memory for tpu_custom_call.1']
    #allocation4 [shape = 's32[2]{0}', space=sflag, size = 0x8, scoped, tag = 'scoped memory for tpu_custom_call.1']
    #allocation5 [shape = 'u8[2048]{0}', space=vmem, size = 0x800, scoped, tag = 'input window, operand 1, single buffered']
    #allocation6 [shape = 's32[1]{0}', space=sflag, size = 0x4, scoped, tag = 'scoped memory for tpu_custom_call.1']
    #allocation7 [shape = 'u8[8192]{0}', space=vmem, size = 0x2000, scoped, tag = 'input window, operand 2, single buffered']
    #allocation8 [shape = 'u8[512]{0}', space=vmem, size = 0x400, scoped, tag = 'input window, operand 3, single buffered']
    #allocation9 [shape = 's32[1]{0}', space=sflag, size = 0x4, scoped, tag = 'scoped memory for tpu_custom_call.1']
    #allocation10 [shape = 'u8[8192]{0}', space=vmem, size = 0x2000, scoped, tag = 'input window, operand 4, single buffered']
    #allocation11 [shape = 'u8[512]{0}', space=vmem, size = 0x400, scoped, tag = 'input window, operand 5, single buffered']
    #allocation12 [shape = 's32[1]{0}', space=sflag, size = 0x4, scoped, tag = 'scoped memory for tpu_custom_call.1']
    #allocation13 [shape = 'u8[8192]{0}', space=vmem, size = 0x2000, scoped, tag = 'input window, operand 6, single buffered']
    #allocation14 [shape = 'u8[512]{0}', space=vmem, size = 0x400, scoped, tag = 'input window, operand 7, single buffered']
    #allocation15 [shape = 's32[1]{0}', space=sflag, size = 0x4, scoped, tag = 'scoped memory for tpu_custom_call.1']
    #allocation16 [shape = 'u8[8192]{0}', space=vmem, size = 0x2000, scoped, tag = 'input window, operand 8, single buffered']
    #allocation17 [shape = 'u8[512]{0}', space=vmem, size = 0x400, scoped, tag = 'input window, operand 9, single buffered']
    #allocation18 [shape = 's32[1]{0}', space=sflag, size = 0x4, scoped, tag = 'scoped memory for tpu_custom_call.1']
    #allocation19 [shape = 'u8[512]{0}', space=vmem, size = 0x400, scoped, tag = 'input window, operand 10, single buffered']
    #allocation20 [shape = 'u8[512]{0}', space=vmem, size = 0x400, scoped, tag = 'input window, operand 11, single buffered']
    #allocation21 [shape = 's32[1]{0}', space=sflag, size = 0x4, scoped, tag = 'scoped memory for tpu_custom_call.1']
    #allocation22 [shape = 'u8[512]{0}', space=vmem, size = 0x400, scoped, tag = 'input window, operand 12, single buffered']
    #allocation23 [shape = 'u8[512]{0}', space=vmem, size = 0x400, scoped, tag = 'input window, operand 13, single buffered']
    #allocation24 [shape = 's32[1]{0}', space=sflag, size = 0x4, scoped, tag = 'scoped memory for tpu_custom_call.1']
    #allocation25 [shape = 'u8[512]{0}', space=vmem, size = 0x400, scoped, tag = 'input window, operand 15, single buffered']
    #allocation26 [shape = 'u8[8192]{0}', space=vmem, size = 0x2000, scoped, tag = 'input window, operand 16, single buffered']
    #allocation27 [shape = 's32[1]{0}', space=sflag, size = 0x4, scoped, tag = 'scoped memory for tpu_custom_call.1']
    #allocation28 [shape = 'u8[512]{0}', space=vmem, size = 0x400, scoped, tag = 'input window, operand 17, single buffered']
    #allocation29 [shape = 'u8[8192]{0}', space=vmem, size = 0x2000, scoped, tag = 'input window, operand 20, single buffered']
    #allocation30 [shape = 's32[1]{0}', space=sflag, size = 0x4, scoped, tag = 'scoped memory for tpu_custom_call.1']
    #allocation31 [shape = 'u8[32768]{0}', space=vmem, size = 0x8000, scoped, tag = 'output window, operand 0']
    %33 = vsyncpa [#allocation3], 0
    %s34 = scalar_lea.sflag [#allocation3], 1
    %35 = vsyncpa %s34, 0
    %36 = vsyncpa [#allocation6], 0
    %37 = vsyncpa [#allocation9], 0
    %38 = vsyncpa [#allocation12], 0
    %39 = vsyncpa [#allocation15], 0
    %40 = vsyncpa [#allocation18], 0
    %41 = vsyncpa [#allocation21], 0
    %42 = vsyncpa [#allocation24], 0
    %43 = vsyncpa [#allocation27], 0
    %44 = vsyncpa [#allocation30], 0
    %45 = vsyncpa [#allocation4], 0
    %s46 = scalar_lea.sflag [#allocation4], 1
    %47 = vsyncpa %s46, 0
    loop: start=0, step=1, limit=4
    $region2: #{tpu_custom_call.1} parent=1 // loop_pre_header
      _
    $region3: #{tpu_custom_call.1} parent=1 // loop_header
      %s49 = sphi 0, %s53
      %p50 = scmp.ge.s32.totalorder %s49, 4
      %s59 = sphi 0, %s61
      %s62 = sphi 0, %s59
      %s63 = sphi 0, %s62
      %s79 = sphi 0, %s63
      %s83 = sphi 0, %s83
      %s85 = sphi 0, %s83
      %s86 = sphi 0, %s85
      %s100 = sphi 0, %s86
      %s104 = sphi 0, %s104
      %s106 = sphi 0, %s104
      %s107 = sphi 0, %s106
      %s121 = sphi 0, %s107
      %s125 = sphi 0, %s125
      %s127 = sphi 0, %s125
      %s128 = sphi 0, %s127
      %s142 = sphi 0, %s128
      %s146 = sphi 0, %s146
      %s148 = sphi 0, %s146
      %s149 = sphi 0, %s148
      %s163 = sphi 0, %s149
      %s167 = sphi 0, %s167
      %s169 = sphi 0, %s167
      %s170 = sphi 0, %s169
      %s184 = sphi 0, %s170
      %s188 = sphi 0, %s188
      %s190 = sphi 0, %s188
      %s191 = sphi 0, %s190
      %s205 = sphi 0, %s191
      %s209 = sphi 0, %s209
      %s211 = sphi 0, %s209
      %s212 = sphi 0, %s211
      %s226 = sphi 0, %s212
      %s230 = sphi 0, %s230
      %s232 = sphi 0, %s230
      %s233 = sphi 0, %s232
      %s247 = sphi 0, %s233
      %s251 = sphi 0, %s251
      %s253 = sphi 0, %s251
      %s254 = sphi 0, %s253
      %s268 = sphi 0, %s254
      %s272 = sphi 0, %s272
      %s274 = sphi 0, %s272
      %s275 = sphi 0, %s274
      %s289 = sphi 0, %s275
      %s293 = sphi 0, %s293
      %s295 = sphi 0, %s293
      %s296 = sphi 0, %s295
      %s310 = sphi 0, %s296
      %s314 = sphi 0, %s314
      %s316 = sphi 0, %s314
      %s317 = sphi 0, %s316
      %s331 = sphi 0, %s317
      %s335 = sphi 0, %s335
      %s337 = sphi 0, %s335
      %s338 = sphi 0, %s337
      %s352 = sphi 0, %s338
      %s356 = sphi 0, %s356
      %s358 = sphi 0, %s356
      %s359 = sphi 0, %s358
      %s373 = sphi 0, %s359
      %s377 = sphi 0, %s377
      %s379 = sphi 0, %s377
      %s380 = sphi 0, %s379
      %s394 = sphi 0, %s380
      %s398 = sphi 0, %s398
      %s400 = sphi 0, %s398
      %s401 = sphi 0, %s400
      %s415 = sphi 0, %s401
      %s419 = sphi 0, %s419
      %s421 = sphi 0, %s419
      %s422 = sphi 0, %s421
      %s436 = sphi 0, %s422
      %s440 = sphi 0, %s440
      %s442 = sphi 0, %s440
      %s443 = sphi 0, %s442
      %s457 = sphi 0, %s443
      %s461 = sphi 0, %s461
      %s463 = sphi 0, %s461
      %s464 = sphi 0, %s463
      %s478 = sphi 0, %s464
      %s482 = sphi 0, %s482
      %s484 = sphi 0, %s482
      %s485 = sphi 0, %s484
      %s499 = sphi 0, %s485
      %s503 = sphi 0, %s503
      %s505 = sphi 0, %s503
      %s506 = sphi 0, %s505
      %s520 = sphi 0, %s506
      %s524 = sphi 0, %s524
      %s526 = sphi 0, %s524
      %s527 = sphi 0, %s526
      %s541 = sphi 0, %s527
      %s545 = sphi 0, %s545
      %s547 = sphi 0, %s545
      %s548 = sphi 0, %s547
      %s562 = sphi 0, %s548
      %s566 = sphi 0, %s566
      %s568 = sphi 0, %s566
      %s569 = sphi 0, %s568
      %s583 = sphi 0, %s569
      %s587 = sphi 0, %s587
      %s589 = sphi 0, %s587
      %s590 = sphi 0, %s589
      %s604 = sphi 0, %s590
      %s608 = sphi 0, %s608
      %s610 = sphi 0, %s608
      %s611 = sphi 0, %s610
      %s625 = sphi 0, %s611
      %s629 = sphi 0, %s629
      %s631 = sphi 0, %s629
      %s632 = sphi 0, %s631
      %s646 = sphi 0, %s632
      %s652 = sphi 0, %s654
      %s655 = sphi 0, %s652
      %s656 = sphi 0, %s655
      %s672 = sphi 0, %s656
    $region4: #{tpu_custom_call.1} parent=1 // loop_header_branch
      %52 = sbr.rel (%p50) target = $region8
    $region5: #{tpu_custom_call.1} parent=1 // loop_body
      %s54 = ssub.s32 %s49, 1
      %s55 = ssub.s32 %s49, 2
      %s56 = sadd.s32 %s49, 1
      %s57 = ssub.s32 %s49, %s56
      %p58 = scmp.eq.s32.totalorder %s57, 0
      %s60 = sadd.s32 %s59, 1
      %s61 = scalar_select %p58, %s59, %s60
      %p64 = pneg %p58
      %p65 = scmp.eq.s32.totalorder %s49, 1
      %p66 = por %p64, %p65
      %p67 = scmp.ne.s32.totalorder %s59, %s62
      %p68 = scmp.eq.s32.totalorder %s49, 0
      %p69 = por %p67, %p68
      %p70 = scmp.ne.s32.totalorder %s59, %s62
      %p71 = scmp.eq.s32.totalorder %s54, 1
      %p72 = por %p70, %p71
      %p73 = scmp.ne.s32.totalorder %s62, %s63
      %p74 = scmp.eq.s32.totalorder %s54, 0
      %p75 = por %p73, %p74
      %p76 = scmp.ne.s32.totalorder %s62, %s63
      %p77 = scmp.eq.s32.totalorder %s55, 1
      %p78 = por %p76, %p77
      %p80 = scmp.ne.s32.totalorder %s63, %s79
      %p81 = scmp.eq.s32.totalorder %s55, 0
      %p82 = por %p80, %p81
      %s84 = sadd.s32 %s83, 1
      %p87 = scmp.eq.s32.totalorder %s49, 1
      %p88 = scmp.ne.s32.totalorder %s83, %s85
      %p89 = scmp.eq.s32.totalorder %s49, 0
      %p90 = por %p88, %p89
      %p91 = scmp.ne.s32.totalorder %s83, %s85
      %p92 = scmp.eq.s32.totalorder %s54, 1
      %p93 = por %p91, %p92
      %p94 = scmp.ne.s32.totalorder %s85, %s86
      %p95 = scmp.eq.s32.totalorder %s54, 0
      %p96 = por %p94, %p95
      %p97 = scmp.ne.s32.totalorder %s85, %s86
      %p98 = scmp.eq.s32.totalorder %s55, 1
      %p99 = por %p97, %p98
      %p101 = scmp.ne.s32.totalorder %s86, %s100
      %p102 = scmp.eq.s32.totalorder %s55, 0
      %p103 = por %p101, %p102
      %s105 = sadd.s32 %s104, 1
      %p108 = scmp.eq.s32.totalorder %s49, 1
      %p109 = scmp.ne.s32.totalorder %s104, %s106
      %p110 = scmp.eq.s32.totalorder %s49, 0
      %p111 = por %p109, %p110
      %p112 = scmp.ne.s32.totalorder %s104, %s106
      %p113 = scmp.eq.s32.totalorder %s54, 1
      %p114 = por %p112, %p113
      %p115 = scmp.ne.s32.totalorder %s106, %s107
      %p116 = scmp.eq.s32.totalorder %s54, 0
      %p117 = por %p115, %p116
      %p118 = scmp.ne.s32.totalorder %s106, %s107
      %p119 = scmp.eq.s32.totalorder %s55, 1
      %p120 = por %p118, %p119
      %p122 = scmp.ne.s32.totalorder %s107, %s121
      %p123 = scmp.eq.s32.totalorder %s55, 0
      %p124 = por %p122, %p123
      %s126 = sadd.s32 %s125, 1
      %p129 = scmp.eq.s32.totalorder %s49, 1
      %p130 = scmp.ne.s32.totalorder %s125, %s127
      %p131 = scmp.eq.s32.totalorder %s49, 0
      %p132 = por %p130, %p131
      %p133 = scmp.ne.s32.totalorder %s125, %s127
      %p134 = scmp.eq.s32.totalorder %s54, 1
      %p135 = por %p133, %p134
      %p136 = scmp.ne.s32.totalorder %s127, %s128
      %p137 = scmp.eq.s32.totalorder %s54, 0
      %p138 = por %p136, %p137
      %p139 = scmp.ne.s32.totalorder %s127, %s128
      %p140 = scmp.eq.s32.totalorder %s55, 1
      %p141 = por %p139, %p140
      %p143 = scmp.ne.s32.totalorder %s128, %s142
      %p144 = scmp.eq.s32.totalorder %s55, 0
      %p145 = por %p143, %p144
      %s147 = sadd.s32 %s146, 1
      %p150 = scmp.eq.s32.totalorder %s49, 1
      %p151 = scmp.ne.s32.totalorder %s146, %s148
      %p152 = scmp.eq.s32.totalorder %s49, 0
      %p153 = por %p151, %p152
      %p154 = scmp.ne.s32.totalorder %s146, %s148
      %p155 = scmp.eq.s32.totalorder %s54, 1
      %p156 = por %p154, %p155
      %p157 = scmp.ne.s32.totalorder %s148, %s149
      %p158 = scmp.eq.s32.totalorder %s54, 0
      %p159 = por %p157, %p158
      %p160 = scmp.ne.s32.totalorder %s148, %s149
      %p161 = scmp.eq.s32.totalorder %s55, 1
      %p162 = por %p160, %p161
      %p164 = scmp.ne.s32.totalorder %s149, %s163
      %p165 = scmp.eq.s32.totalorder %s55, 0
      %p166 = por %p164, %p165
      %s168 = sadd.s32 %s167, 1
      %p171 = scmp.eq.s32.totalorder %s49, 1
      %p172 = scmp.ne.s32.totalorder %s167, %s169
      %p173 = scmp.eq.s32.totalorder %s49, 0
      %p174 = por %p172, %p173
      %p175 = scmp.ne.s32.totalorder %s167, %s169
      %p176 = scmp.eq.s32.totalorder %s54, 1
      %p177 = por %p175, %p176
      %p178 = scmp.ne.s32.totalorder %s169, %s170
      %p179 = scmp.eq.s32.totalorder %s54, 0
      %p180 = por %p178, %p179
      %p181 = scmp.ne.s32.totalorder %s169, %s170
      %p182 = scmp.eq.s32.totalorder %s55, 1
      %p183 = por %p181, %p182
      %p185 = scmp.ne.s32.totalorder %s170, %s184
      %p186 = scmp.eq.s32.totalorder %s55, 0
      %p187 = por %p185, %p186
      %s189 = sadd.s32 %s188, 1
      %p192 = scmp.eq.s32.totalorder %s49, 1
      %p193 = scmp.ne.s32.totalorder %s188, %s190
      %p194 = scmp.eq.s32.totalorder %s49, 0
      %p195 = por %p193, %p194
      %p196 = scmp.ne.s32.totalorder %s188, %s190
      %p197 = scmp.eq.s32.totalorder %s54, 1
      %p198 = por %p196, %p197
      %p199 = scmp.ne.s32.totalorder %s190, %s191
      %p200 = scmp.eq.s32.totalorder %s54, 0
      %p201 = por %p199, %p200
      %p202 = scmp.ne.s32.totalorder %s190, %s191
      %p203 = scmp.eq.s32.totalorder %s55, 1
      %p204 = por %p202, %p203
      %p206 = scmp.ne.s32.totalorder %s191, %s205
      %p207 = scmp.eq.s32.totalorder %s55, 0
      %p208 = por %p206, %p207
      %s210 = sadd.s32 %s209, 1
      %p213 = scmp.eq.s32.totalorder %s49, 1
      %p214 = scmp.ne.s32.totalorder %s209, %s211
      %p215 = scmp.eq.s32.totalorder %s49, 0
      %p216 = por %p214, %p215
      %p217 = scmp.ne.s32.totalorder %s209, %s211
      %p218 = scmp.eq.s32.totalorder %s54, 1
      %p219 = por %p217, %p218
      %p220 = scmp.ne.s32.totalorder %s211, %s212
      %p221 = scmp.eq.s32.totalorder %s54, 0
      %p222 = por %p220, %p221
      %p223 = scmp.ne.s32.totalorder %s211, %s212
      %p224 = scmp.eq.s32.totalorder %s55, 1
      %p225 = por %p223, %p224
      %p227 = scmp.ne.s32.totalorder %s212, %s226
      %p228 = scmp.eq.s32.totalorder %s55, 0
      %p229 = por %p227, %p228
      %s231 = sadd.s32 %s230, 1
      %p234 = scmp.eq.s32.totalorder %s49, 1
      %p235 = scmp.ne.s32.totalorder %s230, %s232
      %p236 = scmp.eq.s32.totalorder %s49, 0
      %p237 = por %p235, %p236
      %p238 = scmp.ne.s32.totalorder %s230, %s232
      %p239 = scmp.eq.s32.totalorder %s54, 1
      %p240 = por %p238, %p239
      %p241 = scmp.ne.s32.totalorder %s232, %s233
      %p242 = scmp.eq.s32.totalorder %s54, 0
      %p243 = por %p241, %p242
      %p244 = scmp.ne.s32.totalorder %s232, %s233
      %p245 = scmp.eq.s32.totalorder %s55, 1
      %p246 = por %p244, %p245
      %p248 = scmp.ne.s32.totalorder %s233, %s247
      %p249 = scmp.eq.s32.totalorder %s55, 0
      %p250 = por %p248, %p249
      %s252 = sadd.s32 %s251, 1
      %p255 = scmp.eq.s32.totalorder %s49, 1
      %p256 = scmp.ne.s32.totalorder %s251, %s253
      %p257 = scmp.eq.s32.totalorder %s49, 0
      %p258 = por %p256, %p257
      %p259 = scmp.ne.s32.totalorder %s251, %s253
      %p260 = scmp.eq.s32.totalorder %s54, 1
      %p261 = por %p259, %p260
      %p262 = scmp.ne.s32.totalorder %s253, %s254
      %p263 = scmp.eq.s32.totalorder %s54, 0
      %p264 = por %p262, %p263
      %p265 = scmp.ne.s32.totalorder %s253, %s254
      %p266 = scmp.eq.s32.totalorder %s55, 1
      %p267 = por %p265, %p266
      %p269 = scmp.ne.s32.totalorder %s254, %s268
      %p270 = scmp.eq.s32.totalorder %s55, 0
      %p271 = por %p269, %p270
      %s273 = sadd.s32 %s272, 1
      %p276 = scmp.eq.s32.totalorder %s49, 1
      %p277 = scmp.ne.s32.totalorder %s272, %s274
      %p278 = scmp.eq.s32.totalorder %s49, 0
      %p279 = por %p277, %p278
      %p280 = scmp.ne.s32.totalorder %s272, %s274
      %p281 = scmp.eq.s32.totalorder %s54, 1
      %p282 = por %p280, %p281
      %p283 = scmp.ne.s32.totalorder %s274, %s275
      %p284 = scmp.eq.s32.totalorder %s54, 0
      %p285 = por %p283, %p284
      %p286 = scmp.ne.s32.totalorder %s274, %s275
      %p287 = scmp.eq.s32.totalorder %s55, 1
      %p288 = por %p286, %p287
      %p290 = scmp.ne.s32.totalorder %s275, %s289
      %p291 = scmp.eq.s32.totalorder %s55, 0
      %p292 = por %p290, %p291
      %s294 = sadd.s32 %s293, 1
      %p297 = scmp.eq.s32.totalorder %s49, 1
      %p298 = scmp.ne.s32.totalorder %s293, %s295
      %p299 = scmp.eq.s32.totalorder %s49, 0
      %p300 = por %p298, %p299
      %p301 = scmp.ne.s32.totalorder %s293, %s295
      %p302 = scmp.eq.s32.totalorder %s54, 1
      %p303 = por %p301, %p302
      %p304 = scmp.ne.s32.totalorder %s295, %s296
      %p305 = scmp.eq.s32.totalorder %s54, 0
      %p306 = por %p304, %p305
      %p307 = scmp.ne.s32.totalorder %s295, %s296
      %p308 = scmp.eq.s32.totalorder %s55, 1
      %p309 = por %p307, %p308
      %p311 = scmp.ne.s32.totalorder %s296, %s310
      %p312 = scmp.eq.s32.totalorder %s55, 0
      %p313 = por %p311, %p312
      %s315 = sadd.s32 %s314, 1
      %p318 = scmp.eq.s32.totalorder %s49, 1
      %p319 = scmp.ne.s32.totalorder %s314, %s316
      %p320 = scmp.eq.s32.totalorder %s49, 0
      %p321 = por %p319, %p320
      %p322 = scmp.ne.s32.totalorder %s314, %s316
      %p323 = scmp.eq.s32.totalorder %s54, 1
      %p324 = por %p322, %p323
      %p325 = scmp.ne.s32.totalorder %s316, %s317
      %p326 = scmp.eq.s32.totalorder %s54, 0
      %p327 = por %p325, %p326
      %p328 = scmp.ne.s32.totalorder %s316, %s317
      %p329 = scmp.eq.s32.totalorder %s55, 1
      %p330 = por %p328, %p329
      %p332 = scmp.ne.s32.totalorder %s317, %s331
      %p333 = scmp.eq.s32.totalorder %s55, 0
      %p334 = por %p332, %p333
      %s336 = sadd.s32 %s335, 1
      %p339 = scmp.eq.s32.totalorder %s49, 1
      %p340 = scmp.ne.s32.totalorder %s335, %s337
      %p341 = scmp.eq.s32.totalorder %s49, 0
      %p342 = por %p340, %p341
      %p343 = scmp.ne.s32.totalorder %s335, %s337
      %p344 = scmp.eq.s32.totalorder %s54, 1
      %p345 = por %p343, %p344
      %p346 = scmp.ne.s32.totalorder %s337, %s338
      %p347 = scmp.eq.s32.totalorder %s54, 0
      %p348 = por %p346, %p347
      %p349 = scmp.ne.s32.totalorder %s337, %s338
      %p350 = scmp.eq.s32.totalorder %s55, 1
      %p351 = por %p349, %p350
      %p353 = scmp.ne.s32.totalorder %s338, %s352
      %p354 = scmp.eq.s32.totalorder %s55, 0
      %p355 = por %p353, %p354
      %s357 = sadd.s32 %s356, 1
      %p360 = scmp.eq.s32.totalorder %s49, 1
      %p361 = scmp.ne.s32.totalorder %s356, %s358
      %p362 = scmp.eq.s32.totalorder %s49, 0
      %p363 = por %p361, %p362
      %p364 = scmp.ne.s32.totalorder %s356, %s358
      %p365 = scmp.eq.s32.totalorder %s54, 1
      %p366 = por %p364, %p365
      %p367 = scmp.ne.s32.totalorder %s358, %s359
      %p368 = scmp.eq.s32.totalorder %s54, 0
      %p369 = por %p367, %p368
      %p370 = scmp.ne.s32.totalorder %s358, %s359
      %p371 = scmp.eq.s32.totalorder %s55, 1
      %p372 = por %p370, %p371
      %p374 = scmp.ne.s32.totalorder %s359, %s373
      %p375 = scmp.eq.s32.totalorder %s55, 0
      %p376 = por %p374, %p375
      %s378 = sadd.s32 %s377, 1
      %p381 = scmp.eq.s32.totalorder %s49, 1
      %p382 = scmp.ne.s32.totalorder %s377, %s379
      %p383 = scmp.eq.s32.totalorder %s49, 0
      %p384 = por %p382, %p383
      %p385 = scmp.ne.s32.totalorder %s377, %s379
      %p386 = scmp.eq.s32.totalorder %s54, 1
      %p387 = por %p385, %p386
      %p388 = scmp.ne.s32.totalorder %s379, %s380
      %p389 = scmp.eq.s32.totalorder %s54, 0
      %p390 = por %p388, %p389
      %p391 = scmp.ne.s32.totalorder %s379, %s380
      %p392 = scmp.eq.s32.totalorder %s55, 1
      %p393 = por %p391, %p392
      %p395 = scmp.ne.s32.totalorder %s380, %s394
      %p396 = scmp.eq.s32.totalorder %s55, 0
      %p397 = por %p395, %p396
      %s399 = sadd.s32 %s398, 1
      %p402 = scmp.eq.s32.totalorder %s49, 1
      %p403 = scmp.ne.s32.totalorder %s398, %s400
      %p404 = scmp.eq.s32.totalorder %s49, 0
      %p405 = por %p403, %p404
      %p406 = scmp.ne.s32.totalorder %s398, %s400
      %p407 = scmp.eq.s32.totalorder %s54, 1
      %p408 = por %p406, %p407
      %p409 = scmp.ne.s32.totalorder %s400, %s401
      %p410 = scmp.eq.s32.totalorder %s54, 0
      %p411 = por %p409, %p410
      %p412 = scmp.ne.s32.totalorder %s400, %s401
      %p413 = scmp.eq.s32.totalorder %s55, 1
      %p414 = por %p412, %p413
      %p416 = scmp.ne.s32.totalorder %s401, %s415
      %p417 = scmp.eq.s32.totalorder %s55, 0
      %p418 = por %p416, %p417
      %s420 = sadd.s32 %s419, 1
      %p423 = scmp.eq.s32.totalorder %s49, 1
      %p424 = scmp.ne.s32.totalorder %s419, %s421
      %p425 = scmp.eq.s32.totalorder %s49, 0
      %p426 = por %p424, %p425
      %p427 = scmp.ne.s32.totalorder %s419, %s421
      %p428 = scmp.eq.s32.totalorder %s54, 1
      %p429 = por %p427, %p428
      %p430 = scmp.ne.s32.totalorder %s421, %s422
      %p431 = scmp.eq.s32.totalorder %s54, 0
      %p432 = por %p430, %p431
      %p433 = scmp.ne.s32.totalorder %s421, %s422
      %p434 = scmp.eq.s32.totalorder %s55, 1
      %p435 = por %p433, %p434
      %p437 = scmp.ne.s32.totalorder %s422, %s436
      %p438 = scmp.eq.s32.totalorder %s55, 0
      %p439 = por %p437, %p438
      %s441 = sadd.s32 %s440, 1
      %p444 = scmp.eq.s32.totalorder %s49, 1
      %p445 = scmp.ne.s32.totalorder %s440, %s442
      %p446 = scmp.eq.s32.totalorder %s49, 0
      %p447 = por %p445, %p446
      %p448 = scmp.ne.s32.totalorder %s440, %s442
      %p449 = scmp.eq.s32.totalorder %s54, 1
      %p450 = por %p448, %p449
      %p451 = scmp.ne.s32.totalorder %s442, %s443
      %p452 = scmp.eq.s32.totalorder %s54, 0
      %p453 = por %p451, %p452
      %p454 = scmp.ne.s32.totalorder %s442, %s443
      %p455 = scmp.eq.s32.totalorder %s55, 1
      %p456 = por %p454, %p455
      %p458 = scmp.ne.s32.totalorder %s443, %s457
      %p459 = scmp.eq.s32.totalorder %s55, 0
      %p460 = por %p458, %p459
      %s462 = sadd.s32 %s461, 1
      %p465 = scmp.eq.s32.totalorder %s49, 1
      %p466 = scmp.ne.s32.totalorder %s461, %s463
      %p467 = scmp.eq.s32.totalorder %s49, 0
      %p468 = por %p466, %p467
      %p469 = scmp.ne.s32.totalorder %s461, %s463
      %p470 = scmp.eq.s32.totalorder %s54, 1
      %p471 = por %p469, %p470
      %p472 = scmp.ne.s32.totalorder %s463, %s464
      %p473 = scmp.eq.s32.totalorder %s54, 0
      %p474 = por %p472, %p473
      %p475 = scmp.ne.s32.totalorder %s463, %s464
      %p476 = scmp.eq.s32.totalorder %s55, 1
      %p477 = por %p475, %p476
      %p479 = scmp.ne.s32.totalorder %s464, %s478
      %p480 = scmp.eq.s32.totalorder %s55, 0
      %p481 = por %p479, %p480
      %s483 = sadd.s32 %s482, 1
      %p486 = scmp.eq.s32.totalorder %s49, 1
      %p487 = scmp.ne.s32.totalorder %s482, %s484
      %p488 = scmp.eq.s32.totalorder %s49, 0
      %p489 = por %p487, %p488
      %p490 = scmp.ne.s32.totalorder %s482, %s484
      %p491 = scmp.eq.s32.totalorder %s54, 1
      %p492 = por %p490, %p491
      %p493 = scmp.ne.s32.totalorder %s484, %s485
      %p494 = scmp.eq.s32.totalorder %s54, 0
      %p495 = por %p493, %p494
      %p496 = scmp.ne.s32.totalorder %s484, %s485
      %p497 = scmp.eq.s32.totalorder %s55, 1
      %p498 = por %p496, %p497
      %p500 = scmp.ne.s32.totalorder %s485, %s499
      %p501 = scmp.eq.s32.totalorder %s55, 0
      %p502 = por %p500, %p501
      %s504 = sadd.s32 %s503, 1
      %p507 = scmp.eq.s32.totalorder %s49, 1
      %p508 = scmp.ne.s32.totalorder %s503, %s505
      %p509 = scmp.eq.s32.totalorder %s49, 0
      %p510 = por %p508, %p509
      %p511 = scmp.ne.s32.totalorder %s503, %s505
      %p512 = scmp.eq.s32.totalorder %s54, 1
      %p513 = por %p511, %p512
      %p514 = scmp.ne.s32.totalorder %s505, %s506
      %p515 = scmp.eq.s32.totalorder %s54, 0
      %p516 = por %p514, %p515
      %p517 = scmp.ne.s32.totalorder %s505, %s506
      %p518 = scmp.eq.s32.totalorder %s55, 1
      %p519 = por %p517, %p518
      %p521 = scmp.ne.s32.totalorder %s506, %s520
      %p522 = scmp.eq.s32.totalorder %s55, 0
      %p523 = por %p521, %p522
      %s525 = sadd.s32 %s524, 1
      %p528 = scmp.eq.s32.totalorder %s49, 1
      %p529 = scmp.ne.s32.totalorder %s524, %s526
      %p530 = scmp.eq.s32.totalorder %s49, 0
      %p531 = por %p529, %p530
      %p532 = scmp.ne.s32.totalorder %s524, %s526
      %p533 = scmp.eq.s32.totalorder %s54, 1
      %p534 = por %p532, %p533
      %p535 = scmp.ne.s32.totalorder %s526, %s527
      %p536 = scmp.eq.s32.totalorder %s54, 0
      %p537 = por %p535, %p536
      %p538 = scmp.ne.s32.totalorder %s526, %s527
      %p539 = scmp.eq.s32.totalorder %s55, 1
      %p540 = por %p538, %p539
      %p542 = scmp.ne.s32.totalorder %s527, %s541
      %p543 = scmp.eq.s32.totalorder %s55, 0
      %p544 = por %p542, %p543
      %s546 = sadd.s32 %s545, 1
      %p549 = scmp.eq.s32.totalorder %s49, 1
      %p550 = scmp.ne.s32.totalorder %s545, %s547
      %p551 = scmp.eq.s32.totalorder %s49, 0
      %p552 = por %p550, %p551
      %p553 = scmp.ne.s32.totalorder %s545, %s547
      %p554 = scmp.eq.s32.totalorder %s54, 1
      %p555 = por %p553, %p554
      %p556 = scmp.ne.s32.totalorder %s547, %s548
      %p557 = scmp.eq.s32.totalorder %s54, 0
      %p558 = por %p556, %p557
      %p559 = scmp.ne.s32.totalorder %s547, %s548
      %p560 = scmp.eq.s32.totalorder %s55, 1
      %p561 = por %p559, %p560
      %p563 = scmp.ne.s32.totalorder %s548, %s562
      %p564 = scmp.eq.s32.totalorder %s55, 0
      %p565 = por %p563, %p564
      %s567 = sadd.s32 %s566, 1
      %p570 = scmp.eq.s32.totalorder %s49, 1
      %p571 = scmp.ne.s32.totalorder %s566, %s568
      %p572 = scmp.eq.s32.totalorder %s49, 0
      %p573 = por %p571, %p572
      %p574 = scmp.ne.s32.totalorder %s566, %s568
      %p575 = scmp.eq.s32.totalorder %s54, 1
      %p576 = por %p574, %p575
      %p577 = scmp.ne.s32.totalorder %s568, %s569
      %p578 = scmp.eq.s32.totalorder %s54, 0
      %p579 = por %p577, %p578
      %p580 = scmp.ne.s32.totalorder %s568, %s569
      %p581 = scmp.eq.s32.totalorder %s55, 1
      %p582 = por %p580, %p581
      %p584 = scmp.ne.s32.totalorder %s569, %s583
      %p585 = scmp.eq.s32.totalorder %s55, 0
      %p586 = por %p584, %p585
      %s588 = sadd.s32 %s587, 1
      %p591 = scmp.eq.s32.totalorder %s49, 1
      %p592 = scmp.ne.s32.totalorder %s587, %s589
      %p593 = scmp.eq.s32.totalorder %s49, 0
      %p594 = por %p592, %p593
      %p595 = scmp.ne.s32.totalorder %s587, %s589
      %p596 = scmp.eq.s32.totalorder %s54, 1
      %p597 = por %p595, %p596
      %p598 = scmp.ne.s32.totalorder %s589, %s590
      %p599 = scmp.eq.s32.totalorder %s54, 0
      %p600 = por %p598, %p599
      %p601 = scmp.ne.s32.totalorder %s589, %s590
      %p602 = scmp.eq.s32.totalorder %s55, 1
      %p603 = por %p601, %p602
      %p605 = scmp.ne.s32.totalorder %s590, %s604
      %p606 = scmp.eq.s32.totalorder %s55, 0
      %p607 = por %p605, %p606
      %s609 = sadd.s32 %s608, 1
      %p612 = scmp.eq.s32.totalorder %s49, 1
      %p613 = scmp.ne.s32.totalorder %s608, %s610
      %p614 = scmp.eq.s32.totalorder %s49, 0
      %p615 = por %p613, %p614
      %p616 = scmp.ne.s32.totalorder %s608, %s610
      %p617 = scmp.eq.s32.totalorder %s54, 1
      %p618 = por %p616, %p617
      %p619 = scmp.ne.s32.totalorder %s610, %s611
      %p620 = scmp.eq.s32.totalorder %s54, 0
      %p621 = por %p619, %p620
      %p622 = scmp.ne.s32.totalorder %s610, %s611
      %p623 = scmp.eq.s32.totalorder %s55, 1
      %p624 = por %p622, %p623
      %p626 = scmp.ne.s32.totalorder %s611, %s625
      %p627 = scmp.eq.s32.totalorder %s55, 0
      %p628 = por %p626, %p627
      %s630 = sadd.s32 %s629, 1
      %p633 = scmp.eq.s32.totalorder %s49, 1
      %p634 = scmp.ne.s32.totalorder %s629, %s631
      %p635 = scmp.eq.s32.totalorder %s49, 0
      %p636 = por %p634, %p635
      %p637 = scmp.ne.s32.totalorder %s629, %s631
      %p638 = scmp.eq.s32.totalorder %s54, 1
      %p639 = por %p637, %p638
      %p640 = scmp.ne.s32.totalorder %s631, %s632
      %p641 = scmp.eq.s32.totalorder %s54, 0
      %p642 = por %p640, %p641
      %p643 = scmp.ne.s32.totalorder %s631, %s632
      %p644 = scmp.eq.s32.totalorder %s55, 1
      %p645 = por %p643, %p644
      %p647 = scmp.ne.s32.totalorder %s632, %s646
      %p648 = scmp.eq.s32.totalorder %s55, 0
      %p649 = por %p647, %p648
      %s650 = ssub.s32 %s49, %s56
      %p651 = scmp.eq.s32.totalorder %s650, 0
      %s653 = sadd.s32 %s652, 1
      %s654 = scalar_select %p651, %s652, %s653
      %p657 = pneg %p651
      %p658 = scmp.eq.s32.totalorder %s49, 1
      %p659 = por %p657, %p658
      %p660 = scmp.ne.s32.totalorder %s652, %s655
      %p661 = scmp.eq.s32.totalorder %s49, 0
      %p662 = por %p660, %p661
      %p663 = scmp.ne.s32.totalorder %s652, %s655
      %p664 = scmp.eq.s32.totalorder %s54, 1
      %p665 = por %p663, %p664
      %p666 = scmp.ne.s32.totalorder %s655, %s656
      %p667 = scmp.eq.s32.totalorder %s54, 0
      %p668 = por %p666, %p667
      %p669 = scmp.ne.s32.totalorder %s655, %s656
      %p670 = scmp.eq.s32.totalorder %s55, 1
      %p671 = por %p669, %p670
      %p673 = scmp.ne.s32.totalorder %s656, %s672
      %p674 = scmp.eq.s32.totalorder %s55, 0
      %p675 = por %p673, %p674
      %p676 = scmp.le.s32.totalorder 1, %s49
      %p677 = scmp.lt.s32.totalorder %s49, 3
      %p678 = pnand %p676, %p677
      %p679 = pneg %p678
      // Predicated region
      $region9: #{tpu_custom_call.1} parent=5 // pred_check
        _
      $region10: #{tpu_custom_call.1} parent=5 // pred_check_branch
        %681 = sbr.rel (%p678) target = $region12
      $region11: #{tpu_custom_call.1} parent=5 // pred_region
        %s682 = ssub.s32 %s49, 1
        // Predicated region
        $region13: #{tpu_custom_call.1} parent=11 // pred_check
          %p683 = pneg %p96
        $region14: #{tpu_custom_call.1} parent=11 // pred_check_branch
          %685 = sbr.rel (%p683) target = $region16
        $region15: #{tpu_custom_call.1} parent=11 // pred_region
          %s687 = ssub.s32 64, 64
          %688 = vsyncadd [#allocation6], %s687
          %s690 = sshll.u32 [#allocation5], 4
          %s691 = int_to_ptr.vmem [resolvable:$true] %s690
          %693 = dma.hbm_to_vmem [thread:$0]  %s1, 64, %s691, [#allocation6]
        $region16: #{tpu_custom_call.1} parent=11 // pred_fallthru
          _
        // Predicated region
        $region17: #{tpu_custom_call.1} parent=11 // pred_check
          %p694 = pneg %p117
        $region18: #{tpu_custom_call.1} parent=11 // pred_check_branch
          %696 = sbr.rel (%p694) target = $region20
        $region19: #{tpu_custom_call.1} parent=11 // pred_region
          %s698 = ssub.s32 256, 256
          %699 = vsyncadd [#allocation6], %s698
          %s700 = sshll.u32 [#allocation7], 4
          %s701 = int_to_ptr.vmem [resolvable:$true] %s700
          %706 = dma.hbm_to_vmem [thread:$0]  %s2, 256, %s701, [#allocation6], 64, 64, 4
        $region20: #{tpu_custom_call.1} parent=11 // pred_fallthru
          _
        // Predicated region
        $region21: #{tpu_custom_call.1} parent=11 // pred_check
          %p707 = pneg %p138
        $region22: #{tpu_custom_call.1} parent=11 // pred_check_branch
          %709 = sbr.rel (%p707) target = $region24
        $region23: #{tpu_custom_call.1} parent=11 // pred_region
          %s711 = ssub.s32 16, 16
          %712 = vsyncadd [#allocation9], %s711
          %s714 = sshll.u32 [#allocation8], 4
          %s715 = int_to_ptr.vmem [resolvable:$true] %s714
          %717 = dma.hbm_to_vmem [thread:$0]  %s3, 16, %s715, [#allocation9]
        $region24: #{tpu_custom_call.1} parent=11 // pred_fallthru
          _
        // Predicated region
        $region25: #{tpu_custom_call.1} parent=11 // pred_check
          %p718 = pneg %p159
        $region26: #{tpu_custom_call.1} parent=11 // pred_check_branch
          %720 = sbr.rel (%p718) target = $region28
        $region27: #{tpu_custom_call.1} parent=11 // pred_region
          %s722 = ssub.s32 256, 256
          %723 = vsyncadd [#allocation9], %s722
          %s724 = sshll.u32 [#allocation10], 4
          %s725 = int_to_ptr.vmem [resolvable:$true] %s724
          %730 = dma.hbm_to_vmem [thread:$0]  %s4, 256, %s725, [#allocation9], 64, 64, 4
        $region28: #{tpu_custom_call.1} parent=11 // pred_fallthru
          _
        // Predicated region
        $region29: #{tpu_custom_call.1} parent=11 // pred_check
          %p731 = pneg %p180
        $region30: #{tpu_custom_call.1} parent=11 // pred_check_branch
          %733 = sbr.rel (%p731) target = $region32
        $region31: #{tpu_custom_call.1} parent=11 // pred_region
          %s735 = ssub.s32 16, 16
          %736 = vsyncadd [#allocation12], %s735
          %s738 = sshll.u32 [#allocation11], 4
          %s739 = int_to_ptr.vmem [resolvable:$true] %s738
          %741 = dma.hbm_to_vmem [thread:$0]  %s5, 16, %s739, [#allocation12]
        $region32: #{tpu_custom_call.1} parent=11 // pred_fallthru
          _
        // Predicated region
        $region33: #{tpu_custom_call.1} parent=11 // pred_check
          %p742 = pneg %p201
        $region34: #{tpu_custom_call.1} parent=11 // pred_check_branch
          %744 = sbr.rel (%p742) target = $region36
        $region35: #{tpu_custom_call.1} parent=11 // pred_region
          %s746 = ssub.s32 256, 256
          %747 = vsyncadd [#allocation12], %s746
          %s748 = sshll.u32 [#allocation13], 4
          %s749 = int_to_ptr.vmem [resolvable:$true] %s748
          %754 = dma.hbm_to_vmem [thread:$0]  %s6, 256, %s749, [#allocation12], 64, 64, 4
        $region36: #{tpu_custom_call.1} parent=11 // pred_fallthru
          _
        // Predicated region
        $region37: #{tpu_custom_call.1} parent=11 // pred_check
          %p755 = pneg %p222
        $region38: #{tpu_custom_call.1} parent=11 // pred_check_branch
          %757 = sbr.rel (%p755) target = $region40
        $region39: #{tpu_custom_call.1} parent=11 // pred_region
          %s759 = ssub.s32 16, 16
          %760 = vsyncadd [#allocation15], %s759
          %s762 = sshll.u32 [#allocation14], 4
          %s763 = int_to_ptr.vmem [resolvable:$true] %s762
          %765 = dma.hbm_to_vmem [thread:$0]  %s7, 16, %s763, [#allocation15]
        $region40: #{tpu_custom_call.1} parent=11 // pred_fallthru
          _
        // Predicated region
        $region41: #{tpu_custom_call.1} parent=11 // pred_check
          %p766 = pneg %p243
        $region42: #{tpu_custom_call.1} parent=11 // pred_check_branch
          %768 = sbr.rel (%p766) target = $region44
        $region43: #{tpu_custom_call.1} parent=11 // pred_region
          %s770 = ssub.s32 256, 256
          %771 = vsyncadd [#allocation15], %s770
          %s772 = sshll.u32 [#allocation16], 4
          %s773 = int_to_ptr.vmem [resolvable:$true] %s772
          %778 = dma.hbm_to_vmem [thread:$0]  %s8, 256, %s773, [#allocation15], 64, 64, 4
        $region44: #{tpu_custom_call.1} parent=11 // pred_fallthru
          _
        // Predicated region
        $region45: #{tpu_custom_call.1} parent=11 // pred_check
          %p779 = pneg %p264
        $region46: #{tpu_custom_call.1} parent=11 // pred_check_branch
          %781 = sbr.rel (%p779) target = $region48
        $region47: #{tpu_custom_call.1} parent=11 // pred_region
          %s783 = ssub.s32 16, 16
          %784 = vsyncadd [#allocation18], %s783
          %s786 = sshll.u32 [#allocation17], 4
          %s787 = int_to_ptr.vmem [resolvable:$true] %s786
          %789 = dma.hbm_to_vmem [thread:$0]  %s9, 16, %s787, [#allocation18]
        $region48: #{tpu_custom_call.1} parent=11 // pred_fallthru
          _
        // Predicated region
        $region49: #{tpu_custom_call.1} parent=11 // pred_check
          %p790 = pneg %p285
        $region50: #{tpu_custom_call.1} parent=11 // pred_check_branch
          %792 = sbr.rel (%p790) target = $region52
        $region51: #{tpu_custom_call.1} parent=11 // pred_region
          %s794 = ssub.s32 16, 16
          %795 = vsyncadd [#allocation18], %s794
          %s797 = sshll.u32 [#allocation19], 4
          %s798 = int_to_ptr.vmem [resolvable:$true] %s797
          %800 = dma.hbm_to_vmem [thread:$0]  %s10, 16, %s798, [#allocation18]
        $region52: #{tpu_custom_call.1} parent=11 // pred_fallthru
          _
        // Predicated region
        $region53: #{tpu_custom_call.1} parent=11 // pred_check
          %p801 = pneg %p306
        $region54: #{tpu_custom_call.1} parent=11 // pred_check_branch
          %803 = sbr.rel (%p801) target = $region56
        $region55: #{tpu_custom_call.1} parent=11 // pred_region
          %s805 = ssub.s32 16, 16
          %806 = vsyncadd [#allocation21], %s805
          %s808 = sshll.u32 [#allocation20], 4
          %s809 = int_to_ptr.vmem [resolvable:$true] %s808
          %811 = dma.hbm_to_vmem [thread:$0]  %s11, 16, %s809, [#allocation21]
        $region56: #{tpu_custom_call.1} parent=11 // pred_fallthru
          _
        // Predicated region
        $region57: #{tpu_custom_call.1} parent=11 // pred_check
          %p812 = pneg %p327
        $region58: #{tpu_custom_call.1} parent=11 // pred_check_branch
          %814 = sbr.rel (%p812) target = $region60
        $region59: #{tpu_custom_call.1} parent=11 // pred_region
          %s816 = ssub.s32 16, 16
          %817 = vsyncadd [#allocation21], %s816
          %s819 = sshll.u32 [#allocation22], 4
          %s820 = int_to_ptr.vmem [resolvable:$true] %s819
          %822 = dma.hbm_to_vmem [thread:$0]  %s12, 16, %s820, [#allocation21]
        $region60: #{tpu_custom_call.1} parent=11 // pred_fallthru
          _
        // Predicated region
        $region61: #{tpu_custom_call.1} parent=11 // pred_check
          %p823 = pneg %p348
        $region62: #{tpu_custom_call.1} parent=11 // pred_check_branch
          %825 = sbr.rel (%p823) target = $region64
        $region63: #{tpu_custom_call.1} parent=11 // pred_region
          %s827 = ssub.s32 16, 16
          %828 = vsyncadd [#allocation24], %s827
          %s830 = sshll.u32 [#allocation23], 4
          %s831 = int_to_ptr.vmem [resolvable:$true] %s830
          %833 = dma.hbm_to_vmem [thread:$0]  %s13, 16, %s831, [#allocation24]
        $region64: #{tpu_custom_call.1} parent=11 // pred_fallthru
          _
        // Predicated region
        $region65: #{tpu_custom_call.1} parent=11 // pred_check
          %p834 = pneg %p369
        $region66: #{tpu_custom_call.1} parent=11 // pred_check_branch
          %836 = sbr.rel (%p834) target = $region68
        $region67: #{tpu_custom_call.1} parent=11 // pred_region
          _
        $region68: #{tpu_custom_call.1} parent=11 // pred_fallthru
          _
        // Predicated region
        $region69: #{tpu_custom_call.1} parent=11 // pred_check
          %p837 = pneg %p390
        $region70: #{tpu_custom_call.1} parent=11 // pred_check_branch
          %839 = sbr.rel (%p837) target = $region72
        $region71: #{tpu_custom_call.1} parent=11 // pred_region
          %s841 = ssub.s32 16, 16
          %842 = vsyncadd [#allocation24], %s841
          %s844 = sshll.u32 [#allocation25], 4
          %s845 = int_to_ptr.vmem [resolvable:$true] %s844
          %847 = dma.hbm_to_vmem [thread:$0]  %s15, 16, %s845, [#allocation24]
        $region72: #{tpu_custom_call.1} parent=11 // pred_fallthru
          _
        // Predicated region
        $region73: #{tpu_custom_call.1} parent=11 // pred_check
          %p848 = pneg %p411
        $region74: #{tpu_custom_call.1} parent=11 // pred_check_branch
          %850 = sbr.rel (%p848) target = $region76
        $region75: #{tpu_custom_call.1} parent=11 // pred_region
          %s852 = ssub.s32 256, 256
          %853 = vsyncadd [#allocation27], %s852
          %s854 = sshll.u32 [#allocation26], 4
          %s855 = int_to_ptr.vmem [resolvable:$true] %s854
          %860 = dma.hbm_to_vmem [thread:$0]  %s16, 256, %s855, [#allocation27], 64, 64, 4
        $region76: #{tpu_custom_call.1} parent=11 // pred_fallthru
          _
        // Predicated region
        $region77: #{tpu_custom_call.1} parent=11 // pred_check
          %p861 = pneg %p432
        $region78: #{tpu_custom_call.1} parent=11 // pred_check_branch
          %863 = sbr.rel (%p861) target = $region80
        $region79: #{tpu_custom_call.1} parent=11 // pred_region
          %s865 = ssub.s32 16, 16
          %866 = vsyncadd [#allocation27], %s865
          %s868 = sshll.u32 [#allocation28], 4
          %s869 = int_to_ptr.vmem [resolvable:$true] %s868
          %871 = dma.hbm_to_vmem [thread:$0]  %s17, 16, %s869, [#allocation27]
        $region80: #{tpu_custom_call.1} parent=11 // pred_fallthru
          _
        // Predicated region
        $region81: #{tpu_custom_call.1} parent=11 // pred_check
          %p872 = pneg %p453
        $region82: #{tpu_custom_call.1} parent=11 // pred_check_branch
          %874 = sbr.rel (%p872) target = $region84
        $region83: #{tpu_custom_call.1} parent=11 // pred_region
          _
        $region84: #{tpu_custom_call.1} parent=11 // pred_fallthru
          _
        // Predicated region
        $region85: #{tpu_custom_call.1} parent=11 // pred_check
          %p875 = pneg %p474
        $region86: #{tpu_custom_call.1} parent=11 // pred_check_branch
          %877 = sbr.rel (%p875) target = $region88
        $region87: #{tpu_custom_call.1} parent=11 // pred_region
          _
        $region88: #{tpu_custom_call.1} parent=11 // pred_fallthru
          _
        // Predicated region
        $region89: #{tpu_custom_call.1} parent=11 // pred_check
          %p878 = pneg %p495
        $region90: #{tpu_custom_call.1} parent=11 // pred_check_branch
          %880 = sbr.rel (%p878) target = $region92
        $region91: #{tpu_custom_call.1} parent=11 // pred_region
          %s882 = ssub.s32 256, 256
          %883 = vsyncadd [#allocation30], %s882
          %s884 = sshll.u32 [#allocation29], 4
          %s885 = int_to_ptr.vmem [resolvable:$true] %s884
          %890 = dma.hbm_to_vmem [thread:$0]  %s20, 256, %s885, [#allocation30], 64, 64, 4
        $region92: #{tpu_custom_call.1} parent=11 // pred_fallthru
          _
        // Predicated region
        $region93: #{tpu_custom_call.1} parent=11 // pred_check
          %p891 = pneg %p516
        $region94: #{tpu_custom_call.1} parent=11 // pred_check_branch
          %893 = sbr.rel (%p891) target = $region96
        $region95: #{tpu_custom_call.1} parent=11 // pred_region
          _
        $region96: #{tpu_custom_call.1} parent=11 // pred_fallthru
          _
        // Predicated region
        $region97: #{tpu_custom_call.1} parent=11 // pred_check
          %p894 = pneg %p537
        $region98: #{tpu_custom_call.1} parent=11 // pred_check_branch
          %896 = sbr.rel (%p894) target = $region100
        $region99: #{tpu_custom_call.1} parent=11 // pred_region
          _
        $region100: #{tpu_custom_call.1} parent=11 // pred_fallthru
          _
        // Predicated region
        $region101: #{tpu_custom_call.1} parent=11 // pred_check
          %p897 = pneg %p558
        $region102: #{tpu_custom_call.1} parent=11 // pred_check_branch
          %899 = sbr.rel (%p897) target = $region104
        $region103: #{tpu_custom_call.1} parent=11 // pred_region
          _
        $region104: #{tpu_custom_call.1} parent=11 // pred_fallthru
          _
        // Predicated region
        $region105: #{tpu_custom_call.1} parent=11 // pred_check
          %p900 = pneg %p579
        $region106: #{tpu_custom_call.1} parent=11 // pred_check_branch
          %902 = sbr.rel (%p900) target = $region108
        $region107: #{tpu_custom_call.1} parent=11 // pred_region
          _
        $region108: #{tpu_custom_call.1} parent=11 // pred_fallthru
          _
        // Predicated region
        $region109: #{tpu_custom_call.1} parent=11 // pred_check
          %p903 = pneg %p600
        $region110: #{tpu_custom_call.1} parent=11 // pred_check_branch
          %905 = sbr.rel (%p903) target = $region112
        $region111: #{tpu_custom_call.1} parent=11 // pred_region
          _
        $region112: #{tpu_custom_call.1} parent=11 // pred_fallthru
          _
        // Predicated region
        $region113: #{tpu_custom_call.1} parent=11 // pred_check
          %p906 = pneg %p621
        $region114: #{tpu_custom_call.1} parent=11 // pred_check_branch
          %908 = sbr.rel (%p906) target = $region116
        $region115: #{tpu_custom_call.1} parent=11 // pred_region
          _
        $region116: #{tpu_custom_call.1} parent=11 // pred_fallthru
          _
        // Predicated region
        $region117: #{tpu_custom_call.1} parent=11 // pred_check
          %p909 = pneg %p642
        $region118: #{tpu_custom_call.1} parent=11 // pred_check_branch
          %911 = sbr.rel (%p909) target = $region120
        $region119: #{tpu_custom_call.1} parent=11 // pred_region
          _
        $region120: #{tpu_custom_call.1} parent=11 // pred_fallthru
          _
      $region12: #{tpu_custom_call.1} parent=5 // pred_fallthru
        _
      %p912 = scmp.lt.s32.totalorder %s49, 2
      // Predicated region
      $region121: #{tpu_custom_call.1} parent=5 // pred_check
        %p913 = pneg %p912
      $region122: #{tpu_custom_call.1} parent=5 // pred_check_branch
        %915 = sbr.rel (%p913) target = $region124
      $region123: #{tpu_custom_call.1} parent=5 // pred_region
        // Predicated region
        $region125: #{tpu_custom_call.1} parent=123 // pred_check
          %p916 = pneg %p69
        $region126: #{tpu_custom_call.1} parent=123 // pred_check_branch
          %918 = sbr.rel (%p916) target = $region128
        $region127: #{tpu_custom_call.1} parent=123 // pred_region
          %s919 = sand.u32 %s59, 1
          %s920 = scalar_lea.sflag [#allocation3], %s919
          %s921 = sand.u32 %s59, 1
          %s922 = smul.addr %s921, 32
          %s923 = scalar_lea.vmem [#allocation2], %s922
          %s924 = smul.u32 4, %s49
          %s926 = ssub.s32 512, 512
          %927 = vsyncadd %s920, %s926
          %s928 = smul.addr %s924, 128
          %s929 = scalar_lea.hbm %s0, %s928
          %s930 = sshll.u32 %s923, 4
          %s931 = int_to_ptr.vmem [resolvable:$true] %s930
          %936 = dma.hbm_to_vmem [thread:$0]  %s929, 512, %s931, %s920, 128, 128, 8
        $region128: #{tpu_custom_call.1} parent=123 // pred_fallthru
          _
      $region124: #{tpu_custom_call.1} parent=5 // pred_fallthru
        _
      %p937 = scmp.le.s32.totalorder 1, %s49
      %p938 = scmp.lt.s32.totalorder %s49, 3
      %p939 = pnand %p937, %p938
      %p940 = pneg %p939
      // Predicated region
      $region129: #{tpu_custom_call.1} parent=5 // pred_check
        _
      $region130: #{tpu_custom_call.1} parent=5 // pred_check_branch
        %942 = sbr.rel (%p939) target = $region132
      $region131: #{tpu_custom_call.1} parent=5 // pred_region
        %s943 = ssub.s32 %s49, 1
        %s944 = sand.u32 %s62, 1
        %s945 = scalar_lea.sflag [#allocation3], %s944
        %s946 = sand.u32 %s62, 1
        %s947 = smul.addr %s946, 32
        %s948 = scalar_lea.vmem [#allocation2], %s947
        // Predicated region
        $region133: #{tpu_custom_call.1} parent=131 // pred_check
          %p949 = pneg %p75
        $region134: #{tpu_custom_call.1} parent=131 // pred_check_branch
          %951 = sbr.rel (%p949) target = $region136
        $region135: #{tpu_custom_call.1} parent=131 // pred_region
          %952 = dma.done %s945, 512
        $region136: #{tpu_custom_call.1} parent=131 // pred_fallthru
          _
        // Predicated region
        $region137: #{tpu_custom_call.1} parent=131 // pred_check
          %p953 = pneg %p96
        $region138: #{tpu_custom_call.1} parent=131 // pred_check_branch
          %955 = sbr.rel (%p953) target = $region140
        $region139: #{tpu_custom_call.1} parent=131 // pred_region
          %956 = dma.done [#allocation6], 64
        $region140: #{tpu_custom_call.1} parent=131 // pred_fallthru
          _
        // Predicated region
        $region141: #{tpu_custom_call.1} parent=131 // pred_check
          %p957 = pneg %p117
        $region142: #{tpu_custom_call.1} parent=131 // pred_check_branch
          %959 = sbr.rel (%p957) target = $region144
        $region143: #{tpu_custom_call.1} parent=131 // pred_region
          %960 = dma.done [#allocation6], 256
        $region144: #{tpu_custom_call.1} parent=131 // pred_fallthru
          _
        // Predicated region
        $region145: #{tpu_custom_call.1} parent=131 // pred_check
          %p961 = pneg %p138
        $region146: #{tpu_custom_call.1} parent=131 // pred_check_branch
          %963 = sbr.rel (%p961) target = $region148
        $region147: #{tpu_custom_call.1} parent=131 // pred_region
          %964 = dma.done [#allocation9], 16
        $region148: #{tpu_custom_call.1} parent=131 // pred_fallthru
          _
        // Predicated region
        $region149: #{tpu_custom_call.1} parent=131 // pred_check
          %p965 = pneg %p159
        $region150: #{tpu_custom_call.1} parent=131 // pred_check_branch
          %967 = sbr.rel (%p965) target = $region152
        $region151: #{tpu_custom_call.1} parent=131 // pred_region
          %968 = dma.done [#allocation9], 256
        $region152: #{tpu_custom_call.1} parent=131 // pred_fallthru
          _
        // Predicated region
        $region153: #{tpu_custom_call.1} parent=131 // pred_check
          %p969 = pneg %p180
        $region154: #{tpu_custom_call.1} parent=131 // pred_check_branch
          %971 = sbr.rel (%p969) target = $region156
        $region155: #{tpu_custom_call.1} parent=131 // pred_region
          %972 = dma.done [#allocation12], 16
        $region156: #{tpu_custom_call.1} parent=131 // pred_fallthru
          _
        // Predicated region
        $region157: #{tpu_custom_call.1} parent=131 // pred_check
          %p973 = pneg %p201
        $region158: #{tpu_custom_call.1} parent=131 // pred_check_branch
          %975 = sbr.rel (%p973) target = $region160
        $region159: #{tpu_custom_call.1} parent=131 // pred_region
          %976 = dma.done [#allocation12], 256
        $region160: #{tpu_custom_call.1} parent=131 // pred_fallthru
          _
        // Predicated region
        $region161: #{tpu_custom_call.1} parent=131 // pred_check
          %p977 = pneg %p222
        $region162: #{tpu_custom_call.1} parent=131 // pred_check_branch
          %979 = sbr.rel (%p977) target = $region164
        $region163: #{tpu_custom_call.1} parent=131 // pred_region
          %980 = dma.done [#allocation15], 16
        $region164: #{tpu_custom_call.1} parent=131 // pred_fallthru
          _
        // Predicated region
        $region165: #{tpu_custom_call.1} parent=131 // pred_check
          %p981 = pneg %p243
        $region166: #{tpu_custom_call.1} parent=131 // pred_check_branch
          %983 = sbr.rel (%p981) target = $region168
        $region167: #{tpu_custom_call.1} parent=131 // pred_region
          %984 = dma.done [#allocation15], 256
        $region168: #{tpu_custom_call.1} parent=131 // pred_fallthru
          _
        // Predicated region
        $region169: #{tpu_custom_call.1} parent=131 // pred_check
          %p985 = pneg %p264
        $region170: #{tpu_custom_call.1} parent=131 // pred_check_branch
          %987 = sbr.rel (%p985) target = $region172
        $region171: #{tpu_custom_call.1} parent=131 // pred_region
          %988 = dma.done [#allocation18], 16
        $region172: #{tpu_custom_call.1} parent=131 // pred_fallthru
          _
        // Predicated region
        $region173: #{tpu_custom_call.1} parent=131 // pred_check
          %p989 = pneg %p285
        $region174: #{tpu_custom_call.1} parent=131 // pred_check_branch
          %991 = sbr.rel (%p989) target = $region176
        $region175: #{tpu_custom_call.1} parent=131 // pred_region
          %992 = dma.done [#allocation18], 16
        $region176: #{tpu_custom_call.1} parent=131 // pred_fallthru
          _
        // Predicated region
        $region177: #{tpu_custom_call.1} parent=131 // pred_check
          %p993 = pneg %p306
        $region178: #{tpu_custom_call.1} parent=131 // pred_check_branch
          %995 = sbr.rel (%p993) target = $region180
        $region179: #{tpu_custom_call.1} parent=131 // pred_region
          %996 = dma.done [#allocation21], 16
        $region180: #{tpu_custom_call.1} parent=131 // pred_fallthru
          _
        // Predicated region
        $region181: #{tpu_custom_call.1} parent=131 // pred_check
          %p997 = pneg %p327
        $region182: #{tpu_custom_call.1} parent=131 // pred_check_branch
          %999 = sbr.rel (%p997) target = $region184
        $region183: #{tpu_custom_call.1} parent=131 // pred_region
          %1000 = dma.done [#allocation21], 16
        $region184: #{tpu_custom_call.1} parent=131 // pred_fallthru
          _
        // Predicated region
        $region185: #{tpu_custom_call.1} parent=131 // pred_check
          %p1001 = pneg %p348
        $region186: #{tpu_custom_call.1} parent=131 // pred_check_branch
          %1003 = sbr.rel (%p1001) target = $region188
        $region187: #{tpu_custom_call.1} parent=131 // pred_region
          %1004 = dma.done [#allocation24], 16
        $region188: #{tpu_custom_call.1} parent=131 // pred_fallthru
          _
        // Predicated region
        $region189: #{tpu_custom_call.1} parent=131 // pred_check
          %p1005 = pneg %p390
        $region190: #{tpu_custom_call.1} parent=131 // pred_check_branch
          %1007 = sbr.rel (%p1005) target = $region192
        $region191: #{tpu_custom_call.1} parent=131 // pred_region
          %1008 = dma.done [#allocation24], 16
        $region192: #{tpu_custom_call.1} parent=131 // pred_fallthru
          _
        // Predicated region
        $region193: #{tpu_custom_call.1} parent=131 // pred_check
          %p1009 = pneg %p411
        $region194: #{tpu_custom_call.1} parent=131 // pred_check_branch
          %1011 = sbr.rel (%p1009) target = $region196
        $region195: #{tpu_custom_call.1} parent=131 // pred_region
          %1012 = dma.done [#allocation27], 256
        $region196: #{tpu_custom_call.1} parent=131 // pred_fallthru
          _
        // Predicated region
        $region197: #{tpu_custom_call.1} parent=131 // pred_check
          %p1013 = pneg %p432
        $region198: #{tpu_custom_call.1} parent=131 // pred_check_branch
          %1015 = sbr.rel (%p1013) target = $region200
        $region199: #{tpu_custom_call.1} parent=131 // pred_region
          %1016 = dma.done [#allocation27], 16
        $region200: #{tpu_custom_call.1} parent=131 // pred_fallthru
          _
        // Predicated region
        $region201: #{tpu_custom_call.1} parent=131 // pred_check
          %p1017 = pneg %p495
        $region202: #{tpu_custom_call.1} parent=131 // pred_check_branch
          %1019 = sbr.rel (%p1017) target = $region204
        $region203: #{tpu_custom_call.1} parent=131 // pred_region
          %1020 = dma.done [#allocation30], 256
        $region204: #{tpu_custom_call.1} parent=131 // pred_fallthru
          _
        %s1021 = sand.u32 %s62, 1
        %s1022 = scalar_lea.sflag [#allocation3], %s1021
        %s1023 = sand.u32 %s62, 1
        %s1024 = smul.addr %s1023, 32
        %s1025 = scalar_lea.vmem [#allocation2], %s1024
        %p1026 = pneg %p75
        %p1027 = pneg %p72
        %p1028 = pneg %p96
        %p1029 = pneg %p93
        %p1030 = pneg %p117
        %p1031 = pneg %p114
        %p1032 = pneg %p138
        %p1033 = pneg %p135
        %p1034 = pneg %p159
        %p1035 = pneg %p156
        %p1036 = pneg %p180
        %p1037 = pneg %p177
        %p1038 = pneg %p201
        %p1039 = pneg %p198
        %p1040 = pneg %p222
        %p1041 = pneg %p219
        %p1042 = pneg %p243
        %p1043 = pneg %p240
        %p1044 = pneg %p264
        %p1045 = pneg %p261
        %p1046 = pneg %p285
        %p1047 = pneg %p282
        %p1048 = pneg %p306
        %p1049 = pneg %p303
        %p1050 = pneg %p327
        %p1051 = pneg %p324
        %p1052 = pneg %p348
        %p1053 = pneg %p345
        %p1054 = pneg %p369
        %p1055 = pneg %p366
        %p1056 = pneg %p390
        %p1057 = pneg %p387
        %p1058 = pneg %p411
        %p1059 = pneg %p408
        %p1060 = pneg %p432
        %p1061 = pneg %p429
        %p1062 = pneg %p453
        %p1063 = pneg %p450
        %p1064 = pneg %p474
        %p1065 = pneg %p471
        %p1066 = pneg %p495
        %p1067 = pneg %p492
        %p1068 = pneg %p516
        %p1069 = pneg %p513
        %p1070 = pneg %p537
        %p1071 = pneg %p534
        %p1072 = pneg %p558
        %p1073 = pneg %p555
        %p1074 = pneg %p579
        %p1075 = pneg %p576
        %p1076 = pneg %p600
        %p1077 = pneg %p597
        %p1078 = pneg %p621
        %p1079 = pneg %p618
        %p1080 = pneg %p642
        %p1081 = pneg %p639
        %p1082 = pneg %p668
        %p1083 = pneg %p665
        %s1084 = sand.u32 %s655, 1
        %s1085 = scalar_lea.sflag [#allocation4], %s1084
        %s1086 = sand.u32 %s655, 1
        %s1087 = smul.addr %s1086, 32
        %s1088 = scalar_lea.vmem [#allocation31], %s1087
        %s1089 = smul.u32 4, %s54
        %s1090 = smul.u32 4, %s54
        %v1092 = vld [vmem:[%s948] sm:$0xff]
        %v1093 = vld [vmem:[%s948 + $0x8] sm:$0xff]
        %v1094 = vld [vmem:[%s948 + $0x10] sm:$0xff]
        %v1095 = vld [vmem:[%s948 + $0x18] sm:$0xff]
        %v1096 = vld [vmem:[#allocation5] sm:$0xf]
        %vm1097 = vcmask 261120
        %v1098 = vsel %vm1097, %v1092, 0.0
        %1099 = vadd.xlane.f32.xlu0 %v1098
        %v1100 = vpop.xlane.xlu0 %1099
        %v1101 = vsel %vm1097, %v1093, 0.0
        %1102 = vadd.xlane.f32.xlu0 %v1101
        %v1103 = vpop.xlane.xlu0 %1102
        %v1104 = vsel %vm1097, %v1094, 0.0
        %1105 = vadd.xlane.f32.xlu0 %v1104
        %v1106 = vpop.xlane.xlu0 %1105
        %v1107 = vsel %vm1097, %v1095, 0.0
        %1108 = vadd.xlane.f32.xlu0 %v1107
        %v1109 = vpop.xlane.xlu0 %1108
        %v1110 = vrcp.pop 32.0
        %v1111 = vmul.f32 %v1100, %v1110
        %v1112 = vmul.f32 %v1103, %v1110
        %v1113 = vmul.f32 %v1106, %v1110
        %v1114 = vmul.f32 %v1109, %v1110
        %v1115 = vrot.slane %v1111, 4
        %v1116 = vadd.f32 %v1111, %v1115
        %v1117 = vrot.slane %v1116, 2
        %v1118 = vadd.f32 %v1116, %v1117
        %v1119 = vrot.slane %v1118, 1
        %v1120 = vadd.f32 %v1118, %v1119
        %v1121 = vrot.slane %v1112, 4
        %v1122 = vadd.f32 %v1112, %v1121
        %v1123 = vrot.slane %v1122, 2
        %v1124 = vadd.f32 %v1122, %v1123
        %v1125 = vrot.slane %v1124, 1
        %v1126 = vadd.f32 %v1124, %v1125
        %v1127 = vrot.slane %v1113, 4
        %v1128 = vadd.f32 %v1113, %v1127
        %v1129 = vrot.slane %v1128, 2
        %v1130 = vadd.f32 %v1128, %v1129
        %v1131 = vrot.slane %v1130, 1
        %v1132 = vadd.f32 %v1130, %v1131
        %v1133 = vrot.slane %v1114, 4
        %v1134 = vadd.f32 %v1114, %v1133
        %v1135 = vrot.slane %v1134, 2
        %v1136 = vadd.f32 %v1134, %v1135
        %v1137 = vrot.slane %v1136, 1
        %v1138 = vadd.f32 %v1136, %v1137
        %v1139 = vrcp.pop 8.0
        %v1140 = vmul.f32 %v1120, %v1139
        %v1141 = vmul.f32 %v1126, %v1139
        %v1142 = vmul.f32 %v1132, %v1139
        %v1143 = vmul.f32 %v1138, %v1139
        %v1144 = vsub.f32 %v1092, %v1140
        %v1145 = vsub.f32 %v1093, %v1141
        %v1146 = vsub.f32 %v1094, %v1142
        %v1147 = vsub.f32 %v1095, %v1143
        %v1148 = vmul.f32 %v1144, %v1144
        %v1149 = vmul.f32 %v1145, %v1145
        %v1150 = vmul.f32 %v1146, %v1146
        %v1151 = vmul.f32 %v1147, %v1147
        %v1152 = vsel %vm1097, %v1148, 0.0
        %1153 = vadd.xlane.f32.xlu0 %v1152
        %v1154 = vpop.xlane.xlu0 %1153
        %v1155 = vsel %vm1097, %v1149, 0.0
        %1156 = vadd.xlane.f32.xlu0 %v1155
        %v1157 = vpop.xlane.xlu0 %1156
        %v1158 = vsel %vm1097, %v1150, 0.0
        %1159 = vadd.xlane.f32.xlu0 %v1158
        %v1160 = vpop.xlane.xlu0 %1159
        %v1161 = vsel %vm1097, %v1151, 0.0
        %1162 = vadd.xlane.f32.xlu0 %v1161
        %v1163 = vpop.xlane.xlu0 %1162
        %v1164 = vmul.f32 %v1154, %v1110
        %v1165 = vmul.f32 %v1157, %v1110
        %v1166 = vmul.f32 %v1160, %v1110
        %v1167 = vmul.f32 %v1163, %v1110
        %v1168 = vrot.slane %v1164, 4
        %v1169 = vadd.f32 %v1164, %v1168
        %v1170 = vrot.slane %v1169, 2
        %v1171 = vadd.f32 %v1169, %v1170
        %v1172 = vrot.slane %v1171, 1
        %v1173 = vadd.f32 %v1171, %v1172
        %v1174 = vrot.slane %v1165, 4
        %v1175 = vadd.f32 %v1165, %v1174
        %v1176 = vrot.slane %v1175, 2
        %v1177 = vadd.f32 %v1175, %v1176
        %v1178 = vrot.slane %v1177, 1
        %v1179 = vadd.f32 %v1177, %v1178
        %v1180 = vrot.slane %v1166, 4
        %v1181 = vadd.f32 %v1166, %v1180
        %v1182 = vrot.slane %v1181, 2
        %v1183 = vadd.f32 %v1181, %v1182
        %v1184 = vrot.slane %v1183, 1
        %v1185 = vadd.f32 %v1183, %v1184
        %v1186 = vrot.slane %v1167, 4
        %v1187 = vadd.f32 %v1167, %v1186
        %v1188 = vrot.slane %v1187, 2
        %v1189 = vadd.f32 %v1187, %v1188
        %v1190 = vrot.slane %v1189, 1
        %v1191 = vadd.f32 %v1189, %v1190
        %v1192 = vmul.f32 %v1173, %v1139
        %v1193 = vmul.f32 %v1179, %v1139
        %v1194 = vmul.f32 %v1185, %v1139
        %v1195 = vmul.f32 %v1191, %v1139
        %v1196 = vadd.f32 %v1192, 1e-05
        %v1197 = vadd.f32 %v1193, 1e-05
        %v1198 = vadd.f32 %v1194, 1e-05
        %v1199 = vadd.f32 %v1195, 1e-05
        %v1200 = vrsqrt.pop %v1196
        %v1201 = vrsqrt.pop %v1197
        %v1202 = vrsqrt.pop %v1198
        %v1203 = vrsqrt.pop %v1199
        %v1204 = vmul.f32 %v1144, %v1200
        %v1205 = vmul.f32 %v1145, %v1201
        %v1206 = vmul.f32 %v1146, %v1202
        %v1207 = vmul.f32 %v1147, %v1203
        %v1208 = vld [vmem:[#allocation19] sm:$0x1]
        %v1210 = vlaneseq
        %v1211 = vshrl.u32 %v1210, 7
        %v1212 = vsub.s32 0, %v1211
        %v1213 = vrot.slane %v1208, %v1212
        %v1215 = vmul.f32 %v1204, %v1213
        %v1216 = vmul.f32 %v1205, %v1213
        %v1217 = vmul.f32 %v1206, %v1213
        %v1218 = vmul.f32 %v1207, %v1213
        %v1219 = vld [vmem:[#allocation20] sm:$0x1]
        %v1221 = vlaneseq
        %v1222 = vshrl.u32 %v1221, 7
        %v1223 = vsub.s32 0, %v1222
        %v1224 = vrot.slane %v1219, %v1223
        %v1226 = vadd.f32 %v1215, %v1224
        %v1227 = vadd.f32 %v1216, %v1224
        %v1228 = vadd.f32 %v1217, %v1224
        %v1229 = vadd.f32 %v1218, %v1224
        %v1230 = vpack.c.bf16 %v1227, %v1226
        %v1231 = vpack.c.bf16 %v1229, %v1228
        %v1232 = vld [vmem:[#allocation10] sm:$0xf]
        %v1233 = vld [vmem:[#allocation10 + $0x4] sm:$0xf]
        %v1234 = vld [vmem:[#allocation10 + $0x8] sm:$0xf]
        %v1235 = vld [vmem:[#allocation10 + $0xc] sm:$0xf]
        %v1236 = vld [vmem:[#allocation11] sm:$0x1]
        %v1238 = vlaneseq
        %v1239 = vshrl.u32 %v1238, 7
        %v1240 = vsub.s32 0, %v1239
        %v1241 = vrot.slane %v1236, %v1240
        %v1247 = vunpack.c.l.b16 %v1232
        %v1248 = vunpack.c.l.b16 %v1233
        %v1249 = vunpack.c.l.b16 %v1234
        %v1250 = vunpack.c.l.b16 %v1235
        %v1251 = vpack.c.b16 %v1248, %v1247
        %v1252 = vpack.c.b16 %v1250, %v1249
        %v1256 = vsel %vm1097, %v1230, 0
        %v1259 = vsel %vm1097, %v1231, 0
        %1261 = vmatprep.subr.bf16.mxu0 0
        %1262 = vmatpush1.bf16.msra.mxu0 0
        %1263 = vmatprep.subr.bf16.mxu0 0
        %1264 = vmatpush1.bf16.msra.mxu0 0
        %1265 = vmatprep.subr.bf16.mxu0 0
        %1266 = vmatpush1.bf16.msra.mxu0 0
        %1267 = vmatprep.subr.bf16.mxu0 0
        %1268 = vmatpush1.bf16.msra.mxu0 0
        %1269 = vmatprep.subr.bf16.mxu0 0
        %1270 = vmatpush1.bf16.msra.mxu0 0
        %1271 = vmatprep.subr.bf16.mxu0 0
        %1272 = vmatpush1.bf16.msra.mxu0 0
        %1273 = vmatprep.subr.bf16.mxu0 0
        %1274 = vmatpush1.bf16.msra.mxu0 %v1252
        %1275 = vmatprep.subr.bf16.mxu0 0
        %1276 = vmatpush1.bf16.msra.mxu0 %v1251
        %1277 = vmatprep.subr.bf16.mxu0 0
        %1278 = vmatpush2.bf16.msra.mxu0 0
        %1279 = vmatprep.subr.bf16.mxu0 0
        %1280 = vmatpush2.bf16.msra.mxu0 0
        %1281 = vmatprep.subr.bf16.mxu0 0
        %1282 = vmatpush2.bf16.msra.mxu0 0
        %1283 = vmatprep.subr.bf16.mxu0 0
        %1284 = vmatpush2.bf16.msra.mxu0 0
        %1285 = vmatprep.subr.bf16.mxu0 0
        %1286 = vmatpush2.bf16.msra.mxu0 0
        %1287 = vmatprep.subr.bf16.mxu0 0
        %1288 = vmatpush2.bf16.msra.mxu0 0
        %1289 = vmatprep.subr.bf16.mxu0 0
        %1290 = vmatpush2.bf16.msra.mxu0 0
        %1291 = vmatprep.subr.bf16.mxu0 0
        %1292 = vmatpush2.bf16.msra.mxu0 0
        %1293 = vmatprep.mubr.bf16.mxu0 0
        %1294 = vmatmul.mubr.bf16.gmra.mxu0 %v1256
        %v1295 = vpop.f32.mrf.mxu0
        %v1296 = vadd.f32 %v1241, %v1295
        %v1297 = vpop.f32.mrf.mxu0
        %v1298 = vpop.f32.mrf.mxu0
        %v1299 = vadd.f32 %v1241, %v1298
        %v1300 = vpop.f32.mrf.mxu0
        %1301 = vmatprep.mubr.bf16.mxu0 0
        %1302 = vmatmul.mubr.bf16.gmra.mxu0 %v1259
        %v1303 = vpop.f32.mrf.mxu0
        %v1304 = vadd.f32 %v1241, %v1303
        %v1305 = vpop.f32.mrf.mxu0
        %v1306 = vpop.f32.mrf.mxu0
        %v1307 = vadd.f32 %v1241, %v1306
        %v1308 = vpop.f32.mrf.mxu0
        %1309 = vdwg.mxu0
        %v1310 = vld [vmem:[#allocation13] sm:$0xf]
        %v1311 = vld [vmem:[#allocation13 + $0x4] sm:$0xf]
        %v1312 = vld [vmem:[#allocation13 + $0x8] sm:$0xf]
        %v1313 = vld [vmem:[#allocation13 + $0xc] sm:$0xf]
        %v1314 = vld [vmem:[#allocation14] sm:$0x1]
        %v1316 = vlaneseq
        %v1317 = vshrl.u32 %v1316, 7
        %v1318 = vsub.s32 0, %v1317
        %v1319 = vrot.slane %v1314, %v1318
        %v1325 = vunpack.c.l.b16 %v1310
        %v1326 = vunpack.c.l.b16 %v1311
        %v1327 = vunpack.c.l.b16 %v1312
        %v1328 = vunpack.c.l.b16 %v1313
        %v1329 = vpack.c.b16 %v1326, %v1325
        %v1330 = vpack.c.b16 %v1328, %v1327
        %1333 = vmatprep.subr.bf16.mxu0 0
        %1334 = vmatpush1.bf16.msra.mxu0 0
        %1335 = vmatprep.subr.bf16.mxu0 0
        %1336 = vmatpush1.bf16.msra.mxu0 0
        %1337 = vmatprep.subr.bf16.mxu0 0
        %1338 = vmatpush1.bf16.msra.mxu0 0
        %1339 = vmatprep.subr.bf16.mxu0 0
        %1340 = vmatpush1.bf16.msra.mxu0 0
        %1341 = vmatprep.subr.bf16.mxu0 0
        %1342 = vmatpush1.bf16.msra.mxu0 0
        %1343 = vmatprep.subr.bf16.mxu0 0
        %1344 = vmatpush1.bf16.msra.mxu0 0
        %1345 = vmatprep.subr.bf16.mxu0 0
        %1346 = vmatpush1.bf16.msra.mxu0 %v1330
        %1347 = vmatprep.subr.bf16.mxu0 0
        %1348 = vmatpush1.bf16.msra.mxu0 %v1329
        %1349 = vmatprep.subr.bf16.mxu0 0
        %1350 = vmatpush2.bf16.msra.mxu0 0
        %1351 = vmatprep.subr.bf16.mxu0 0
        %1352 = vmatpush2.bf16.msra.mxu0 0
        %1353 = vmatprep.subr.bf16.mxu0 0
        %1354 = vmatpush2.bf16.msra.mxu0 0
        %1355 = vmatprep.subr.bf16.mxu0 0
        %1356 = vmatpush2.bf16.msra.mxu0 0
        %1357 = vmatprep.subr.bf16.mxu0 0
        %1358 = vmatpush2.bf16.msra.mxu0 0
        %1359 = vmatprep.subr.bf16.mxu0 0
        %1360 = vmatpush2.bf16.msra.mxu0 0
        %1361 = vmatprep.subr.bf16.mxu0 0
        %1362 = vmatpush2.bf16.msra.mxu0 0
        %1363 = vmatprep.subr.bf16.mxu0 0
        %1364 = vmatpush2.bf16.msra.mxu0 0
        %1365 = vmatprep.mubr.bf16.mxu0 0
        %1366 = vmatmul.mubr.bf16.gmra.mxu0 %v1256
        %v1367 = vpop.f32.mrf.mxu0
        %v1368 = vadd.f32 %v1319, %v1367
        %v1369 = vpop.f32.mrf.mxu0
        %v1370 = vpop.f32.mrf.mxu0
        %v1371 = vadd.f32 %v1319, %v1370
        %v1372 = vpop.f32.mrf.mxu0
        %1373 = vmatprep.mubr.bf16.mxu0 0
        %1374 = vmatmul.mubr.bf16.gmra.mxu0 %v1259
        %v1375 = vpop.f32.mrf.mxu0
        %v1376 = vadd.f32 %v1319, %v1375
        %v1377 = vpop.f32.mrf.mxu0
        %v1378 = vpop.f32.mrf.mxu0
        %v1379 = vadd.f32 %v1319, %v1378
        %v1380 = vpop.f32.mrf.mxu0
        %1381 = vdwg.mxu0
        %v1382 = vpack.c.bf16 %v1096, %v1096
        %v1383 = vld [vmem:[#allocation7] sm:$0xf]
        %v1384 = vld [vmem:[#allocation7 + $0x4] sm:$0xf]
        %v1385 = vld [vmem:[#allocation7 + $0x8] sm:$0xf]
        %v1386 = vld [vmem:[#allocation7 + $0xc] sm:$0xf]
        %v1387 = vld [vmem:[#allocation8] sm:$0x1]
        %v1389 = vlaneseq
        %v1390 = vshrl.u32 %v1389, 7
        %v1391 = vsub.s32 0, %v1390
        %v1392 = vrot.slane %v1387, %v1391
        %v1398 = vunpack.c.l.b16 %v1383
        %v1399 = vunpack.c.l.b16 %v1384
        %v1400 = vunpack.c.l.b16 %v1385
        %v1401 = vunpack.c.l.b16 %v1386
        %v1402 = vpack.c.b16 %v1399, %v1398
        %v1403 = vpack.c.b16 %v1401, %v1400
        %v1407 = vsel %vm1097, %v1382, 0
        %1409 = vmatprep.subr.bf16.mxu0 0
        %1410 = vmatpush1.bf16.msra.mxu0 0
        %1411 = vmatprep.subr.bf16.mxu0 0
        %1412 = vmatpush1.bf16.msra.mxu0 0
        %1413 = vmatprep.subr.bf16.mxu0 0
        %1414 = vmatpush1.bf16.msra.mxu0 0
        %1415 = vmatprep.subr.bf16.mxu0 0
        %1416 = vmatpush1.bf16.msra.mxu0 0
        %1417 = vmatprep.subr.bf16.mxu0 0
        %1418 = vmatpush1.bf16.msra.mxu0 0
        %1419 = vmatprep.subr.bf16.mxu0 0
        %1420 = vmatpush1.bf16.msra.mxu0 0
        %1421 = vmatprep.subr.bf16.mxu0 0
        %1422 = vmatpush1.bf16.msra.mxu0 %v1403
        %1423 = vmatprep.subr.bf16.mxu0 0
        %1424 = vmatpush1.bf16.msra.mxu0 %v1402
        %1425 = vmatprep.subr.bf16.mxu0 0
        %1426 = vmatpush2.bf16.msra.mxu0 0
        %1427 = vmatprep.subr.bf16.mxu0 0
        %1428 = vmatpush2.bf16.msra.mxu0 0
        %1429 = vmatprep.subr.bf16.mxu0 0
        %1430 = vmatpush2.bf16.msra.mxu0 0
        %1431 = vmatprep.subr.bf16.mxu0 0
        %1432 = vmatpush2.bf16.msra.mxu0 0
        %1433 = vmatprep.subr.bf16.mxu0 0
        %1434 = vmatpush2.bf16.msra.mxu0 0
        %1435 = vmatprep.subr.bf16.mxu0 0
        %1436 = vmatpush2.bf16.msra.mxu0 0
        %1437 = vmatprep.subr.bf16.mxu0 0
        %1438 = vmatpush2.bf16.msra.mxu0 0
        %1439 = vmatprep.subr.bf16.mxu0 0
        %1440 = vmatpush2.bf16.msra.mxu0 0
        %1441 = vmatprep.mubr.bf16.mxu0 0
        %1442 = vmatmul.mubr.bf16.gmra.mxu0 %v1407
        %v1443 = vpop.f32.mrf.mxu0
        %v1444 = vadd.f32 %v1392, %v1443
        %v1445 = vpop.f32.mrf.mxu0
        %v1446 = vpop.f32.mrf.mxu0
        %v1447 = vpop.f32.mrf.mxu0
        %1448 = vdwg.mxu0
        %v1449 = vmul.f32 %v1444, 0.17677669
        %1451 = vrot.lane.b32.xlu0 %v1449, 120
        %v1452 = vpop.permute.xlu0 %1451
        %1454 = vrot.lane.b32.xlu0 %v1449, 112
        %v1455 = vpop.permute.xlu0 %1454
        %1457 = vrot.lane.b32.xlu0 %v1449, 104
        %v1458 = vpop.permute.xlu0 %1457
        %v1460 = vpack.c.bf16 %v1449, %v1449
        %v1461 = vpack.c.bf16 %v1452, %v1452
        %v1462 = vpack.c.bf16 %v1455, %v1455
        %v1463 = vpack.c.bf16 %v1458, %v1458
        %1468 = vrot.lane.b32.xlu0 %v1296, 120
        %v1469 = vpop.permute.xlu0 %1468
        %1470 = vrot.lane.b32.xlu0 %v1299, 120
        %v1471 = vpop.permute.xlu0 %1470
        %1472 = vrot.lane.b32.xlu0 %v1304, 120
        %v1473 = vpop.permute.xlu0 %1472
        %1474 = vrot.lane.b32.xlu0 %v1307, 120
        %v1475 = vpop.permute.xlu0 %1474
        %1480 = vrot.lane.b32.xlu0 %v1296, 112
        %v1481 = vpop.permute.xlu0 %1480
        %1482 = vrot.lane.b32.xlu0 %v1299, 112
        %v1483 = vpop.permute.xlu0 %1482
        %1484 = vrot.lane.b32.xlu0 %v1304, 112
        %v1485 = vpop.permute.xlu0 %1484
        %1486 = vrot.lane.b32.xlu0 %v1307, 112
        %v1487 = vpop.permute.xlu0 %1486
        %1492 = vrot.lane.b32.xlu0 %v1296, 104
        %v1493 = vpop.permute.xlu0 %1492
        %1494 = vrot.lane.b32.xlu0 %v1299, 104
        %v1495 = vpop.permute.xlu0 %1494
        %1496 = vrot.lane.b32.xlu0 %v1304, 104
        %v1497 = vpop.permute.xlu0 %1496
        %1498 = vrot.lane.b32.xlu0 %v1307, 104
        %v1499 = vpop.permute.xlu0 %1498
        %v1504 = vpack.c.bf16 %v1296, %v1296
        %v1505 = vpack.c.bf16 %v1299, %v1299
        %v1506 = vpack.c.bf16 %v1304, %v1304
        %v1507 = vpack.c.bf16 %v1307, %v1307
        %v1508 = vpack.c.bf16 %v1469, %v1469
        %v1509 = vpack.c.bf16 %v1471, %v1471
        %v1510 = vpack.c.bf16 %v1473, %v1473
        %v1511 = vpack.c.bf16 %v1475, %v1475
        %v1512 = vpack.c.bf16 %v1481, %v1481
        %v1513 = vpack.c.bf16 %v1483, %v1483
        %v1514 = vpack.c.bf16 %v1485, %v1485
        %v1515 = vpack.c.bf16 %v1487, %v1487
        %v1516 = vpack.c.bf16 %v1493, %v1493
        %v1517 = vpack.c.bf16 %v1495, %v1495
        %v1518 = vpack.c.bf16 %v1497, %v1497
        %v1519 = vpack.c.bf16 %v1499, %v1499
        %1524 = vrot.lane.b32.xlu0 %v1368, 120
        %v1525 = vpop.permute.xlu0 %1524
        %1526 = vrot.lane.b32.xlu0 %v1371, 120
        %v1527 = vpop.permute.xlu0 %1526
        %1528 = vrot.lane.b32.xlu0 %v1376, 120
        %v1529 = vpop.permute.xlu0 %1528
        %1530 = vrot.lane.b32.xlu0 %v1379, 120
        %v1531 = vpop.permute.xlu0 %1530
        %1536 = vrot.lane.b32.xlu0 %v1368, 112
        %v1537 = vpop.permute.xlu0 %1536
        %1538 = vrot.lane.b32.xlu0 %v1371, 112
        %v1539 = vpop.permute.xlu0 %1538
        %1540 = vrot.lane.b32.xlu0 %v1376, 112
        %v1541 = vpop.permute.xlu0 %1540
        %1542 = vrot.lane.b32.xlu0 %v1379, 112
        %v1543 = vpop.permute.xlu0 %1542
        %1548 = vrot.lane.b32.xlu0 %v1368, 104
        %v1549 = vpop.permute.xlu0 %1548
        %1550 = vrot.lane.b32.xlu0 %v1371, 104
        %v1551 = vpop.permute.xlu0 %1550
        %1552 = vrot.lane.b32.xlu0 %v1376, 104
        %v1553 = vpop.permute.xlu0 %1552
        %1554 = vrot.lane.b32.xlu0 %v1379, 104
        %v1555 = vpop.permute.xlu0 %1554
        %v1560 = vpack.c.bf16 %v1368, %v1368
        %v1561 = vpack.c.bf16 %v1371, %v1371
        %v1562 = vpack.c.bf16 %v1376, %v1376
        %v1563 = vpack.c.bf16 %v1379, %v1379
        %v1564 = vpack.c.bf16 %v1525, %v1525
        %v1565 = vpack.c.bf16 %v1527, %v1527
        %v1566 = vpack.c.bf16 %v1529, %v1529
        %v1567 = vpack.c.bf16 %v1531, %v1531
        %v1568 = vpack.c.bf16 %v1537, %v1537
        %v1569 = vpack.c.bf16 %v1539, %v1539
        %v1570 = vpack.c.bf16 %v1541, %v1541
        %v1571 = vpack.c.bf16 %v1543, %v1543
        %v1572 = vpack.c.bf16 %v1549, %v1549
        %v1573 = vpack.c.bf16 %v1551, %v1551
        %v1574 = vpack.c.bf16 %v1553, %v1553
        %v1575 = vpack.c.bf16 %v1555, %v1555
        %vm1576 = vcmask 64512
        %v1578 = vsel %vm1576, %v1460, 0
        %v1581 = vsel %vm1576, %v1504, 0
        %1583 = vmatprep.subr.bf16.mxu0 0
        %1584 = vmatpush1.bf16.xpose.msra.mxu0 0
        %1585 = vmatprep.subr.bf16.mxu0 0
        %1586 = vmatpush1.bf16.xpose.msra.mxu0 0
        %1587 = vmatprep.subr.bf16.mxu0 0
        %1588 = vmatpush1.bf16.xpose.msra.mxu0 0
        %1589 = vmatprep.subr.bf16.mxu0 0
        %1590 = vmatpush1.bf16.xpose.msra.mxu0 0
        %1591 = vmatprep.subr.bf16.mxu0 0
        %1592 = vmatpush1.bf16.xpose.msra.mxu0 0
        %1593 = vmatprep.subr.bf16.mxu0 0
        %1594 = vmatpush1.bf16.xpose.msra.mxu0 0
        %1595 = vmatprep.subr.bf16.mxu0 0
        %1596 = vmatpush1.bf16.xpose.msra.mxu0 0
        %1597 = vmatprep.subr.bf16.mxu0 0
        %1598 = vmatpush1.bf16.xpose.msra.mxu0 %v1581
        %1599 = vmatprep.subr.bf16.mxu0 0
        %1600 = vmatpush2.bf16.xpose.msra.mxu0 0
        %1601 = vmatprep.subr.bf16.mxu0 0
        %1602 = vmatpush2.bf16.xpose.msra.mxu0 0
        %1603 = vmatprep.subr.bf16.mxu0 0
        %1604 = vmatpush2.bf16.xpose.msra.mxu0 0
        %1605 = vmatprep.subr.bf16.mxu0 0
        %1606 = vmatpush2.bf16.xpose.msra.mxu0 0
        %1607 = vmatprep.subr.bf16.mxu0 0
        %1608 = vmatpush2.bf16.xpose.msra.mxu0 0
        %1609 = vmatprep.subr.bf16.mxu0 0
        %1610 = vmatpush2.bf16.xpose.msra.mxu0 0
        %1611 = vmatprep.subr.bf16.mxu0 0
        %1612 = vmatpush2.bf16.xpose.msra.mxu0 0
        %1613 = vmatprep.subr.bf16.mxu0 0
        %1614 = vmatpush2.bf16.xpose.msra.mxu0 0
        %1615 = vmatprep.mubr.bf16.mxu0 0
        %1616 = vmatmul.mubr.bf16.gmra.mxu0 %v1578
        %v1617 = vpop.f32.mrf.mxu0
        %v1618 = vadd.f32 0.0, %v1617
        %v1619 = vpop.f32.mrf.mxu0
        %v1620 = vpop.f32.mrf.mxu0
        %v1621 = vpop.f32.mrf.mxu0
        %1622 = vdwg.mxu0
        %v1624 = vsel %vm1576, %v1505, 0
        %1626 = vmatprep.subr.bf16.mxu0 0
        %1627 = vmatpush1.bf16.xpose.msra.mxu0 0
        %1628 = vmatprep.subr.bf16.mxu0 0
        %1629 = vmatpush1.bf16.xpose.msra.mxu0 0
        %1630 = vmatprep.subr.bf16.mxu0 0
        %1631 = vmatpush1.bf16.xpose.msra.mxu0 0
        %1632 = vmatprep.subr.bf16.mxu0 0
        %1633 = vmatpush1.bf16.xpose.msra.mxu0 0
        %1634 = vmatprep.subr.bf16.mxu0 0
        %1635 = vmatpush1.bf16.xpose.msra.mxu0 0
        %1636 = vmatprep.subr.bf16.mxu0 0
        %1637 = vmatpush1.bf16.xpose.msra.mxu0 0
        %1638 = vmatprep.subr.bf16.mxu0 0
        %1639 = vmatpush1.bf16.xpose.msra.mxu0 0
        %1640 = vmatprep.subr.bf16.mxu0 0
        %1641 = vmatpush1.bf16.xpose.msra.mxu0 %v1624
        %1642 = vmatprep.subr.bf16.mxu0 0
        %1643 = vmatpush2.bf16.xpose.msra.mxu0 0
        %1644 = vmatprep.subr.bf16.mxu0 0
        %1645 = vmatpush2.bf16.xpose.msra.mxu0 0
        %1646 = vmatprep.subr.bf16.mxu0 0
        %1647 = vmatpush2.bf16.xpose.msra.mxu0 0
        %1648 = vmatprep.subr.bf16.mxu0 0
        %1649 = vmatpush2.bf16.xpose.msra.mxu0 0
        %1650 = vmatprep.subr.bf16.mxu0 0
        %1651 = vmatpush2.bf16.xpose.msra.mxu0 0
        %1652 = vmatprep.subr.bf16.mxu0 0
        %1653 = vmatpush2.bf16.xpose.msra.mxu0 0
        %1654 = vmatprep.subr.bf16.mxu0 0
        %1655 = vmatpush2.bf16.xpose.msra.mxu0 0
        %1656 = vmatprep.subr.bf16.mxu0 0
        %1657 = vmatpush2.bf16.xpose.msra.mxu0 0
        %1658 = vmatprep.mubr.bf16.mxu0 0
        %1659 = vmatmul.mubr.bf16.gmra.mxu0 %v1578
        %v1660 = vpop.f32.mrf.mxu0
        %v1661 = vadd.f32 0.0, %v1660
        %v1662 = vpop.f32.mrf.mxu0
        %v1663 = vpop.f32.mrf.mxu0
        %v1664 = vpop.f32.mrf.mxu0
        %1665 = vdwg.mxu0
        %v1667 = vsel %vm1576, %v1506, 0
        %1669 = vmatprep.subr.bf16.mxu0 0
        %1670 = vmatpush1.bf16.xpose.msra.mxu0 0
        %1671 = vmatprep.subr.bf16.mxu0 0
        %1672 = vmatpush1.bf16.xpose.msra.mxu0 0
        %1673 = vmatprep.subr.bf16.mxu0 0
        %1674 = vmatpush1.bf16.xpose.msra.mxu0 0
        %1675 = vmatprep.subr.bf16.mxu0 0
        %1676 = vmatpush1.bf16.xpose.msra.mxu0 0
        %1677 = vmatprep.subr.bf16.mxu0 0
        %1678 = vmatpush1.bf16.xpose.msra.mxu0 0
        %1679 = vmatprep.subr.bf16.mxu0 0
        %1680 = vmatpush1.bf16.xpose.msra.mxu0 0
        %1681 = vmatprep.subr.bf16.mxu0 0
        %1682 = vmatpush1.bf16.xpose.msra.mxu0 0
        %1683 = vmatprep.subr.bf16.mxu0 0
        %1684 = vmatpush1.bf16.xpose.msra.mxu0 %v1667
        %1685 = vmatprep.subr.bf16.mxu0 0
        %1686 = vmatpush2.bf16.xpose.msra.mxu0 0
        %1687 = vmatprep.subr.bf16.mxu0 0
        %1688 = vmatpush2.bf16.xpose.msra.mxu0 0
        %1689 = vmatprep.subr.bf16.mxu0 0
        %1690 = vmatpush2.bf16.xpose.msra.mxu0 0
        %1691 = vmatprep.subr.bf16.mxu0 0
        %1692 = vmatpush2.bf16.xpose.msra.mxu0 0
        %1693 = vmatprep.subr.bf16.mxu0 0
        %1694 = vmatpush2.bf16.xpose.msra.mxu0 0
        %1695 = vmatprep.subr.bf16.mxu0 0
        %1696 = vmatpush2.bf16.xpose.msra.mxu0 0
        %1697 = vmatprep.subr.bf16.mxu0 0
        %1698 = vmatpush2.bf16.xpose.msra.mxu0 0
        %1699 = vmatprep.subr.bf16.mxu0 0
        %1700 = vmatpush2.bf16.xpose.msra.mxu0 0
        %1701 = vmatprep.mubr.bf16.mxu0 0
        %1702 = vmatmul.mubr.bf16.gmra.mxu0 %v1578
        %v1703 = vpop.f32.mrf.mxu0
        %v1704 = vadd.f32 0.0, %v1703
        %v1705 = vpop.f32.mrf.mxu0
        %v1706 = vpop.f32.mrf.mxu0
        %v1707 = vpop.f32.mrf.mxu0
        %1708 = vdwg.mxu0
        %v1710 = vsel %vm1576, %v1507, 0
        %1712 = vmatprep.subr.bf16.mxu0 0
        %1713 = vmatpush1.bf16.xpose.msra.mxu0 0
        %1714 = vmatprep.subr.bf16.mxu0 0
        %1715 = vmatpush1.bf16.xpose.msra.mxu0 0
        %1716 = vmatprep.subr.bf16.mxu0 0
        %1717 = vmatpush1.bf16.xpose.msra.mxu0 0
        %1718 = vmatprep.subr.bf16.mxu0 0
        %1719 = vmatpush1.bf16.xpose.msra.mxu0 0
        %1720 = vmatprep.subr.bf16.mxu0 0
        %1721 = vmatpush1.bf16.xpose.msra.mxu0 0
        %1722 = vmatprep.subr.bf16.mxu0 0
        %1723 = vmatpush1.bf16.xpose.msra.mxu0 0
        %1724 = vmatprep.subr.bf16.mxu0 0
        %1725 = vmatpush1.bf16.xpose.msra.mxu0 0
        %1726 = vmatprep.subr.bf16.mxu0 0
        %1727 = vmatpush1.bf16.xpose.msra.mxu0 %v1710
        %1728 = vmatprep.subr.bf16.mxu0 0
        %1729 = vmatpush2.bf16.xpose.msra.mxu0 0
        %1730 = vmatprep.subr.bf16.mxu0 0
        %1731 = vmatpush2.bf16.xpose.msra.mxu0 0
        %1732 = vmatprep.subr.bf16.mxu0 0
        %1733 = vmatpush2.bf16.xpose.msra.mxu0 0
        %1734 = vmatprep.subr.bf16.mxu0 0
        %1735 = vmatpush2.bf16.xpose.msra.mxu0 0
        %1736 = vmatprep.subr.bf16.mxu0 0
        %1737 = vmatpush2.bf16.xpose.msra.mxu0 0
        %1738 = vmatprep.subr.bf16.mxu0 0
        %1739 = vmatpush2.bf16.xpose.msra.mxu0 0
        %1740 = vmatprep.subr.bf16.mxu0 0
        %1741 = vmatpush2.bf16.xpose.msra.mxu0 0
        %1742 = vmatprep.subr.bf16.mxu0 0
        %1743 = vmatpush2.bf16.xpose.msra.mxu0 0
        %1744 = vmatprep.mubr.bf16.mxu0 0
        %1745 = vmatmul.mubr.bf16.gmra.mxu0 %v1578
        %v1746 = vpop.f32.mrf.mxu0
        %v1747 = vadd.f32 0.0, %v1746
        %v1748 = vpop.f32.mrf.mxu0
        %v1749 = vpop.f32.mrf.mxu0
        %v1750 = vpop.f32.mrf.mxu0
        %1751 = vdwg.mxu0
        %v1753 = vsel %vm1576, %v1461, 0
        %v1756 = vsel %vm1576, %v1508, 0
        %1758 = vmatprep.subr.bf16.mxu0 0
        %1759 = vmatpush1.bf16.xpose.msra.mxu0 0
        %1760 = vmatprep.subr.bf16.mxu0 0
        %1761 = vmatpush1.bf16.xpose.msra.mxu0 0
        %1762 = vmatprep.subr.bf16.mxu0 0
        %1763 = vmatpush1.bf16.xpose.msra.mxu0 0
        %1764 = vmatprep.subr.bf16.mxu0 0
        %1765 = vmatpush1.bf16.xpose.msra.mxu0 0
        %1766 = vmatprep.subr.bf16.mxu0 0
        %1767 = vmatpush1.bf16.xpose.msra.mxu0 0
        %1768 = vmatprep.subr.bf16.mxu0 0
        %1769 = vmatpush1.bf16.xpose.msra.mxu0 0
        %1770 = vmatprep.subr.bf16.mxu0 0
        %1771 = vmatpush1.bf16.xpose.msra.mxu0 0
        %1772 = vmatprep.subr.bf16.mxu0 0
        %1773 = vmatpush1.bf16.xpose.msra.mxu0 %v1756
        %1774 = vmatprep.subr.bf16.mxu0 0
        %1775 = vmatpush2.bf16.xpose.msra.mxu0 0
        %1776 = vmatprep.subr.bf16.mxu0 0
        %1777 = vmatpush2.bf16.xpose.msra.mxu0 0
        %1778 = vmatprep.subr.bf16.mxu0 0
        %1779 = vmatpush2.bf16.xpose.msra.mxu0 0
        %1780 = vmatprep.subr.bf16.mxu0 0
        %1781 = vmatpush2.bf16.xpose.msra.mxu0 0
        %1782 = vmatprep.subr.bf16.mxu0 0
        %1783 = vmatpush2.bf16.xpose.msra.mxu0 0
        %1784 = vmatprep.subr.bf16.mxu0 0
        %1785 = vmatpush2.bf16.xpose.msra.mxu0 0
        %1786 = vmatprep.subr.bf16.mxu0 0
        %1787 = vmatpush2.bf16.xpose.msra.mxu0 0
        %1788 = vmatprep.subr.bf16.mxu0 0
        %1789 = vmatpush2.bf16.xpose.msra.mxu0 0
        %1790 = vmatprep.mubr.bf16.mxu0 0
        %1791 = vmatmul.mubr.bf16.gmra.mxu0 %v1753
        %v1792 = vpop.f32.mrf.mxu0
        %v1793 = vadd.f32 0.0, %v1792
        %v1794 = vpop.f32.mrf.mxu0
        %v1795 = vpop.f32.mrf.mxu0
        %v1796 = vpop.f32.mrf.mxu0
        %1797 = vdwg.mxu0
        %v1799 = vsel %vm1576, %v1509, 0
        %1801 = vmatprep.subr.bf16.mxu0 0
        %1802 = vmatpush1.bf16.xpose.msra.mxu0 0
        %1803 = vmatprep.subr.bf16.mxu0 0
        %1804 = vmatpush1.bf16.xpose.msra.mxu0 0
        %1805 = vmatprep.subr.bf16.mxu0 0
        %1806 = vmatpush1.bf16.xpose.msra.mxu0 0
        %1807 = vmatprep.subr.bf16.mxu0 0
        %1808 = vmatpush1.bf16.xpose.msra.mxu0 0
        %1809 = vmatprep.subr.bf16.mxu0 0
        %1810 = vmatpush1.bf16.xpose.msra.mxu0 0
        %1811 = vmatprep.subr.bf16.mxu0 0
        %1812 = vmatpush1.bf16.xpose.msra.mxu0 0
        %1813 = vmatprep.subr.bf16.mxu0 0
        %1814 = vmatpush1.bf16.xpose.msra.mxu0 0
        %1815 = vmatprep.subr.bf16.mxu0 0
        %1816 = vmatpush1.bf16.xpose.msra.mxu0 %v1799
        %1817 = vmatprep.subr.bf16.mxu0 0
        %1818 = vmatpush2.bf16.xpose.msra.mxu0 0
        %1819 = vmatprep.subr.bf16.mxu0 0
        %1820 = vmatpush2.bf16.xpose.msra.mxu0 0
        %1821 = vmatprep.subr.bf16.mxu0 0
        %1822 = vmatpush2.bf16.xpose.msra.mxu0 0
        %1823 = vmatprep.subr.bf16.mxu0 0
        %1824 = vmatpush2.bf16.xpose.msra.mxu0 0
        %1825 = vmatprep.subr.bf16.mxu0 0
        %1826 = vmatpush2.bf16.xpose.msra.mxu0 0
        %1827 = vmatprep.subr.bf16.mxu0 0
        %1828 = vmatpush2.bf16.xpose.msra.mxu0 0
        %1829 = vmatprep.subr.bf16.mxu0 0
        %1830 = vmatpush2.bf16.xpose.msra.mxu0 0
        %1831 = vmatprep.subr.bf16.mxu0 0
        %1832 = vmatpush2.bf16.xpose.msra.mxu0 0
        %1833 = vmatprep.mubr.bf16.mxu0 0
        %1834 = vmatmul.mubr.bf16.gmra.mxu0 %v1753
        %v1835 = vpop.f32.mrf.mxu0
        %v1836 = vadd.f32 0.0, %v1835
        %v1837 = vpop.f32.mrf.mxu0
        %v1838 = vpop.f32.mrf.mxu0
        %v1839 = vpop.f32.mrf.mxu0
        %1840 = vdwg.mxu0
        %v1842 = vsel %vm1576, %v1510, 0
        %1844 = vmatprep.subr.bf16.mxu0 0
        %1845 = vmatpush1.bf16.xpose.msra.mxu0 0
        %1846 = vmatprep.subr.bf16.mxu0 0
        %1847 = vmatpush1.bf16.xpose.msra.mxu0 0
        %1848 = vmatprep.subr.bf16.mxu0 0
        %1849 = vmatpush1.bf16.xpose.msra.mxu0 0
        %1850 = vmatprep.subr.bf16.mxu0 0
        %1851 = vmatpush1.bf16.xpose.msra.mxu0 0
        %1852 = vmatprep.subr.bf16.mxu0 0
        %1853 = vmatpush1.bf16.xpose.msra.mxu0 0
        %1854 = vmatprep.subr.bf16.mxu0 0
        %1855 = vmatpush1.bf16.xpose.msra.mxu0 0
        %1856 = vmatprep.subr.bf16.mxu0 0
        %1857 = vmatpush1.bf16.xpose.msra.mxu0 0
        %1858 = vmatprep.subr.bf16.mxu0 0
        %1859 = vmatpush1.bf16.xpose.msra.mxu0 %v1842
        %1860 = vmatprep.subr.bf16.mxu0 0
        %1861 = vmatpush2.bf16.xpose.msra.mxu0 0
        %1862 = vmatprep.subr.bf16.mxu0 0
        %1863 = vmatpush2.bf16.xpose.msra.mxu0 0
        %1864 = vmatprep.subr.bf16.mxu0 0
        %1865 = vmatpush2.bf16.xpose.msra.mxu0 0
        %1866 = vmatprep.subr.bf16.mxu0 0
        %1867 = vmatpush2.bf16.xpose.msra.mxu0 0
        %1868 = vmatprep.subr.bf16.mxu0 0
        %1869 = vmatpush2.bf16.xpose.msra.mxu0 0
        %1870 = vmatprep.subr.bf16.mxu0 0
        %1871 = vmatpush2.bf16.xpose.msra.mxu0 0
        %1872 = vmatprep.subr.bf16.mxu0 0
        %1873 = vmatpush2.bf16.xpose.msra.mxu0 0
        %1874 = vmatprep.subr.bf16.mxu0 0
        %1875 = vmatpush2.bf16.xpose.msra.mxu0 0
        %1876 = vmatprep.mubr.bf16.mxu0 0
        %1877 = vmatmul.mubr.bf16.gmra.mxu0 %v1753
        %v1878 = vpop.f32.mrf.mxu0
        %v1879 = vadd.f32 0.0, %v1878
        %v1880 = vpop.f32.mrf.mxu0
        %v1881 = vpop.f32.mrf.mxu0
        %v1882 = vpop.f32.mrf.mxu0
        %1883 = vdwg.mxu0
        %v1885 = vsel %vm1576, %v1511, 0
        %1887 = vmatprep.subr.bf16.mxu0 0
        %1888 = vmatpush1.bf16.xpose.msra.mxu0 0
        %1889 = vmatprep.subr.bf16.mxu0 0
        %1890 = vmatpush1.bf16.xpose.msra.mxu0 0
        %1891 = vmatprep.subr.bf16.mxu0 0
        %1892 = vmatpush1.bf16.xpose.msra.mxu0 0
        %1893 = vmatprep.subr.bf16.mxu0 0
        %1894 = vmatpush1.bf16.xpose.msra.mxu0 0
        %1895 = vmatprep.subr.bf16.mxu0 0
        %1896 = vmatpush1.bf16.xpose.msra.mxu0 0
        %1897 = vmatprep.subr.bf16.mxu0 0
        %1898 = vmatpush1.bf16.xpose.msra.mxu0 0
        %1899 = vmatprep.subr.bf16.mxu0 0
        %1900 = vmatpush1.bf16.xpose.msra.mxu0 0
        %1901 = vmatprep.subr.bf16.mxu0 0
        %1902 = vmatpush1.bf16.xpose.msra.mxu0 %v1885
        %1903 = vmatprep.subr.bf16.mxu0 0
        %1904 = vmatpush2.bf16.xpose.msra.mxu0 0
        %1905 = vmatprep.subr.bf16.mxu0 0
        %1906 = vmatpush2.bf16.xpose.msra.mxu0 0
        %1907 = vmatprep.subr.bf16.mxu0 0
        %1908 = vmatpush2.bf16.xpose.msra.mxu0 0
        %1909 = vmatprep.subr.bf16.mxu0 0
        %1910 = vmatpush2.bf16.xpose.msra.mxu0 0
        %1911 = vmatprep.subr.bf16.mxu0 0
        %1912 = vmatpush2.bf16.xpose.msra.mxu0 0
        %1913 = vmatprep.subr.bf16.mxu0 0
        %1914 = vmatpush2.bf16.xpose.msra.mxu0 0
        %1915 = vmatprep.subr.bf16.mxu0 0
        %1916 = vmatpush2.bf16.xpose.msra.mxu0 0
        %1917 = vmatprep.subr.bf16.mxu0 0
        %1918 = vmatpush2.bf16.xpose.msra.mxu0 0
        %1919 = vmatprep.mubr.bf16.mxu0 0
        %1920 = vmatmul.mubr.bf16.gmra.mxu0 %v1753
        %v1921 = vpop.f32.mrf.mxu0
        %v1922 = vadd.f32 0.0, %v1921
        %v1923 = vpop.f32.mrf.mxu0
        %v1924 = vpop.f32.mrf.mxu0
        %v1925 = vpop.f32.mrf.mxu0
        %1926 = vdwg.mxu0
        %v1928 = vsel %vm1576, %v1462, 0
        %v1931 = vsel %vm1576, %v1512, 0
        %1933 = vmatprep.subr.bf16.mxu0 0
        %1934 = vmatpush1.bf16.xpose.msra.mxu0 0
        %1935 = vmatprep.subr.bf16.mxu0 0
        %1936 = vmatpush1.bf16.xpose.msra.mxu0 0
        %1937 = vmatprep.subr.bf16.mxu0 0
        %1938 = vmatpush1.bf16.xpose.msra.mxu0 0
        %1939 = vmatprep.subr.bf16.mxu0 0
        %1940 = vmatpush1.bf16.xpose.msra.mxu0 0
        %1941 = vmatprep.subr.bf16.mxu0 0
        %1942 = vmatpush1.bf16.xpose.msra.mxu0 0
        %1943 = vmatprep.subr.bf16.mxu0 0
        %1944 = vmatpush1.bf16.xpose.msra.mxu0 0
        %1945 = vmatprep.subr.bf16.mxu0 0
        %1946 = vmatpush1.bf16.xpose.msra.mxu0 0
        %1947 = vmatprep.subr.bf16.mxu0 0
        %1948 = vmatpush1.bf16.xpose.msra.mxu0 %v1931
        %1949 = vmatprep.subr.bf16.mxu0 0
        %1950 = vmatpush2.bf16.xpose.msra.mxu0 0
        %1951 = vmatprep.subr.bf16.mxu0 0
        %1952 = vmatpush2.bf16.xpose.msra.mxu0 0
        %1953 = vmatprep.subr.bf16.mxu0 0
        %1954 = vmatpush2.bf16.xpose.msra.mxu0 0
        %1955 = vmatprep.subr.bf16.mxu0 0
        %1956 = vmatpush2.bf16.xpose.msra.mxu0 0
        %1957 = vmatprep.subr.bf16.mxu0 0
        %1958 = vmatpush2.bf16.xpose.msra.mxu0 0
        %1959 = vmatprep.subr.bf16.mxu0 0
        %1960 = vmatpush2.bf16.xpose.msra.mxu0 0
        %1961 = vmatprep.subr.bf16.mxu0 0
        %1962 = vmatpush2.bf16.xpose.msra.mxu0 0
        %1963 = vmatprep.subr.bf16.mxu0 0
        %1964 = vmatpush2.bf16.xpose.msra.mxu0 0
        %1965 = vmatprep.mubr.bf16.mxu0 0
        %1966 = vmatmul.mubr.bf16.gmra.mxu0 %v1928
        %v1967 = vpop.f32.mrf.mxu0
        %v1968 = vadd.f32 0.0, %v1967
        %v1969 = vpop.f32.mrf.mxu0
        %v1970 = vpop.f32.mrf.mxu0
        %v1971 = vpop.f32.mrf.mxu0
        %1972 = vdwg.mxu0
        %v1974 = vsel %vm1576, %v1513, 0
        %1976 = vmatprep.subr.bf16.mxu0 0
        %1977 = vmatpush1.bf16.xpose.msra.mxu0 0
        %1978 = vmatprep.subr.bf16.mxu0 0
        %1979 = vmatpush1.bf16.xpose.msra.mxu0 0
        %1980 = vmatprep.subr.bf16.mxu0 0
        %1981 = vmatpush1.bf16.xpose.msra.mxu0 0
        %1982 = vmatprep.subr.bf16.mxu0 0
        %1983 = vmatpush1.bf16.xpose.msra.mxu0 0
        %1984 = vmatprep.subr.bf16.mxu0 0
        %1985 = vmatpush1.bf16.xpose.msra.mxu0 0
        %1986 = vmatprep.subr.bf16.mxu0 0
        %1987 = vmatpush1.bf16.xpose.msra.mxu0 0
        %1988 = vmatprep.subr.bf16.mxu0 0
        %1989 = vmatpush1.bf16.xpose.msra.mxu0 0
        %1990 = vmatprep.subr.bf16.mxu0 0
        %1991 = vmatpush1.bf16.xpose.msra.mxu0 %v1974
        %1992 = vmatprep.subr.bf16.mxu0 0
        %1993 = vmatpush2.bf16.xpose.msra.mxu0 0
        %1994 = vmatprep.subr.bf16.mxu0 0
        %1995 = vmatpush2.bf16.xpose.msra.mxu0 0
        %1996 = vmatprep.subr.bf16.mxu0 0
        %1997 = vmatpush2.bf16.xpose.msra.mxu0 0
        %1998 = vmatprep.subr.bf16.mxu0 0
        %1999 = vmatpush2.bf16.xpose.msra.mxu0 0
        %2000 = vmatprep.subr.bf16.mxu0 0
        %2001 = vmatpush2.bf16.xpose.msra.mxu0 0
        %2002 = vmatprep.subr.bf16.mxu0 0
        %2003 = vmatpush2.bf16.xpose.msra.mxu0 0
        %2004 = vmatprep.subr.bf16.mxu0 0
        %2005 = vmatpush2.bf16.xpose.msra.mxu0 0
        %2006 = vmatprep.subr.bf16.mxu0 0
        %2007 = vmatpush2.bf16.xpose.msra.mxu0 0
        %2008 = vmatprep.mubr.bf16.mxu0 0
        %2009 = vmatmul.mubr.bf16.gmra.mxu0 %v1928
        %v2010 = vpop.f32.mrf.mxu0
        %v2011 = vadd.f32 0.0, %v2010
        %v2012 = vpop.f32.mrf.mxu0
        %v2013 = vpop.f32.mrf.mxu0
        %v2014 = vpop.f32.mrf.mxu0
        %2015 = vdwg.mxu0
        %v2017 = vsel %vm1576, %v1514, 0
        %2019 = vmatprep.subr.bf16.mxu0 0
        %2020 = vmatpush1.bf16.xpose.msra.mxu0 0
        %2021 = vmatprep.subr.bf16.mxu0 0
        %2022 = vmatpush1.bf16.xpose.msra.mxu0 0
        %2023 = vmatprep.subr.bf16.mxu0 0
        %2024 = vmatpush1.bf16.xpose.msra.mxu0 0
        %2025 = vmatprep.subr.bf16.mxu0 0
        %2026 = vmatpush1.bf16.xpose.msra.mxu0 0
        %2027 = vmatprep.subr.bf16.mxu0 0
        %2028 = vmatpush1.bf16.xpose.msra.mxu0 0
        %2029 = vmatprep.subr.bf16.mxu0 0
        %2030 = vmatpush1.bf16.xpose.msra.mxu0 0
        %2031 = vmatprep.subr.bf16.mxu0 0
        %2032 = vmatpush1.bf16.xpose.msra.mxu0 0
        %2033 = vmatprep.subr.bf16.mxu0 0
        %2034 = vmatpush1.bf16.xpose.msra.mxu0 %v2017
        %2035 = vmatprep.subr.bf16.mxu0 0
        %2036 = vmatpush2.bf16.xpose.msra.mxu0 0
        %2037 = vmatprep.subr.bf16.mxu0 0
        %2038 = vmatpush2.bf16.xpose.msra.mxu0 0
        %2039 = vmatprep.subr.bf16.mxu0 0
        %2040 = vmatpush2.bf16.xpose.msra.mxu0 0
        %2041 = vmatprep.subr.bf16.mxu0 0
        %2042 = vmatpush2.bf16.xpose.msra.mxu0 0
        %2043 = vmatprep.subr.bf16.mxu0 0
        %2044 = vmatpush2.bf16.xpose.msra.mxu0 0
        %2045 = vmatprep.subr.bf16.mxu0 0
        %2046 = vmatpush2.bf16.xpose.msra.mxu0 0
        %2047 = vmatprep.subr.bf16.mxu0 0
        %2048 = vmatpush2.bf16.xpose.msra.mxu0 0
        %2049 = vmatprep.subr.bf16.mxu0 0
        %2050 = vmatpush2.bf16.xpose.msra.mxu0 0
        %2051 = vmatprep.mubr.bf16.mxu0 0
        %2052 = vmatmul.mubr.bf16.gmra.mxu0 %v1928
        %v2053 = vpop.f32.mrf.mxu0
        %v2054 = vadd.f32 0.0, %v2053
        %v2055 = vpop.f32.mrf.mxu0
        %v2056 = vpop.f32.mrf.mxu0
        %v2057 = vpop.f32.mrf.mxu0
        %2058 = vdwg.mxu0
        %v2060 = vsel %vm1576, %v1515, 0
        %2062 = vmatprep.subr.bf16.mxu0 0
        %2063 = vmatpush1.bf16.xpose.msra.mxu0 0
        %2064 = vmatprep.subr.bf16.mxu0 0
        %2065 = vmatpush1.bf16.xpose.msra.mxu0 0
        %2066 = vmatprep.subr.bf16.mxu0 0
        %2067 = vmatpush1.bf16.xpose.msra.mxu0 0
        %2068 = vmatprep.subr.bf16.mxu0 0
        %2069 = vmatpush1.bf16.xpose.msra.mxu0 0
        %2070 = vmatprep.subr.bf16.mxu0 0
        %2071 = vmatpush1.bf16.xpose.msra.mxu0 0
        %2072 = vmatprep.subr.bf16.mxu0 0
        %2073 = vmatpush1.bf16.xpose.msra.mxu0 0
        %2074 = vmatprep.subr.bf16.mxu0 0
        %2075 = vmatpush1.bf16.xpose.msra.mxu0 0
        %2076 = vmatprep.subr.bf16.mxu0 0
        %2077 = vmatpush1.bf16.xpose.msra.mxu0 %v2060
        %2078 = vmatprep.subr.bf16.mxu0 0
        %2079 = vmatpush2.bf16.xpose.msra.mxu0 0
        %2080 = vmatprep.subr.bf16.mxu0 0
        %2081 = vmatpush2.bf16.xpose.msra.mxu0 0
        %2082 = vmatprep.subr.bf16.mxu0 0
        %2083 = vmatpush2.bf16.xpose.msra.mxu0 0
        %2084 = vmatprep.subr.bf16.mxu0 0
        %2085 = vmatpush2.bf16.xpose.msra.mxu0 0
        %2086 = vmatprep.subr.bf16.mxu0 0
        %2087 = vmatpush2.bf16.xpose.msra.mxu0 0
        %2088 = vmatprep.subr.bf16.mxu0 0
        %2089 = vmatpush2.bf16.xpose.msra.mxu0 0
        %2090 = vmatprep.subr.bf16.mxu0 0
        %2091 = vmatpush2.bf16.xpose.msra.mxu0 0
        %2092 = vmatprep.subr.bf16.mxu0 0
        %2093 = vmatpush2.bf16.xpose.msra.mxu0 0
        %2094 = vmatprep.mubr.bf16.mxu0 0
        %2095 = vmatmul.mubr.bf16.gmra.mxu0 %v1928
        %v2096 = vpop.f32.mrf.mxu0
        %v2097 = vadd.f32 0.0, %v2096
        %v2098 = vpop.f32.mrf.mxu0
        %v2099 = vpop.f32.mrf.mxu0
        %v2100 = vpop.f32.mrf.mxu0
        %2101 = vdwg.mxu0
        %v2103 = vsel %vm1576, %v1463, 0
        %v2106 = vsel %vm1576, %v1516, 0
        %2108 = vmatprep.subr.bf16.mxu0 0
        %2109 = vmatpush1.bf16.xpose.msra.mxu0 0
        %2110 = vmatprep.subr.bf16.mxu0 0
        %2111 = vmatpush1.bf16.xpose.msra.mxu0 0
        %2112 = vmatprep.subr.bf16.mxu0 0
        %2113 = vmatpush1.bf16.xpose.msra.mxu0 0
        %2114 = vmatprep.subr.bf16.mxu0 0
        %2115 = vmatpush1.bf16.xpose.msra.mxu0 0
        %2116 = vmatprep.subr.bf16.mxu0 0
        %2117 = vmatpush1.bf16.xpose.msra.mxu0 0
        %2118 = vmatprep.subr.bf16.mxu0 0
        %2119 = vmatpush1.bf16.xpose.msra.mxu0 0
        %2120 = vmatprep.subr.bf16.mxu0 0
        %2121 = vmatpush1.bf16.xpose.msra.mxu0 0
        %2122 = vmatprep.subr.bf16.mxu0 0
        %2123 = vmatpush1.bf16.xpose.msra.mxu0 %v2106
        %2124 = vmatprep.subr.bf16.mxu0 0
        %2125 = vmatpush2.bf16.xpose.msra.mxu0 0
        %2126 = vmatprep.subr.bf16.mxu0 0
        %2127 = vmatpush2.bf16.xpose.msra.mxu0 0
        %2128 = vmatprep.subr.bf16.mxu0 0
        %2129 = vmatpush2.bf16.xpose.msra.mxu0 0
        %2130 = vmatprep.subr.bf16.mxu0 0
        %2131 = vmatpush2.bf16.xpose.msra.mxu0 0
        %2132 = vmatprep.subr.bf16.mxu0 0
        %2133 = vmatpush2.bf16.xpose.msra.mxu0 0
        %2134 = vmatprep.subr.bf16.mxu0 0
        %2135 = vmatpush2.bf16.xpose.msra.mxu0 0
        %2136 = vmatprep.subr.bf16.mxu0 0
        %2137 = vmatpush2.bf16.xpose.msra.mxu0 0
        %2138 = vmatprep.subr.bf16.mxu0 0
        %2139 = vmatpush2.bf16.xpose.msra.mxu0 0
        %2140 = vmatprep.mubr.bf16.mxu0 0
        %2141 = vmatmul.mubr.bf16.gmra.mxu0 %v2103
        %v2142 = vpop.f32.mrf.mxu0
        %v2143 = vadd.f32 0.0, %v2142
        %v2144 = vpop.f32.mrf.mxu0
        %v2145 = vpop.f32.mrf.mxu0
        %v2146 = vpop.f32.mrf.mxu0
        %2147 = vdwg.mxu0
        %v2149 = vsel %vm1576, %v1517, 0
        %2151 = vmatprep.subr.bf16.mxu0 0
        %2152 = vmatpush1.bf16.xpose.msra.mxu0 0
        %2153 = vmatprep.subr.bf16.mxu0 0
        %2154 = vmatpush1.bf16.xpose.msra.mxu0 0
        %2155 = vmatprep.subr.bf16.mxu0 0
        %2156 = vmatpush1.bf16.xpose.msra.mxu0 0
        %2157 = vmatprep.subr.bf16.mxu0 0
        %2158 = vmatpush1.bf16.xpose.msra.mxu0 0
        %2159 = vmatprep.subr.bf16.mxu0 0
        %2160 = vmatpush1.bf16.xpose.msra.mxu0 0
        %2161 = vmatprep.subr.bf16.mxu0 0
        %2162 = vmatpush1.bf16.xpose.msra.mxu0 0
        %2163 = vmatprep.subr.bf16.mxu0 0
        %2164 = vmatpush1.bf16.xpose.msra.mxu0 0
        %2165 = vmatprep.subr.bf16.mxu0 0
        %2166 = vmatpush1.bf16.xpose.msra.mxu0 %v2149
        %2167 = vmatprep.subr.bf16.mxu0 0
        %2168 = vmatpush2.bf16.xpose.msra.mxu0 0
        %2169 = vmatprep.subr.bf16.mxu0 0
        %2170 = vmatpush2.bf16.xpose.msra.mxu0 0
        %2171 = vmatprep.subr.bf16.mxu0 0
        %2172 = vmatpush2.bf16.xpose.msra.mxu0 0
        %2173 = vmatprep.subr.bf16.mxu0 0
        %2174 = vmatpush2.bf16.xpose.msra.mxu0 0
        %2175 = vmatprep.subr.bf16.mxu0 0
        %2176 = vmatpush2.bf16.xpose.msra.mxu0 0
        %2177 = vmatprep.subr.bf16.mxu0 0
        %2178 = vmatpush2.bf16.xpose.msra.mxu0 0
        %2179 = vmatprep.subr.bf16.mxu0 0
        %2180 = vmatpush2.bf16.xpose.msra.mxu0 0
        %2181 = vmatprep.subr.bf16.mxu0 0
        %2182 = vmatpush2.bf16.xpose.msra.mxu0 0
        %2183 = vmatprep.mubr.bf16.mxu0 0
        %2184 = vmatmul.mubr.bf16.gmra.mxu0 %v2103
        %v2185 = vpop.f32.mrf.mxu0
        %v2186 = vadd.f32 0.0, %v2185
        %v2187 = vpop.f32.mrf.mxu0
        %v2188 = vpop.f32.mrf.mxu0
        %v2189 = vpop.f32.mrf.mxu0
        %2190 = vdwg.mxu0
        %v2192 = vsel %vm1576, %v1518, 0
        %2194 = vmatprep.subr.bf16.mxu0 0
        %2195 = vmatpush1.bf16.xpose.msra.mxu0 0
        %2196 = vmatprep.subr.bf16.mxu0 0
        %2197 = vmatpush1.bf16.xpose.msra.mxu0 0
        %2198 = vmatprep.subr.bf16.mxu0 0
        %2199 = vmatpush1.bf16.xpose.msra.mxu0 0
        %2200 = vmatprep.subr.bf16.mxu0 0
        %2201 = vmatpush1.bf16.xpose.msra.mxu0 0
        %2202 = vmatprep.subr.bf16.mxu0 0
        %2203 = vmatpush1.bf16.xpose.msra.mxu0 0
        %2204 = vmatprep.subr.bf16.mxu0 0
        %2205 = vmatpush1.bf16.xpose.msra.mxu0 0
        %2206 = vmatprep.subr.bf16.mxu0 0
        %2207 = vmatpush1.bf16.xpose.msra.mxu0 0
        %2208 = vmatprep.subr.bf16.mxu0 0
        %2209 = vmatpush1.bf16.xpose.msra.mxu0 %v2192
        %2210 = vmatprep.subr.bf16.mxu0 0
        %2211 = vmatpush2.bf16.xpose.msra.mxu0 0
        %2212 = vmatprep.subr.bf16.mxu0 0
        %2213 = vmatpush2.bf16.xpose.msra.mxu0 0
        %2214 = vmatprep.subr.bf16.mxu0 0
        %2215 = vmatpush2.bf16.xpose.msra.mxu0 0
        %2216 = vmatprep.subr.bf16.mxu0 0
        %2217 = vmatpush2.bf16.xpose.msra.mxu0 0
        %2218 = vmatprep.subr.bf16.mxu0 0
        %2219 = vmatpush2.bf16.xpose.msra.mxu0 0
        %2220 = vmatprep.subr.bf16.mxu0 0
        %2221 = vmatpush2.bf16.xpose.msra.mxu0 0
        %2222 = vmatprep.subr.bf16.mxu0 0
        %2223 = vmatpush2.bf16.xpose.msra.mxu0 0
        %2224 = vmatprep.subr.bf16.mxu0 0
        %2225 = vmatpush2.bf16.xpose.msra.mxu0 0
        %2226 = vmatprep.mubr.bf16.mxu0 0
        %2227 = vmatmul.mubr.bf16.gmra.mxu0 %v2103
        %v2228 = vpop.f32.mrf.mxu0
        %v2229 = vadd.f32 0.0, %v2228
        %v2230 = vpop.f32.mrf.mxu0
        %v2231 = vpop.f32.mrf.mxu0
        %v2232 = vpop.f32.mrf.mxu0
        %2233 = vdwg.mxu0
        %v2235 = vsel %vm1576, %v1519, 0
        %2237 = vmatprep.subr.bf16.mxu0 0
        %2238 = vmatpush1.bf16.xpose.msra.mxu0 0
        %2239 = vmatprep.subr.bf16.mxu0 0
        %2240 = vmatpush1.bf16.xpose.msra.mxu0 0
        %2241 = vmatprep.subr.bf16.mxu0 0
        %2242 = vmatpush1.bf16.xpose.msra.mxu0 0
        %2243 = vmatprep.subr.bf16.mxu0 0
        %2244 = vmatpush1.bf16.xpose.msra.mxu0 0
        %2245 = vmatprep.subr.bf16.mxu0 0
        %2246 = vmatpush1.bf16.xpose.msra.mxu0 0
        %2247 = vmatprep.subr.bf16.mxu0 0
        %2248 = vmatpush1.bf16.xpose.msra.mxu0 0
        %2249 = vmatprep.subr.bf16.mxu0 0
        %2250 = vmatpush1.bf16.xpose.msra.mxu0 0
        %2251 = vmatprep.subr.bf16.mxu0 0
        %2252 = vmatpush1.bf16.xpose.msra.mxu0 %v2235
        %2253 = vmatprep.subr.bf16.mxu0 0
        %2254 = vmatpush2.bf16.xpose.msra.mxu0 0
        %2255 = vmatprep.subr.bf16.mxu0 0
        %2256 = vmatpush2.bf16.xpose.msra.mxu0 0
        %2257 = vmatprep.subr.bf16.mxu0 0
        %2258 = vmatpush2.bf16.xpose.msra.mxu0 0
        %2259 = vmatprep.subr.bf16.mxu0 0
        %2260 = vmatpush2.bf16.xpose.msra.mxu0 0
        %2261 = vmatprep.subr.bf16.mxu0 0
        %2262 = vmatpush2.bf16.xpose.msra.mxu0 0
        %2263 = vmatprep.subr.bf16.mxu0 0
        %2264 = vmatpush2.bf16.xpose.msra.mxu0 0
        %2265 = vmatprep.subr.bf16.mxu0 0
        %2266 = vmatpush2.bf16.xpose.msra.mxu0 0
        %2267 = vmatprep.subr.bf16.mxu0 0
        %2268 = vmatpush2.bf16.xpose.msra.mxu0 0
        %2269 = vmatprep.mubr.bf16.mxu0 0
        %2270 = vmatmul.mubr.bf16.gmra.mxu0 %v2103
        %v2271 = vpop.f32.mrf.mxu0
        %v2272 = vadd.f32 0.0, %v2271
        %v2273 = vpop.f32.mrf.mxu0
        %v2274 = vpop.f32.mrf.mxu0
        %v2275 = vpop.f32.mrf.mxu0
        %2276 = vdwg.mxu0
        %vm2277 = vcmask 60416
        %v2278 = vsel %vm2277, %v1618, -inf
        %2279 = vmax.xlane.f32.xlu0 %v2278
        %v2280 = vpop.xlane.xlu0 %2279
        %v2281 = vsel %vm2277, %v1661, -inf
        %2282 = vmax.xlane.f32.xlu0 %v2281
        %v2283 = vpop.xlane.xlu0 %2282
        %v2284 = vsel %vm2277, %v1704, -inf
        %2285 = vmax.xlane.f32.xlu0 %v2284
        %v2286 = vpop.xlane.xlu0 %2285
        %v2287 = vsel %vm2277, %v1747, -inf
        %2288 = vmax.xlane.f32.xlu0 %v2287
        %v2289 = vpop.xlane.xlu0 %2288
        %v2290 = vsel %vm2277, %v1793, -inf
        %2291 = vmax.xlane.f32.xlu0 %v2290
        %v2292 = vpop.xlane.xlu0 %2291
        %v2293 = vsel %vm2277, %v1836, -inf
        %2294 = vmax.xlane.f32.xlu0 %v2293
        %v2295 = vpop.xlane.xlu0 %2294
        %v2296 = vsel %vm2277, %v1879, -inf
        %2297 = vmax.xlane.f32.xlu0 %v2296
        %v2298 = vpop.xlane.xlu0 %2297
        %v2299 = vsel %vm2277, %v1922, -inf
        %2300 = vmax.xlane.f32.xlu0 %v2299
        %v2301 = vpop.xlane.xlu0 %2300
        %v2302 = vsel %vm2277, %v1968, -inf
        %2303 = vmax.xlane.f32.xlu0 %v2302
        %v2304 = vpop.xlane.xlu0 %2303
        %v2305 = vsel %vm2277, %v2011, -inf
        %2306 = vmax.xlane.f32.xlu0 %v2305
        %v2307 = vpop.xlane.xlu0 %2306
        %v2308 = vsel %vm2277, %v2054, -inf
        %2309 = vmax.xlane.f32.xlu0 %v2308
        %v2310 = vpop.xlane.xlu0 %2309
        %v2311 = vsel %vm2277, %v2097, -inf
        %2312 = vmax.xlane.f32.xlu0 %v2311
        %v2313 = vpop.xlane.xlu0 %2312
        %v2314 = vsel %vm2277, %v2143, -inf
        %2315 = vmax.xlane.f32.xlu0 %v2314
        %v2316 = vpop.xlane.xlu0 %2315
        %v2317 = vsel %vm2277, %v2186, -inf
        %2318 = vmax.xlane.f32.xlu0 %v2317
        %v2319 = vpop.xlane.xlu0 %2318
        %v2320 = vsel %vm2277, %v2229, -inf
        %2321 = vmax.xlane.f32.xlu0 %v2320
        %v2322 = vpop.xlane.xlu0 %2321
        %v2323 = vsel %vm2277, %v2272, -inf
        %2324 = vmax.xlane.f32.xlu0 %v2323
        %v2325 = vpop.xlane.xlu0 %2324
        %v2326 = vsub.f32 %v1618, %v2280
        %v2327 = vsub.f32 %v1661, %v2283
        %v2328 = vsub.f32 %v1704, %v2286
        %v2329 = vsub.f32 %v1747, %v2289
        %v2330 = vsub.f32 %v1793, %v2292
        %v2331 = vsub.f32 %v1836, %v2295
        %v2332 = vsub.f32 %v1879, %v2298
        %v2333 = vsub.f32 %v1922, %v2301
        %v2334 = vsub.f32 %v1968, %v2304
        %v2335 = vsub.f32 %v2011, %v2307
        %v2336 = vsub.f32 %v2054, %v2310
        %v2337 = vsub.f32 %v2097, %v2313
        %v2338 = vsub.f32 %v2143, %v2316
        %v2339 = vsub.f32 %v2186, %v2319
        %v2340 = vsub.f32 %v2229, %v2322
        %v2341 = vsub.f32 %v2272, %v2325
        %v2342 = vmul.f32 %v2326, 1.442695
        %v2343 = vpow.pop %v2342
        %v2344 = vmul.f32 %v2327, 1.442695
        %v2345 = vpow.pop %v2344
        %v2346 = vmul.f32 %v2328, 1.442695
        %v2347 = vpow.pop %v2346
        %v2348 = vmul.f32 %v2329, 1.442695
        %v2349 = vpow.pop %v2348
        %v2350 = vmul.f32 %v2330, 1.442695
        %v2351 = vpow.pop %v2350
        %v2352 = vmul.f32 %v2331, 1.442695
        %v2353 = vpow.pop %v2352
        %v2354 = vmul.f32 %v2332, 1.442695
        %v2355 = vpow.pop %v2354
        %v2356 = vmul.f32 %v2333, 1.442695
        %v2357 = vpow.pop %v2356
        %v2358 = vmul.f32 %v2334, 1.442695
        %v2359 = vpow.pop %v2358
        %v2360 = vmul.f32 %v2335, 1.442695
        %v2361 = vpow.pop %v2360
        %v2362 = vmul.f32 %v2336, 1.442695
        %v2363 = vpow.pop %v2362
        %v2364 = vmul.f32 %v2337, 1.442695
        %v2365 = vpow.pop %v2364
        %v2366 = vmul.f32 %v2338, 1.442695
        %v2367 = vpow.pop %v2366
        %v2368 = vmul.f32 %v2339, 1.442695
        %v2369 = vpow.pop %v2368
        %v2370 = vmul.f32 %v2340, 1.442695
        %v2371 = vpow.pop %v2370
        %v2372 = vmul.f32 %v2341, 1.442695
        %v2373 = vpow.pop %v2372
        %v2374 = vsel %vm2277, %v2343, 0.0
        %2375 = vadd.xlane.f32.xlu0 %v2374
        %v2376 = vpop.xlane.xlu0 %2375
        %v2377 = vsel %vm2277, %v2345, 0.0
        %2378 = vadd.xlane.f32.xlu0 %v2377
        %v2379 = vpop.xlane.xlu0 %2378
        %v2380 = vsel %vm2277, %v2347, 0.0
        %2381 = vadd.xlane.f32.xlu0 %v2380
        %v2382 = vpop.xlane.xlu0 %2381
        %v2383 = vsel %vm2277, %v2349, 0.0
        %2384 = vadd.xlane.f32.xlu0 %v2383
        %v2385 = vpop.xlane.xlu0 %2384
        %v2386 = vsel %vm2277, %v2351, 0.0
        %2387 = vadd.xlane.f32.xlu0 %v2386
        %v2388 = vpop.xlane.xlu0 %2387
        %v2389 = vsel %vm2277, %v2353, 0.0
        %2390 = vadd.xlane.f32.xlu0 %v2389
        %v2391 = vpop.xlane.xlu0 %2390
        %v2392 = vsel %vm2277, %v2355, 0.0
        %2393 = vadd.xlane.f32.xlu0 %v2392
        %v2394 = vpop.xlane.xlu0 %2393
        %v2395 = vsel %vm2277, %v2357, 0.0
        %2396 = vadd.xlane.f32.xlu0 %v2395
        %v2397 = vpop.xlane.xlu0 %2396
        %v2398 = vsel %vm2277, %v2359, 0.0
        %2399 = vadd.xlane.f32.xlu0 %v2398
        %v2400 = vpop.xlane.xlu0 %2399
        %v2401 = vsel %vm2277, %v2361, 0.0
        %2402 = vadd.xlane.f32.xlu0 %v2401
        %v2403 = vpop.xlane.xlu0 %2402
        %v2404 = vsel %vm2277, %v2363, 0.0
        %2405 = vadd.xlane.f32.xlu0 %v2404
        %v2406 = vpop.xlane.xlu0 %2405
        %v2407 = vsel %vm2277, %v2365, 0.0
        %2408 = vadd.xlane.f32.xlu0 %v2407
        %v2409 = vpop.xlane.xlu0 %2408
        %v2410 = vsel %vm2277, %v2367, 0.0
        %2411 = vadd.xlane.f32.xlu0 %v2410
        %v2412 = vpop.xlane.xlu0 %2411
        %v2413 = vsel %vm2277, %v2369, 0.0
        %2414 = vadd.xlane.f32.xlu0 %v2413
        %v2415 = vpop.xlane.xlu0 %2414
        %v2416 = vsel %vm2277, %v2371, 0.0
        %2417 = vadd.xlane.f32.xlu0 %v2416
        %v2418 = vpop.xlane.xlu0 %2417
        %v2419 = vsel %vm2277, %v2373, 0.0
        %2420 = vadd.xlane.f32.xlu0 %v2419
        %v2421 = vpop.xlane.xlu0 %2420
        %v2422 = vrcp.pop %v2376
        %v2423 = vrcp.pop %v2379
        %v2424 = vrcp.pop %v2382
        %v2425 = vrcp.pop %v2385
        %v2426 = vrcp.pop %v2388
        %v2427 = vrcp.pop %v2391
        %v2428 = vrcp.pop %v2394
        %v2429 = vrcp.pop %v2397
        %v2430 = vrcp.pop %v2400
        %v2431 = vrcp.pop %v2403
        %v2432 = vrcp.pop %v2406
        %v2433 = vrcp.pop %v2409
        %v2434 = vrcp.pop %v2412
        %v2435 = vrcp.pop %v2415
        %v2436 = vrcp.pop %v2418
        %v2437 = vrcp.pop %v2421
        %v2438 = vmul.f32 %v2343, %v2422
        %v2439 = vmul.f32 %v2345, %v2423
        %v2440 = vmul.f32 %v2347, %v2424
        %v2441 = vmul.f32 %v2349, %v2425
        %v2442 = vmul.f32 %v2351, %v2426
        %v2443 = vmul.f32 %v2353, %v2427
        %v2444 = vmul.f32 %v2355, %v2428
        %v2445 = vmul.f32 %v2357, %v2429
        %v2446 = vmul.f32 %v2359, %v2430
        %v2447 = vmul.f32 %v2361, %v2431
        %v2448 = vmul.f32 %v2363, %v2432
        %v2449 = vmul.f32 %v2365, %v2433
        %v2450 = vmul.f32 %v2367, %v2434
        %v2451 = vmul.f32 %v2369, %v2435
        %v2452 = vmul.f32 %v2371, %v2436
        %v2453 = vmul.f32 %v2373, %v2437
        %v2454 = vpack.c.bf16 %v2438, %v2438
        %v2455 = vpack.c.bf16 %v2439, %v2439
        %v2456 = vpack.c.bf16 %v2440, %v2440
        %v2457 = vpack.c.bf16 %v2441, %v2441
        %v2458 = vpack.c.bf16 %v2442, %v2442
        %v2459 = vpack.c.bf16 %v2443, %v2443
        %v2460 = vpack.c.bf16 %v2444, %v2444
        %v2461 = vpack.c.bf16 %v2445, %v2445
        %v2462 = vpack.c.bf16 %v2446, %v2446
        %v2463 = vpack.c.bf16 %v2447, %v2447
        %v2464 = vpack.c.bf16 %v2448, %v2448
        %v2465 = vpack.c.bf16 %v2449, %v2449
        %v2466 = vpack.c.bf16 %v2450, %v2450
        %v2467 = vpack.c.bf16 %v2451, %v2451
        %v2468 = vpack.c.bf16 %v2452, %v2452
        %v2469 = vpack.c.bf16 %v2453, %v2453
        %v2471 = vsel %vm1576, %v2454, 0
        %vm2473 = vcmask 1043456
        %v2475 = vsel %vm2473, %v1560, 0
        %2477 = vmatprep.subr.bf16.mxu0 0
        %2478 = vmatpush1.bf16.msra.mxu0 0
        %2479 = vmatprep.subr.bf16.mxu0 0
        %2480 = vmatpush1.bf16.msra.mxu0 0
        %2481 = vmatprep.subr.bf16.mxu0 0
        %2482 = vmatpush1.bf16.msra.mxu0 0
        %2483 = vmatprep.subr.bf16.mxu0 0
        %2484 = vmatpush1.bf16.msra.mxu0 0
        %2485 = vmatprep.subr.bf16.mxu0 0
        %2486 = vmatpush1.bf16.msra.mxu0 0
        %2487 = vmatprep.subr.bf16.mxu0 0
        %2488 = vmatpush1.bf16.msra.mxu0 0
        %2489 = vmatprep.subr.bf16.mxu0 0
        %2490 = vmatpush1.bf16.msra.mxu0 0
        %2491 = vmatprep.subr.bf16.mxu0 0
        %2492 = vmatpush1.bf16.msra.mxu0 %v2475
        %2493 = vmatprep.subr.bf16.mxu0 0
        %2494 = vmatpush2.bf16.msra.mxu0 0
        %2495 = vmatprep.subr.bf16.mxu0 0
        %2496 = vmatpush2.bf16.msra.mxu0 0
        %2497 = vmatprep.subr.bf16.mxu0 0
        %2498 = vmatpush2.bf16.msra.mxu0 0
        %2499 = vmatprep.subr.bf16.mxu0 0
        %2500 = vmatpush2.bf16.msra.mxu0 0
        %2501 = vmatprep.subr.bf16.mxu0 0
        %2502 = vmatpush2.bf16.msra.mxu0 0
        %2503 = vmatprep.subr.bf16.mxu0 0
        %2504 = vmatpush2.bf16.msra.mxu0 0
        %2505 = vmatprep.subr.bf16.mxu0 0
        %2506 = vmatpush2.bf16.msra.mxu0 0
        %2507 = vmatprep.subr.bf16.mxu0 0
        %2508 = vmatpush2.bf16.msra.mxu0 0
        %2509 = vmatprep.mubr.bf16.mxu0 0
        %2510 = vmatmul.mubr.bf16.gmra.mxu0 %v2471
        %v2511 = vpop.f32.mrf.mxu0
        %v2512 = vadd.f32 0.0, %v2511
        %v2513 = vpop.f32.mrf.mxu0
        %v2514 = vpop.f32.mrf.mxu0
        %v2515 = vpop.f32.mrf.mxu0
        %2516 = vdwg.mxu0
        %v2518 = vsel %vm1576, %v2455, 0
        %v2521 = vsel %vm2473, %v1561, 0
        %2523 = vmatprep.subr.bf16.mxu0 0
        %2524 = vmatpush1.bf16.msra.mxu0 0
        %2525 = vmatprep.subr.bf16.mxu0 0
        %2526 = vmatpush1.bf16.msra.mxu0 0
        %2527 = vmatprep.subr.bf16.mxu0 0
        %2528 = vmatpush1.bf16.msra.mxu0 0
        %2529 = vmatprep.subr.bf16.mxu0 0
        %2530 = vmatpush1.bf16.msra.mxu0 0
        %2531 = vmatprep.subr.bf16.mxu0 0
        %2532 = vmatpush1.bf16.msra.mxu0 0
        %2533 = vmatprep.subr.bf16.mxu0 0
        %2534 = vmatpush1.bf16.msra.mxu0 0
        %2535 = vmatprep.subr.bf16.mxu0 0
        %2536 = vmatpush1.bf16.msra.mxu0 0
        %2537 = vmatprep.subr.bf16.mxu0 0
        %2538 = vmatpush1.bf16.msra.mxu0 %v2521
        %2539 = vmatprep.subr.bf16.mxu0 0
        %2540 = vmatpush2.bf16.msra.mxu0 0
        %2541 = vmatprep.subr.bf16.mxu0 0
        %2542 = vmatpush2.bf16.msra.mxu0 0
        %2543 = vmatprep.subr.bf16.mxu0 0
        %2544 = vmatpush2.bf16.msra.mxu0 0
        %2545 = vmatprep.subr.bf16.mxu0 0
        %2546 = vmatpush2.bf16.msra.mxu0 0
        %2547 = vmatprep.subr.bf16.mxu0 0
        %2548 = vmatpush2.bf16.msra.mxu0 0
        %2549 = vmatprep.subr.bf16.mxu0 0
        %2550 = vmatpush2.bf16.msra.mxu0 0
        %2551 = vmatprep.subr.bf16.mxu0 0
        %2552 = vmatpush2.bf16.msra.mxu0 0
        %2553 = vmatprep.subr.bf16.mxu0 0
        %2554 = vmatpush2.bf16.msra.mxu0 0
        %2555 = vmatprep.mubr.bf16.mxu0 0
        %2556 = vmatmul.mubr.bf16.gmra.mxu0 %v2518
        %v2557 = vpop.f32.mrf.mxu0
        %v2558 = vadd.f32 0.0, %v2557
        %v2559 = vpop.f32.mrf.mxu0
        %v2560 = vpop.f32.mrf.mxu0
        %v2561 = vpop.f32.mrf.mxu0
        %2562 = vdwg.mxu0
        %v2564 = vsel %vm1576, %v2456, 0
        %v2567 = vsel %vm2473, %v1562, 0
        %2569 = vmatprep.subr.bf16.mxu0 0
        %2570 = vmatpush1.bf16.msra.mxu0 0
        %2571 = vmatprep.subr.bf16.mxu0 0
        %2572 = vmatpush1.bf16.msra.mxu0 0
        %2573 = vmatprep.subr.bf16.mxu0 0
        %2574 = vmatpush1.bf16.msra.mxu0 0
        %2575 = vmatprep.subr.bf16.mxu0 0
        %2576 = vmatpush1.bf16.msra.mxu0 0
        %2577 = vmatprep.subr.bf16.mxu0 0
        %2578 = vmatpush1.bf16.msra.mxu0 0
        %2579 = vmatprep.subr.bf16.mxu0 0
        %2580 = vmatpush1.bf16.msra.mxu0 0
        %2581 = vmatprep.subr.bf16.mxu0 0
        %2582 = vmatpush1.bf16.msra.mxu0 0
        %2583 = vmatprep.subr.bf16.mxu0 0
        %2584 = vmatpush1.bf16.msra.mxu0 %v2567
        %2585 = vmatprep.subr.bf16.mxu0 0
        %2586 = vmatpush2.bf16.msra.mxu0 0
        %2587 = vmatprep.subr.bf16.mxu0 0
        %2588 = vmatpush2.bf16.msra.mxu0 0
        %2589 = vmatprep.subr.bf16.mxu0 0
        %2590 = vmatpush2.bf16.msra.mxu0 0
        %2591 = vmatprep.subr.bf16.mxu0 0
        %2592 = vmatpush2.bf16.msra.mxu0 0
        %2593 = vmatprep.subr.bf16.mxu0 0
        %2594 = vmatpush2.bf16.msra.mxu0 0
        %2595 = vmatprep.subr.bf16.mxu0 0
        %2596 = vmatpush2.bf16.msra.mxu0 0
        %2597 = vmatprep.subr.bf16.mxu0 0
        %2598 = vmatpush2.bf16.msra.mxu0 0
        %2599 = vmatprep.subr.bf16.mxu0 0
        %2600 = vmatpush2.bf16.msra.mxu0 0
        %2601 = vmatprep.mubr.bf16.mxu0 0
        %2602 = vmatmul.mubr.bf16.gmra.mxu0 %v2564
        %v2603 = vpop.f32.mrf.mxu0
        %v2604 = vadd.f32 0.0, %v2603
        %v2605 = vpop.f32.mrf.mxu0
        %v2606 = vpop.f32.mrf.mxu0
        %v2607 = vpop.f32.mrf.mxu0
        %2608 = vdwg.mxu0
        %v2610 = vsel %vm1576, %v2457, 0
        %v2613 = vsel %vm2473, %v1563, 0
        %2615 = vmatprep.subr.bf16.mxu0 0
        %2616 = vmatpush1.bf16.msra.mxu0 0
        %2617 = vmatprep.subr.bf16.mxu0 0
        %2618 = vmatpush1.bf16.msra.mxu0 0
        %2619 = vmatprep.subr.bf16.mxu0 0
        %2620 = vmatpush1.bf16.msra.mxu0 0
        %2621 = vmatprep.subr.bf16.mxu0 0
        %2622 = vmatpush1.bf16.msra.mxu0 0
        %2623 = vmatprep.subr.bf16.mxu0 0
        %2624 = vmatpush1.bf16.msra.mxu0 0
        %2625 = vmatprep.subr.bf16.mxu0 0
        %2626 = vmatpush1.bf16.msra.mxu0 0
        %2627 = vmatprep.subr.bf16.mxu0 0
        %2628 = vmatpush1.bf16.msra.mxu0 0
        %2629 = vmatprep.subr.bf16.mxu0 0
        %2630 = vmatpush1.bf16.msra.mxu0 %v2613
        %2631 = vmatprep.subr.bf16.mxu0 0
        %2632 = vmatpush2.bf16.msra.mxu0 0
        %2633 = vmatprep.subr.bf16.mxu0 0
        %2634 = vmatpush2.bf16.msra.mxu0 0
        %2635 = vmatprep.subr.bf16.mxu0 0
        %2636 = vmatpush2.bf16.msra.mxu0 0
        %2637 = vmatprep.subr.bf16.mxu0 0
        %2638 = vmatpush2.bf16.msra.mxu0 0
        %2639 = vmatprep.subr.bf16.mxu0 0
        %2640 = vmatpush2.bf16.msra.mxu0 0
        %2641 = vmatprep.subr.bf16.mxu0 0
        %2642 = vmatpush2.bf16.msra.mxu0 0
        %2643 = vmatprep.subr.bf16.mxu0 0
        %2644 = vmatpush2.bf16.msra.mxu0 0
        %2645 = vmatprep.subr.bf16.mxu0 0
        %2646 = vmatpush2.bf16.msra.mxu0 0
        %2647 = vmatprep.mubr.bf16.mxu0 0
        %2648 = vmatmul.mubr.bf16.gmra.mxu0 %v2610
        %v2649 = vpop.f32.mrf.mxu0
        %v2650 = vadd.f32 0.0, %v2649
        %v2651 = vpop.f32.mrf.mxu0
        %v2652 = vpop.f32.mrf.mxu0
        %v2653 = vpop.f32.mrf.mxu0
        %2654 = vdwg.mxu0
        %v2656 = vsel %vm1576, %v2458, 0
        %v2659 = vsel %vm2473, %v1564, 0
        %2661 = vmatprep.subr.bf16.mxu0 0
        %2662 = vmatpush1.bf16.msra.mxu0 0
        %2663 = vmatprep.subr.bf16.mxu0 0
        %2664 = vmatpush1.bf16.msra.mxu0 0
        %2665 = vmatprep.subr.bf16.mxu0 0
        %2666 = vmatpush1.bf16.msra.mxu0 0
        %2667 = vmatprep.subr.bf16.mxu0 0
        %2668 = vmatpush1.bf16.msra.mxu0 0
        %2669 = vmatprep.subr.bf16.mxu0 0
        %2670 = vmatpush1.bf16.msra.mxu0 0
        %2671 = vmatprep.subr.bf16.mxu0 0
        %2672 = vmatpush1.bf16.msra.mxu0 0
        %2673 = vmatprep.subr.bf16.mxu0 0
        %2674 = vmatpush1.bf16.msra.mxu0 0
        %2675 = vmatprep.subr.bf16.mxu0 0
        %2676 = vmatpush1.bf16.msra.mxu0 %v2659
        %2677 = vmatprep.subr.bf16.mxu0 0
        %2678 = vmatpush2.bf16.msra.mxu0 0
        %2679 = vmatprep.subr.bf16.mxu0 0
        %2680 = vmatpush2.bf16.msra.mxu0 0
        %2681 = vmatprep.subr.bf16.mxu0 0
        %2682 = vmatpush2.bf16.msra.mxu0 0
        %2683 = vmatprep.subr.bf16.mxu0 0
        %2684 = vmatpush2.bf16.msra.mxu0 0
        %2685 = vmatprep.subr.bf16.mxu0 0
        %2686 = vmatpush2.bf16.msra.mxu0 0
        %2687 = vmatprep.subr.bf16.mxu0 0
        %2688 = vmatpush2.bf16.msra.mxu0 0
        %2689 = vmatprep.subr.bf16.mxu0 0
        %2690 = vmatpush2.bf16.msra.mxu0 0
        %2691 = vmatprep.subr.bf16.mxu0 0
        %2692 = vmatpush2.bf16.msra.mxu0 0
        %2693 = vmatprep.mubr.bf16.mxu0 0
        %2694 = vmatmul.mubr.bf16.gmra.mxu0 %v2656
        %v2695 = vpop.f32.mrf.mxu0
        %v2696 = vadd.f32 0.0, %v2695
        %v2697 = vpop.f32.mrf.mxu0
        %v2698 = vpop.f32.mrf.mxu0
        %v2699 = vpop.f32.mrf.mxu0
        %2700 = vdwg.mxu0
        %v2702 = vsel %vm1576, %v2459, 0
        %v2705 = vsel %vm2473, %v1565, 0
        %2707 = vmatprep.subr.bf16.mxu0 0
        %2708 = vmatpush1.bf16.msra.mxu0 0
        %2709 = vmatprep.subr.bf16.mxu0 0
        %2710 = vmatpush1.bf16.msra.mxu0 0
        %2711 = vmatprep.subr.bf16.mxu0 0
        %2712 = vmatpush1.bf16.msra.mxu0 0
        %2713 = vmatprep.subr.bf16.mxu0 0
        %2714 = vmatpush1.bf16.msra.mxu0 0
        %2715 = vmatprep.subr.bf16.mxu0 0
        %2716 = vmatpush1.bf16.msra.mxu0 0
        %2717 = vmatprep.subr.bf16.mxu0 0
        %2718 = vmatpush1.bf16.msra.mxu0 0
        %2719 = vmatprep.subr.bf16.mxu0 0
        %2720 = vmatpush1.bf16.msra.mxu0 0
        %2721 = vmatprep.subr.bf16.mxu0 0
        %2722 = vmatpush1.bf16.msra.mxu0 %v2705
        %2723 = vmatprep.subr.bf16.mxu0 0
        %2724 = vmatpush2.bf16.msra.mxu0 0
        %2725 = vmatprep.subr.bf16.mxu0 0
        %2726 = vmatpush2.bf16.msra.mxu0 0
        %2727 = vmatprep.subr.bf16.mxu0 0
        %2728 = vmatpush2.bf16.msra.mxu0 0
        %2729 = vmatprep.subr.bf16.mxu0 0
        %2730 = vmatpush2.bf16.msra.mxu0 0
        %2731 = vmatprep.subr.bf16.mxu0 0
        %2732 = vmatpush2.bf16.msra.mxu0 0
        %2733 = vmatprep.subr.bf16.mxu0 0
        %2734 = vmatpush2.bf16.msra.mxu0 0
        %2735 = vmatprep.subr.bf16.mxu0 0
        %2736 = vmatpush2.bf16.msra.mxu0 0
        %2737 = vmatprep.subr.bf16.mxu0 0
        %2738 = vmatpush2.bf16.msra.mxu0 0
        %2739 = vmatprep.mubr.bf16.mxu0 0
        %2740 = vmatmul.mubr.bf16.gmra.mxu0 %v2702
        %v2741 = vpop.f32.mrf.mxu0
        %v2742 = vadd.f32 0.0, %v2741
        %v2743 = vpop.f32.mrf.mxu0
        %v2744 = vpop.f32.mrf.mxu0
        %v2745 = vpop.f32.mrf.mxu0
        %2746 = vdwg.mxu0
        %v2748 = vsel %vm1576, %v2460, 0
        %v2751 = vsel %vm2473, %v1566, 0
        %2753 = vmatprep.subr.bf16.mxu0 0
        %2754 = vmatpush1.bf16.msra.mxu0 0
        %2755 = vmatprep.subr.bf16.mxu0 0
        %2756 = vmatpush1.bf16.msra.mxu0 0
        %2757 = vmatprep.subr.bf16.mxu0 0
        %2758 = vmatpush1.bf16.msra.mxu0 0
        %2759 = vmatprep.subr.bf16.mxu0 0
        %2760 = vmatpush1.bf16.msra.mxu0 0
        %2761 = vmatprep.subr.bf16.mxu0 0
        %2762 = vmatpush1.bf16.msra.mxu0 0
        %2763 = vmatprep.subr.bf16.mxu0 0
        %2764 = vmatpush1.bf16.msra.mxu0 0
        %2765 = vmatprep.subr.bf16.mxu0 0
        %2766 = vmatpush1.bf16.msra.mxu0 0
        %2767 = vmatprep.subr.bf16.mxu0 0
        %2768 = vmatpush1.bf16.msra.mxu0 %v2751
        %2769 = vmatprep.subr.bf16.mxu0 0
        %2770 = vmatpush2.bf16.msra.mxu0 0
        %2771 = vmatprep.subr.bf16.mxu0 0
        %2772 = vmatpush2.bf16.msra.mxu0 0
        %2773 = vmatprep.subr.bf16.mxu0 0
        %2774 = vmatpush2.bf16.msra.mxu0 0
        %2775 = vmatprep.subr.bf16.mxu0 0
        %2776 = vmatpush2.bf16.msra.mxu0 0
        %2777 = vmatprep.subr.bf16.mxu0 0
        %2778 = vmatpush2.bf16.msra.mxu0 0
        %2779 = vmatprep.subr.bf16.mxu0 0
        %2780 = vmatpush2.bf16.msra.mxu0 0
        %2781 = vmatprep.subr.bf16.mxu0 0
        %2782 = vmatpush2.bf16.msra.mxu0 0
        %2783 = vmatprep.subr.bf16.mxu0 0
        %2784 = vmatpush2.bf16.msra.mxu0 0
        %2785 = vmatprep.mubr.bf16.mxu0 0
        %2786 = vmatmul.mubr.bf16.gmra.mxu0 %v2748
        %v2787 = vpop.f32.mrf.mxu0
        %v2788 = vadd.f32 0.0, %v2787
        %v2789 = vpop.f32.mrf.mxu0
        %v2790 = vpop.f32.mrf.mxu0
        %v2791 = vpop.f32.mrf.mxu0
        %2792 = vdwg.mxu0
        %v2794 = vsel %vm1576, %v2461, 0
        %v2797 = vsel %vm2473, %v1567, 0
        %2799 = vmatprep.subr.bf16.mxu0 0
        %2800 = vmatpush1.bf16.msra.mxu0 0
        %2801 = vmatprep.subr.bf16.mxu0 0
        %2802 = vmatpush1.bf16.msra.mxu0 0
        %2803 = vmatprep.subr.bf16.mxu0 0
        %2804 = vmatpush1.bf16.msra.mxu0 0
        %2805 = vmatprep.subr.bf16.mxu0 0
        %2806 = vmatpush1.bf16.msra.mxu0 0
        %2807 = vmatprep.subr.bf16.mxu0 0
        %2808 = vmatpush1.bf16.msra.mxu0 0
        %2809 = vmatprep.subr.bf16.mxu0 0
        %2810 = vmatpush1.bf16.msra.mxu0 0
        %2811 = vmatprep.subr.bf16.mxu0 0
        %2812 = vmatpush1.bf16.msra.mxu0 0
        %2813 = vmatprep.subr.bf16.mxu0 0
        %2814 = vmatpush1.bf16.msra.mxu0 %v2797
        %2815 = vmatprep.subr.bf16.mxu0 0
        %2816 = vmatpush2.bf16.msra.mxu0 0
        %2817 = vmatprep.subr.bf16.mxu0 0
        %2818 = vmatpush2.bf16.msra.mxu0 0
        %2819 = vmatprep.subr.bf16.mxu0 0
        %2820 = vmatpush2.bf16.msra.mxu0 0
        %2821 = vmatprep.subr.bf16.mxu0 0
        %2822 = vmatpush2.bf16.msra.mxu0 0
        %2823 = vmatprep.subr.bf16.mxu0 0
        %2824 = vmatpush2.bf16.msra.mxu0 0
        %2825 = vmatprep.subr.bf16.mxu0 0
        %2826 = vmatpush2.bf16.msra.mxu0 0
        %2827 = vmatprep.subr.bf16.mxu0 0
        %2828 = vmatpush2.bf16.msra.mxu0 0
        %2829 = vmatprep.subr.bf16.mxu0 0
        %2830 = vmatpush2.bf16.msra.mxu0 0
        %2831 = vmatprep.mubr.bf16.mxu0 0
        %2832 = vmatmul.mubr.bf16.gmra.mxu0 %v2794
        %v2833 = vpop.f32.mrf.mxu0
        %v2834 = vadd.f32 0.0, %v2833
        %v2835 = vpop.f32.mrf.mxu0
        %v2836 = vpop.f32.mrf.mxu0
        %v2837 = vpop.f32.mrf.mxu0
        %2838 = vdwg.mxu0
        %v2840 = vsel %vm1576, %v2462, 0
        %v2843 = vsel %vm2473, %v1568, 0
        %2845 = vmatprep.subr.bf16.mxu0 0
        %2846 = vmatpush1.bf16.msra.mxu0 0
        %2847 = vmatprep.subr.bf16.mxu0 0
        %2848 = vmatpush1.bf16.msra.mxu0 0
        %2849 = vmatprep.subr.bf16.mxu0 0
        %2850 = vmatpush1.bf16.msra.mxu0 0
        %2851 = vmatprep.subr.bf16.mxu0 0
        %2852 = vmatpush1.bf16.msra.mxu0 0
        %2853 = vmatprep.subr.bf16.mxu0 0
        %2854 = vmatpush1.bf16.msra.mxu0 0
        %2855 = vmatprep.subr.bf16.mxu0 0
        %2856 = vmatpush1.bf16.msra.mxu0 0
        %2857 = vmatprep.subr.bf16.mxu0 0
        %2858 = vmatpush1.bf16.msra.mxu0 0
        %2859 = vmatprep.subr.bf16.mxu0 0
        %2860 = vmatpush1.bf16.msra.mxu0 %v2843
        %2861 = vmatprep.subr.bf16.mxu0 0
        %2862 = vmatpush2.bf16.msra.mxu0 0
        %2863 = vmatprep.subr.bf16.mxu0 0
        %2864 = vmatpush2.bf16.msra.mxu0 0
        %2865 = vmatprep.subr.bf16.mxu0 0
        %2866 = vmatpush2.bf16.msra.mxu0 0
        %2867 = vmatprep.subr.bf16.mxu0 0
        %2868 = vmatpush2.bf16.msra.mxu0 0
        %2869 = vmatprep.subr.bf16.mxu0 0
        %2870 = vmatpush2.bf16.msra.mxu0 0
        %2871 = vmatprep.subr.bf16.mxu0 0
        %2872 = vmatpush2.bf16.msra.mxu0 0
        %2873 = vmatprep.subr.bf16.mxu0 0
        %2874 = vmatpush2.bf16.msra.mxu0 0
        %2875 = vmatprep.subr.bf16.mxu0 0
        %2876 = vmatpush2.bf16.msra.mxu0 0
        %2877 = vmatprep.mubr.bf16.mxu0 0
        %2878 = vmatmul.mubr.bf16.gmra.mxu0 %v2840
        %v2879 = vpop.f32.mrf.mxu0
        %v2880 = vadd.f32 0.0, %v2879
        %v2881 = vpop.f32.mrf.mxu0
        %v2882 = vpop.f32.mrf.mxu0
        %v2883 = vpop.f32.mrf.mxu0
        %2884 = vdwg.mxu0
        %v2886 = vsel %vm1576, %v2463, 0
        %v2889 = vsel %vm2473, %v1569, 0
        %2891 = vmatprep.subr.bf16.mxu0 0
        %2892 = vmatpush1.bf16.msra.mxu0 0
        %2893 = vmatprep.subr.bf16.mxu0 0
        %2894 = vmatpush1.bf16.msra.mxu0 0
        %2895 = vmatprep.subr.bf16.mxu0 0
        %2896 = vmatpush1.bf16.msra.mxu0 0
        %2897 = vmatprep.subr.bf16.mxu0 0
        %2898 = vmatpush1.bf16.msra.mxu0 0
        %2899 = vmatprep.subr.bf16.mxu0 0
        %2900 = vmatpush1.bf16.msra.mxu0 0
        %2901 = vmatprep.subr.bf16.mxu0 0
        %2902 = vmatpush1.bf16.msra.mxu0 0
        %2903 = vmatprep.subr.bf16.mxu0 0
        %2904 = vmatpush1.bf16.msra.mxu0 0
        %2905 = vmatprep.subr.bf16.mxu0 0
        %2906 = vmatpush1.bf16.msra.mxu0 %v2889
        %2907 = vmatprep.subr.bf16.mxu0 0
        %2908 = vmatpush2.bf16.msra.mxu0 0
        %2909 = vmatprep.subr.bf16.mxu0 0
        %2910 = vmatpush2.bf16.msra.mxu0 0
        %2911 = vmatprep.subr.bf16.mxu0 0
        %2912 = vmatpush2.bf16.msra.mxu0 0
        %2913 = vmatprep.subr.bf16.mxu0 0
        %2914 = vmatpush2.bf16.msra.mxu0 0
        %2915 = vmatprep.subr.bf16.mxu0 0
        %2916 = vmatpush2.bf16.msra.mxu0 0
        %2917 = vmatprep.subr.bf16.mxu0 0
        %2918 = vmatpush2.bf16.msra.mxu0 0
        %2919 = vmatprep.subr.bf16.mxu0 0
        %2920 = vmatpush2.bf16.msra.mxu0 0
        %2921 = vmatprep.subr.bf16.mxu0 0
        %2922 = vmatpush2.bf16.msra.mxu0 0
        %2923 = vmatprep.mubr.bf16.mxu0 0
        %2924 = vmatmul.mubr.bf16.gmra.mxu0 %v2886
        %v2925 = vpop.f32.mrf.mxu0
        %v2926 = vadd.f32 0.0, %v2925
        %v2927 = vpop.f32.mrf.mxu0
        %v2928 = vpop.f32.mrf.mxu0
        %v2929 = vpop.f32.mrf.mxu0
        %2930 = vdwg.mxu0
        %v2932 = vsel %vm1576, %v2464, 0
        %v2935 = vsel %vm2473, %v1570, 0
        %2937 = vmatprep.subr.bf16.mxu0 0
        %2938 = vmatpush1.bf16.msra.mxu0 0
        %2939 = vmatprep.subr.bf16.mxu0 0
        %2940 = vmatpush1.bf16.msra.mxu0 0
        %2941 = vmatprep.subr.bf16.mxu0 0
        %2942 = vmatpush1.bf16.msra.mxu0 0
        %2943 = vmatprep.subr.bf16.mxu0 0
        %2944 = vmatpush1.bf16.msra.mxu0 0
        %2945 = vmatprep.subr.bf16.mxu0 0
        %2946 = vmatpush1.bf16.msra.mxu0 0
        %2947 = vmatprep.subr.bf16.mxu0 0
        %2948 = vmatpush1.bf16.msra.mxu0 0
        %2949 = vmatprep.subr.bf16.mxu0 0
        %2950 = vmatpush1.bf16.msra.mxu0 0
        %2951 = vmatprep.subr.bf16.mxu0 0
        %2952 = vmatpush1.bf16.msra.mxu0 %v2935
        %2953 = vmatprep.subr.bf16.mxu0 0
        %2954 = vmatpush2.bf16.msra.mxu0 0
        %2955 = vmatprep.subr.bf16.mxu0 0
        %2956 = vmatpush2.bf16.msra.mxu0 0
        %2957 = vmatprep.subr.bf16.mxu0 0
        %2958 = vmatpush2.bf16.msra.mxu0 0
        %2959 = vmatprep.subr.bf16.mxu0 0
        %2960 = vmatpush2.bf16.msra.mxu0 0
        %2961 = vmatprep.subr.bf16.mxu0 0
        %2962 = vmatpush2.bf16.msra.mxu0 0
        %2963 = vmatprep.subr.bf16.mxu0 0
        %2964 = vmatpush2.bf16.msra.mxu0 0
        %2965 = vmatprep.subr.bf16.mxu0 0
        %2966 = vmatpush2.bf16.msra.mxu0 0
        %2967 = vmatprep.subr.bf16.mxu0 0
        %2968 = vmatpush2.bf16.msra.mxu0 0
        %2969 = vmatprep.mubr.bf16.mxu0 0
        %2970 = vmatmul.mubr.bf16.gmra.mxu0 %v2932
        %v2971 = vpop.f32.mrf.mxu0
        %v2972 = vadd.f32 0.0, %v2971
        %v2973 = vpop.f32.mrf.mxu0
        %v2974 = vpop.f32.mrf.mxu0
        %v2975 = vpop.f32.mrf.mxu0
        %2976 = vdwg.mxu0
        %v2978 = vsel %vm1576, %v2465, 0
        %v2981 = vsel %vm2473, %v1571, 0
        %2983 = vmatprep.subr.bf16.mxu0 0
        %2984 = vmatpush1.bf16.msra.mxu0 0
        %2985 = vmatprep.subr.bf16.mxu0 0
        %2986 = vmatpush1.bf16.msra.mxu0 0
        %2987 = vmatprep.subr.bf16.mxu0 0
        %2988 = vmatpush1.bf16.msra.mxu0 0
        %2989 = vmatprep.subr.bf16.mxu0 0
        %2990 = vmatpush1.bf16.msra.mxu0 0
        %2991 = vmatprep.subr.bf16.mxu0 0
        %2992 = vmatpush1.bf16.msra.mxu0 0
        %2993 = vmatprep.subr.bf16.mxu0 0
        %2994 = vmatpush1.bf16.msra.mxu0 0
        %2995 = vmatprep.subr.bf16.mxu0 0
        %2996 = vmatpush1.bf16.msra.mxu0 0
        %2997 = vmatprep.subr.bf16.mxu0 0
        %2998 = vmatpush1.bf16.msra.mxu0 %v2981
        %2999 = vmatprep.subr.bf16.mxu0 0
        %3000 = vmatpush2.bf16.msra.mxu0 0
        %3001 = vmatprep.subr.bf16.mxu0 0
        %3002 = vmatpush2.bf16.msra.mxu0 0
        %3003 = vmatprep.subr.bf16.mxu0 0
        %3004 = vmatpush2.bf16.msra.mxu0 0
        %3005 = vmatprep.subr.bf16.mxu0 0
        %3006 = vmatpush2.bf16.msra.mxu0 0
        %3007 = vmatprep.subr.bf16.mxu0 0
        %3008 = vmatpush2.bf16.msra.mxu0 0
        %3009 = vmatprep.subr.bf16.mxu0 0
        %3010 = vmatpush2.bf16.msra.mxu0 0
        %3011 = vmatprep.subr.bf16.mxu0 0
        %3012 = vmatpush2.bf16.msra.mxu0 0
        %3013 = vmatprep.subr.bf16.mxu0 0
        %3014 = vmatpush2.bf16.msra.mxu0 0
        %3015 = vmatprep.mubr.bf16.mxu0 0
        %3016 = vmatmul.mubr.bf16.gmra.mxu0 %v2978
        %v3017 = vpop.f32.mrf.mxu0
        %v3018 = vadd.f32 0.0, %v3017
        %v3019 = vpop.f32.mrf.mxu0
        %v3020 = vpop.f32.mrf.mxu0
        %v3021 = vpop.f32.mrf.mxu0
        %3022 = vdwg.mxu0
        %v3024 = vsel %vm1576, %v2466, 0
        %v3027 = vsel %vm2473, %v1572, 0
        %3029 = vmatprep.subr.bf16.mxu0 0
        %3030 = vmatpush1.bf16.msra.mxu0 0
        %3031 = vmatprep.subr.bf16.mxu0 0
        %3032 = vmatpush1.bf16.msra.mxu0 0
        %3033 = vmatprep.subr.bf16.mxu0 0
        %3034 = vmatpush1.bf16.msra.mxu0 0
        %3035 = vmatprep.subr.bf16.mxu0 0
        %3036 = vmatpush1.bf16.msra.mxu0 0
        %3037 = vmatprep.subr.bf16.mxu0 0
        %3038 = vmatpush1.bf16.msra.mxu0 0
        %3039 = vmatprep.subr.bf16.mxu0 0
        %3040 = vmatpush1.bf16.msra.mxu0 0
        %3041 = vmatprep.subr.bf16.mxu0 0
        %3042 = vmatpush1.bf16.msra.mxu0 0
        %3043 = vmatprep.subr.bf16.mxu0 0
        %3044 = vmatpush1.bf16.msra.mxu0 %v3027
        %3045 = vmatprep.subr.bf16.mxu0 0
        %3046 = vmatpush2.bf16.msra.mxu0 0
        %3047 = vmatprep.subr.bf16.mxu0 0
        %3048 = vmatpush2.bf16.msra.mxu0 0
        %3049 = vmatprep.subr.bf16.mxu0 0
        %3050 = vmatpush2.bf16.msra.mxu0 0
        %3051 = vmatprep.subr.bf16.mxu0 0
        %3052 = vmatpush2.bf16.msra.mxu0 0
        %3053 = vmatprep.subr.bf16.mxu0 0
        %3054 = vmatpush2.bf16.msra.mxu0 0
        %3055 = vmatprep.subr.bf16.mxu0 0
        %3056 = vmatpush2.bf16.msra.mxu0 0
        %3057 = vmatprep.subr.bf16.mxu0 0
        %3058 = vmatpush2.bf16.msra.mxu0 0
        %3059 = vmatprep.subr.bf16.mxu0 0
        %3060 = vmatpush2.bf16.msra.mxu0 0
        %3061 = vmatprep.mubr.bf16.mxu0 0
        %3062 = vmatmul.mubr.bf16.gmra.mxu0 %v3024
        %v3063 = vpop.f32.mrf.mxu0
        %v3064 = vadd.f32 0.0, %v3063
        %v3065 = vpop.f32.mrf.mxu0
        %v3066 = vpop.f32.mrf.mxu0
        %v3067 = vpop.f32.mrf.mxu0
        %3068 = vdwg.mxu0
        %v3070 = vsel %vm1576, %v2467, 0
        %v3073 = vsel %vm2473, %v1573, 0
        %3075 = vmatprep.subr.bf16.mxu0 0
        %3076 = vmatpush1.bf16.msra.mxu0 0
        %3077 = vmatprep.subr.bf16.mxu0 0
        %3078 = vmatpush1.bf16.msra.mxu0 0
        %3079 = vmatprep.subr.bf16.mxu0 0
        %3080 = vmatpush1.bf16.msra.mxu0 0
        %3081 = vmatprep.subr.bf16.mxu0 0
        %3082 = vmatpush1.bf16.msra.mxu0 0
        %3083 = vmatprep.subr.bf16.mxu0 0
        %3084 = vmatpush1.bf16.msra.mxu0 0
        %3085 = vmatprep.subr.bf16.mxu0 0
        %3086 = vmatpush1.bf16.msra.mxu0 0
        %3087 = vmatprep.subr.bf16.mxu0 0
        %3088 = vmatpush1.bf16.msra.mxu0 0
        %3089 = vmatprep.subr.bf16.mxu0 0
        %3090 = vmatpush1.bf16.msra.mxu0 %v3073
        %3091 = vmatprep.subr.bf16.mxu0 0
        %3092 = vmatpush2.bf16.msra.mxu0 0
        %3093 = vmatprep.subr.bf16.mxu0 0
        %3094 = vmatpush2.bf16.msra.mxu0 0
        %3095 = vmatprep.subr.bf16.mxu0 0
        %3096 = vmatpush2.bf16.msra.mxu0 0
        %3097 = vmatprep.subr.bf16.mxu0 0
        %3098 = vmatpush2.bf16.msra.mxu0 0
        %3099 = vmatprep.subr.bf16.mxu0 0
        %3100 = vmatpush2.bf16.msra.mxu0 0
        %3101 = vmatprep.subr.bf16.mxu0 0
        %3102 = vmatpush2.bf16.msra.mxu0 0
        %3103 = vmatprep.subr.bf16.mxu0 0
        %3104 = vmatpush2.bf16.msra.mxu0 0
        %3105 = vmatprep.subr.bf16.mxu0 0
        %3106 = vmatpush2.bf16.msra.mxu0 0
        %3107 = vmatprep.mubr.bf16.mxu0 0
        %3108 = vmatmul.mubr.bf16.gmra.mxu0 %v3070
        %v3109 = vpop.f32.mrf.mxu0
        %v3110 = vadd.f32 0.0, %v3109
        %v3111 = vpop.f32.mrf.mxu0
        %v3112 = vpop.f32.mrf.mxu0
        %v3113 = vpop.f32.mrf.mxu0
        %3114 = vdwg.mxu0
        %v3116 = vsel %vm1576, %v2468, 0
        %v3119 = vsel %vm2473, %v1574, 0
        %3121 = vmatprep.subr.bf16.mxu0 0
        %3122 = vmatpush1.bf16.msra.mxu0 0
        %3123 = vmatprep.subr.bf16.mxu0 0
        %3124 = vmatpush1.bf16.msra.mxu0 0
        %3125 = vmatprep.subr.bf16.mxu0 0
        %3126 = vmatpush1.bf16.msra.mxu0 0
        %3127 = vmatprep.subr.bf16.mxu0 0
        %3128 = vmatpush1.bf16.msra.mxu0 0
        %3129 = vmatprep.subr.bf16.mxu0 0
        %3130 = vmatpush1.bf16.msra.mxu0 0
        %3131 = vmatprep.subr.bf16.mxu0 0
        %3132 = vmatpush1.bf16.msra.mxu0 0
        %3133 = vmatprep.subr.bf16.mxu0 0
        %3134 = vmatpush1.bf16.msra.mxu0 0
        %3135 = vmatprep.subr.bf16.mxu0 0
        %3136 = vmatpush1.bf16.msra.mxu0 %v3119
        %3137 = vmatprep.subr.bf16.mxu0 0
        %3138 = vmatpush2.bf16.msra.mxu0 0
        %3139 = vmatprep.subr.bf16.mxu0 0
        %3140 = vmatpush2.bf16.msra.mxu0 0
        %3141 = vmatprep.subr.bf16.mxu0 0
        %3142 = vmatpush2.bf16.msra.mxu0 0
        %3143 = vmatprep.subr.bf16.mxu0 0
        %3144 = vmatpush2.bf16.msra.mxu0 0
        %3145 = vmatprep.subr.bf16.mxu0 0
        %3146 = vmatpush2.bf16.msra.mxu0 0
        %3147 = vmatprep.subr.bf16.mxu0 0
        %3148 = vmatpush2.bf16.msra.mxu0 0
        %3149 = vmatprep.subr.bf16.mxu0 0
        %3150 = vmatpush2.bf16.msra.mxu0 0
        %3151 = vmatprep.subr.bf16.mxu0 0
        %3152 = vmatpush2.bf16.msra.mxu0 0
        %3153 = vmatprep.mubr.bf16.mxu0 0
        %3154 = vmatmul.mubr.bf16.gmra.mxu0 %v3116
        %v3155 = vpop.f32.mrf.mxu0
        %v3156 = vadd.f32 0.0, %v3155
        %v3157 = vpop.f32.mrf.mxu0
        %v3158 = vpop.f32.mrf.mxu0
        %v3159 = vpop.f32.mrf.mxu0
        %3160 = vdwg.mxu0
        %v3162 = vsel %vm1576, %v2469, 0
        %v3165 = vsel %vm2473, %v1575, 0
        %3167 = vmatprep.subr.bf16.mxu0 0
        %3168 = vmatpush1.bf16.msra.mxu0 0
        %3169 = vmatprep.subr.bf16.mxu0 0
        %3170 = vmatpush1.bf16.msra.mxu0 0
        %3171 = vmatprep.subr.bf16.mxu0 0
        %3172 = vmatpush1.bf16.msra.mxu0 0
        %3173 = vmatprep.subr.bf16.mxu0 0
        %3174 = vmatpush1.bf16.msra.mxu0 0
        %3175 = vmatprep.subr.bf16.mxu0 0
        %3176 = vmatpush1.bf16.msra.mxu0 0
        %3177 = vmatprep.subr.bf16.mxu0 0
        %3178 = vmatpush1.bf16.msra.mxu0 0
        %3179 = vmatprep.subr.bf16.mxu0 0
        %3180 = vmatpush1.bf16.msra.mxu0 0
        %3181 = vmatprep.subr.bf16.mxu0 0
        %3182 = vmatpush1.bf16.msra.mxu0 %v3165
        %3183 = vmatprep.subr.bf16.mxu0 0
        %3184 = vmatpush2.bf16.msra.mxu0 0
        %3185 = vmatprep.subr.bf16.mxu0 0
        %3186 = vmatpush2.bf16.msra.mxu0 0
        %3187 = vmatprep.subr.bf16.mxu0 0
        %3188 = vmatpush2.bf16.msra.mxu0 0
        %3189 = vmatprep.subr.bf16.mxu0 0
        %3190 = vmatpush2.bf16.msra.mxu0 0
        %3191 = vmatprep.subr.bf16.mxu0 0
        %3192 = vmatpush2.bf16.msra.mxu0 0
        %3193 = vmatprep.subr.bf16.mxu0 0
        %3194 = vmatpush2.bf16.msra.mxu0 0
        %3195 = vmatprep.subr.bf16.mxu0 0
        %3196 = vmatpush2.bf16.msra.mxu0 0
        %3197 = vmatprep.subr.bf16.mxu0 0
        %3198 = vmatpush2.bf16.msra.mxu0 0
        %3199 = vmatprep.mubr.bf16.mxu0 0
        %3200 = vmatmul.mubr.bf16.gmra.mxu0 %v3162
        %v3201 = vpop.f32.mrf.mxu0
        %v3202 = vadd.f32 0.0, %v3201
        %v3203 = vpop.f32.mrf.mxu0
        %v3204 = vpop.f32.mrf.mxu0
        %v3205 = vpop.f32.mrf.mxu0
        %3206 = vdwg.mxu0
        %3211 = vrot.lane.b32.xlu0 %v2696, 8
        %v3212 = vpop.permute.xlu0 %3211
        %3213 = vrot.lane.b32.xlu0 %v2742, 8
        %v3214 = vpop.permute.xlu0 %3213
        %3215 = vrot.lane.b32.xlu0 %v2788, 8
        %v3216 = vpop.permute.xlu0 %3215
        %3217 = vrot.lane.b32.xlu0 %v2834, 8
        %v3218 = vpop.permute.xlu0 %3217
        %3227 = vrot.lane.b32.xlu0 %v2880, 16
        %v3228 = vpop.permute.xlu0 %3227
        %3229 = vrot.lane.b32.xlu0 %v2926, 16
        %v3230 = vpop.permute.xlu0 %3229
        %3231 = vrot.lane.b32.xlu0 %v2972, 16
        %v3232 = vpop.permute.xlu0 %3231
        %3233 = vrot.lane.b32.xlu0 %v3018, 16
        %v3234 = vpop.permute.xlu0 %3233
        %3243 = vrot.lane.b32.xlu0 %v3064, 24
        %v3244 = vpop.permute.xlu0 %3243
        %3245 = vrot.lane.b32.xlu0 %v3110, 24
        %v3246 = vpop.permute.xlu0 %3245
        %3247 = vrot.lane.b32.xlu0 %v3156, 24
        %v3248 = vpop.permute.xlu0 %3247
        %3249 = vrot.lane.b32.xlu0 %v3202, 24
        %v3250 = vpop.permute.xlu0 %3249
        %v3255 = vsel %vm1576, %v2512, %v3212
        %v3256 = vsel %vm1576, %v2558, %v3214
        %v3257 = vsel %vm1576, %v2604, %v3216
        %v3258 = vsel %vm1576, %v2650, %v3218
        %vm3259 = vcmask 130048
        %v3260 = vsel %vm3259, %v3255, %v3228
        %v3261 = vsel %vm3259, %v3256, %v3230
        %v3262 = vsel %vm3259, %v3257, %v3232
        %v3263 = vsel %vm3259, %v3258, %v3234
        %vm3264 = vcmask 195584
        %v3265 = vsel %vm3264, %v3260, %v3244
        %v3266 = vsel %vm3264, %v3261, %v3246
        %v3267 = vsel %vm3264, %v3262, %v3248
        %v3268 = vsel %vm3264, %v3263, %v3250
        %v3269 = vadd.f32 %v1096, %v3265
        %v3270 = vadd.f32 %v1096, %v3266
        %v3271 = vadd.f32 %v1096, %v3267
        %v3272 = vadd.f32 %v1096, %v3268
        %vm3273 = vcmask 257024
        %v3274 = vsel %vm3273, %v3269, 0.0
        %3275 = vadd.xlane.f32.xlu0 %v3274
        %v3276 = vpop.xlane.xlu0 %3275
        %v3277 = vsel %vm3273, %v3270, 0.0
        %3278 = vadd.xlane.f32.xlu0 %v3277
        %v3279 = vpop.xlane.xlu0 %3278
        %v3280 = vsel %vm3273, %v3271, 0.0
        %3281 = vadd.xlane.f32.xlu0 %v3280
        %v3282 = vpop.xlane.xlu0 %3281
        %v3283 = vsel %vm3273, %v3272, 0.0
        %3284 = vadd.xlane.f32.xlu0 %v3283
        %v3285 = vpop.xlane.xlu0 %3284
        %v3286 = vmul.f32 %v3276, %v1110
        %v3287 = vmul.f32 %v3279, %v1110
        %v3288 = vmul.f32 %v3282, %v1110
        %v3289 = vmul.f32 %v3285, %v1110
        %v3290 = vsel %vm2473, %v3286, 0.0
        %v3291 = vrot.slane %v3290, 4
        %v3292 = vadd.f32 %v3290, %v3291
        %v3293 = vrot.slane %v3292, 2
        %v3294 = vadd.f32 %v3292, %v3293
        %v3295 = vrot.slane %v3294, 1
        %v3296 = vadd.f32 %v3294, %v3295
        %v3297 = vsel %vm2473, %v3287, 0.0
        %v3298 = vrot.slane %v3297, 4
        %v3299 = vadd.f32 %v3297, %v3298
        %v3300 = vrot.slane %v3299, 2
        %v3301 = vadd.f32 %v3299, %v3300
        %v3302 = vrot.slane %v3301, 1
        %v3303 = vadd.f32 %v3301, %v3302
        %v3304 = vsel %vm2473, %v3288, 0.0
        %v3305 = vrot.slane %v3304, 4
        %v3306 = vadd.f32 %v3304, %v3305
        %v3307 = vrot.slane %v3306, 2
        %v3308 = vadd.f32 %v3306, %v3307
        %v3309 = vrot.slane %v3308, 1
        %v3310 = vadd.f32 %v3308, %v3309
        %v3311 = vsel %vm2473, %v3289, 0.0
        %v3312 = vrot.slane %v3311, 4
        %v3313 = vadd.f32 %v3311, %v3312
        %v3314 = vrot.slane %v3313, 2
        %v3315 = vadd.f32 %v3313, %v3314
        %v3316 = vrot.slane %v3315, 1
        %v3317 = vadd.f32 %v3315, %v3316
        %v3318 = vrcp.pop 4.0
        %v3319 = vmul.f32 %v3296, %v3318
        %v3320 = vmul.f32 %v3303, %v3318
        %v3321 = vmul.f32 %v3310, %v3318
        %v3322 = vmul.f32 %v3317, %v3318
        %v3323 = vsub.f32 %v3269, %v3319
        %v3324 = vsub.f32 %v3270, %v3320
        %v3325 = vsub.f32 %v3271, %v3321
        %v3326 = vsub.f32 %v3272, %v3322
        %v3327 = vmul.f32 %v3323, %v3323
        %v3328 = vmul.f32 %v3324, %v3324
        %v3329 = vmul.f32 %v3325, %v3325
        %v3330 = vmul.f32 %v3326, %v3326
        %v3331 = vsel %vm3273, %v3327, 0.0
        %3332 = vadd.xlane.f32.xlu0 %v3331
        %v3333 = vpop.xlane.xlu0 %3332
        %v3334 = vsel %vm3273, %v3328, 0.0
        %3335 = vadd.xlane.f32.xlu0 %v3334
        %v3336 = vpop.xlane.xlu0 %3335
        %v3337 = vsel %vm3273, %v3329, 0.0
        %3338 = vadd.xlane.f32.xlu0 %v3337
        %v3339 = vpop.xlane.xlu0 %3338
        %v3340 = vsel %vm3273, %v3330, 0.0
        %3341 = vadd.xlane.f32.xlu0 %v3340
        %v3342 = vpop.xlane.xlu0 %3341
        %v3343 = vmul.f32 %v3333, %v1110
        %v3344 = vmul.f32 %v3336, %v1110
        %v3345 = vmul.f32 %v3339, %v1110
        %v3346 = vmul.f32 %v3342, %v1110
        %v3347 = vsel %vm2473, %v3343, 0.0
        %v3348 = vrot.slane %v3347, 4
        %v3349 = vadd.f32 %v3347, %v3348
        %v3350 = vrot.slane %v3349, 2
        %v3351 = vadd.f32 %v3349, %v3350
        %v3352 = vrot.slane %v3351, 1
        %v3353 = vadd.f32 %v3351, %v3352
        %v3354 = vsel %vm2473, %v3344, 0.0
        %v3355 = vrot.slane %v3354, 4
        %v3356 = vadd.f32 %v3354, %v3355
        %v3357 = vrot.slane %v3356, 2
        %v3358 = vadd.f32 %v3356, %v3357
        %v3359 = vrot.slane %v3358, 1
        %v3360 = vadd.f32 %v3358, %v3359
        %v3361 = vsel %vm2473, %v3345, 0.0
        %v3362 = vrot.slane %v3361, 4
        %v3363 = vadd.f32 %v3361, %v3362
        %v3364 = vrot.slane %v3363, 2
        %v3365 = vadd.f32 %v3363, %v3364
        %v3366 = vrot.slane %v3365, 1
        %v3367 = vadd.f32 %v3365, %v3366
        %v3368 = vsel %vm2473, %v3346, 0.0
        %v3369 = vrot.slane %v3368, 4
        %v3370 = vadd.f32 %v3368, %v3369
        %v3371 = vrot.slane %v3370, 2
        %v3372 = vadd.f32 %v3370, %v3371
        %v3373 = vrot.slane %v3372, 1
        %v3374 = vadd.f32 %v3372, %v3373
        %v3375 = vmul.f32 %v3353, %v3318
        %v3376 = vmul.f32 %v3360, %v3318
        %v3377 = vmul.f32 %v3367, %v3318
        %v3378 = vmul.f32 %v3374, %v3318
        %v3379 = vadd.f32 %v3375, 1e-05
        %v3380 = vadd.f32 %v3376, 1e-05
        %v3381 = vadd.f32 %v3377, 1e-05
        %v3382 = vadd.f32 %v3378, 1e-05
        %v3383 = vrsqrt.pop %v3379
        %v3384 = vrsqrt.pop %v3380
        %v3385 = vrsqrt.pop %v3381
        %v3386 = vrsqrt.pop %v3382
        %v3387 = vmul.f32 %v3323, %v3383
        %v3388 = vmul.f32 %v3324, %v3384
        %v3389 = vmul.f32 %v3325, %v3385
        %v3390 = vmul.f32 %v3326, %v3386
        %v3391 = vld [vmem:[#allocation22] sm:$0x1]
        %v3393 = vlaneseq
        %v3394 = vshrl.u32 %v3393, 7
        %v3395 = vsub.s32 0, %v3394
        %v3396 = vrot.slane %v3391, %v3395
        %v3398 = vmul.f32 %v3387, %v3396
        %v3399 = vmul.f32 %v3388, %v3396
        %v3400 = vmul.f32 %v3389, %v3396
        %v3401 = vmul.f32 %v3390, %v3396
        %v3402 = vld [vmem:[#allocation23] sm:$0x1]
        %v3404 = vlaneseq
        %v3405 = vshrl.u32 %v3404, 7
        %v3406 = vsub.s32 0, %v3405
        %v3407 = vrot.slane %v3402, %v3406
        %v3409 = vadd.f32 %v3398, %v3407
        %v3410 = vadd.f32 %v3399, %v3407
        %v3411 = vadd.f32 %v3400, %v3407
        %v3412 = vadd.f32 %v3401, %v3407
        %v3414 = vrot.slane %v3410, 4
        %v3417 = vrot.slane %v3412, 4
        %v3419 = vsel %vm2473, %v3409, %v3414
        %v3420 = vsel %vm2473, %v3411, %v3417
        %v3421 = vpack.c.bf16 %v3420, %v3419
        %v3422 = vld [vmem:[#allocation16] sm:$0xf]
        %v3423 = vld [vmem:[#allocation16 + $0x4] sm:$0xf]
        %v3424 = vld [vmem:[#allocation16 + $0x8] sm:$0xf]
        %v3425 = vld [vmem:[#allocation16 + $0xc] sm:$0xf]
        %v3426 = vld [vmem:[#allocation17] sm:$0x1]
        %v3428 = vlaneseq
        %v3429 = vshrl.u32 %v3428, 7
        %v3430 = vsub.s32 0, %v3429
        %v3431 = vrot.slane %v3426, %v3430
        %v3437 = vunpack.c.l.b16 %v3422
        %v3438 = vunpack.c.l.b16 %v3423
        %v3439 = vunpack.c.l.b16 %v3424
        %v3440 = vunpack.c.l.b16 %v3425
        %v3441 = vpack.c.b16 %v3438, %v3437
        %v3442 = vpack.c.b16 %v3440, %v3439
        %v3446 = vsel %vm1097, %v3421, 0
        %3448 = vmatprep.subr.bf16.mxu0 0
        %3449 = vmatpush1.bf16.msra.mxu0 0
        %3450 = vmatprep.subr.bf16.mxu0 0
        %3451 = vmatpush1.bf16.msra.mxu0 0
        %3452 = vmatprep.subr.bf16.mxu0 0
        %3453 = vmatpush1.bf16.msra.mxu0 0
        %3454 = vmatprep.subr.bf16.mxu0 0
        %3455 = vmatpush1.bf16.msra.mxu0 0
        %3456 = vmatprep.subr.bf16.mxu0 0
        %3457 = vmatpush1.bf16.msra.mxu0 0
        %3458 = vmatprep.subr.bf16.mxu0 0
        %3459 = vmatpush1.bf16.msra.mxu0 0
        %3460 = vmatprep.subr.bf16.mxu0 0
        %3461 = vmatpush1.bf16.msra.mxu0 %v3442
        %3462 = vmatprep.subr.bf16.mxu0 0
        %3463 = vmatpush1.bf16.msra.mxu0 %v3441
        %3464 = vmatprep.subr.bf16.mxu0 0
        %3465 = vmatpush2.bf16.msra.mxu0 0
        %3466 = vmatprep.subr.bf16.mxu0 0
        %3467 = vmatpush2.bf16.msra.mxu0 0
        %3468 = vmatprep.subr.bf16.mxu0 0
        %3469 = vmatpush2.bf16.msra.mxu0 0
        %3470 = vmatprep.subr.bf16.mxu0 0
        %3471 = vmatpush2.bf16.msra.mxu0 0
        %3472 = vmatprep.subr.bf16.mxu0 0
        %3473 = vmatpush2.bf16.msra.mxu0 0
        %3474 = vmatprep.subr.bf16.mxu0 0
        %3475 = vmatpush2.bf16.msra.mxu0 0
        %3476 = vmatprep.subr.bf16.mxu0 0
        %3477 = vmatpush2.bf16.msra.mxu0 0
        %3478 = vmatprep.subr.bf16.mxu0 0
        %3479 = vmatpush2.bf16.msra.mxu0 0
        %3480 = vmatprep.mubr.bf16.mxu0 0
        %3481 = vmatmul.mubr.bf16.gmra.mxu0 %v3446
        %v3482 = vpop.f32.mrf.mxu0
        %v3483 = vadd.f32 %v3431, %v3482
        %v3484 = vpop.f32.mrf.mxu0
        %v3485 = vpop.f32.mrf.mxu0
        %v3486 = vadd.f32 %v3431, %v3485
        %v3487 = vpop.f32.mrf.mxu0
        %3488 = vdwg.mxu0
        %v3489 = vmax.f32 %v3483, 0.0
        %v3490 = vmax.f32 %v3486, 0.0
        %v3492 = vrot.slane %v3489, 4
        %v3495 = vrot.slane %v3490, 4
        %v3497 = vadd.f32 %v3269, %v3489
        %v3498 = vadd.f32 %v3270, %v3492
        %v3499 = vadd.f32 %v3271, %v3490
        %v3500 = vadd.f32 %v3272, %v3495
        %v3501 = vld [vmem:[%s22] sm:$0x1]
        %v3503 = vlaneseq
        %v3504 = vshrl.u32 %v3503, 7
        %v3505 = vsub.s32 0, %v3504
        %v3506 = vrot.slane %v3501, %v3505
        %v3508 = vmul.f32 %v1204, %v3506
        %v3509 = vmul.f32 %v1205, %v3506
        %v3510 = vmul.f32 %v1206, %v3506
        %v3511 = vmul.f32 %v1207, %v3506
        %v3512 = vld [vmem:[%s23] sm:$0x1]
        %v3514 = vlaneseq
        %v3515 = vshrl.u32 %v3514, 7
        %v3516 = vsub.s32 0, %v3515
        %v3517 = vrot.slane %v3512, %v3516
        %v3519 = vadd.f32 %v3508, %v3517
        %v3520 = vadd.f32 %v3509, %v3517
        %v3521 = vadd.f32 %v3510, %v3517
        %v3522 = vadd.f32 %v3511, %v3517
        %v3523 = vsel %vm3273, %v3497, 0.0
        %3524 = vadd.xlane.f32.xlu0 %v3523
        %v3525 = vpop.xlane.xlu0 %3524
        %v3526 = vsel %vm3273, %v3498, 0.0
        %3527 = vadd.xlane.f32.xlu0 %v3526
        %v3528 = vpop.xlane.xlu0 %3527
        %v3529 = vsel %vm3273, %v3499, 0.0
        %3530 = vadd.xlane.f32.xlu0 %v3529
        %v3531 = vpop.xlane.xlu0 %3530
        %v3532 = vsel %vm3273, %v3500, 0.0
        %3533 = vadd.xlane.f32.xlu0 %v3532
        %v3534 = vpop.xlane.xlu0 %3533
        %v3535 = vmul.f32 %v3525, %v1110
        %v3536 = vmul.f32 %v3528, %v1110
        %v3537 = vmul.f32 %v3531, %v1110
        %v3538 = vmul.f32 %v3534, %v1110
        %v3539 = vsel %vm2473, %v3535, 0.0
        %v3540 = vrot.slane %v3539, 4
        %v3541 = vadd.f32 %v3539, %v3540
        %v3542 = vrot.slane %v3541, 2
        %v3543 = vadd.f32 %v3541, %v3542
        %v3544 = vrot.slane %v3543, 1
        %v3545 = vadd.f32 %v3543, %v3544
        %v3546 = vsel %vm2473, %v3536, 0.0
        %v3547 = vrot.slane %v3546, 4
        %v3548 = vadd.f32 %v3546, %v3547
        %v3549 = vrot.slane %v3548, 2
        %v3550 = vadd.f32 %v3548, %v3549
        %v3551 = vrot.slane %v3550, 1
        %v3552 = vadd.f32 %v3550, %v3551
        %v3553 = vsel %vm2473, %v3537, 0.0
        %v3554 = vrot.slane %v3553, 4
        %v3555 = vadd.f32 %v3553, %v3554
        %v3556 = vrot.slane %v3555, 2
        %v3557 = vadd.f32 %v3555, %v3556
        %v3558 = vrot.slane %v3557, 1
        %v3559 = vadd.f32 %v3557, %v3558
        %v3560 = vsel %vm2473, %v3538, 0.0
        %v3561 = vrot.slane %v3560, 4
        %v3562 = vadd.f32 %v3560, %v3561
        %v3563 = vrot.slane %v3562, 2
        %v3564 = vadd.f32 %v3562, %v3563
        %v3565 = vrot.slane %v3564, 1
        %v3566 = vadd.f32 %v3564, %v3565
        %v3567 = vmul.f32 %v3545, %v3318
        %v3568 = vmul.f32 %v3552, %v3318
        %v3569 = vmul.f32 %v3559, %v3318
        %v3570 = vmul.f32 %v3566, %v3318
        %v3571 = vsub.f32 %v3497, %v3567
        %v3572 = vsub.f32 %v3498, %v3568
        %v3573 = vsub.f32 %v3499, %v3569
        %v3574 = vsub.f32 %v3500, %v3570
        %v3575 = vmul.f32 %v3571, %v3571
        %v3576 = vmul.f32 %v3572, %v3572
        %v3577 = vmul.f32 %v3573, %v3573
        %v3578 = vmul.f32 %v3574, %v3574
        %v3579 = vsel %vm3273, %v3575, 0.0
        %3580 = vadd.xlane.f32.xlu0 %v3579
        %v3581 = vpop.xlane.xlu0 %3580
        %v3582 = vsel %vm3273, %v3576, 0.0
        %3583 = vadd.xlane.f32.xlu0 %v3582
        %v3584 = vpop.xlane.xlu0 %3583
        %v3585 = vsel %vm3273, %v3577, 0.0
        %3586 = vadd.xlane.f32.xlu0 %v3585
        %v3587 = vpop.xlane.xlu0 %3586
        %v3588 = vsel %vm3273, %v3578, 0.0
        %3589 = vadd.xlane.f32.xlu0 %v3588
        %v3590 = vpop.xlane.xlu0 %3589
        %v3591 = vmul.f32 %v3581, %v1110
        %v3592 = vmul.f32 %v3584, %v1110
        %v3593 = vmul.f32 %v3587, %v1110
        %v3594 = vmul.f32 %v3590, %v1110
        %v3595 = vsel %vm2473, %v3591, 0.0
        %v3596 = vrot.slane %v3595, 4
        %v3597 = vadd.f32 %v3595, %v3596
        %v3598 = vrot.slane %v3597, 2
        %v3599 = vadd.f32 %v3597, %v3598
        %v3600 = vrot.slane %v3599, 1
        %v3601 = vadd.f32 %v3599, %v3600
        %v3602 = vsel %vm2473, %v3592, 0.0
        %v3603 = vrot.slane %v3602, 4
        %v3604 = vadd.f32 %v3602, %v3603
        %v3605 = vrot.slane %v3604, 2
        %v3606 = vadd.f32 %v3604, %v3605
        %v3607 = vrot.slane %v3606, 1
        %v3608 = vadd.f32 %v3606, %v3607
        %v3609 = vsel %vm2473, %v3593, 0.0
        %v3610 = vrot.slane %v3609, 4
        %v3611 = vadd.f32 %v3609, %v3610
        %v3612 = vrot.slane %v3611, 2
        %v3613 = vadd.f32 %v3611, %v3612
        %v3614 = vrot.slane %v3613, 1
        %v3615 = vadd.f32 %v3613, %v3614
        %v3616 = vsel %vm2473, %v3594, 0.0
        %v3617 = vrot.slane %v3616, 4
        %v3618 = vadd.f32 %v3616, %v3617
        %v3619 = vrot.slane %v3618, 2
        %v3620 = vadd.f32 %v3618, %v3619
        %v3621 = vrot.slane %v3620, 1
        %v3622 = vadd.f32 %v3620, %v3621
        %v3623 = vmul.f32 %v3601, %v3318
        %v3624 = vmul.f32 %v3608, %v3318
        %v3625 = vmul.f32 %v3615, %v3318
        %v3626 = vmul.f32 %v3622, %v3318
        %v3627 = vadd.f32 %v3623, 1e-05
        %v3628 = vadd.f32 %v3624, 1e-05
        %v3629 = vadd.f32 %v3625, 1e-05
        %v3630 = vadd.f32 %v3626, 1e-05
        %v3631 = vrsqrt.pop %v3627
        %v3632 = vrsqrt.pop %v3628
        %v3633 = vrsqrt.pop %v3629
        %v3634 = vrsqrt.pop %v3630
        %v3635 = vmul.f32 %v3571, %v3631
        %v3636 = vmul.f32 %v3572, %v3632
        %v3637 = vmul.f32 %v3573, %v3633
        %v3638 = vmul.f32 %v3574, %v3634
        %v3639 = vld [vmem:[%s24] sm:$0x1]
        %v3641 = vlaneseq
        %v3642 = vshrl.u32 %v3641, 7
        %v3643 = vsub.s32 0, %v3642
        %v3644 = vrot.slane %v3639, %v3643
        %v3646 = vmul.f32 %v3635, %v3644
        %v3647 = vmul.f32 %v3636, %v3644
        %v3648 = vmul.f32 %v3637, %v3644
        %v3649 = vmul.f32 %v3638, %v3644
        %v3650 = vld [vmem:[%s25] sm:$0x1]
        %v3652 = vlaneseq
        %v3653 = vshrl.u32 %v3652, 7
        %v3654 = vsub.s32 0, %v3653
        %v3655 = vrot.slane %v3650, %v3654
        %v3657 = vadd.f32 %v3646, %v3655
        %v3658 = vadd.f32 %v3647, %v3655
        %v3659 = vadd.f32 %v3648, %v3655
        %v3660 = vadd.f32 %v3649, %v3655
        %v3662 = vrot.slane %v3658, 4
        %v3665 = vrot.slane %v3660, 4
        %v3667 = vsel %vm2473, %v3657, %v3662
        %v3668 = vsel %vm2473, %v3659, %v3665
        %v3669 = vpack.c.bf16 %v3520, %v3519
        %v3670 = vpack.c.bf16 %v3522, %v3521
        %v3671 = vld [vmem:[%s14] sm:$0xf]
        %v3672 = vld [vmem:[%s14 + $0x4] sm:$0xf]
        %v3673 = vld [vmem:[%s14 + $0x8] sm:$0xf]
        %v3674 = vld [vmem:[%s14 + $0xc] sm:$0xf]
        %v3675 = vld [vmem:[#allocation25] sm:$0x1]
        %v3677 = vlaneseq
        %v3678 = vshrl.u32 %v3677, 7
        %v3679 = vsub.s32 0, %v3678
        %v3680 = vrot.slane %v3675, %v3679
        %v3686 = vunpack.c.l.b16 %v3671
        %v3687 = vunpack.c.l.b16 %v3672
        %v3688 = vunpack.c.l.b16 %v3673
        %v3689 = vunpack.c.l.b16 %v3674
        %v3690 = vpack.c.b16 %v3687, %v3686
        %v3691 = vpack.c.b16 %v3689, %v3688
        %v3695 = vsel %vm1097, %v3669, 0
        %v3698 = vsel %vm1097, %v3670, 0
        %3700 = vmatprep.subr.bf16.mxu0 0
        %3701 = vmatpush1.bf16.msra.mxu0 0
        %3702 = vmatprep.subr.bf16.mxu0 0
        %3703 = vmatpush1.bf16.msra.mxu0 0
        %3704 = vmatprep.subr.bf16.mxu0 0
        %3705 = vmatpush1.bf16.msra.mxu0 0
        %3706 = vmatprep.subr.bf16.mxu0 0
        %3707 = vmatpush1.bf16.msra.mxu0 0
        %3708 = vmatprep.subr.bf16.mxu0 0
        %3709 = vmatpush1.bf16.msra.mxu0 0
        %3710 = vmatprep.subr.bf16.mxu0 0
        %3711 = vmatpush1.bf16.msra.mxu0 0
        %3712 = vmatprep.subr.bf16.mxu0 0
        %3713 = vmatpush1.bf16.msra.mxu0 %v3691
        %3714 = vmatprep.subr.bf16.mxu0 0
        %3715 = vmatpush1.bf16.msra.mxu0 %v3690
        %3716 = vmatprep.subr.bf16.mxu0 0
        %3717 = vmatpush2.bf16.msra.mxu0 0
        %3718 = vmatprep.subr.bf16.mxu0 0
        %3719 = vmatpush2.bf16.msra.mxu0 0
        %3720 = vmatprep.subr.bf16.mxu0 0
        %3721 = vmatpush2.bf16.msra.mxu0 0
        %3722 = vmatprep.subr.bf16.mxu0 0
        %3723 = vmatpush2.bf16.msra.mxu0 0
        %3724 = vmatprep.subr.bf16.mxu0 0
        %3725 = vmatpush2.bf16.msra.mxu0 0
        %3726 = vmatprep.subr.bf16.mxu0 0
        %3727 = vmatpush2.bf16.msra.mxu0 0
        %3728 = vmatprep.subr.bf16.mxu0 0
        %3729 = vmatpush2.bf16.msra.mxu0 0
        %3730 = vmatprep.subr.bf16.mxu0 0
        %3731 = vmatpush2.bf16.msra.mxu0 0
        %3732 = vmatprep.mubr.bf16.mxu0 0
        %3733 = vmatmul.mubr.bf16.gmra.mxu0 %v3695
        %v3734 = vpop.f32.mrf.mxu0
        %v3735 = vadd.f32 %v3680, %v3734
        %v3736 = vpop.f32.mrf.mxu0
        %v3737 = vpop.f32.mrf.mxu0
        %v3738 = vadd.f32 %v3680, %v3737
        %v3739 = vpop.f32.mrf.mxu0
        %3740 = vmatprep.mubr.bf16.mxu0 0
        %3741 = vmatmul.mubr.bf16.gmra.mxu0 %v3698
        %v3742 = vpop.f32.mrf.mxu0
        %v3743 = vadd.f32 %v3680, %v3742
        %v3744 = vpop.f32.mrf.mxu0
        %v3745 = vpop.f32.mrf.mxu0
        %v3746 = vadd.f32 %v3680, %v3745
        %v3747 = vpop.f32.mrf.mxu0
        %3748 = vdwg.mxu0
        %v3749 = vmul.f32 %v3735, 0.17677669
        %v3750 = vmul.f32 %v3738, 0.17677669
        %v3751 = vmul.f32 %v3743, 0.17677669
        %v3752 = vmul.f32 %v3746, 0.17677669
        %v3753 = vpack.c.bf16 %v3668, %v3667
        %v3754 = vld [vmem:[#allocation26] sm:$0xf]
        %v3755 = vld [vmem:[#allocation26 + $0x4] sm:$0xf]
        %v3756 = vld [vmem:[#allocation26 + $0x8] sm:$0xf]
        %v3757 = vld [vmem:[#allocation26 + $0xc] sm:$0xf]
        %v3758 = vld [vmem:[#allocation28] sm:$0x1]
        %v3760 = vlaneseq
        %v3761 = vshrl.u32 %v3760, 7
        %v3762 = vsub.s32 0, %v3761
        %v3763 = vrot.slane %v3758, %v3762
        %v3769 = vunpack.c.l.b16 %v3754
        %v3770 = vunpack.c.l.b16 %v3755
        %v3771 = vunpack.c.l.b16 %v3756
        %v3772 = vunpack.c.l.b16 %v3757
        %v3773 = vpack.c.b16 %v3770, %v3769
        %v3774 = vpack.c.b16 %v3772, %v3771
        %v3778 = vsel %vm1097, %v3753, 0
        %3780 = vmatprep.subr.bf16.mxu0 0
        %3781 = vmatpush1.bf16.msra.mxu0 0
        %3782 = vmatprep.subr.bf16.mxu0 0
        %3783 = vmatpush1.bf16.msra.mxu0 0
        %3784 = vmatprep.subr.bf16.mxu0 0
        %3785 = vmatpush1.bf16.msra.mxu0 0
        %3786 = vmatprep.subr.bf16.mxu0 0
        %3787 = vmatpush1.bf16.msra.mxu0 0
        %3788 = vmatprep.subr.bf16.mxu0 0
        %3789 = vmatpush1.bf16.msra.mxu0 0
        %3790 = vmatprep.subr.bf16.mxu0 0
        %3791 = vmatpush1.bf16.msra.mxu0 0
        %3792 = vmatprep.subr.bf16.mxu0 0
        %3793 = vmatpush1.bf16.msra.mxu0 %v3774
        %3794 = vmatprep.subr.bf16.mxu0 0
        %3795 = vmatpush1.bf16.msra.mxu0 %v3773
        %3796 = vmatprep.subr.bf16.mxu0 0
        %3797 = vmatpush2.bf16.msra.mxu0 0
        %3798 = vmatprep.subr.bf16.mxu0 0
        %3799 = vmatpush2.bf16.msra.mxu0 0
        %3800 = vmatprep.subr.bf16.mxu0 0
        %3801 = vmatpush2.bf16.msra.mxu0 0
        %3802 = vmatprep.subr.bf16.mxu0 0
        %3803 = vmatpush2.bf16.msra.mxu0 0
        %3804 = vmatprep.subr.bf16.mxu0 0
        %3805 = vmatpush2.bf16.msra.mxu0 0
        %3806 = vmatprep.subr.bf16.mxu0 0
        %3807 = vmatpush2.bf16.msra.mxu0 0
        %3808 = vmatprep.subr.bf16.mxu0 0
        %3809 = vmatpush2.bf16.msra.mxu0 0
        %3810 = vmatprep.subr.bf16.mxu0 0
        %3811 = vmatpush2.bf16.msra.mxu0 0
        %3812 = vmatprep.mubr.bf16.mxu0 0
        %3813 = vmatmul.mubr.bf16.gmra.mxu0 %v3778
        %v3814 = vpop.f32.mrf.mxu0
        %v3815 = vadd.f32 %v3763, %v3814
        %v3816 = vpop.f32.mrf.mxu0
        %v3817 = vpop.f32.mrf.mxu0
        %v3818 = vadd.f32 %v3763, %v3817
        %v3819 = vpop.f32.mrf.mxu0
        %3820 = vdwg.mxu0
        %v3822 = vrot.slane %v3815, 4
        %v3825 = vrot.slane %v3818, 4
        %v3827 = vld [vmem:[%s18] sm:$0xf]
        %v3828 = vld [vmem:[%s18 + $0x4] sm:$0xf]
        %v3829 = vld [vmem:[%s18 + $0x8] sm:$0xf]
        %v3830 = vld [vmem:[%s18 + $0xc] sm:$0xf]
        %v3831 = vld [vmem:[%s19] sm:$0x1]
        %v3833 = vlaneseq
        %v3834 = vshrl.u32 %v3833, 7
        %v3835 = vsub.s32 0, %v3834
        %v3836 = vrot.slane %v3831, %v3835
        %v3842 = vunpack.c.l.b16 %v3827
        %v3843 = vunpack.c.l.b16 %v3828
        %v3844 = vunpack.c.l.b16 %v3829
        %v3845 = vunpack.c.l.b16 %v3830
        %v3846 = vpack.c.b16 %v3843, %v3842
        %v3847 = vpack.c.b16 %v3845, %v3844
        %3850 = vmatprep.subr.bf16.mxu0 0
        %3851 = vmatpush1.bf16.msra.mxu0 0
        %3852 = vmatprep.subr.bf16.mxu0 0
        %3853 = vmatpush1.bf16.msra.mxu0 0
        %3854 = vmatprep.subr.bf16.mxu0 0
        %3855 = vmatpush1.bf16.msra.mxu0 0
        %3856 = vmatprep.subr.bf16.mxu0 0
        %3857 = vmatpush1.bf16.msra.mxu0 0
        %3858 = vmatprep.subr.bf16.mxu0 0
        %3859 = vmatpush1.bf16.msra.mxu0 0
        %3860 = vmatprep.subr.bf16.mxu0 0
        %3861 = vmatpush1.bf16.msra.mxu0 0
        %3862 = vmatprep.subr.bf16.mxu0 0
        %3863 = vmatpush1.bf16.msra.mxu0 %v3847
        %3864 = vmatprep.subr.bf16.mxu0 0
        %3865 = vmatpush1.bf16.msra.mxu0 %v3846
        %3866 = vmatprep.subr.bf16.mxu0 0
        %3867 = vmatpush2.bf16.msra.mxu0 0
        %3868 = vmatprep.subr.bf16.mxu0 0
        %3869 = vmatpush2.bf16.msra.mxu0 0
        %3870 = vmatprep.subr.bf16.mxu0 0
        %3871 = vmatpush2.bf16.msra.mxu0 0
        %3872 = vmatprep.subr.bf16.mxu0 0
        %3873 = vmatpush2.bf16.msra.mxu0 0
        %3874 = vmatprep.subr.bf16.mxu0 0
        %3875 = vmatpush2.bf16.msra.mxu0 0
        %3876 = vmatprep.subr.bf16.mxu0 0
        %3877 = vmatpush2.bf16.msra.mxu0 0
        %3878 = vmatprep.subr.bf16.mxu0 0
        %3879 = vmatpush2.bf16.msra.mxu0 0
        %3880 = vmatprep.subr.bf16.mxu0 0
        %3881 = vmatpush2.bf16.msra.mxu0 0
        %3882 = vmatprep.mubr.bf16.mxu0 0
        %3883 = vmatmul.mubr.bf16.gmra.mxu0 %v3778
        %v3884 = vpop.f32.mrf.mxu0
        %v3885 = vadd.f32 %v3836, %v3884
        %v3886 = vpop.f32.mrf.mxu0
        %v3887 = vpop.f32.mrf.mxu0
        %v3888 = vadd.f32 %v3836, %v3887
        %v3889 = vpop.f32.mrf.mxu0
        %3890 = vdwg.mxu0
        %v3892 = vrot.slane %v3885, 4
        %v3895 = vrot.slane %v3888, 4
        %3901 = vrot.lane.b32.xlu0 %v3749, 120
        %v3902 = vpop.permute.xlu0 %3901
        %3903 = vrot.lane.b32.xlu0 %v3750, 120
        %v3904 = vpop.permute.xlu0 %3903
        %3905 = vrot.lane.b32.xlu0 %v3751, 120
        %v3906 = vpop.permute.xlu0 %3905
        %3907 = vrot.lane.b32.xlu0 %v3752, 120
        %v3908 = vpop.permute.xlu0 %3907
        %3913 = vrot.lane.b32.xlu0 %v3749, 112
        %v3914 = vpop.permute.xlu0 %3913
        %3915 = vrot.lane.b32.xlu0 %v3750, 112
        %v3916 = vpop.permute.xlu0 %3915
        %3917 = vrot.lane.b32.xlu0 %v3751, 112
        %v3918 = vpop.permute.xlu0 %3917
        %3919 = vrot.lane.b32.xlu0 %v3752, 112
        %v3920 = vpop.permute.xlu0 %3919
        %3925 = vrot.lane.b32.xlu0 %v3749, 104
        %v3926 = vpop.permute.xlu0 %3925
        %3927 = vrot.lane.b32.xlu0 %v3750, 104
        %v3928 = vpop.permute.xlu0 %3927
        %3929 = vrot.lane.b32.xlu0 %v3751, 104
        %v3930 = vpop.permute.xlu0 %3929
        %3931 = vrot.lane.b32.xlu0 %v3752, 104
        %v3932 = vpop.permute.xlu0 %3931
        %v3937 = vpack.c.bf16 %v3749, %v3749
        %v3938 = vpack.c.bf16 %v3750, %v3750
        %v3939 = vpack.c.bf16 %v3751, %v3751
        %v3940 = vpack.c.bf16 %v3752, %v3752
        %v3941 = vpack.c.bf16 %v3902, %v3902
        %v3942 = vpack.c.bf16 %v3904, %v3904
        %v3943 = vpack.c.bf16 %v3906, %v3906
        %v3944 = vpack.c.bf16 %v3908, %v3908
        %v3945 = vpack.c.bf16 %v3914, %v3914
        %v3946 = vpack.c.bf16 %v3916, %v3916
        %v3947 = vpack.c.bf16 %v3918, %v3918
        %v3948 = vpack.c.bf16 %v3920, %v3920
        %v3949 = vpack.c.bf16 %v3926, %v3926
        %v3950 = vpack.c.bf16 %v3928, %v3928
        %v3951 = vpack.c.bf16 %v3930, %v3930
        %v3952 = vpack.c.bf16 %v3932, %v3932
        %3953 = vrot.lane.b32.xlu0 %v3815, 120
        %v3954 = vpop.permute.xlu0 %3953
        %3955 = vrot.lane.b32.xlu0 %v3822, 120
        %v3956 = vpop.permute.xlu0 %3955
        %3957 = vrot.lane.b32.xlu0 %v3818, 120
        %v3958 = vpop.permute.xlu0 %3957
        %3959 = vrot.lane.b32.xlu0 %v3825, 120
        %v3960 = vpop.permute.xlu0 %3959
        %3965 = vrot.lane.b32.xlu0 %v3815, 112
        %v3966 = vpop.permute.xlu0 %3965
        %3967 = vrot.lane.b32.xlu0 %v3822, 112
        %v3968 = vpop.permute.xlu0 %3967
        %3969 = vrot.lane.b32.xlu0 %v3818, 112
        %v3970 = vpop.permute.xlu0 %3969
        %3971 = vrot.lane.b32.xlu0 %v3825, 112
        %v3972 = vpop.permute.xlu0 %3971
        %3977 = vrot.lane.b32.xlu0 %v3815, 104
        %v3978 = vpop.permute.xlu0 %3977
        %3979 = vrot.lane.b32.xlu0 %v3822, 104
        %v3980 = vpop.permute.xlu0 %3979
        %3981 = vrot.lane.b32.xlu0 %v3818, 104
        %v3982 = vpop.permute.xlu0 %3981
        %3983 = vrot.lane.b32.xlu0 %v3825, 104
        %v3984 = vpop.permute.xlu0 %3983
        %v3989 = vpack.c.bf16 %v3815, %v3815
        %v3990 = vpack.c.bf16 %v3822, %v3822
        %v3991 = vpack.c.bf16 %v3818, %v3818
        %v3992 = vpack.c.bf16 %v3825, %v3825
        %v3993 = vpack.c.bf16 %v3954, %v3954
        %v3994 = vpack.c.bf16 %v3956, %v3956
        %v3995 = vpack.c.bf16 %v3958, %v3958
        %v3996 = vpack.c.bf16 %v3960, %v3960
        %v3997 = vpack.c.bf16 %v3966, %v3966
        %v3998 = vpack.c.bf16 %v3968, %v3968
        %v3999 = vpack.c.bf16 %v3970, %v3970
        %v4000 = vpack.c.bf16 %v3972, %v3972
        %v4001 = vpack.c.bf16 %v3978, %v3978
        %v4002 = vpack.c.bf16 %v3980, %v3980
        %v4003 = vpack.c.bf16 %v3982, %v3982
        %v4004 = vpack.c.bf16 %v3984, %v3984
        %4005 = vrot.lane.b32.xlu0 %v3885, 120
        %v4006 = vpop.permute.xlu0 %4005
        %4007 = vrot.lane.b32.xlu0 %v3892, 120
        %v4008 = vpop.permute.xlu0 %4007
        %4009 = vrot.lane.b32.xlu0 %v3888, 120
        %v4010 = vpop.permute.xlu0 %4009
        %4011 = vrot.lane.b32.xlu0 %v3895, 120
        %v4012 = vpop.permute.xlu0 %4011
        %4017 = vrot.lane.b32.xlu0 %v3885, 112
        %v4018 = vpop.permute.xlu0 %4017
        %4019 = vrot.lane.b32.xlu0 %v3892, 112
        %v4020 = vpop.permute.xlu0 %4019
        %4021 = vrot.lane.b32.xlu0 %v3888, 112
        %v4022 = vpop.permute.xlu0 %4021
        %4023 = vrot.lane.b32.xlu0 %v3895, 112
        %v4024 = vpop.permute.xlu0 %4023
        %4029 = vrot.lane.b32.xlu0 %v3885, 104
        %v4030 = vpop.permute.xlu0 %4029
        %4031 = vrot.lane.b32.xlu0 %v3892, 104
        %v4032 = vpop.permute.xlu0 %4031
        %4033 = vrot.lane.b32.xlu0 %v3888, 104
        %v4034 = vpop.permute.xlu0 %4033
        %4035 = vrot.lane.b32.xlu0 %v3895, 104
        %v4036 = vpop.permute.xlu0 %4035
        %v4041 = vpack.c.bf16 %v3885, %v3885
        %v4042 = vpack.c.bf16 %v3892, %v3892
        %v4043 = vpack.c.bf16 %v3888, %v3888
        %v4044 = vpack.c.bf16 %v3895, %v3895
        %v4045 = vpack.c.bf16 %v4006, %v4006
        %v4046 = vpack.c.bf16 %v4008, %v4008
        %v4047 = vpack.c.bf16 %v4010, %v4010
        %v4048 = vpack.c.bf16 %v4012, %v4012
        %v4049 = vpack.c.bf16 %v4018, %v4018
        %v4050 = vpack.c.bf16 %v4020, %v4020
        %v4051 = vpack.c.bf16 %v4022, %v4022
        %v4052 = vpack.c.bf16 %v4024, %v4024
        %v4053 = vpack.c.bf16 %v4030, %v4030
        %v4054 = vpack.c.bf16 %v4032, %v4032
        %v4055 = vpack.c.bf16 %v4034, %v4034
        %v4056 = vpack.c.bf16 %v4036, %v4036
        %v4058 = vsel %vm1576, %v3937, 0
        %v4061 = vsel %vm1576, %v3989, 0
        %4063 = vmatprep.subr.bf16.mxu0 0
        %4064 = vmatpush1.bf16.xpose.msra.mxu0 0
        %4065 = vmatprep.subr.bf16.mxu0 0
        %4066 = vmatpush1.bf16.xpose.msra.mxu0 0
        %4067 = vmatprep.subr.bf16.mxu0 0
        %4068 = vmatpush1.bf16.xpose.msra.mxu0 0
        %4069 = vmatprep.subr.bf16.mxu0 0
        %4070 = vmatpush1.bf16.xpose.msra.mxu0 0
        %4071 = vmatprep.subr.bf16.mxu0 0
        %4072 = vmatpush1.bf16.xpose.msra.mxu0 0
        %4073 = vmatprep.subr.bf16.mxu0 0
        %4074 = vmatpush1.bf16.xpose.msra.mxu0 0
        %4075 = vmatprep.subr.bf16.mxu0 0
        %4076 = vmatpush1.bf16.xpose.msra.mxu0 0
        %4077 = vmatprep.subr.bf16.mxu0 0
        %4078 = vmatpush1.bf16.xpose.msra.mxu0 %v4061
        %4079 = vmatprep.subr.bf16.mxu0 0
        %4080 = vmatpush2.bf16.xpose.msra.mxu0 0
        %4081 = vmatprep.subr.bf16.mxu0 0
        %4082 = vmatpush2.bf16.xpose.msra.mxu0 0
        %4083 = vmatprep.subr.bf16.mxu0 0
        %4084 = vmatpush2.bf16.xpose.msra.mxu0 0
        %4085 = vmatprep.subr.bf16.mxu0 0
        %4086 = vmatpush2.bf16.xpose.msra.mxu0 0
        %4087 = vmatprep.subr.bf16.mxu0 0
        %4088 = vmatpush2.bf16.xpose.msra.mxu0 0
        %4089 = vmatprep.subr.bf16.mxu0 0
        %4090 = vmatpush2.bf16.xpose.msra.mxu0 0
        %4091 = vmatprep.subr.bf16.mxu0 0
        %4092 = vmatpush2.bf16.xpose.msra.mxu0 0
        %4093 = vmatprep.subr.bf16.mxu0 0
        %4094 = vmatpush2.bf16.xpose.msra.mxu0 0
        %4095 = vmatprep.mubr.bf16.mxu0 0
        %4096 = vmatmul.mubr.bf16.gmra.mxu0 %v4058
        %v4097 = vpop.f32.mrf.mxu0
        %v4098 = vadd.f32 0.0, %v4097
        %v4099 = vpop.f32.mrf.mxu0
        %v4100 = vpop.f32.mrf.mxu0
        %v4101 = vpop.f32.mrf.mxu0
        %4102 = vdwg.mxu0
        %v4104 = vsel %vm1576, %v3938, 0
        %v4107 = vsel %vm1576, %v3990, 0
        %4109 = vmatprep.subr.bf16.mxu0 0
        %4110 = vmatpush1.bf16.xpose.msra.mxu0 0
        %4111 = vmatprep.subr.bf16.mxu0 0
        %4112 = vmatpush1.bf16.xpose.msra.mxu0 0
        %4113 = vmatprep.subr.bf16.mxu0 0
        %4114 = vmatpush1.bf16.xpose.msra.mxu0 0
        %4115 = vmatprep.subr.bf16.mxu0 0
        %4116 = vmatpush1.bf16.xpose.msra.mxu0 0
        %4117 = vmatprep.subr.bf16.mxu0 0
        %4118 = vmatpush1.bf16.xpose.msra.mxu0 0
        %4119 = vmatprep.subr.bf16.mxu0 0
        %4120 = vmatpush1.bf16.xpose.msra.mxu0 0
        %4121 = vmatprep.subr.bf16.mxu0 0
        %4122 = vmatpush1.bf16.xpose.msra.mxu0 0
        %4123 = vmatprep.subr.bf16.mxu0 0
        %4124 = vmatpush1.bf16.xpose.msra.mxu0 %v4107
        %4125 = vmatprep.subr.bf16.mxu0 0
        %4126 = vmatpush2.bf16.xpose.msra.mxu0 0
        %4127 = vmatprep.subr.bf16.mxu0 0
        %4128 = vmatpush2.bf16.xpose.msra.mxu0 0
        %4129 = vmatprep.subr.bf16.mxu0 0
        %4130 = vmatpush2.bf16.xpose.msra.mxu0 0
        %4131 = vmatprep.subr.bf16.mxu0 0
        %4132 = vmatpush2.bf16.xpose.msra.mxu0 0
        %4133 = vmatprep.subr.bf16.mxu0 0
        %4134 = vmatpush2.bf16.xpose.msra.mxu0 0
        %4135 = vmatprep.subr.bf16.mxu0 0
        %4136 = vmatpush2.bf16.xpose.msra.mxu0 0
        %4137 = vmatprep.subr.bf16.mxu0 0
        %4138 = vmatpush2.bf16.xpose.msra.mxu0 0
        %4139 = vmatprep.subr.bf16.mxu0 0
        %4140 = vmatpush2.bf16.xpose.msra.mxu0 0
        %4141 = vmatprep.mubr.bf16.mxu0 0
        %4142 = vmatmul.mubr.bf16.gmra.mxu0 %v4104
        %v4143 = vpop.f32.mrf.mxu0
        %v4144 = vadd.f32 0.0, %v4143
        %v4145 = vpop.f32.mrf.mxu0
        %v4146 = vpop.f32.mrf.mxu0
        %v4147 = vpop.f32.mrf.mxu0
        %4148 = vdwg.mxu0
        %v4150 = vsel %vm1576, %v3939, 0
        %v4153 = vsel %vm1576, %v3991, 0
        %4155 = vmatprep.subr.bf16.mxu0 0
        %4156 = vmatpush1.bf16.xpose.msra.mxu0 0
        %4157 = vmatprep.subr.bf16.mxu0 0
        %4158 = vmatpush1.bf16.xpose.msra.mxu0 0
        %4159 = vmatprep.subr.bf16.mxu0 0
        %4160 = vmatpush1.bf16.xpose.msra.mxu0 0
        %4161 = vmatprep.subr.bf16.mxu0 0
        %4162 = vmatpush1.bf16.xpose.msra.mxu0 0
        %4163 = vmatprep.subr.bf16.mxu0 0
        %4164 = vmatpush1.bf16.xpose.msra.mxu0 0
        %4165 = vmatprep.subr.bf16.mxu0 0
        %4166 = vmatpush1.bf16.xpose.msra.mxu0 0
        %4167 = vmatprep.subr.bf16.mxu0 0
        %4168 = vmatpush1.bf16.xpose.msra.mxu0 0
        %4169 = vmatprep.subr.bf16.mxu0 0
        %4170 = vmatpush1.bf16.xpose.msra.mxu0 %v4153
        %4171 = vmatprep.subr.bf16.mxu0 0
        %4172 = vmatpush2.bf16.xpose.msra.mxu0 0
        %4173 = vmatprep.subr.bf16.mxu0 0
        %4174 = vmatpush2.bf16.xpose.msra.mxu0 0
        %4175 = vmatprep.subr.bf16.mxu0 0
        %4176 = vmatpush2.bf16.xpose.msra.mxu0 0
        %4177 = vmatprep.subr.bf16.mxu0 0
        %4178 = vmatpush2.bf16.xpose.msra.mxu0 0
        %4179 = vmatprep.subr.bf16.mxu0 0
        %4180 = vmatpush2.bf16.xpose.msra.mxu0 0
        %4181 = vmatprep.subr.bf16.mxu0 0
        %4182 = vmatpush2.bf16.xpose.msra.mxu0 0
        %4183 = vmatprep.subr.bf16.mxu0 0
        %4184 = vmatpush2.bf16.xpose.msra.mxu0 0
        %4185 = vmatprep.subr.bf16.mxu0 0
        %4186 = vmatpush2.bf16.xpose.msra.mxu0 0
        %4187 = vmatprep.mubr.bf16.mxu0 0
        %4188 = vmatmul.mubr.bf16.gmra.mxu0 %v4150
        %v4189 = vpop.f32.mrf.mxu0
        %v4190 = vadd.f32 0.0, %v4189
        %v4191 = vpop.f32.mrf.mxu0
        %v4192 = vpop.f32.mrf.mxu0
        %v4193 = vpop.f32.mrf.mxu0
        %4194 = vdwg.mxu0
        %v4196 = vsel %vm1576, %v3940, 0
        %v4199 = vsel %vm1576, %v3992, 0
        %4201 = vmatprep.subr.bf16.mxu0 0
        %4202 = vmatpush1.bf16.xpose.msra.mxu0 0
        %4203 = vmatprep.subr.bf16.mxu0 0
        %4204 = vmatpush1.bf16.xpose.msra.mxu0 0
        %4205 = vmatprep.subr.bf16.mxu0 0
        %4206 = vmatpush1.bf16.xpose.msra.mxu0 0
        %4207 = vmatprep.subr.bf16.mxu0 0
        %4208 = vmatpush1.bf16.xpose.msra.mxu0 0
        %4209 = vmatprep.subr.bf16.mxu0 0
        %4210 = vmatpush1.bf16.xpose.msra.mxu0 0
        %4211 = vmatprep.subr.bf16.mxu0 0
        %4212 = vmatpush1.bf16.xpose.msra.mxu0 0
        %4213 = vmatprep.subr.bf16.mxu0 0
        %4214 = vmatpush1.bf16.xpose.msra.mxu0 0
        %4215 = vmatprep.subr.bf16.mxu0 0
        %4216 = vmatpush1.bf16.xpose.msra.mxu0 %v4199
        %4217 = vmatprep.subr.bf16.mxu0 0
        %4218 = vmatpush2.bf16.xpose.msra.mxu0 0
        %4219 = vmatprep.subr.bf16.mxu0 0
        %4220 = vmatpush2.bf16.xpose.msra.mxu0 0
        %4221 = vmatprep.subr.bf16.mxu0 0
        %4222 = vmatpush2.bf16.xpose.msra.mxu0 0
        %4223 = vmatprep.subr.bf16.mxu0 0
        %4224 = vmatpush2.bf16.xpose.msra.mxu0 0
        %4225 = vmatprep.subr.bf16.mxu0 0
        %4226 = vmatpush2.bf16.xpose.msra.mxu0 0
        %4227 = vmatprep.subr.bf16.mxu0 0
        %4228 = vmatpush2.bf16.xpose.msra.mxu0 0
        %4229 = vmatprep.subr.bf16.mxu0 0
        %4230 = vmatpush2.bf16.xpose.msra.mxu0 0
        %4231 = vmatprep.subr.bf16.mxu0 0
        %4232 = vmatpush2.bf16.xpose.msra.mxu0 0
        %4233 = vmatprep.mubr.bf16.mxu0 0
        %4234 = vmatmul.mubr.bf16.gmra.mxu0 %v4196
        %v4235 = vpop.f32.mrf.mxu0
        %v4236 = vadd.f32 0.0, %v4235
        %v4237 = vpop.f32.mrf.mxu0
        %v4238 = vpop.f32.mrf.mxu0
        %v4239 = vpop.f32.mrf.mxu0
        %4240 = vdwg.mxu0
        %v4242 = vsel %vm1576, %v3941, 0
        %v4245 = vsel %vm1576, %v3993, 0
        %4247 = vmatprep.subr.bf16.mxu0 0
        %4248 = vmatpush1.bf16.xpose.msra.mxu0 0
        %4249 = vmatprep.subr.bf16.mxu0 0
        %4250 = vmatpush1.bf16.xpose.msra.mxu0 0
        %4251 = vmatprep.subr.bf16.mxu0 0
        %4252 = vmatpush1.bf16.xpose.msra.mxu0 0
        %4253 = vmatprep.subr.bf16.mxu0 0
        %4254 = vmatpush1.bf16.xpose.msra.mxu0 0
        %4255 = vmatprep.subr.bf16.mxu0 0
        %4256 = vmatpush1.bf16.xpose.msra.mxu0 0
        %4257 = vmatprep.subr.bf16.mxu0 0
        %4258 = vmatpush1.bf16.xpose.msra.mxu0 0
        %4259 = vmatprep.subr.bf16.mxu0 0
        %4260 = vmatpush1.bf16.xpose.msra.mxu0 0
        %4261 = vmatprep.subr.bf16.mxu0 0
        %4262 = vmatpush1.bf16.xpose.msra.mxu0 %v4245
        %4263 = vmatprep.subr.bf16.mxu0 0
        %4264 = vmatpush2.bf16.xpose.msra.mxu0 0
        %4265 = vmatprep.subr.bf16.mxu0 0
        %4266 = vmatpush2.bf16.xpose.msra.mxu0 0
        %4267 = vmatprep.subr.bf16.mxu0 0
        %4268 = vmatpush2.bf16.xpose.msra.mxu0 0
        %4269 = vmatprep.subr.bf16.mxu0 0
        %4270 = vmatpush2.bf16.xpose.msra.mxu0 0
        %4271 = vmatprep.subr.bf16.mxu0 0
        %4272 = vmatpush2.bf16.xpose.msra.mxu0 0
        %4273 = vmatprep.subr.bf16.mxu0 0
        %4274 = vmatpush2.bf16.xpose.msra.mxu0 0
        %4275 = vmatprep.subr.bf16.mxu0 0
        %4276 = vmatpush2.bf16.xpose.msra.mxu0 0
        %4277 = vmatprep.subr.bf16.mxu0 0
        %4278 = vmatpush2.bf16.xpose.msra.mxu0 0
        %4279 = vmatprep.mubr.bf16.mxu0 0
        %4280 = vmatmul.mubr.bf16.gmra.mxu0 %v4242
        %v4281 = vpop.f32.mrf.mxu0
        %v4282 = vadd.f32 0.0, %v4281
        %v4283 = vpop.f32.mrf.mxu0
        %v4284 = vpop.f32.mrf.mxu0
        %v4285 = vpop.f32.mrf.mxu0
        %4286 = vdwg.mxu0
        %v4288 = vsel %vm1576, %v3942, 0
        %v4291 = vsel %vm1576, %v3994, 0
        %4293 = vmatprep.subr.bf16.mxu0 0
        %4294 = vmatpush1.bf16.xpose.msra.mxu0 0
        %4295 = vmatprep.subr.bf16.mxu0 0
        %4296 = vmatpush1.bf16.xpose.msra.mxu0 0
        %4297 = vmatprep.subr.bf16.mxu0 0
        %4298 = vmatpush1.bf16.xpose.msra.mxu0 0
        %4299 = vmatprep.subr.bf16.mxu0 0
        %4300 = vmatpush1.bf16.xpose.msra.mxu0 0
        %4301 = vmatprep.subr.bf16.mxu0 0
        %4302 = vmatpush1.bf16.xpose.msra.mxu0 0
        %4303 = vmatprep.subr.bf16.mxu0 0
        %4304 = vmatpush1.bf16.xpose.msra.mxu0 0
        %4305 = vmatprep.subr.bf16.mxu0 0
        %4306 = vmatpush1.bf16.xpose.msra.mxu0 0
        %4307 = vmatprep.subr.bf16.mxu0 0
        %4308 = vmatpush1.bf16.xpose.msra.mxu0 %v4291
        %4309 = vmatprep.subr.bf16.mxu0 0
        %4310 = vmatpush2.bf16.xpose.msra.mxu0 0
        %4311 = vmatprep.subr.bf16.mxu0 0
        %4312 = vmatpush2.bf16.xpose.msra.mxu0 0
        %4313 = vmatprep.subr.bf16.mxu0 0
        %4314 = vmatpush2.bf16.xpose.msra.mxu0 0
        %4315 = vmatprep.subr.bf16.mxu0 0
        %4316 = vmatpush2.bf16.xpose.msra.mxu0 0
        %4317 = vmatprep.subr.bf16.mxu0 0
        %4318 = vmatpush2.bf16.xpose.msra.mxu0 0
        %4319 = vmatprep.subr.bf16.mxu0 0
        %4320 = vmatpush2.bf16.xpose.msra.mxu0 0
        %4321 = vmatprep.subr.bf16.mxu0 0
        %4322 = vmatpush2.bf16.xpose.msra.mxu0 0
        %4323 = vmatprep.subr.bf16.mxu0 0
        %4324 = vmatpush2.bf16.xpose.msra.mxu0 0
        %4325 = vmatprep.mubr.bf16.mxu0 0
        %4326 = vmatmul.mubr.bf16.gmra.mxu0 %v4288
        %v4327 = vpop.f32.mrf.mxu0
        %v4328 = vadd.f32 0.0, %v4327
        %v4329 = vpop.f32.mrf.mxu0
        %v4330 = vpop.f32.mrf.mxu0
        %v4331 = vpop.f32.mrf.mxu0
        %4332 = vdwg.mxu0
        %v4334 = vsel %vm1576, %v3943, 0
        %v4337 = vsel %vm1576, %v3995, 0
        %4339 = vmatprep.subr.bf16.mxu0 0
        %4340 = vmatpush1.bf16.xpose.msra.mxu0 0
        %4341 = vmatprep.subr.bf16.mxu0 0
        %4342 = vmatpush1.bf16.xpose.msra.mxu0 0
        %4343 = vmatprep.subr.bf16.mxu0 0
        %4344 = vmatpush1.bf16.xpose.msra.mxu0 0
        %4345 = vmatprep.subr.bf16.mxu0 0
        %4346 = vmatpush1.bf16.xpose.msra.mxu0 0
        %4347 = vmatprep.subr.bf16.mxu0 0
        %4348 = vmatpush1.bf16.xpose.msra.mxu0 0
        %4349 = vmatprep.subr.bf16.mxu0 0
        %4350 = vmatpush1.bf16.xpose.msra.mxu0 0
        %4351 = vmatprep.subr.bf16.mxu0 0
        %4352 = vmatpush1.bf16.xpose.msra.mxu0 0
        %4353 = vmatprep.subr.bf16.mxu0 0
        %4354 = vmatpush1.bf16.xpose.msra.mxu0 %v4337
        %4355 = vmatprep.subr.bf16.mxu0 0
        %4356 = vmatpush2.bf16.xpose.msra.mxu0 0
        %4357 = vmatprep.subr.bf16.mxu0 0
        %4358 = vmatpush2.bf16.xpose.msra.mxu0 0
        %4359 = vmatprep.subr.bf16.mxu0 0
        %4360 = vmatpush2.bf16.xpose.msra.mxu0 0
        %4361 = vmatprep.subr.bf16.mxu0 0
        %4362 = vmatpush2.bf16.xpose.msra.mxu0 0
        %4363 = vmatprep.subr.bf16.mxu0 0
        %4364 = vmatpush2.bf16.xpose.msra.mxu0 0
        %4365 = vmatprep.subr.bf16.mxu0 0
        %4366 = vmatpush2.bf16.xpose.msra.mxu0 0
        %4367 = vmatprep.subr.bf16.mxu0 0
        %4368 = vmatpush2.bf16.xpose.msra.mxu0 0
        %4369 = vmatprep.subr.bf16.mxu0 0
        %4370 = vmatpush2.bf16.xpose.msra.mxu0 0
        %4371 = vmatprep.mubr.bf16.mxu0 0
        %4372 = vmatmul.mubr.bf16.gmra.mxu0 %v4334
        %v4373 = vpop.f32.mrf.mxu0
        %v4374 = vadd.f32 0.0, %v4373
        %v4375 = vpop.f32.mrf.mxu0
        %v4376 = vpop.f32.mrf.mxu0
        %v4377 = vpop.f32.mrf.mxu0
        %4378 = vdwg.mxu0
        %v4380 = vsel %vm1576, %v3944, 0
        %v4383 = vsel %vm1576, %v3996, 0
        %4385 = vmatprep.subr.bf16.mxu0 0
        %4386 = vmatpush1.bf16.xpose.msra.mxu0 0
        %4387 = vmatprep.subr.bf16.mxu0 0
        %4388 = vmatpush1.bf16.xpose.msra.mxu0 0
        %4389 = vmatprep.subr.bf16.mxu0 0
        %4390 = vmatpush1.bf16.xpose.msra.mxu0 0
        %4391 = vmatprep.subr.bf16.mxu0 0
        %4392 = vmatpush1.bf16.xpose.msra.mxu0 0
        %4393 = vmatprep.subr.bf16.mxu0 0
        %4394 = vmatpush1.bf16.xpose.msra.mxu0 0
        %4395 = vmatprep.subr.bf16.mxu0 0
        %4396 = vmatpush1.bf16.xpose.msra.mxu0 0
        %4397 = vmatprep.subr.bf16.mxu0 0
        %4398 = vmatpush1.bf16.xpose.msra.mxu0 0
        %4399 = vmatprep.subr.bf16.mxu0 0
        %4400 = vmatpush1.bf16.xpose.msra.mxu0 %v4383
        %4401 = vmatprep.subr.bf16.mxu0 0
        %4402 = vmatpush2.bf16.xpose.msra.mxu0 0
        %4403 = vmatprep.subr.bf16.mxu0 0
        %4404 = vmatpush2.bf16.xpose.msra.mxu0 0
        %4405 = vmatprep.subr.bf16.mxu0 0
        %4406 = vmatpush2.bf16.xpose.msra.mxu0 0
        %4407 = vmatprep.subr.bf16.mxu0 0
        %4408 = vmatpush2.bf16.xpose.msra.mxu0 0
        %4409 = vmatprep.subr.bf16.mxu0 0
        %4410 = vmatpush2.bf16.xpose.msra.mxu0 0
        %4411 = vmatprep.subr.bf16.mxu0 0
        %4412 = vmatpush2.bf16.xpose.msra.mxu0 0
        %4413 = vmatprep.subr.bf16.mxu0 0
        %4414 = vmatpush2.bf16.xpose.msra.mxu0 0
        %4415 = vmatprep.subr.bf16.mxu0 0
        %4416 = vmatpush2.bf16.xpose.msra.mxu0 0
        %4417 = vmatprep.mubr.bf16.mxu0 0
        %4418 = vmatmul.mubr.bf16.gmra.mxu0 %v4380
        %v4419 = vpop.f32.mrf.mxu0
        %v4420 = vadd.f32 0.0, %v4419
        %v4421 = vpop.f32.mrf.mxu0
        %v4422 = vpop.f32.mrf.mxu0
        %v4423 = vpop.f32.mrf.mxu0
        %4424 = vdwg.mxu0
        %v4426 = vsel %vm1576, %v3945, 0
        %v4429 = vsel %vm1576, %v3997, 0
        %4431 = vmatprep.subr.bf16.mxu0 0
        %4432 = vmatpush1.bf16.xpose.msra.mxu0 0
        %4433 = vmatprep.subr.bf16.mxu0 0
        %4434 = vmatpush1.bf16.xpose.msra.mxu0 0
        %4435 = vmatprep.subr.bf16.mxu0 0
        %4436 = vmatpush1.bf16.xpose.msra.mxu0 0
        %4437 = vmatprep.subr.bf16.mxu0 0
        %4438 = vmatpush1.bf16.xpose.msra.mxu0 0
        %4439 = vmatprep.subr.bf16.mxu0 0
        %4440 = vmatpush1.bf16.xpose.msra.mxu0 0
        %4441 = vmatprep.subr.bf16.mxu0 0
        %4442 = vmatpush1.bf16.xpose.msra.mxu0 0
        %4443 = vmatprep.subr.bf16.mxu0 0
        %4444 = vmatpush1.bf16.xpose.msra.mxu0 0
        %4445 = vmatprep.subr.bf16.mxu0 0
        %4446 = vmatpush1.bf16.xpose.msra.mxu0 %v4429
        %4447 = vmatprep.subr.bf16.mxu0 0
        %4448 = vmatpush2.bf16.xpose.msra.mxu0 0
        %4449 = vmatprep.subr.bf16.mxu0 0
        %4450 = vmatpush2.bf16.xpose.msra.mxu0 0
        %4451 = vmatprep.subr.bf16.mxu0 0
        %4452 = vmatpush2.bf16.xpose.msra.mxu0 0
        %4453 = vmatprep.subr.bf16.mxu0 0
        %4454 = vmatpush2.bf16.xpose.msra.mxu0 0
        %4455 = vmatprep.subr.bf16.mxu0 0
        %4456 = vmatpush2.bf16.xpose.msra.mxu0 0
        %4457 = vmatprep.subr.bf16.mxu0 0
        %4458 = vmatpush2.bf16.xpose.msra.mxu0 0
        %4459 = vmatprep.subr.bf16.mxu0 0
        %4460 = vmatpush2.bf16.xpose.msra.mxu0 0
        %4461 = vmatprep.subr.bf16.mxu0 0
        %4462 = vmatpush2.bf16.xpose.msra.mxu0 0
        %4463 = vmatprep.mubr.bf16.mxu0 0
        %4464 = vmatmul.mubr.bf16.gmra.mxu0 %v4426
        %v4465 = vpop.f32.mrf.mxu0
        %v4466 = vadd.f32 0.0, %v4465
        %v4467 = vpop.f32.mrf.mxu0
        %v4468 = vpop.f32.mrf.mxu0
        %v4469 = vpop.f32.mrf.mxu0
        %4470 = vdwg.mxu0
        %v4472 = vsel %vm1576, %v3946, 0
        %v4475 = vsel %vm1576, %v3998, 0
        %4477 = vmatprep.subr.bf16.mxu0 0
        %4478 = vmatpush1.bf16.xpose.msra.mxu0 0
        %4479 = vmatprep.subr.bf16.mxu0 0
        %4480 = vmatpush1.bf16.xpose.msra.mxu0 0
        %4481 = vmatprep.subr.bf16.mxu0 0
        %4482 = vmatpush1.bf16.xpose.msra.mxu0 0
        %4483 = vmatprep.subr.bf16.mxu0 0
        %4484 = vmatpush1.bf16.xpose.msra.mxu0 0
        %4485 = vmatprep.subr.bf16.mxu0 0
        %4486 = vmatpush1.bf16.xpose.msra.mxu0 0
        %4487 = vmatprep.subr.bf16.mxu0 0
        %4488 = vmatpush1.bf16.xpose.msra.mxu0 0
        %4489 = vmatprep.subr.bf16.mxu0 0
        %4490 = vmatpush1.bf16.xpose.msra.mxu0 0
        %4491 = vmatprep.subr.bf16.mxu0 0
        %4492 = vmatpush1.bf16.xpose.msra.mxu0 %v4475
        %4493 = vmatprep.subr.bf16.mxu0 0
        %4494 = vmatpush2.bf16.xpose.msra.mxu0 0
        %4495 = vmatprep.subr.bf16.mxu0 0
        %4496 = vmatpush2.bf16.xpose.msra.mxu0 0
        %4497 = vmatprep.subr.bf16.mxu0 0
        %4498 = vmatpush2.bf16.xpose.msra.mxu0 0
        %4499 = vmatprep.subr.bf16.mxu0 0
        %4500 = vmatpush2.bf16.xpose.msra.mxu0 0
        %4501 = vmatprep.subr.bf16.mxu0 0
        %4502 = vmatpush2.bf16.xpose.msra.mxu0 0
        %4503 = vmatprep.subr.bf16.mxu0 0
        %4504 = vmatpush2.bf16.xpose.msra.mxu0 0
        %4505 = vmatprep.subr.bf16.mxu0 0
        %4506 = vmatpush2.bf16.xpose.msra.mxu0 0
        %4507 = vmatprep.subr.bf16.mxu0 0
        %4508 = vmatpush2.bf16.xpose.msra.mxu0 0
        %4509 = vmatprep.mubr.bf16.mxu0 0
        %4510 = vmatmul.mubr.bf16.gmra.mxu0 %v4472
        %v4511 = vpop.f32.mrf.mxu0
        %v4512 = vadd.f32 0.0, %v4511
        %v4513 = vpop.f32.mrf.mxu0
        %v4514 = vpop.f32.mrf.mxu0
        %v4515 = vpop.f32.mrf.mxu0
        %4516 = vdwg.mxu0
        %v4518 = vsel %vm1576, %v3947, 0
        %v4521 = vsel %vm1576, %v3999, 0
        %4523 = vmatprep.subr.bf16.mxu0 0
        %4524 = vmatpush1.bf16.xpose.msra.mxu0 0
        %4525 = vmatprep.subr.bf16.mxu0 0
        %4526 = vmatpush1.bf16.xpose.msra.mxu0 0
        %4527 = vmatprep.subr.bf16.mxu0 0
        %4528 = vmatpush1.bf16.xpose.msra.mxu0 0
        %4529 = vmatprep.subr.bf16.mxu0 0
        %4530 = vmatpush1.bf16.xpose.msra.mxu0 0
        %4531 = vmatprep.subr.bf16.mxu0 0
        %4532 = vmatpush1.bf16.xpose.msra.mxu0 0
        %4533 = vmatprep.subr.bf16.mxu0 0
        %4534 = vmatpush1.bf16.xpose.msra.mxu0 0
        %4535 = vmatprep.subr.bf16.mxu0 0
        %4536 = vmatpush1.bf16.xpose.msra.mxu0 0
        %4537 = vmatprep.subr.bf16.mxu0 0
        %4538 = vmatpush1.bf16.xpose.msra.mxu0 %v4521
        %4539 = vmatprep.subr.bf16.mxu0 0
        %4540 = vmatpush2.bf16.xpose.msra.mxu0 0
        %4541 = vmatprep.subr.bf16.mxu0 0
        %4542 = vmatpush2.bf16.xpose.msra.mxu0 0
        %4543 = vmatprep.subr.bf16.mxu0 0
        %4544 = vmatpush2.bf16.xpose.msra.mxu0 0
        %4545 = vmatprep.subr.bf16.mxu0 0
        %4546 = vmatpush2.bf16.xpose.msra.mxu0 0
        %4547 = vmatprep.subr.bf16.mxu0 0
        %4548 = vmatpush2.bf16.xpose.msra.mxu0 0
        %4549 = vmatprep.subr.bf16.mxu0 0
        %4550 = vmatpush2.bf16.xpose.msra.mxu0 0
        %4551 = vmatprep.subr.bf16.mxu0 0
        %4552 = vmatpush2.bf16.xpose.msra.mxu0 0
        %4553 = vmatprep.subr.bf16.mxu0 0
        %4554 = vmatpush2.bf16.xpose.msra.mxu0 0
        %4555 = vmatprep.mubr.bf16.mxu0 0
        %4556 = vmatmul.mubr.bf16.gmra.mxu0 %v4518
        %v4557 = vpop.f32.mrf.mxu0
        %v4558 = vadd.f32 0.0, %v4557
        %v4559 = vpop.f32.mrf.mxu0
        %v4560 = vpop.f32.mrf.mxu0
        %v4561 = vpop.f32.mrf.mxu0
        %4562 = vdwg.mxu0
        %v4564 = vsel %vm1576, %v3948, 0
        %v4567 = vsel %vm1576, %v4000, 0
        %4569 = vmatprep.subr.bf16.mxu0 0
        %4570 = vmatpush1.bf16.xpose.msra.mxu0 0
        %4571 = vmatprep.subr.bf16.mxu0 0
        %4572 = vmatpush1.bf16.xpose.msra.mxu0 0
        %4573 = vmatprep.subr.bf16.mxu0 0
        %4574 = vmatpush1.bf16.xpose.msra.mxu0 0
        %4575 = vmatprep.subr.bf16.mxu0 0
        %4576 = vmatpush1.bf16.xpose.msra.mxu0 0
        %4577 = vmatprep.subr.bf16.mxu0 0
        %4578 = vmatpush1.bf16.xpose.msra.mxu0 0
        %4579 = vmatprep.subr.bf16.mxu0 0
        %4580 = vmatpush1.bf16.xpose.msra.mxu0 0
        %4581 = vmatprep.subr.bf16.mxu0 0
        %4582 = vmatpush1.bf16.xpose.msra.mxu0 0
        %4583 = vmatprep.subr.bf16.mxu0 0
        %4584 = vmatpush1.bf16.xpose.msra.mxu0 %v4567
        %4585 = vmatprep.subr.bf16.mxu0 0
        %4586 = vmatpush2.bf16.xpose.msra.mxu0 0
        %4587 = vmatprep.subr.bf16.mxu0 0
        %4588 = vmatpush2.bf16.xpose.msra.mxu0 0
        %4589 = vmatprep.subr.bf16.mxu0 0
        %4590 = vmatpush2.bf16.xpose.msra.mxu0 0
        %4591 = vmatprep.subr.bf16.mxu0 0
        %4592 = vmatpush2.bf16.xpose.msra.mxu0 0
        %4593 = vmatprep.subr.bf16.mxu0 0
        %4594 = vmatpush2.bf16.xpose.msra.mxu0 0
        %4595 = vmatprep.subr.bf16.mxu0 0
        %4596 = vmatpush2.bf16.xpose.msra.mxu0 0
        %4597 = vmatprep.subr.bf16.mxu0 0
        %4598 = vmatpush2.bf16.xpose.msra.mxu0 0
        %4599 = vmatprep.subr.bf16.mxu0 0
        %4600 = vmatpush2.bf16.xpose.msra.mxu0 0
        %4601 = vmatprep.mubr.bf16.mxu0 0
        %4602 = vmatmul.mubr.bf16.gmra.mxu0 %v4564
        %v4603 = vpop.f32.mrf.mxu0
        %v4604 = vadd.f32 0.0, %v4603
        %v4605 = vpop.f32.mrf.mxu0
        %v4606 = vpop.f32.mrf.mxu0
        %v4607 = vpop.f32.mrf.mxu0
        %4608 = vdwg.mxu0
        %v4610 = vsel %vm1576, %v3949, 0
        %v4613 = vsel %vm1576, %v4001, 0
        %4615 = vmatprep.subr.bf16.mxu0 0
        %4616 = vmatpush1.bf16.xpose.msra.mxu0 0
        %4617 = vmatprep.subr.bf16.mxu0 0
        %4618 = vmatpush1.bf16.xpose.msra.mxu0 0
        %4619 = vmatprep.subr.bf16.mxu0 0
        %4620 = vmatpush1.bf16.xpose.msra.mxu0 0
        %4621 = vmatprep.subr.bf16.mxu0 0
        %4622 = vmatpush1.bf16.xpose.msra.mxu0 0
        %4623 = vmatprep.subr.bf16.mxu0 0
        %4624 = vmatpush1.bf16.xpose.msra.mxu0 0
        %4625 = vmatprep.subr.bf16.mxu0 0
        %4626 = vmatpush1.bf16.xpose.msra.mxu0 0
        %4627 = vmatprep.subr.bf16.mxu0 0
        %4628 = vmatpush1.bf16.xpose.msra.mxu0 0
        %4629 = vmatprep.subr.bf16.mxu0 0
        %4630 = vmatpush1.bf16.xpose.msra.mxu0 %v4613
        %4631 = vmatprep.subr.bf16.mxu0 0
        %4632 = vmatpush2.bf16.xpose.msra.mxu0 0
        %4633 = vmatprep.subr.bf16.mxu0 0
        %4634 = vmatpush2.bf16.xpose.msra.mxu0 0
        %4635 = vmatprep.subr.bf16.mxu0 0
        %4636 = vmatpush2.bf16.xpose.msra.mxu0 0
        %4637 = vmatprep.subr.bf16.mxu0 0
        %4638 = vmatpush2.bf16.xpose.msra.mxu0 0
        %4639 = vmatprep.subr.bf16.mxu0 0
        %4640 = vmatpush2.bf16.xpose.msra.mxu0 0
        %4641 = vmatprep.subr.bf16.mxu0 0
        %4642 = vmatpush2.bf16.xpose.msra.mxu0 0
        %4643 = vmatprep.subr.bf16.mxu0 0
        %4644 = vmatpush2.bf16.xpose.msra.mxu0 0
        %4645 = vmatprep.subr.bf16.mxu0 0
        %4646 = vmatpush2.bf16.xpose.msra.mxu0 0
        %4647 = vmatprep.mubr.bf16.mxu0 0
        %4648 = vmatmul.mubr.bf16.gmra.mxu0 %v4610
        %v4649 = vpop.f32.mrf.mxu0
        %v4650 = vadd.f32 0.0, %v4649
        %v4651 = vpop.f32.mrf.mxu0
        %v4652 = vpop.f32.mrf.mxu0
        %v4653 = vpop.f32.mrf.mxu0
        %4654 = vdwg.mxu0
        %v4656 = vsel %vm1576, %v3950, 0
        %v4659 = vsel %vm1576, %v4002, 0
        %4661 = vmatprep.subr.bf16.mxu0 0
        %4662 = vmatpush1.bf16.xpose.msra.mxu0 0
        %4663 = vmatprep.subr.bf16.mxu0 0
        %4664 = vmatpush1.bf16.xpose.msra.mxu0 0
        %4665 = vmatprep.subr.bf16.mxu0 0
        %4666 = vmatpush1.bf16.xpose.msra.mxu0 0
        %4667 = vmatprep.subr.bf16.mxu0 0
        %4668 = vmatpush1.bf16.xpose.msra.mxu0 0
        %4669 = vmatprep.subr.bf16.mxu0 0
        %4670 = vmatpush1.bf16.xpose.msra.mxu0 0
        %4671 = vmatprep.subr.bf16.mxu0 0
        %4672 = vmatpush1.bf16.xpose.msra.mxu0 0
        %4673 = vmatprep.subr.bf16.mxu0 0
        %4674 = vmatpush1.bf16.xpose.msra.mxu0 0
        %4675 = vmatprep.subr.bf16.mxu0 0
        %4676 = vmatpush1.bf16.xpose.msra.mxu0 %v4659
        %4677 = vmatprep.subr.bf16.mxu0 0
        %4678 = vmatpush2.bf16.xpose.msra.mxu0 0
        %4679 = vmatprep.subr.bf16.mxu0 0
        %4680 = vmatpush2.bf16.xpose.msra.mxu0 0
        %4681 = vmatprep.subr.bf16.mxu0 0
        %4682 = vmatpush2.bf16.xpose.msra.mxu0 0
        %4683 = vmatprep.subr.bf16.mxu0 0
        %4684 = vmatpush2.bf16.xpose.msra.mxu0 0
        %4685 = vmatprep.subr.bf16.mxu0 0
        %4686 = vmatpush2.bf16.xpose.msra.mxu0 0
        %4687 = vmatprep.subr.bf16.mxu0 0
        %4688 = vmatpush2.bf16.xpose.msra.mxu0 0
        %4689 = vmatprep.subr.bf16.mxu0 0
        %4690 = vmatpush2.bf16.xpose.msra.mxu0 0
        %4691 = vmatprep.subr.bf16.mxu0 0
        %4692 = vmatpush2.bf16.xpose.msra.mxu0 0
        %4693 = vmatprep.mubr.bf16.mxu0 0
        %4694 = vmatmul.mubr.bf16.gmra.mxu0 %v4656
        %v4695 = vpop.f32.mrf.mxu0
        %v4696 = vadd.f32 0.0, %v4695
        %v4697 = vpop.f32.mrf.mxu0
        %v4698 = vpop.f32.mrf.mxu0
        %v4699 = vpop.f32.mrf.mxu0
        %4700 = vdwg.mxu0
        %v4702 = vsel %vm1576, %v3951, 0
        %v4705 = vsel %vm1576, %v4003, 0
        %4707 = vmatprep.subr.bf16.mxu0 0
        %4708 = vmatpush1.bf16.xpose.msra.mxu0 0
        %4709 = vmatprep.subr.bf16.mxu0 0
        %4710 = vmatpush1.bf16.xpose.msra.mxu0 0
        %4711 = vmatprep.subr.bf16.mxu0 0
        %4712 = vmatpush1.bf16.xpose.msra.mxu0 0
        %4713 = vmatprep.subr.bf16.mxu0 0
        %4714 = vmatpush1.bf16.xpose.msra.mxu0 0
        %4715 = vmatprep.subr.bf16.mxu0 0
        %4716 = vmatpush1.bf16.xpose.msra.mxu0 0
        %4717 = vmatprep.subr.bf16.mxu0 0
        %4718 = vmatpush1.bf16.xpose.msra.mxu0 0
        %4719 = vmatprep.subr.bf16.mxu0 0
        %4720 = vmatpush1.bf16.xpose.msra.mxu0 0
        %4721 = vmatprep.subr.bf16.mxu0 0
        %4722 = vmatpush1.bf16.xpose.msra.mxu0 %v4705
        %4723 = vmatprep.subr.bf16.mxu0 0
        %4724 = vmatpush2.bf16.xpose.msra.mxu0 0
        %4725 = vmatprep.subr.bf16.mxu0 0
        %4726 = vmatpush2.bf16.xpose.msra.mxu0 0
        %4727 = vmatprep.subr.bf16.mxu0 0
        %4728 = vmatpush2.bf16.xpose.msra.mxu0 0
        %4729 = vmatprep.subr.bf16.mxu0 0
        %4730 = vmatpush2.bf16.xpose.msra.mxu0 0
        %4731 = vmatprep.subr.bf16.mxu0 0
        %4732 = vmatpush2.bf16.xpose.msra.mxu0 0
        %4733 = vmatprep.subr.bf16.mxu0 0
        %4734 = vmatpush2.bf16.xpose.msra.mxu0 0
        %4735 = vmatprep.subr.bf16.mxu0 0
        %4736 = vmatpush2.bf16.xpose.msra.mxu0 0
        %4737 = vmatprep.subr.bf16.mxu0 0
        %4738 = vmatpush2.bf16.xpose.msra.mxu0 0
        %4739 = vmatprep.mubr.bf16.mxu0 0
        %4740 = vmatmul.mubr.bf16.gmra.mxu0 %v4702
        %v4741 = vpop.f32.mrf.mxu0
        %v4742 = vadd.f32 0.0, %v4741
        %v4743 = vpop.f32.mrf.mxu0
        %v4744 = vpop.f32.mrf.mxu0
        %v4745 = vpop.f32.mrf.mxu0
        %4746 = vdwg.mxu0
        %v4748 = vsel %vm1576, %v3952, 0
        %v4751 = vsel %vm1576, %v4004, 0
        %4753 = vmatprep.subr.bf16.mxu0 0
        %4754 = vmatpush1.bf16.xpose.msra.mxu0 0
        %4755 = vmatprep.subr.bf16.mxu0 0
        %4756 = vmatpush1.bf16.xpose.msra.mxu0 0
        %4757 = vmatprep.subr.bf16.mxu0 0
        %4758 = vmatpush1.bf16.xpose.msra.mxu0 0
        %4759 = vmatprep.subr.bf16.mxu0 0
        %4760 = vmatpush1.bf16.xpose.msra.mxu0 0
        %4761 = vmatprep.subr.bf16.mxu0 0
        %4762 = vmatpush1.bf16.xpose.msra.mxu0 0
        %4763 = vmatprep.subr.bf16.mxu0 0
        %4764 = vmatpush1.bf16.xpose.msra.mxu0 0
        %4765 = vmatprep.subr.bf16.mxu0 0
        %4766 = vmatpush1.bf16.xpose.msra.mxu0 0
        %4767 = vmatprep.subr.bf16.mxu0 0
        %4768 = vmatpush1.bf16.xpose.msra.mxu0 %v4751
        %4769 = vmatprep.subr.bf16.mxu0 0
        %4770 = vmatpush2.bf16.xpose.msra.mxu0 0
        %4771 = vmatprep.subr.bf16.mxu0 0
        %4772 = vmatpush2.bf16.xpose.msra.mxu0 0
        %4773 = vmatprep.subr.bf16.mxu0 0
        %4774 = vmatpush2.bf16.xpose.msra.mxu0 0
        %4775 = vmatprep.subr.bf16.mxu0 0
        %4776 = vmatpush2.bf16.xpose.msra.mxu0 0
        %4777 = vmatprep.subr.bf16.mxu0 0
        %4778 = vmatpush2.bf16.xpose.msra.mxu0 0
        %4779 = vmatprep.subr.bf16.mxu0 0
        %4780 = vmatpush2.bf16.xpose.msra.mxu0 0
        %4781 = vmatprep.subr.bf16.mxu0 0
        %4782 = vmatpush2.bf16.xpose.msra.mxu0 0
        %4783 = vmatprep.subr.bf16.mxu0 0
        %4784 = vmatpush2.bf16.xpose.msra.mxu0 0
        %4785 = vmatprep.mubr.bf16.mxu0 0
        %4786 = vmatmul.mubr.bf16.gmra.mxu0 %v4748
        %v4787 = vpop.f32.mrf.mxu0
        %v4788 = vadd.f32 0.0, %v4787
        %v4789 = vpop.f32.mrf.mxu0
        %v4790 = vpop.f32.mrf.mxu0
        %v4791 = vpop.f32.mrf.mxu0
        %4792 = vdwg.mxu0
        %vm4793 = vcmask 31744
        %v4794 = vsel %vm4793, %v4098, -inf
        %4795 = vmax.xlane.f32.xlu0 %v4794
        %v4796 = vpop.xlane.xlu0 %4795
        %v4797 = vsel %vm4793, %v4144, -inf
        %4798 = vmax.xlane.f32.xlu0 %v4797
        %v4799 = vpop.xlane.xlu0 %4798
        %v4800 = vsel %vm4793, %v4190, -inf
        %4801 = vmax.xlane.f32.xlu0 %v4800
        %v4802 = vpop.xlane.xlu0 %4801
        %v4803 = vsel %vm4793, %v4236, -inf
        %4804 = vmax.xlane.f32.xlu0 %v4803
        %v4805 = vpop.xlane.xlu0 %4804
        %v4806 = vsel %vm4793, %v4282, -inf
        %4807 = vmax.xlane.f32.xlu0 %v4806
        %v4808 = vpop.xlane.xlu0 %4807
        %v4809 = vsel %vm4793, %v4328, -inf
        %4810 = vmax.xlane.f32.xlu0 %v4809
        %v4811 = vpop.xlane.xlu0 %4810
        %v4812 = vsel %vm4793, %v4374, -inf
        %4813 = vmax.xlane.f32.xlu0 %v4812
        %v4814 = vpop.xlane.xlu0 %4813
        %v4815 = vsel %vm4793, %v4420, -inf
        %4816 = vmax.xlane.f32.xlu0 %v4815
        %v4817 = vpop.xlane.xlu0 %4816
        %v4818 = vsel %vm4793, %v4466, -inf
        %4819 = vmax.xlane.f32.xlu0 %v4818
        %v4820 = vpop.xlane.xlu0 %4819
        %v4821 = vsel %vm4793, %v4512, -inf
        %4822 = vmax.xlane.f32.xlu0 %v4821
        %v4823 = vpop.xlane.xlu0 %4822
        %v4824 = vsel %vm4793, %v4558, -inf
        %4825 = vmax.xlane.f32.xlu0 %v4824
        %v4826 = vpop.xlane.xlu0 %4825
        %v4827 = vsel %vm4793, %v4604, -inf
        %4828 = vmax.xlane.f32.xlu0 %v4827
        %v4829 = vpop.xlane.xlu0 %4828
        %v4830 = vsel %vm4793, %v4650, -inf
        %4831 = vmax.xlane.f32.xlu0 %v4830
        %v4832 = vpop.xlane.xlu0 %4831
        %v4833 = vsel %vm4793, %v4696, -inf
        %4834 = vmax.xlane.f32.xlu0 %v4833
        %v4835 = vpop.xlane.xlu0 %4834
        %v4836 = vsel %vm4793, %v4742, -inf
        %4837 = vmax.xlane.f32.xlu0 %v4836
        %v4838 = vpop.xlane.xlu0 %4837
        %v4839 = vsel %vm4793, %v4788, -inf
        %4840 = vmax.xlane.f32.xlu0 %v4839
        %v4841 = vpop.xlane.xlu0 %4840
        %v4842 = vsub.f32 %v4098, %v4796
        %v4843 = vsub.f32 %v4144, %v4799
        %v4844 = vsub.f32 %v4190, %v4802
        %v4845 = vsub.f32 %v4236, %v4805
        %v4846 = vsub.f32 %v4282, %v4808
        %v4847 = vsub.f32 %v4328, %v4811
        %v4848 = vsub.f32 %v4374, %v4814
        %v4849 = vsub.f32 %v4420, %v4817
        %v4850 = vsub.f32 %v4466, %v4820
        %v4851 = vsub.f32 %v4512, %v4823
        %v4852 = vsub.f32 %v4558, %v4826
        %v4853 = vsub.f32 %v4604, %v4829
        %v4854 = vsub.f32 %v4650, %v4832
        %v4855 = vsub.f32 %v4696, %v4835
        %v4856 = vsub.f32 %v4742, %v4838
        %v4857 = vsub.f32 %v4788, %v4841
        %v4858 = vmul.f32 %v4842, 1.442695
        %v4859 = vpow.pop %v4858
        %v4860 = vmul.f32 %v4843, 1.442695
        %v4861 = vpow.pop %v4860
        %v4862 = vmul.f32 %v4844, 1.442695
        %v4863 = vpow.pop %v4862
        %v4864 = vmul.f32 %v4845, 1.442695
        %v4865 = vpow.pop %v4864
        %v4866 = vmul.f32 %v4846, 1.442695
        %v4867 = vpow.pop %v4866
        %v4868 = vmul.f32 %v4847, 1.442695
        %v4869 = vpow.pop %v4868
        %v4870 = vmul.f32 %v4848, 1.442695
        %v4871 = vpow.pop %v4870
        %v4872 = vmul.f32 %v4849, 1.442695
        %v4873 = vpow.pop %v4872
        %v4874 = vmul.f32 %v4850, 1.442695
        %v4875 = vpow.pop %v4874
        %v4876 = vmul.f32 %v4851, 1.442695
        %v4877 = vpow.pop %v4876
        %v4878 = vmul.f32 %v4852, 1.442695
        %v4879 = vpow.pop %v4878
        %v4880 = vmul.f32 %v4853, 1.442695
        %v4881 = vpow.pop %v4880
        %v4882 = vmul.f32 %v4854, 1.442695
        %v4883 = vpow.pop %v4882
        %v4884 = vmul.f32 %v4855, 1.442695
        %v4885 = vpow.pop %v4884
        %v4886 = vmul.f32 %v4856, 1.442695
        %v4887 = vpow.pop %v4886
        %v4888 = vmul.f32 %v4857, 1.442695
        %v4889 = vpow.pop %v4888
        %v4890 = vsel %vm4793, %v4859, 0.0
        %4891 = vadd.xlane.f32.xlu0 %v4890
        %v4892 = vpop.xlane.xlu0 %4891
        %v4893 = vsel %vm4793, %v4861, 0.0
        %4894 = vadd.xlane.f32.xlu0 %v4893
        %v4895 = vpop.xlane.xlu0 %4894
        %v4896 = vsel %vm4793, %v4863, 0.0
        %4897 = vadd.xlane.f32.xlu0 %v4896
        %v4898 = vpop.xlane.xlu0 %4897
        %v4899 = vsel %vm4793, %v4865, 0.0
        %4900 = vadd.xlane.f32.xlu0 %v4899
        %v4901 = vpop.xlane.xlu0 %4900
        %v4902 = vsel %vm4793, %v4867, 0.0
        %4903 = vadd.xlane.f32.xlu0 %v4902
        %v4904 = vpop.xlane.xlu0 %4903
        %v4905 = vsel %vm4793, %v4869, 0.0
        %4906 = vadd.xlane.f32.xlu0 %v4905
        %v4907 = vpop.xlane.xlu0 %4906
        %v4908 = vsel %vm4793, %v4871, 0.0
        %4909 = vadd.xlane.f32.xlu0 %v4908
        %v4910 = vpop.xlane.xlu0 %4909
        %v4911 = vsel %vm4793, %v4873, 0.0
        %4912 = vadd.xlane.f32.xlu0 %v4911
        %v4913 = vpop.xlane.xlu0 %4912
        %v4914 = vsel %vm4793, %v4875, 0.0
        %4915 = vadd.xlane.f32.xlu0 %v4914
        %v4916 = vpop.xlane.xlu0 %4915
        %v4917 = vsel %vm4793, %v4877, 0.0
        %4918 = vadd.xlane.f32.xlu0 %v4917
        %v4919 = vpop.xlane.xlu0 %4918
        %v4920 = vsel %vm4793, %v4879, 0.0
        %4921 = vadd.xlane.f32.xlu0 %v4920
        %v4922 = vpop.xlane.xlu0 %4921
        %v4923 = vsel %vm4793, %v4881, 0.0
        %4924 = vadd.xlane.f32.xlu0 %v4923
        %v4925 = vpop.xlane.xlu0 %4924
        %v4926 = vsel %vm4793, %v4883, 0.0
        %4927 = vadd.xlane.f32.xlu0 %v4926
        %v4928 = vpop.xlane.xlu0 %4927
        %v4929 = vsel %vm4793, %v4885, 0.0
        %4930 = vadd.xlane.f32.xlu0 %v4929
        %v4931 = vpop.xlane.xlu0 %4930
        %v4932 = vsel %vm4793, %v4887, 0.0
        %4933 = vadd.xlane.f32.xlu0 %v4932
        %v4934 = vpop.xlane.xlu0 %4933
        %v4935 = vsel %vm4793, %v4889, 0.0
        %4936 = vadd.xlane.f32.xlu0 %v4935
        %v4937 = vpop.xlane.xlu0 %4936
        %v4938 = vrcp.pop %v4892
        %v4939 = vrcp.pop %v4895
        %v4940 = vrcp.pop %v4898
        %v4941 = vrcp.pop %v4901
        %v4942 = vrcp.pop %v4904
        %v4943 = vrcp.pop %v4907
        %v4944 = vrcp.pop %v4910
        %v4945 = vrcp.pop %v4913
        %v4946 = vrcp.pop %v4916
        %v4947 = vrcp.pop %v4919
        %v4948 = vrcp.pop %v4922
        %v4949 = vrcp.pop %v4925
        %v4950 = vrcp.pop %v4928
        %v4951 = vrcp.pop %v4931
        %v4952 = vrcp.pop %v4934
        %v4953 = vrcp.pop %v4937
        %v4954 = vmul.f32 %v4859, %v4938
        %v4955 = vmul.f32 %v4861, %v4939
        %v4956 = vmul.f32 %v4863, %v4940
        %v4957 = vmul.f32 %v4865, %v4941
        %v4958 = vmul.f32 %v4867, %v4942
        %v4959 = vmul.f32 %v4869, %v4943
        %v4960 = vmul.f32 %v4871, %v4944
        %v4961 = vmul.f32 %v4873, %v4945
        %v4962 = vmul.f32 %v4875, %v4946
        %v4963 = vmul.f32 %v4877, %v4947
        %v4964 = vmul.f32 %v4879, %v4948
        %v4965 = vmul.f32 %v4881, %v4949
        %v4966 = vmul.f32 %v4883, %v4950
        %v4967 = vmul.f32 %v4885, %v4951
        %v4968 = vmul.f32 %v4887, %v4952
        %v4969 = vmul.f32 %v4889, %v4953
        %v4970 = vpack.c.bf16 %v4954, %v4954
        %v4971 = vpack.c.bf16 %v4955, %v4955
        %v4972 = vpack.c.bf16 %v4956, %v4956
        %v4973 = vpack.c.bf16 %v4957, %v4957
        %v4974 = vpack.c.bf16 %v4958, %v4958
        %v4975 = vpack.c.bf16 %v4959, %v4959
        %v4976 = vpack.c.bf16 %v4960, %v4960
        %v4977 = vpack.c.bf16 %v4961, %v4961
        %v4978 = vpack.c.bf16 %v4962, %v4962
        %v4979 = vpack.c.bf16 %v4963, %v4963
        %v4980 = vpack.c.bf16 %v4964, %v4964
        %v4981 = vpack.c.bf16 %v4965, %v4965
        %v4982 = vpack.c.bf16 %v4966, %v4966
        %v4983 = vpack.c.bf16 %v4967, %v4967
        %v4984 = vpack.c.bf16 %v4968, %v4968
        %v4985 = vpack.c.bf16 %v4969, %v4969
        %v4987 = vsel %vm4793, %v4970, 0
        %vm4989 = vcmask 1041408
        %v4991 = vsel %vm4989, %v4041, 0
        %4993 = vmatprep.subr.bf16.mxu0 0
        %4994 = vmatpush1.bf16.msra.mxu0 0
        %4995 = vmatprep.subr.bf16.mxu0 0
        %4996 = vmatpush1.bf16.msra.mxu0 0
        %4997 = vmatprep.subr.bf16.mxu0 0
        %4998 = vmatpush1.bf16.msra.mxu0 0
        %4999 = vmatprep.subr.bf16.mxu0 0
        %5000 = vmatpush1.bf16.msra.mxu0 0
        %5001 = vmatprep.subr.bf16.mxu0 0
        %5002 = vmatpush1.bf16.msra.mxu0 0
        %5003 = vmatprep.subr.bf16.mxu0 0
        %5004 = vmatpush1.bf16.msra.mxu0 0
        %5005 = vmatprep.subr.bf16.mxu0 0
        %5006 = vmatpush1.bf16.msra.mxu0 0
        %5007 = vmatprep.subr.bf16.mxu0 0
        %5008 = vmatpush1.bf16.msra.mxu0 %v4991
        %5009 = vmatprep.subr.bf16.mxu0 0
        %5010 = vmatpush2.bf16.msra.mxu0 0
        %5011 = vmatprep.subr.bf16.mxu0 0
        %5012 = vmatpush2.bf16.msra.mxu0 0
        %5013 = vmatprep.subr.bf16.mxu0 0
        %5014 = vmatpush2.bf16.msra.mxu0 0
        %5015 = vmatprep.subr.bf16.mxu0 0
        %5016 = vmatpush2.bf16.msra.mxu0 0
        %5017 = vmatprep.subr.bf16.mxu0 0
        %5018 = vmatpush2.bf16.msra.mxu0 0
        %5019 = vmatprep.subr.bf16.mxu0 0
        %5020 = vmatpush2.bf16.msra.mxu0 0
        %5021 = vmatprep.subr.bf16.mxu0 0
        %5022 = vmatpush2.bf16.msra.mxu0 0
        %5023 = vmatprep.subr.bf16.mxu0 0
        %5024 = vmatpush2.bf16.msra.mxu0 0
        %5025 = vmatprep.mubr.bf16.mxu0 0
        %5026 = vmatmul.mubr.bf16.gmra.mxu0 %v4987
        %v5027 = vpop.f32.mrf.mxu0
        %v5028 = vadd.f32 0.0, %v5027
        %v5029 = vpop.f32.mrf.mxu0
        %v5030 = vpop.f32.mrf.mxu0
        %v5031 = vpop.f32.mrf.mxu0
        %5032 = vdwg.mxu0
        %v5034 = vsel %vm4793, %v4971, 0
        %v5037 = vsel %vm4989, %v4042, 0
        %5039 = vmatprep.subr.bf16.mxu0 0
        %5040 = vmatpush1.bf16.msra.mxu0 0
        %5041 = vmatprep.subr.bf16.mxu0 0
        %5042 = vmatpush1.bf16.msra.mxu0 0
        %5043 = vmatprep.subr.bf16.mxu0 0
        %5044 = vmatpush1.bf16.msra.mxu0 0
        %5045 = vmatprep.subr.bf16.mxu0 0
        %5046 = vmatpush1.bf16.msra.mxu0 0
        %5047 = vmatprep.subr.bf16.mxu0 0
        %5048 = vmatpush1.bf16.msra.mxu0 0
        %5049 = vmatprep.subr.bf16.mxu0 0
        %5050 = vmatpush1.bf16.msra.mxu0 0
        %5051 = vmatprep.subr.bf16.mxu0 0
        %5052 = vmatpush1.bf16.msra.mxu0 0
        %5053 = vmatprep.subr.bf16.mxu0 0
        %5054 = vmatpush1.bf16.msra.mxu0 %v5037
        %5055 = vmatprep.subr.bf16.mxu0 0
        %5056 = vmatpush2.bf16.msra.mxu0 0
        %5057 = vmatprep.subr.bf16.mxu0 0
        %5058 = vmatpush2.bf16.msra.mxu0 0
        %5059 = vmatprep.subr.bf16.mxu0 0
        %5060 = vmatpush2.bf16.msra.mxu0 0
        %5061 = vmatprep.subr.bf16.mxu0 0
        %5062 = vmatpush2.bf16.msra.mxu0 0
        %5063 = vmatprep.subr.bf16.mxu0 0
        %5064 = vmatpush2.bf16.msra.mxu0 0
        %5065 = vmatprep.subr.bf16.mxu0 0
        %5066 = vmatpush2.bf16.msra.mxu0 0
        %5067 = vmatprep.subr.bf16.mxu0 0
        %5068 = vmatpush2.bf16.msra.mxu0 0
        %5069 = vmatprep.subr.bf16.mxu0 0
        %5070 = vmatpush2.bf16.msra.mxu0 0
        %5071 = vmatprep.mubr.bf16.mxu0 0
        %5072 = vmatmul.mubr.bf16.gmra.mxu0 %v5034
        %v5073 = vpop.f32.mrf.mxu0
        %v5074 = vadd.f32 0.0, %v5073
        %v5075 = vpop.f32.mrf.mxu0
        %v5076 = vpop.f32.mrf.mxu0
        %v5077 = vpop.f32.mrf.mxu0
        %5078 = vdwg.mxu0
        %v5080 = vsel %vm4793, %v4972, 0
        %v5083 = vsel %vm4989, %v4043, 0
        %5085 = vmatprep.subr.bf16.mxu0 0
        %5086 = vmatpush1.bf16.msra.mxu0 0
        %5087 = vmatprep.subr.bf16.mxu0 0
        %5088 = vmatpush1.bf16.msra.mxu0 0
        %5089 = vmatprep.subr.bf16.mxu0 0
        %5090 = vmatpush1.bf16.msra.mxu0 0
        %5091 = vmatprep.subr.bf16.mxu0 0
        %5092 = vmatpush1.bf16.msra.mxu0 0
        %5093 = vmatprep.subr.bf16.mxu0 0
        %5094 = vmatpush1.bf16.msra.mxu0 0
        %5095 = vmatprep.subr.bf16.mxu0 0
        %5096 = vmatpush1.bf16.msra.mxu0 0
        %5097 = vmatprep.subr.bf16.mxu0 0
        %5098 = vmatpush1.bf16.msra.mxu0 0
        %5099 = vmatprep.subr.bf16.mxu0 0
        %5100 = vmatpush1.bf16.msra.mxu0 %v5083
        %5101 = vmatprep.subr.bf16.mxu0 0
        %5102 = vmatpush2.bf16.msra.mxu0 0
        %5103 = vmatprep.subr.bf16.mxu0 0
        %5104 = vmatpush2.bf16.msra.mxu0 0
        %5105 = vmatprep.subr.bf16.mxu0 0
        %5106 = vmatpush2.bf16.msra.mxu0 0
        %5107 = vmatprep.subr.bf16.mxu0 0
        %5108 = vmatpush2.bf16.msra.mxu0 0
        %5109 = vmatprep.subr.bf16.mxu0 0
        %5110 = vmatpush2.bf16.msra.mxu0 0
        %5111 = vmatprep.subr.bf16.mxu0 0
        %5112 = vmatpush2.bf16.msra.mxu0 0
        %5113 = vmatprep.subr.bf16.mxu0 0
        %5114 = vmatpush2.bf16.msra.mxu0 0
        %5115 = vmatprep.subr.bf16.mxu0 0
        %5116 = vmatpush2.bf16.msra.mxu0 0
        %5117 = vmatprep.mubr.bf16.mxu0 0
        %5118 = vmatmul.mubr.bf16.gmra.mxu0 %v5080
        %v5119 = vpop.f32.mrf.mxu0
        %v5120 = vadd.f32 0.0, %v5119
        %v5121 = vpop.f32.mrf.mxu0
        %v5122 = vpop.f32.mrf.mxu0
        %v5123 = vpop.f32.mrf.mxu0
        %5124 = vdwg.mxu0
        %v5126 = vsel %vm4793, %v4973, 0
        %v5129 = vsel %vm4989, %v4044, 0
        %5131 = vmatprep.subr.bf16.mxu0 0
        %5132 = vmatpush1.bf16.msra.mxu0 0
        %5133 = vmatprep.subr.bf16.mxu0 0
        %5134 = vmatpush1.bf16.msra.mxu0 0
        %5135 = vmatprep.subr.bf16.mxu0 0
        %5136 = vmatpush1.bf16.msra.mxu0 0
        %5137 = vmatprep.subr.bf16.mxu0 0
        %5138 = vmatpush1.bf16.msra.mxu0 0
        %5139 = vmatprep.subr.bf16.mxu0 0
        %5140 = vmatpush1.bf16.msra.mxu0 0
        %5141 = vmatprep.subr.bf16.mxu0 0
        %5142 = vmatpush1.bf16.msra.mxu0 0
        %5143 = vmatprep.subr.bf16.mxu0 0
        %5144 = vmatpush1.bf16.msra.mxu0 0
        %5145 = vmatprep.subr.bf16.mxu0 0
        %5146 = vmatpush1.bf16.msra.mxu0 %v5129
        %5147 = vmatprep.subr.bf16.mxu0 0
        %5148 = vmatpush2.bf16.msra.mxu0 0
        %5149 = vmatprep.subr.bf16.mxu0 0
        %5150 = vmatpush2.bf16.msra.mxu0 0
        %5151 = vmatprep.subr.bf16.mxu0 0
        %5152 = vmatpush2.bf16.msra.mxu0 0
        %5153 = vmatprep.subr.bf16.mxu0 0
        %5154 = vmatpush2.bf16.msra.mxu0 0
        %5155 = vmatprep.subr.bf16.mxu0 0
        %5156 = vmatpush2.bf16.msra.mxu0 0
        %5157 = vmatprep.subr.bf16.mxu0 0
        %5158 = vmatpush2.bf16.msra.mxu0 0
        %5159 = vmatprep.subr.bf16.mxu0 0
        %5160 = vmatpush2.bf16.msra.mxu0 0
        %5161 = vmatprep.subr.bf16.mxu0 0
        %5162 = vmatpush2.bf16.msra.mxu0 0
        %5163 = vmatprep.mubr.bf16.mxu0 0
        %5164 = vmatmul.mubr.bf16.gmra.mxu0 %v5126
        %v5165 = vpop.f32.mrf.mxu0
        %v5166 = vadd.f32 0.0, %v5165
        %v5167 = vpop.f32.mrf.mxu0
        %v5168 = vpop.f32.mrf.mxu0
        %v5169 = vpop.f32.mrf.mxu0
        %5170 = vdwg.mxu0
        %v5172 = vsel %vm4793, %v4974, 0
        %v5175 = vsel %vm4989, %v4045, 0
        %5177 = vmatprep.subr.bf16.mxu0 0
        %5178 = vmatpush1.bf16.msra.mxu0 0
        %5179 = vmatprep.subr.bf16.mxu0 0
        %5180 = vmatpush1.bf16.msra.mxu0 0
        %5181 = vmatprep.subr.bf16.mxu0 0
        %5182 = vmatpush1.bf16.msra.mxu0 0
        %5183 = vmatprep.subr.bf16.mxu0 0
        %5184 = vmatpush1.bf16.msra.mxu0 0
        %5185 = vmatprep.subr.bf16.mxu0 0
        %5186 = vmatpush1.bf16.msra.mxu0 0
        %5187 = vmatprep.subr.bf16.mxu0 0
        %5188 = vmatpush1.bf16.msra.mxu0 0
        %5189 = vmatprep.subr.bf16.mxu0 0
        %5190 = vmatpush1.bf16.msra.mxu0 0
        %5191 = vmatprep.subr.bf16.mxu0 0
        %5192 = vmatpush1.bf16.msra.mxu0 %v5175
        %5193 = vmatprep.subr.bf16.mxu0 0
        %5194 = vmatpush2.bf16.msra.mxu0 0
        %5195 = vmatprep.subr.bf16.mxu0 0
        %5196 = vmatpush2.bf16.msra.mxu0 0
        %5197 = vmatprep.subr.bf16.mxu0 0
        %5198 = vmatpush2.bf16.msra.mxu0 0
        %5199 = vmatprep.subr.bf16.mxu0 0
        %5200 = vmatpush2.bf16.msra.mxu0 0
        %5201 = vmatprep.subr.bf16.mxu0 0
        %5202 = vmatpush2.bf16.msra.mxu0 0
        %5203 = vmatprep.subr.bf16.mxu0 0
        %5204 = vmatpush2.bf16.msra.mxu0 0
        %5205 = vmatprep.subr.bf16.mxu0 0
        %5206 = vmatpush2.bf16.msra.mxu0 0
        %5207 = vmatprep.subr.bf16.mxu0 0
        %5208 = vmatpush2.bf16.msra.mxu0 0
        %5209 = vmatprep.mubr.bf16.mxu0 0
        %5210 = vmatmul.mubr.bf16.gmra.mxu0 %v5172
        %v5211 = vpop.f32.mrf.mxu0
        %v5212 = vadd.f32 0.0, %v5211
        %v5213 = vpop.f32.mrf.mxu0
        %v5214 = vpop.f32.mrf.mxu0
        %v5215 = vpop.f32.mrf.mxu0
        %5216 = vdwg.mxu0
        %v5218 = vsel %vm4793, %v4975, 0
        %v5221 = vsel %vm4989, %v4046, 0
        %5223 = vmatprep.subr.bf16.mxu0 0
        %5224 = vmatpush1.bf16.msra.mxu0 0
        %5225 = vmatprep.subr.bf16.mxu0 0
        %5226 = vmatpush1.bf16.msra.mxu0 0
        %5227 = vmatprep.subr.bf16.mxu0 0
        %5228 = vmatpush1.bf16.msra.mxu0 0
        %5229 = vmatprep.subr.bf16.mxu0 0
        %5230 = vmatpush1.bf16.msra.mxu0 0
        %5231 = vmatprep.subr.bf16.mxu0 0
        %5232 = vmatpush1.bf16.msra.mxu0 0
        %5233 = vmatprep.subr.bf16.mxu0 0
        %5234 = vmatpush1.bf16.msra.mxu0 0
        %5235 = vmatprep.subr.bf16.mxu0 0
        %5236 = vmatpush1.bf16.msra.mxu0 0
        %5237 = vmatprep.subr.bf16.mxu0 0
        %5238 = vmatpush1.bf16.msra.mxu0 %v5221
        %5239 = vmatprep.subr.bf16.mxu0 0
        %5240 = vmatpush2.bf16.msra.mxu0 0
        %5241 = vmatprep.subr.bf16.mxu0 0
        %5242 = vmatpush2.bf16.msra.mxu0 0
        %5243 = vmatprep.subr.bf16.mxu0 0
        %5244 = vmatpush2.bf16.msra.mxu0 0
        %5245 = vmatprep.subr.bf16.mxu0 0
        %5246 = vmatpush2.bf16.msra.mxu0 0
        %5247 = vmatprep.subr.bf16.mxu0 0
        %5248 = vmatpush2.bf16.msra.mxu0 0
        %5249 = vmatprep.subr.bf16.mxu0 0
        %5250 = vmatpush2.bf16.msra.mxu0 0
        %5251 = vmatprep.subr.bf16.mxu0 0
        %5252 = vmatpush2.bf16.msra.mxu0 0
        %5253 = vmatprep.subr.bf16.mxu0 0
        %5254 = vmatpush2.bf16.msra.mxu0 0
        %5255 = vmatprep.mubr.bf16.mxu0 0
        %5256 = vmatmul.mubr.bf16.gmra.mxu0 %v5218
        %v5257 = vpop.f32.mrf.mxu0
        %v5258 = vadd.f32 0.0, %v5257
        %v5259 = vpop.f32.mrf.mxu0
        %v5260 = vpop.f32.mrf.mxu0
        %v5261 = vpop.f32.mrf.mxu0
        %5262 = vdwg.mxu0
        %v5264 = vsel %vm4793, %v4976, 0
        %v5267 = vsel %vm4989, %v4047, 0
        %5269 = vmatprep.subr.bf16.mxu0 0
        %5270 = vmatpush1.bf16.msra.mxu0 0
        %5271 = vmatprep.subr.bf16.mxu0 0
        %5272 = vmatpush1.bf16.msra.mxu0 0
        %5273 = vmatprep.subr.bf16.mxu0 0
        %5274 = vmatpush1.bf16.msra.mxu0 0
        %5275 = vmatprep.subr.bf16.mxu0 0
        %5276 = vmatpush1.bf16.msra.mxu0 0
        %5277 = vmatprep.subr.bf16.mxu0 0
        %5278 = vmatpush1.bf16.msra.mxu0 0
        %5279 = vmatprep.subr.bf16.mxu0 0
        %5280 = vmatpush1.bf16.msra.mxu0 0
        %5281 = vmatprep.subr.bf16.mxu0 0
        %5282 = vmatpush1.bf16.msra.mxu0 0
        %5283 = vmatprep.subr.bf16.mxu0 0
        %5284 = vmatpush1.bf16.msra.mxu0 %v5267
        %5285 = vmatprep.subr.bf16.mxu0 0
        %5286 = vmatpush2.bf16.msra.mxu0 0
        %5287 = vmatprep.subr.bf16.mxu0 0
        %5288 = vmatpush2.bf16.msra.mxu0 0
        %5289 = vmatprep.subr.bf16.mxu0 0
        %5290 = vmatpush2.bf16.msra.mxu0 0
        %5291 = vmatprep.subr.bf16.mxu0 0
        %5292 = vmatpush2.bf16.msra.mxu0 0
        %5293 = vmatprep.subr.bf16.mxu0 0
        %5294 = vmatpush2.bf16.msra.mxu0 0
        %5295 = vmatprep.subr.bf16.mxu0 0
        %5296 = vmatpush2.bf16.msra.mxu0 0
        %5297 = vmatprep.subr.bf16.mxu0 0
        %5298 = vmatpush2.bf16.msra.mxu0 0
        %5299 = vmatprep.subr.bf16.mxu0 0
        %5300 = vmatpush2.bf16.msra.mxu0 0
        %5301 = vmatprep.mubr.bf16.mxu0 0
        %5302 = vmatmul.mubr.bf16.gmra.mxu0 %v5264
        %v5303 = vpop.f32.mrf.mxu0
        %v5304 = vadd.f32 0.0, %v5303
        %v5305 = vpop.f32.mrf.mxu0
        %v5306 = vpop.f32.mrf.mxu0
        %v5307 = vpop.f32.mrf.mxu0
        %5308 = vdwg.mxu0
        %v5310 = vsel %vm4793, %v4977, 0
        %v5313 = vsel %vm4989, %v4048, 0
        %5315 = vmatprep.subr.bf16.mxu0 0
        %5316 = vmatpush1.bf16.msra.mxu0 0
        %5317 = vmatprep.subr.bf16.mxu0 0
        %5318 = vmatpush1.bf16.msra.mxu0 0
        %5319 = vmatprep.subr.bf16.mxu0 0
        %5320 = vmatpush1.bf16.msra.mxu0 0
        %5321 = vmatprep.subr.bf16.mxu0 0
        %5322 = vmatpush1.bf16.msra.mxu0 0
        %5323 = vmatprep.subr.bf16.mxu0 0
        %5324 = vmatpush1.bf16.msra.mxu0 0
        %5325 = vmatprep.subr.bf16.mxu0 0
        %5326 = vmatpush1.bf16.msra.mxu0 0
        %5327 = vmatprep.subr.bf16.mxu0 0
        %5328 = vmatpush1.bf16.msra.mxu0 0
        %5329 = vmatprep.subr.bf16.mxu0 0
        %5330 = vmatpush1.bf16.msra.mxu0 %v5313
        %5331 = vmatprep.subr.bf16.mxu0 0
        %5332 = vmatpush2.bf16.msra.mxu0 0
        %5333 = vmatprep.subr.bf16.mxu0 0
        %5334 = vmatpush2.bf16.msra.mxu0 0
        %5335 = vmatprep.subr.bf16.mxu0 0
        %5336 = vmatpush2.bf16.msra.mxu0 0
        %5337 = vmatprep.subr.bf16.mxu0 0
        %5338 = vmatpush2.bf16.msra.mxu0 0
        %5339 = vmatprep.subr.bf16.mxu0 0
        %5340 = vmatpush2.bf16.msra.mxu0 0
        %5341 = vmatprep.subr.bf16.mxu0 0
        %5342 = vmatpush2.bf16.msra.mxu0 0
        %5343 = vmatprep.subr.bf16.mxu0 0
        %5344 = vmatpush2.bf16.msra.mxu0 0
        %5345 = vmatprep.subr.bf16.mxu0 0
        %5346 = vmatpush2.bf16.msra.mxu0 0
        %5347 = vmatprep.mubr.bf16.mxu0 0
        %5348 = vmatmul.mubr.bf16.gmra.mxu0 %v5310
        %v5349 = vpop.f32.mrf.mxu0
        %v5350 = vadd.f32 0.0, %v5349
        %v5351 = vpop.f32.mrf.mxu0
        %v5352 = vpop.f32.mrf.mxu0
        %v5353 = vpop.f32.mrf.mxu0
        %5354 = vdwg.mxu0
        %v5356 = vsel %vm4793, %v4978, 0
        %v5359 = vsel %vm4989, %v4049, 0
        %5361 = vmatprep.subr.bf16.mxu0 0
        %5362 = vmatpush1.bf16.msra.mxu0 0
        %5363 = vmatprep.subr.bf16.mxu0 0
        %5364 = vmatpush1.bf16.msra.mxu0 0
        %5365 = vmatprep.subr.bf16.mxu0 0
        %5366 = vmatpush1.bf16.msra.mxu0 0
        %5367 = vmatprep.subr.bf16.mxu0 0
        %5368 = vmatpush1.bf16.msra.mxu0 0
        %5369 = vmatprep.subr.bf16.mxu0 0
        %5370 = vmatpush1.bf16.msra.mxu0 0
        %5371 = vmatprep.subr.bf16.mxu0 0
        %5372 = vmatpush1.bf16.msra.mxu0 0
        %5373 = vmatprep.subr.bf16.mxu0 0
        %5374 = vmatpush1.bf16.msra.mxu0 0
        %5375 = vmatprep.subr.bf16.mxu0 0
        %5376 = vmatpush1.bf16.msra.mxu0 %v5359
        %5377 = vmatprep.subr.bf16.mxu0 0
        %5378 = vmatpush2.bf16.msra.mxu0 0
        %5379 = vmatprep.subr.bf16.mxu0 0
        %5380 = vmatpush2.bf16.msra.mxu0 0
        %5381 = vmatprep.subr.bf16.mxu0 0
        %5382 = vmatpush2.bf16.msra.mxu0 0
        %5383 = vmatprep.subr.bf16.mxu0 0
        %5384 = vmatpush2.bf16.msra.mxu0 0
        %5385 = vmatprep.subr.bf16.mxu0 0
        %5386 = vmatpush2.bf16.msra.mxu0 0
        %5387 = vmatprep.subr.bf16.mxu0 0
        %5388 = vmatpush2.bf16.msra.mxu0 0
        %5389 = vmatprep.subr.bf16.mxu0 0
        %5390 = vmatpush2.bf16.msra.mxu0 0
        %5391 = vmatprep.subr.bf16.mxu0 0
        %5392 = vmatpush2.bf16.msra.mxu0 0
        %5393 = vmatprep.mubr.bf16.mxu0 0
        %5394 = vmatmul.mubr.bf16.gmra.mxu0 %v5356
        %v5395 = vpop.f32.mrf.mxu0
        %v5396 = vadd.f32 0.0, %v5395
        %v5397 = vpop.f32.mrf.mxu0
        %v5398 = vpop.f32.mrf.mxu0
        %v5399 = vpop.f32.mrf.mxu0
        %5400 = vdwg.mxu0
        %v5402 = vsel %vm4793, %v4979, 0
        %v5405 = vsel %vm4989, %v4050, 0
        %5407 = vmatprep.subr.bf16.mxu0 0
        %5408 = vmatpush1.bf16.msra.mxu0 0
        %5409 = vmatprep.subr.bf16.mxu0 0
        %5410 = vmatpush1.bf16.msra.mxu0 0
        %5411 = vmatprep.subr.bf16.mxu0 0
        %5412 = vmatpush1.bf16.msra.mxu0 0
        %5413 = vmatprep.subr.bf16.mxu0 0
        %5414 = vmatpush1.bf16.msra.mxu0 0
        %5415 = vmatprep.subr.bf16.mxu0 0
        %5416 = vmatpush1.bf16.msra.mxu0 0
        %5417 = vmatprep.subr.bf16.mxu0 0
        %5418 = vmatpush1.bf16.msra.mxu0 0
        %5419 = vmatprep.subr.bf16.mxu0 0
        %5420 = vmatpush1.bf16.msra.mxu0 0
        %5421 = vmatprep.subr.bf16.mxu0 0
        %5422 = vmatpush1.bf16.msra.mxu0 %v5405
        %5423 = vmatprep.subr.bf16.mxu0 0
        %5424 = vmatpush2.bf16.msra.mxu0 0
        %5425 = vmatprep.subr.bf16.mxu0 0
        %5426 = vmatpush2.bf16.msra.mxu0 0
        %5427 = vmatprep.subr.bf16.mxu0 0
        %5428 = vmatpush2.bf16.msra.mxu0 0
        %5429 = vmatprep.subr.bf16.mxu0 0
        %5430 = vmatpush2.bf16.msra.mxu0 0
        %5431 = vmatprep.subr.bf16.mxu0 0
        %5432 = vmatpush2.bf16.msra.mxu0 0
        %5433 = vmatprep.subr.bf16.mxu0 0
        %5434 = vmatpush2.bf16.msra.mxu0 0
        %5435 = vmatprep.subr.bf16.mxu0 0
        %5436 = vmatpush2.bf16.msra.mxu0 0
        %5437 = vmatprep.subr.bf16.mxu0 0
        %5438 = vmatpush2.bf16.msra.mxu0 0
        %5439 = vmatprep.mubr.bf16.mxu0 0
        %5440 = vmatmul.mubr.bf16.gmra.mxu0 %v5402
        %v5441 = vpop.f32.mrf.mxu0
        %v5442 = vadd.f32 0.0, %v5441
        %v5443 = vpop.f32.mrf.mxu0
        %v5444 = vpop.f32.mrf.mxu0
        %v5445 = vpop.f32.mrf.mxu0
        %5446 = vdwg.mxu0
        %v5448 = vsel %vm4793, %v4980, 0
        %v5451 = vsel %vm4989, %v4051, 0
        %5453 = vmatprep.subr.bf16.mxu0 0
        %5454 = vmatpush1.bf16.msra.mxu0 0
        %5455 = vmatprep.subr.bf16.mxu0 0
        %5456 = vmatpush1.bf16.msra.mxu0 0
        %5457 = vmatprep.subr.bf16.mxu0 0
        %5458 = vmatpush1.bf16.msra.mxu0 0
        %5459 = vmatprep.subr.bf16.mxu0 0
        %5460 = vmatpush1.bf16.msra.mxu0 0
        %5461 = vmatprep.subr.bf16.mxu0 0
        %5462 = vmatpush1.bf16.msra.mxu0 0
        %5463 = vmatprep.subr.bf16.mxu0 0
        %5464 = vmatpush1.bf16.msra.mxu0 0
        %5465 = vmatprep.subr.bf16.mxu0 0
        %5466 = vmatpush1.bf16.msra.mxu0 0
        %5467 = vmatprep.subr.bf16.mxu0 0
        %5468 = vmatpush1.bf16.msra.mxu0 %v5451
        %5469 = vmatprep.subr.bf16.mxu0 0
        %5470 = vmatpush2.bf16.msra.mxu0 0
        %5471 = vmatprep.subr.bf16.mxu0 0
        %5472 = vmatpush2.bf16.msra.mxu0 0
        %5473 = vmatprep.subr.bf16.mxu0 0
        %5474 = vmatpush2.bf16.msra.mxu0 0
        %5475 = vmatprep.subr.bf16.mxu0 0
        %5476 = vmatpush2.bf16.msra.mxu0 0
        %5477 = vmatprep.subr.bf16.mxu0 0
        %5478 = vmatpush2.bf16.msra.mxu0 0
        %5479 = vmatprep.subr.bf16.mxu0 0
        %5480 = vmatpush2.bf16.msra.mxu0 0
        %5481 = vmatprep.subr.bf16.mxu0 0
        %5482 = vmatpush2.bf16.msra.mxu0 0
        %5483 = vmatprep.subr.bf16.mxu0 0
        %5484 = vmatpush2.bf16.msra.mxu0 0
        %5485 = vmatprep.mubr.bf16.mxu0 0
        %5486 = vmatmul.mubr.bf16.gmra.mxu0 %v5448
        %v5487 = vpop.f32.mrf.mxu0
        %v5488 = vadd.f32 0.0, %v5487
        %v5489 = vpop.f32.mrf.mxu0
        %v5490 = vpop.f32.mrf.mxu0
        %v5491 = vpop.f32.mrf.mxu0
        %5492 = vdwg.mxu0
        %v5494 = vsel %vm4793, %v4981, 0
        %v5497 = vsel %vm4989, %v4052, 0
        %5499 = vmatprep.subr.bf16.mxu0 0
        %5500 = vmatpush1.bf16.msra.mxu0 0
        %5501 = vmatprep.subr.bf16.mxu0 0
        %5502 = vmatpush1.bf16.msra.mxu0 0
        %5503 = vmatprep.subr.bf16.mxu0 0
        %5504 = vmatpush1.bf16.msra.mxu0 0
        %5505 = vmatprep.subr.bf16.mxu0 0
        %5506 = vmatpush1.bf16.msra.mxu0 0
        %5507 = vmatprep.subr.bf16.mxu0 0
        %5508 = vmatpush1.bf16.msra.mxu0 0
        %5509 = vmatprep.subr.bf16.mxu0 0
        %5510 = vmatpush1.bf16.msra.mxu0 0
        %5511 = vmatprep.subr.bf16.mxu0 0
        %5512 = vmatpush1.bf16.msra.mxu0 0
        %5513 = vmatprep.subr.bf16.mxu0 0
        %5514 = vmatpush1.bf16.msra.mxu0 %v5497
        %5515 = vmatprep.subr.bf16.mxu0 0
        %5516 = vmatpush2.bf16.msra.mxu0 0
        %5517 = vmatprep.subr.bf16.mxu0 0
        %5518 = vmatpush2.bf16.msra.mxu0 0
        %5519 = vmatprep.subr.bf16.mxu0 0
        %5520 = vmatpush2.bf16.msra.mxu0 0
        %5521 = vmatprep.subr.bf16.mxu0 0
        %5522 = vmatpush2.bf16.msra.mxu0 0
        %5523 = vmatprep.subr.bf16.mxu0 0
        %5524 = vmatpush2.bf16.msra.mxu0 0
        %5525 = vmatprep.subr.bf16.mxu0 0
        %5526 = vmatpush2.bf16.msra.mxu0 0
        %5527 = vmatprep.subr.bf16.mxu0 0
        %5528 = vmatpush2.bf16.msra.mxu0 0
        %5529 = vmatprep.subr.bf16.mxu0 0
        %5530 = vmatpush2.bf16.msra.mxu0 0
        %5531 = vmatprep.mubr.bf16.mxu0 0
        %5532 = vmatmul.mubr.bf16.gmra.mxu0 %v5494
        %v5533 = vpop.f32.mrf.mxu0
        %v5534 = vadd.f32 0.0, %v5533
        %v5535 = vpop.f32.mrf.mxu0
        %v5536 = vpop.f32.mrf.mxu0
        %v5537 = vpop.f32.mrf.mxu0
        %5538 = vdwg.mxu0
        %v5540 = vsel %vm4793, %v4982, 0
        %v5543 = vsel %vm4989, %v4053, 0
        %5545 = vmatprep.subr.bf16.mxu0 0
        %5546 = vmatpush1.bf16.msra.mxu0 0
        %5547 = vmatprep.subr.bf16.mxu0 0
        %5548 = vmatpush1.bf16.msra.mxu0 0
        %5549 = vmatprep.subr.bf16.mxu0 0
        %5550 = vmatpush1.bf16.msra.mxu0 0
        %5551 = vmatprep.subr.bf16.mxu0 0
        %5552 = vmatpush1.bf16.msra.mxu0 0
        %5553 = vmatprep.subr.bf16.mxu0 0
        %5554 = vmatpush1.bf16.msra.mxu0 0
        %5555 = vmatprep.subr.bf16.mxu0 0
        %5556 = vmatpush1.bf16.msra.mxu0 0
        %5557 = vmatprep.subr.bf16.mxu0 0
        %5558 = vmatpush1.bf16.msra.mxu0 0
        %5559 = vmatprep.subr.bf16.mxu0 0
        %5560 = vmatpush1.bf16.msra.mxu0 %v5543
        %5561 = vmatprep.subr.bf16.mxu0 0
        %5562 = vmatpush2.bf16.msra.mxu0 0
        %5563 = vmatprep.subr.bf16.mxu0 0
        %5564 = vmatpush2.bf16.msra.mxu0 0
        %5565 = vmatprep.subr.bf16.mxu0 0
        %5566 = vmatpush2.bf16.msra.mxu0 0
        %5567 = vmatprep.subr.bf16.mxu0 0
        %5568 = vmatpush2.bf16.msra.mxu0 0
        %5569 = vmatprep.subr.bf16.mxu0 0
        %5570 = vmatpush2.bf16.msra.mxu0 0
        %5571 = vmatprep.subr.bf16.mxu0 0
        %5572 = vmatpush2.bf16.msra.mxu0 0
        %5573 = vmatprep.subr.bf16.mxu0 0
        %5574 = vmatpush2.bf16.msra.mxu0 0
        %5575 = vmatprep.subr.bf16.mxu0 0
        %5576 = vmatpush2.bf16.msra.mxu0 0
        %5577 = vmatprep.mubr.bf16.mxu0 0
        %5578 = vmatmul.mubr.bf16.gmra.mxu0 %v5540
        %v5579 = vpop.f32.mrf.mxu0
        %v5580 = vadd.f32 0.0, %v5579
        %v5581 = vpop.f32.mrf.mxu0
        %v5582 = vpop.f32.mrf.mxu0
        %v5583 = vpop.f32.mrf.mxu0
        %5584 = vdwg.mxu0
        %v5586 = vsel %vm4793, %v4983, 0
        %v5589 = vsel %vm4989, %v4054, 0
        %5591 = vmatprep.subr.bf16.mxu0 0
        %5592 = vmatpush1.bf16.msra.mxu0 0
        %5593 = vmatprep.subr.bf16.mxu0 0
        %5594 = vmatpush1.bf16.msra.mxu0 0
        %5595 = vmatprep.subr.bf16.mxu0 0
        %5596 = vmatpush1.bf16.msra.mxu0 0
        %5597 = vmatprep.subr.bf16.mxu0 0
        %5598 = vmatpush1.bf16.msra.mxu0 0
        %5599 = vmatprep.subr.bf16.mxu0 0
        %5600 = vmatpush1.bf16.msra.mxu0 0
        %5601 = vmatprep.subr.bf16.mxu0 0
        %5602 = vmatpush1.bf16.msra.mxu0 0
        %5603 = vmatprep.subr.bf16.mxu0 0
        %5604 = vmatpush1.bf16.msra.mxu0 0
        %5605 = vmatprep.subr.bf16.mxu0 0
        %5606 = vmatpush1.bf16.msra.mxu0 %v5589
        %5607 = vmatprep.subr.bf16.mxu0 0
        %5608 = vmatpush2.bf16.msra.mxu0 0
        %5609 = vmatprep.subr.bf16.mxu0 0
        %5610 = vmatpush2.bf16.msra.mxu0 0
        %5611 = vmatprep.subr.bf16.mxu0 0
        %5612 = vmatpush2.bf16.msra.mxu0 0
        %5613 = vmatprep.subr.bf16.mxu0 0
        %5614 = vmatpush2.bf16.msra.mxu0 0
        %5615 = vmatprep.subr.bf16.mxu0 0
        %5616 = vmatpush2.bf16.msra.mxu0 0
        %5617 = vmatprep.subr.bf16.mxu0 0
        %5618 = vmatpush2.bf16.msra.mxu0 0
        %5619 = vmatprep.subr.bf16.mxu0 0
        %5620 = vmatpush2.bf16.msra.mxu0 0
        %5621 = vmatprep.subr.bf16.mxu0 0
        %5622 = vmatpush2.bf16.msra.mxu0 0
        %5623 = vmatprep.mubr.bf16.mxu0 0
        %5624 = vmatmul.mubr.bf16.gmra.mxu0 %v5586
        %v5625 = vpop.f32.mrf.mxu0
        %v5626 = vadd.f32 0.0, %v5625
        %v5627 = vpop.f32.mrf.mxu0
        %v5628 = vpop.f32.mrf.mxu0
        %v5629 = vpop.f32.mrf.mxu0
        %5630 = vdwg.mxu0
        %v5632 = vsel %vm4793, %v4984, 0
        %v5635 = vsel %vm4989, %v4055, 0
        %5637 = vmatprep.subr.bf16.mxu0 0
        %5638 = vmatpush1.bf16.msra.mxu0 0
        %5639 = vmatprep.subr.bf16.mxu0 0
        %5640 = vmatpush1.bf16.msra.mxu0 0
        %5641 = vmatprep.subr.bf16.mxu0 0
        %5642 = vmatpush1.bf16.msra.mxu0 0
        %5643 = vmatprep.subr.bf16.mxu0 0
        %5644 = vmatpush1.bf16.msra.mxu0 0
        %5645 = vmatprep.subr.bf16.mxu0 0
        %5646 = vmatpush1.bf16.msra.mxu0 0
        %5647 = vmatprep.subr.bf16.mxu0 0
        %5648 = vmatpush1.bf16.msra.mxu0 0
        %5649 = vmatprep.subr.bf16.mxu0 0
        %5650 = vmatpush1.bf16.msra.mxu0 0
        %5651 = vmatprep.subr.bf16.mxu0 0
        %5652 = vmatpush1.bf16.msra.mxu0 %v5635
        %5653 = vmatprep.subr.bf16.mxu0 0
        %5654 = vmatpush2.bf16.msra.mxu0 0
        %5655 = vmatprep.subr.bf16.mxu0 0
        %5656 = vmatpush2.bf16.msra.mxu0 0
        %5657 = vmatprep.subr.bf16.mxu0 0
        %5658 = vmatpush2.bf16.msra.mxu0 0
        %5659 = vmatprep.subr.bf16.mxu0 0
        %5660 = vmatpush2.bf16.msra.mxu0 0
        %5661 = vmatprep.subr.bf16.mxu0 0
        %5662 = vmatpush2.bf16.msra.mxu0 0
        %5663 = vmatprep.subr.bf16.mxu0 0
        %5664 = vmatpush2.bf16.msra.mxu0 0
        %5665 = vmatprep.subr.bf16.mxu0 0
        %5666 = vmatpush2.bf16.msra.mxu0 0
        %5667 = vmatprep.subr.bf16.mxu0 0
        %5668 = vmatpush2.bf16.msra.mxu0 0
        %5669 = vmatprep.mubr.bf16.mxu0 0
        %5670 = vmatmul.mubr.bf16.gmra.mxu0 %v5632
        %v5671 = vpop.f32.mrf.mxu0
        %v5672 = vadd.f32 0.0, %v5671
        %v5673 = vpop.f32.mrf.mxu0
        %v5674 = vpop.f32.mrf.mxu0
        %v5675 = vpop.f32.mrf.mxu0
        %5676 = vdwg.mxu0
        %v5678 = vsel %vm4793, %v4985, 0
        %v5681 = vsel %vm4989, %v4056, 0
        %5683 = vmatprep.subr.bf16.mxu0 0
        %5684 = vmatpush1.bf16.msra.mxu0 0
        %5685 = vmatprep.subr.bf16.mxu0 0
        %5686 = vmatpush1.bf16.msra.mxu0 0
        %5687 = vmatprep.subr.bf16.mxu0 0
        %5688 = vmatpush1.bf16.msra.mxu0 0
        %5689 = vmatprep.subr.bf16.mxu0 0
        %5690 = vmatpush1.bf16.msra.mxu0 0
        %5691 = vmatprep.subr.bf16.mxu0 0
        %5692 = vmatpush1.bf16.msra.mxu0 0
        %5693 = vmatprep.subr.bf16.mxu0 0
        %5694 = vmatpush1.bf16.msra.mxu0 0
        %5695 = vmatprep.subr.bf16.mxu0 0
        %5696 = vmatpush1.bf16.msra.mxu0 0
        %5697 = vmatprep.subr.bf16.mxu0 0
        %5698 = vmatpush1.bf16.msra.mxu0 %v5681
        %5699 = vmatprep.subr.bf16.mxu0 0
        %5700 = vmatpush2.bf16.msra.mxu0 0
        %5701 = vmatprep.subr.bf16.mxu0 0
        %5702 = vmatpush2.bf16.msra.mxu0 0
        %5703 = vmatprep.subr.bf16.mxu0 0
        %5704 = vmatpush2.bf16.msra.mxu0 0
        %5705 = vmatprep.subr.bf16.mxu0 0
        %5706 = vmatpush2.bf16.msra.mxu0 0
        %5707 = vmatprep.subr.bf16.mxu0 0
        %5708 = vmatpush2.bf16.msra.mxu0 0
        %5709 = vmatprep.subr.bf16.mxu0 0
        %5710 = vmatpush2.bf16.msra.mxu0 0
        %5711 = vmatprep.subr.bf16.mxu0 0
        %5712 = vmatpush2.bf16.msra.mxu0 0
        %5713 = vmatprep.subr.bf16.mxu0 0
        %5714 = vmatpush2.bf16.msra.mxu0 0
        %5715 = vmatprep.mubr.bf16.mxu0 0
        %5716 = vmatmul.mubr.bf16.gmra.mxu0 %v5678
        %v5717 = vpop.f32.mrf.mxu0
        %v5718 = vadd.f32 0.0, %v5717
        %v5719 = vpop.f32.mrf.mxu0
        %v5720 = vpop.f32.mrf.mxu0
        %v5721 = vpop.f32.mrf.mxu0
        %5722 = vdwg.mxu0
        %5727 = vrot.lane.b32.xlu0 %v5212, 8
        %v5728 = vpop.permute.xlu0 %5727
        %5729 = vrot.lane.b32.xlu0 %v5258, 8
        %v5730 = vpop.permute.xlu0 %5729
        %5731 = vrot.lane.b32.xlu0 %v5304, 8
        %v5732 = vpop.permute.xlu0 %5731
        %5733 = vrot.lane.b32.xlu0 %v5350, 8
        %v5734 = vpop.permute.xlu0 %5733
        %5743 = vrot.lane.b32.xlu0 %v5396, 16
        %v5744 = vpop.permute.xlu0 %5743
        %5745 = vrot.lane.b32.xlu0 %v5442, 16
        %v5746 = vpop.permute.xlu0 %5745
        %5747 = vrot.lane.b32.xlu0 %v5488, 16
        %v5748 = vpop.permute.xlu0 %5747
        %5749 = vrot.lane.b32.xlu0 %v5534, 16
        %v5750 = vpop.permute.xlu0 %5749
        %5759 = vrot.lane.b32.xlu0 %v5580, 24
        %v5760 = vpop.permute.xlu0 %5759
        %5761 = vrot.lane.b32.xlu0 %v5626, 24
        %v5762 = vpop.permute.xlu0 %5761
        %5763 = vrot.lane.b32.xlu0 %v5672, 24
        %v5764 = vpop.permute.xlu0 %5763
        %5765 = vrot.lane.b32.xlu0 %v5718, 24
        %v5766 = vpop.permute.xlu0 %5765
        %v5771 = vsel %vm1576, %v5028, %v5728
        %v5772 = vsel %vm1576, %v5074, %v5730
        %v5773 = vsel %vm1576, %v5120, %v5732
        %v5774 = vsel %vm1576, %v5166, %v5734
        %v5775 = vsel %vm3259, %v5771, %v5744
        %v5776 = vsel %vm3259, %v5772, %v5746
        %v5777 = vsel %vm3259, %v5773, %v5748
        %v5778 = vsel %vm3259, %v5774, %v5750
        %v5779 = vsel %vm3264, %v5775, %v5760
        %v5780 = vsel %vm3264, %v5776, %v5762
        %v5781 = vsel %vm3264, %v5777, %v5764
        %v5782 = vsel %vm3264, %v5778, %v5766
        %v5783 = vadd.f32 %v1092, %v5779
        %v5784 = vadd.f32 %v1093, %v5780
        %v5785 = vadd.f32 %v1094, %v5781
        %v5786 = vadd.f32 %v1095, %v5782
        %v5787 = vsel %vm1097, %v5783, 0.0
        %5788 = vadd.xlane.f32.xlu0 %v5787
        %v5789 = vpop.xlane.xlu0 %5788
        %v5790 = vsel %vm1097, %v5784, 0.0
        %5791 = vadd.xlane.f32.xlu0 %v5790
        %v5792 = vpop.xlane.xlu0 %5791
        %v5793 = vsel %vm1097, %v5785, 0.0
        %5794 = vadd.xlane.f32.xlu0 %v5793
        %v5795 = vpop.xlane.xlu0 %5794
        %v5796 = vsel %vm1097, %v5786, 0.0
        %5797 = vadd.xlane.f32.xlu0 %v5796
        %v5798 = vpop.xlane.xlu0 %5797
        %v5799 = vmul.f32 %v5789, %v1110
        %v5800 = vmul.f32 %v5792, %v1110
        %v5801 = vmul.f32 %v5795, %v1110
        %v5802 = vmul.f32 %v5798, %v1110
        %v5803 = vrot.slane %v5799, 4
        %v5804 = vadd.f32 %v5799, %v5803
        %v5805 = vrot.slane %v5804, 2
        %v5806 = vadd.f32 %v5804, %v5805
        %v5807 = vrot.slane %v5806, 1
        %v5808 = vadd.f32 %v5806, %v5807
        %v5809 = vrot.slane %v5800, 4
        %v5810 = vadd.f32 %v5800, %v5809
        %v5811 = vrot.slane %v5810, 2
        %v5812 = vadd.f32 %v5810, %v5811
        %v5813 = vrot.slane %v5812, 1
        %v5814 = vadd.f32 %v5812, %v5813
        %v5815 = vrot.slane %v5801, 4
        %v5816 = vadd.f32 %v5801, %v5815
        %v5817 = vrot.slane %v5816, 2
        %v5818 = vadd.f32 %v5816, %v5817
        %v5819 = vrot.slane %v5818, 1
        %v5820 = vadd.f32 %v5818, %v5819
        %v5821 = vrot.slane %v5802, 4
        %v5822 = vadd.f32 %v5802, %v5821
        %v5823 = vrot.slane %v5822, 2
        %v5824 = vadd.f32 %v5822, %v5823
        %v5825 = vrot.slane %v5824, 1
        %v5826 = vadd.f32 %v5824, %v5825
        %v5827 = vmul.f32 %v5808, %v1139
        %v5828 = vmul.f32 %v5814, %v1139
        %v5829 = vmul.f32 %v5820, %v1139
        %v5830 = vmul.f32 %v5826, %v1139
        %v5831 = vsub.f32 %v5783, %v5827
        %v5832 = vsub.f32 %v5784, %v5828
        %v5833 = vsub.f32 %v5785, %v5829
        %v5834 = vsub.f32 %v5786, %v5830
        %v5835 = vmul.f32 %v5831, %v5831
        %v5836 = vmul.f32 %v5832, %v5832
        %v5837 = vmul.f32 %v5833, %v5833
        %v5838 = vmul.f32 %v5834, %v5834
        %v5839 = vsel %vm1097, %v5835, 0.0
        %5840 = vadd.xlane.f32.xlu0 %v5839
        %v5841 = vpop.xlane.xlu0 %5840
        %v5842 = vsel %vm1097, %v5836, 0.0
        %5843 = vadd.xlane.f32.xlu0 %v5842
        %v5844 = vpop.xlane.xlu0 %5843
        %v5845 = vsel %vm1097, %v5837, 0.0
        %5846 = vadd.xlane.f32.xlu0 %v5845
        %v5847 = vpop.xlane.xlu0 %5846
        %v5848 = vsel %vm1097, %v5838, 0.0
        %5849 = vadd.xlane.f32.xlu0 %v5848
        %v5850 = vpop.xlane.xlu0 %5849
        %v5851 = vmul.f32 %v5841, %v1110
        %v5852 = vmul.f32 %v5844, %v1110
        %v5853 = vmul.f32 %v5847, %v1110
        %v5854 = vmul.f32 %v5850, %v1110
        %v5855 = vrot.slane %v5851, 4
        %v5856 = vadd.f32 %v5851, %v5855
        %v5857 = vrot.slane %v5856, 2
        %v5858 = vadd.f32 %v5856, %v5857
        %v5859 = vrot.slane %v5858, 1
        %v5860 = vadd.f32 %v5858, %v5859
        %v5861 = vrot.slane %v5852, 4
        %v5862 = vadd.f32 %v5852, %v5861
        %v5863 = vrot.slane %v5862, 2
        %v5864 = vadd.f32 %v5862, %v5863
        %v5865 = vrot.slane %v5864, 1
        %v5866 = vadd.f32 %v5864, %v5865
        %v5867 = vrot.slane %v5853, 4
        %v5868 = vadd.f32 %v5853, %v5867
        %v5869 = vrot.slane %v5868, 2
        %v5870 = vadd.f32 %v5868, %v5869
        %v5871 = vrot.slane %v5870, 1
        %v5872 = vadd.f32 %v5870, %v5871
        %v5873 = vrot.slane %v5854, 4
        %v5874 = vadd.f32 %v5854, %v5873
        %v5875 = vrot.slane %v5874, 2
        %v5876 = vadd.f32 %v5874, %v5875
        %v5877 = vrot.slane %v5876, 1
        %v5878 = vadd.f32 %v5876, %v5877
        %v5879 = vmul.f32 %v5860, %v1139
        %v5880 = vmul.f32 %v5866, %v1139
        %v5881 = vmul.f32 %v5872, %v1139
        %v5882 = vmul.f32 %v5878, %v1139
        %v5883 = vadd.f32 %v5879, 1e-05
        %v5884 = vadd.f32 %v5880, 1e-05
        %v5885 = vadd.f32 %v5881, 1e-05
        %v5886 = vadd.f32 %v5882, 1e-05
        %v5887 = vrsqrt.pop %v5883
        %v5888 = vrsqrt.pop %v5884
        %v5889 = vrsqrt.pop %v5885
        %v5890 = vrsqrt.pop %v5886
        %v5891 = vmul.f32 %v5831, %v5887
        %v5892 = vmul.f32 %v5832, %v5888
        %v5893 = vmul.f32 %v5833, %v5889
        %v5894 = vmul.f32 %v5834, %v5890
        %v5895 = vld [vmem:[%s26] sm:$0x1]
        %v5897 = vlaneseq
        %v5898 = vshrl.u32 %v5897, 7
        %v5899 = vsub.s32 0, %v5898
        %v5900 = vrot.slane %v5895, %v5899
        %v5902 = vmul.f32 %v5891, %v5900
        %v5903 = vmul.f32 %v5892, %v5900
        %v5904 = vmul.f32 %v5893, %v5900
        %v5905 = vmul.f32 %v5894, %v5900
        %v5906 = vld [vmem:[%s27] sm:$0x1]
        %v5908 = vlaneseq
        %v5909 = vshrl.u32 %v5908, 7
        %v5910 = vsub.s32 0, %v5909
        %v5911 = vrot.slane %v5906, %v5910
        %v5913 = vadd.f32 %v5902, %v5911
        %v5914 = vadd.f32 %v5903, %v5911
        %v5915 = vadd.f32 %v5904, %v5911
        %v5916 = vadd.f32 %v5905, %v5911
        %v5917 = vpack.c.bf16 %v5914, %v5913
        %v5918 = vpack.c.bf16 %v5916, %v5915
        %v5919 = vld [vmem:[#allocation29] sm:$0xf]
        %v5920 = vld [vmem:[#allocation29 + $0x4] sm:$0xf]
        %v5921 = vld [vmem:[#allocation29 + $0x8] sm:$0xf]
        %v5922 = vld [vmem:[#allocation29 + $0xc] sm:$0xf]
        %v5923 = vld [vmem:[%s21] sm:$0x1]
        %v5925 = vlaneseq
        %v5926 = vshrl.u32 %v5925, 7
        %v5927 = vsub.s32 0, %v5926
        %v5928 = vrot.slane %v5923, %v5927
        %v5934 = vunpack.c.l.b16 %v5919
        %v5935 = vunpack.c.l.b16 %v5920
        %v5936 = vunpack.c.l.b16 %v5921
        %v5937 = vunpack.c.l.b16 %v5922
        %v5938 = vpack.c.b16 %v5935, %v5934
        %v5939 = vpack.c.b16 %v5937, %v5936
        %v5943 = vsel %vm1097, %v5917, 0
        %v5946 = vsel %vm1097, %v5918, 0
        %5948 = vmatprep.subr.bf16.mxu0 0
        %5949 = vmatpush1.bf16.msra.mxu0 0
        %5950 = vmatprep.subr.bf16.mxu0 0
        %5951 = vmatpush1.bf16.msra.mxu0 0
        %5952 = vmatprep.subr.bf16.mxu0 0
        %5953 = vmatpush1.bf16.msra.mxu0 0
        %5954 = vmatprep.subr.bf16.mxu0 0
        %5955 = vmatpush1.bf16.msra.mxu0 0
        %5956 = vmatprep.subr.bf16.mxu0 0
        %5957 = vmatpush1.bf16.msra.mxu0 0
        %5958 = vmatprep.subr.bf16.mxu0 0
        %5959 = vmatpush1.bf16.msra.mxu0 0
        %5960 = vmatprep.subr.bf16.mxu0 0
        %5961 = vmatpush1.bf16.msra.mxu0 %v5939
        %5962 = vmatprep.subr.bf16.mxu0 0
        %5963 = vmatpush1.bf16.msra.mxu0 %v5938
        %5964 = vmatprep.subr.bf16.mxu0 0
        %5965 = vmatpush2.bf16.msra.mxu0 0
        %5966 = vmatprep.subr.bf16.mxu0 0
        %5967 = vmatpush2.bf16.msra.mxu0 0
        %5968 = vmatprep.subr.bf16.mxu0 0
        %5969 = vmatpush2.bf16.msra.mxu0 0
        %5970 = vmatprep.subr.bf16.mxu0 0
        %5971 = vmatpush2.bf16.msra.mxu0 0
        %5972 = vmatprep.subr.bf16.mxu0 0
        %5973 = vmatpush2.bf16.msra.mxu0 0
        %5974 = vmatprep.subr.bf16.mxu0 0
        %5975 = vmatpush2.bf16.msra.mxu0 0
        %5976 = vmatprep.subr.bf16.mxu0 0
        %5977 = vmatpush2.bf16.msra.mxu0 0
        %5978 = vmatprep.subr.bf16.mxu0 0
        %5979 = vmatpush2.bf16.msra.mxu0 0
        %5980 = vmatprep.mubr.bf16.mxu0 0
        %5981 = vmatmul.mubr.bf16.gmra.mxu0 %v5943
        %v5982 = vpop.f32.mrf.mxu0
        %v5983 = vadd.f32 %v5928, %v5982
        %v5984 = vpop.f32.mrf.mxu0
        %v5985 = vpop.f32.mrf.mxu0
        %v5986 = vadd.f32 %v5928, %v5985
        %v5987 = vpop.f32.mrf.mxu0
        %5988 = vmatprep.mubr.bf16.mxu0 0
        %5989 = vmatmul.mubr.bf16.gmra.mxu0 %v5946
        %v5990 = vpop.f32.mrf.mxu0
        %v5991 = vadd.f32 %v5928, %v5990
        %v5992 = vpop.f32.mrf.mxu0
        %v5993 = vpop.f32.mrf.mxu0
        %v5994 = vadd.f32 %v5928, %v5993
        %v5995 = vpop.f32.mrf.mxu0
        %5996 = vdwg.mxu0
        %v5997 = vmax.f32 %v5983, 0.0
        %v5998 = vmax.f32 %v5986, 0.0
        %v5999 = vmax.f32 %v5991, 0.0
        %v6000 = vmax.f32 %v5994, 0.0
        %v6001 = vadd.f32 %v5783, %v5997
        %v6002 = vadd.f32 %v5784, %v5998
        %v6003 = vadd.f32 %v5785, %v5999
        %v6004 = vadd.f32 %v5786, %v6000
        %6005 = vst.msk [vmem:[%s1088] sm:$0xff] %vm1097, %v6001
        %6006 = vst.msk [vmem:[%s1088 + $0x8] sm:$0xff] %vm1097, %v6002
        %6007 = vst.msk [vmem:[%s1088 + $0x10] sm:$0xff] %vm1097, %v6003
        %6008 = vst.msk [vmem:[%s1088 + $0x18] sm:$0xff] %vm1097, %v6004
        %s6009 = sand.u32 %s655, 1
        %s6010 = scalar_lea.sflag [#allocation4], %s6009
        %s6011 = sand.u32 %s655, 1
        %s6012 = smul.addr %s6011, 32
        %s6013 = scalar_lea.vmem [#allocation31], %s6012
        // Predicated region
        $region205: #{tpu_custom_call.1} parent=131 // pred_check
          %p6014 = pneg %p665
        $region206: #{tpu_custom_call.1} parent=131 // pred_check_branch
          %6016 = sbr.rel (%p6014) target = $region208
        $region207: #{tpu_custom_call.1} parent=131 // pred_region
          %s6017 = smul.u32 4, %s54
          %s6019 = ssub.s32 512, 512
          %6020 = vsyncadd %s6010, %s6019
          %s6021 = smul.addr %s6017, 128
          %s6022 = scalar_lea.hbm %s28, %s6021
          %s6023 = sshll.u32 %s6013, 4
          %s6024 = int_to_ptr.vmem [resolvable:$true] %s6023
          %6029 = dma.vmem_to_hbm [thread:$0]  %s6024, 512, %s6022, %s6010, 128, 128, 8
        $region208: #{tpu_custom_call.1} parent=131 // pred_fallthru
          _
      $region132: #{tpu_custom_call.1} parent=5 // pred_fallthru
        _
      %p6030 = scmp.le.s32.totalorder 2, %s49
      // Predicated region
      $region209: #{tpu_custom_call.1} parent=5 // pred_check
        %p6031 = pneg %p6030
      $region210: #{tpu_custom_call.1} parent=5 // pred_check_branch
        %6033 = sbr.rel (%p6031) target = $region212
      $region211: #{tpu_custom_call.1} parent=5 // pred_region
        %s6034 = ssub.s32 %s49, 2
        // Predicated region
        $region213: #{tpu_custom_call.1} parent=211 // pred_check
          %p6035 = pneg %p671
        $region214: #{tpu_custom_call.1} parent=211 // pred_check_branch
          %6037 = sbr.rel (%p6035) target = $region216
        $region215: #{tpu_custom_call.1} parent=211 // pred_region
          %s6038 = sand.u32 %s656, 1
          %s6039 = scalar_lea.sflag [#allocation4], %s6038
          %s6040 = sand.u32 %s656, 1
          %s6041 = smul.addr %s6040, 32
          %s6042 = scalar_lea.vmem [#allocation31], %s6041
          %6043 = dma.done %s6039, 512
        $region216: #{tpu_custom_call.1} parent=211 // pred_fallthru
          _
      $region212: #{tpu_custom_call.1} parent=5 // pred_fallthru
        _
    $region6: #{tpu_custom_call.1} parent=1 // loop_footer
      %s53 = sadd.s32 1, %s49
    $region7: #{tpu_custom_call.1} parent=1 // loop_footer_branch
      %48 = sbr.rel target = $region3
    $region8: #{tpu_custom_call.1} parent=1 // loop_exit
      _
    %6044 = vsyncpa [#allocation3], 1
    %s6045 = scalar_lea.sflag [#allocation3], 1
    %6046 = vsyncpa %s6045, 1
    %6047 = vsyncpa [#allocation6], 1
    %6048 = vsyncpa [#allocation9], 1
    %6049 = vsyncpa [#allocation12], 1
    %6050 = vsyncpa [#allocation15], 1
    %6051 = vsyncpa [#allocation18], 1
    %6052 = vsyncpa [#allocation21], 1
    %6053 = vsyncpa [#allocation24], 1
    %6054 = vsyncpa [#allocation27], 1
    %6055 = vsyncpa [#allocation30], 1
    %6056 = vsyncpa [#allocation4], 1
    %s6057 = scalar_lea.sflag [#allocation4], 1
    %6058 = vsyncpa %s6057, 1

</llo_original>
